<compile_context>
chip_gen: v7x
topology: tpu7x:2x2x1
jax: 0.10.0
libtpu: 0.0.40
codegen_flags: <defaults>
</compile_context>

<pallas_src>
import functools
import math

import jax
import jax.numpy as jnp
from jax.experimental import pallas as pl
from jax.experimental.pallas import tpu as pltpu

K_CURV = 1.0          # Lorentz curvature parameter k
SQRT_K = 1.0
ACOSH_EPS = 1e-7
LN_EPS = 1e-5         # torch.nn.LayerNorm default eps
NEG_SLOPE = 0.2       # GATConv default negative_slope
THETA_MAX = 50.0      # clamp for exp() overflow safety (f32)
MASK_VALUE = -1e30    # additive attention bias for non-edges


# ----------------------------- Lorentz manifold math ----------------------------- #
def _space_mask(d):
    # (1, d) boolean mask, True on "space" columns (index > 0); broadcasts over rows.
    col = jax.lax.broadcasted_iota(jnp.int32, (1, d), 1)
    return col > 0


def _cosh_sinh(theta):
    # Exact exp(+/-theta): avoids the vrcp cancellation in sinh near the origin.
    ep = jnp.exp(theta)
    en = jnp.exp(-theta)
    return 0.5 * (ep + en), 0.5 * (ep - en)


def _arccosh(t):
    # t >= 1 + eps.  log(t * (1 + sqrt(1 - 1/t^2))) never forms t^2, so it cannot
    # overflow f32 even for t ~ cosh(THETA_MAX) ~ 2.6e21.
    inv_t = 1.0 / t
    s = jnp.sqrt(jnp.maximum(1.0 - inv_t * inv_t, 0.0))
    return jnp.log(t * (1.0 + s))


def _minkowski_inner(x, y, m):
    # <x, y>_L = -x0*y0 + sum_{i>0} xi*yi   (keepdims)
    xy = x * y
    return jnp.sum(jnp.where(m, xy, -xy), axis=-1, keepdims=True)


def _logmap0(x, m):
    # Space-norm form (HGCN / geoopt): u = sqrtK * arccosh(x0/sqrtK) * y / ||y||,
    # time column 0.  No alpha^2-1 term, so no overflow path.
    x0 = x[:, 0:1]
    alpha = jnp.maximum(x0 / SQRT_K, 1.0 + ACOSH_EPS)
    y = jnp.where(m, x, 0.0)
    sq = jnp.maximum(jnp.sum(y * y, axis=-1, keepdims=True), 1e-15)
    coef = (SQRT_K * _arccosh(alpha)) * jax.lax.rsqrt(sq)
    return coef * y


def _expmap0(u, m):
    us = jnp.where(m, u, 0.0)
    sq = jnp.maximum(jnp.sum(us * us, axis=-1, keepdims=True), 1e-15)
    nrm = jnp.sqrt(sq)
    theta = jnp.minimum(nrm / SQRT_K, THETA_MAX)       # overflow guard for exp()
    ch, sh = _cosh_sinh(theta)
    time = SQRT_K * ch
    space = (SQRT_K * sh) * jax.lax.rsqrt(sq) * us
    return jnp.where(m, space, time)


def _transp0(x, v, m):
    # Parallel transport of tangent v at the origin o to the point x.
    x0 = x[:, 0:1]
    inner_xv = _minkowski_inner(x, v, m)
    denom = K_CURV + SQRT_K * x0                       # >= 2k > 0 on the hyperboloid
    o_plus_x = x + jnp.where(m, 0.0, SQRT_K)
    return v + (inner_xv / denom) * o_plus_x


def _expmap(x, v, m):
    sq = jnp.maximum(_minkowski_inner(v, v, m), 1e-15)
    vnorm = jnp.sqrt(sq)
    theta = jnp.minimum(vnorm / SQRT_K, THETA_MAX)
    ch, sh = _cosh_sinh(theta)
    return ch * x + (SQRT_K * sh) * jax.lax.rsqrt(sq) * v


def _layernorm_space(h, gamma_full, beta_full, m):
    # LayerNorm over space columns (1:) only; time column untouched.  gamma/beta padded
    # to full width D; column 0 ignored.
    nfeat = h.shape[-1] - 1
    inv_n = 1.0 / float(nfeat)
    hs = jnp.where(m, h, 0.0)
    mean = jnp.sum(hs, axis=-1, keepdims=True) * inv_n
    centered = jnp.where(m, hs - mean, 0.0)
    var = jnp.sum(centered * centered, axis=-1, keepdims=True) * inv_n
    normed = centered * jax.lax.rsqrt(var + LN_EPS) * gamma_full + beta_full
    return jnp.where(m, normed, h)


# -------------------------- shared forward building blocks ------------------------ #
def _hnn_forward(x, w_lin, b_hyp, ln1_g, ln1_b):
    """HNNLayer: HypLinear -> HypNorm('ln') -> HypAct(ReLU). Row-wise, tileable."""
    in_dim = x.shape[-1]
    out_dim = w_lin.shape[-1]
    m_in = _space_mask(in_dim)            # masks built once and reused
    m_out = _space_mask(out_dim)

    # HypLinear (scale == 1.0, dropout == 0)
    u = _logmap0(x, m_in)
    u = jnp.dot(u, w_lin, preferred_element_type=jnp.float32)
    u = jnp.where(m_out, u, 0.0)          # proj_tan0
    h = _expmap0(u, m_out)
    bias = jnp.where(m_out, b_hyp, 0.0)   # proj_tan0(bias)
    bias = _transp0(h, bias, m_out)
    h = _expmap(h, bias, m_out)

    # HypNorm ('ln')
    t = _logmap0(h, m_out)
    t = _layernorm_space(t, ln1_g, ln1_b, m_out)
    h = _expmap0(t, m_out)

    # HypAct (ReLU); logmap0 already has time column 0, ReLU keeps it 0 -> proj no-op.
    t = jnp.maximum(_logmap0(h, m_out), 0.0)
    return _expmap0(t, m_out)


def _post_gat(gat, ln2_g, ln2_b):
    """HypNorm + HypAct applied to the concatenated GAT output."""
    m = _space_mask(gat.shape[-1])
    t = _logmap0(gat, m)
    t = _layernorm_space(t, ln2_g, ln2_b, m)
    h = _expmap0(t, m)
    t = jnp.maximum(_logmap0(h, m), 0.0)
    return _expmap0(t, m)


# ---------------------------------- Pallas kernels --------------------------------- #
def hnn_proj_kernel(x_ref, w_lin_ref, b_hyp_ref, ln1_g_ref, ln1_b_ref, w_gat_ext_ref,
                    xp_ext_ref):
    """Kernel A: per row tile, HNN layer + GAT projection with folded attention scores.

    Single lane-dense output slab: [h @ w_gat | h @ (w_gat_h@att_src_h) | h @ (w_gat_h@att_dst_h)].
    """
    h = _hnn_forward(x_ref[...], w_lin_ref[...], b_hyp_ref[...],
                     ln1_g_ref[...], ln1_b_ref[...])
    xp_ext_ref[...] = jnp.dot(h, w_gat_ext_ref[...], preferred_element_type=jnp.float32)


def gat_attn_kernel(bias_ref, a_dst_ref, a_src_t_ref, xp_ref,
                    b_gat_ref, ln2_g_ref, ln2_b_ref, out_ref,
                    m_sc, l_sc, acc_sc, *, heads, out_dim, agg_dtype):
    """Kernel B: flash-style GAT attention with an online softmax over source tiles.

    grid = (Npad/tile_i, Npad/tile_j); the j ("arbitrary") axis streams source blocks of
    the additive adjacency bias, a_src^T and xp, so VMEM is bounded by tile_i*tile_j and
    xp is never resident.  Output written once, at the last j block.
    """
    j = pl.program_id(1)

    @pl.when(j == 0)
    def _init():
        m_sc[...] = jnp.full_like(m_sc, -jnp.inf)
        l_sc[...] = jnp.zeros_like(l_sc)
        acc_sc[...] = jnp.zeros_like(acc_sc)

    bias = bias_ref[...].astype(jnp.float32)   # 0 on edge / self-loop, -1e30 otherwise

    # TODO(synk): for large head counts, promote `hh` to a third ("arbitrary") grid axis
    # so each head's (tile_i, tile_j) temporaries do not coexist across the unroll.
    for hh in range(heads):
        c0 = hh * out_dim
        xh = xp_ref[:, c0:c0 + out_dim]                              # (tile_j, out_dim)
        e = a_dst_ref[:, hh:hh + 1] + a_src_t_ref[hh:hh + 1, :]      # (tile_i, tile_j)
        e = jnp.where(e > 0, e, NEG_SLOPE * e) + bias                # LeakyReLU + mask

        m_prev = m_sc[:, hh:hh + 1]
        m_new = jnp.maximum(m_prev, jnp.max(e, axis=-1, keepdims=True))
        alpha = jnp.exp(m_prev - m_new)                              # rescale old stats
        p = jnp.exp(e - m_new)                                       # masked cols -> 0

        l_sc[:, hh:hh + 1] = alpha * l_sc[:, hh:hh + 1] + jnp.sum(p, axis=-1, keepdims=True)
        acc_sc[:, c0:c0 + out_dim] = alpha * acc_sc[:, c0:c0 + out_dim] + jnp.dot(
            p.astype(agg_dtype), xh.astype(agg_dtype),
            preferred_element_type=jnp.float32)
        m_sc[:, hh:hh + 1] = m_new

    @pl.when(j == pl.num_programs(1) - 1)
    def _finish():
        for hh in range(heads):
            c0 = hh * out_dim
            inv_l = pl.reciprocal(l_sc[:, hh:hh + 1], approx=True)   # softmax denominator
            acc_sc[:, c0:c0 + out_dim] = acc_sc[:, c0:c0 + out_dim] * inv_l
        gat = acc_sc[...] + b_gat_ref[...]
        out_ref[...] = _post_gat(gat, ln2_g_ref[...], ln2_b_ref[...])


# ------------------------------------ planning ------------------------------------- #
def _round_up(x, m):
    return ((x + m - 1) // m) * m


def _device_plan():
    """Generation-aware tile / VMEM-limit defaults (v7x: 64 MiB/TC, v5e/v6e: 128 MiB)."""
    try:
        cap = pltpu.get_tpu_info().vmem_capacity_bytes
    except Exception:                       # interpret mode / older runtimes
        cap = 128 * 1024 * 1024
    if cap <= 96 * 1024 * 1024:             # v7x-class
        return dict(vmem_limit=48 * 1024 * 1024, tile_a=256, tile_i=128, tile_j=256)
    return dict(vmem_limit=100 * 1024 * 1024, tile_a=512, tile_i=256, tile_j=512)


def _plan_tiles(n, tile_a, tile_i, tile_j):
    """Snap tiles to TPU-legal values and compute the padded node count.

    Row tiles are multiples of 16 (covers bf16 sublane packing); the source tile is the
    lane axis of the (tile_i, tile_j) attention block, so it must be a multiple of 128
    or cover the whole padded source axis.
    """
    def snap16(t):
        return max(16, (min(t, _round_up(n, 16)) // 16) * 16)

    tile_a = snap16(tile_a)
    tile_i = snap16(tile_i)
    if tile_j >= n or tile_j % 128 != 0:
        n_pad = _round_up(n, math.lcm(tile_a, tile_i))
        tile_j = n_pad                      # single source block covering the full axis
    else:
        n_pad = _round_up(n, math.lcm(tile_a, tile_i, tile_j))
    return n_pad, tile_a, tile_i, tile_j


# ------------------------------------ wrapper -------------------------------------- #
def hat_layer(x, adj, params, *, heads, out_dim, tile_a=None, tile_i=None, tile_j=None,
              agg_dtype=jnp.bfloat16):
    n, in_dim = x.shape
    hd = heads * out_dim
    hd_ext = hd + 2 * heads

    plan = _device_plan()
    tile_a = plan["tile_a"] if tile_a is None else tile_a
    tile_i = plan["tile_i"] if tile_i is None else tile_i
    tile_j = plan["tile_j"] if tile_j is None else tile_j
    n_pad, tile_a, tile_i, tile_j = _plan_tiles(n, tile_a, tile_i, tile_j)

    # Pad N to the tile LCM with hyperboloid-origin rows; padded rows are masked out of
    # every real row's attention (no edges, diagonal self-loop only) and sliced off at
    # the end.  Avoids the "single whole-array tile" fallback entirely.
    pad = n_pad - n
    if pad:
        origin = jnp.zeros((pad, in_dim), x.dtype).at[:, 0].set(SQRT_K)
        x_in = jnp.concatenate([x, origin], axis=0)
        adj_p = jnp.pad(adj, ((0, pad), (0, pad)))
    else:
        x_in, adj_p = x, adj

    # Additive attention bias (replaces the in-kernel iota/mask build): bf16 halves the
    # dominant streamed input of Kernel B.
    eye = jnp.eye(n_pad, dtype=jnp.bool_)
    attn_bias = jnp.where(jnp.logical_or(adj_p > 0, eye), 0.0, MASK_VALUE)
    attn_bias = attn_bias.astype(jnp.bfloat16)

    # Fold the per-head attention-score projections into 2*heads extra matmul columns.
    w_gat = params["w_gat"]                                   # (out_dim, heads*out_dim)
    w_heads = w_gat.reshape(out_dim, heads, out_dim)
    w_src_cols = jnp.einsum("dhe,he->dh", w_heads, params["att_src"])   # (out_dim, heads)
    w_dst_cols = jnp.einsum("dhe,he->dh", w_heads, params["att_dst"])   # (out_dim, heads)
    w_gat_ext = jnp.concatenate([w_gat, w_src_cols, w_dst_cols], axis=1)

    # NOTE: the grid-constant params below are tiny (<= a few KiB), so their default
    # double-buffering is negligible; pl.Buffered(1) is therefore not needed here, and
    # the formerly-resident xp is now streamed per source block instead.
    def const_spec(arr):
        return pl.BlockSpec(arr.shape, lambda *_: (0,) * arr.ndim)

    # --- Kernel A: HNN layer + GAT projection (row-tiled, one lane-dense output) ---
    xp_ext = pl.pallas_call(
        hnn_proj_kernel,
        out_shape=jax.ShapeDtypeStruct((n_pad, hd_ext), jnp.float32),
        grid_spec=pltpu.PrefetchScalarGridSpec(
            num_scalar_prefetch=0,
            grid=(n_pad // tile_a,),
            in_specs=[
                pl.BlockSpec((tile_a, in_dim), lambda i: (i, 0)),
                const_spec(params["w_lin"]),
                const_spec(params["b_hyp"]),
                const_spec(params["ln1_g"]),
                const_spec(params["ln1_b"]),
                const_spec(w_gat_ext),
            ],
            out_specs=pl.BlockSpec((tile_a, hd_ext), lambda i: (i, 0)),
        ),
        compiler_params=pltpu.CompilerParams(
            dimension_semantics=("parallel",),
            vmem_limit_bytes=plan["vmem_limit"]),
    )(x_in, params["w_lin"], params["b_hyp"], params["ln1_g"], params["ln1_b"], w_gat_ext)

    # Slice the slab in the wrapper (tiny XLA ops): bf16 xp halves Kernel B's streamed
    # DMA and puts the aggregation matmul on the bf16 MXU path; scores stay f32.
    xp = xp_ext[:, :hd].astype(agg_dtype)
    a_src_t = xp_ext[:, hd:hd + heads].T          # (heads, n_pad), lane-dense for kernel B
    a_dst = xp_ext[:, hd + heads:hd_ext]          # (n_pad, heads)

    # --- Kernel B: online-softmax GAT attention + HypNorm + HypAct ---
    kern_b = functools.partial(gat_attn_kernel, heads=heads, out_dim=out_dim,
                               agg_dtype=agg_dtype)
    out = pl.pallas_call(
        kern_b,
        out_shape=jax.ShapeDtypeStruct((n_pad, hd), jnp.float32),
        grid_spec=pltpu.PrefetchScalarGridSpec(
            num_scalar_prefetch=0,
            grid=(n_pad // tile_i, n_pad // tile_j),
            in_specs=[
                pl.BlockSpec((tile_i, tile_j), lambda i, j: (i, j)),   # additive bias strip
                pl.BlockSpec((tile_i, heads), lambda i, j: (i, 0)),    # a_dst tile
                pl.BlockSpec((heads, tile_j), lambda i, j: (0, j)),    # a_src^T strip
                pl.BlockSpec((tile_j, hd), lambda i, j: (j, 0)),       # xp source block
                const_spec(params["b_gat"]),
                const_spec(params["ln2_g"]),
                const_spec(params["ln2_b"]),
            ],
            out_specs=pl.BlockSpec((tile_i, hd), lambda i, j: (i, 0)),
            scratch_shapes=[
                pltpu.VMEM((tile_i, heads), jnp.float32),   # running max  m
                pltpu.VMEM((tile_i, heads), jnp.float32),   # running sum  l
                pltpu.VMEM((tile_i, hd), jnp.float32),      # weighted-value accumulator
            ],
        ),
        compiler_params=pltpu.CompilerParams(
            dimension_semantics=("parallel", "arbitrary"),
            vmem_limit_bytes=plan["vmem_limit"]),
    )(attn_bias, a_dst, a_src_t, xp, params["b_gat"], params["ln2_g"], params["ln2_b"])

    return out[:n]


# ------------------------------- pure-JAX reference -------------------------------- #
def _hat_reference(x, adj, params, *, heads, out_dim):
    """Unfolded, full-precision formulation — independent correctness check."""
    n = x.shape[0]
    h = _hnn_forward(x, params["w_lin"], params["b_hyp"], params["ln1_g"], params["ln1_b"])
    xp = jnp.dot(h, params["w_gat"], preferred_element_type=jnp.float32)
    adj_eff = jnp.maximum(adj, jnp.eye(n, dtype=adj.dtype))
    parts = []
    for hh in range(heads):
        xh = xp[:, hh * out_dim:(hh + 1) * out_dim]
        a_src = jnp.sum(xh * params["att_src"][hh], axis=-1, keepdims=True)
        a_dst = jnp.sum(xh * params["att_dst"][hh], axis=-1, keepdims=True)
        e = a_dst + a_src.T
        e = jnp.where(e > 0, e, NEG_SLOPE * e)
        e = jnp.where(adj_eff > 0, e, -jnp.inf)
        p = jax.nn.softmax(e, axis=-1)
        parts.append(jnp.dot(p, xh, preferred_element_type=jnp.float32))
    gat = jnp.concatenate(parts, axis=-1) + params["b_gat"]
    return _post_gat(gat, params["ln2_g"], params["ln2_b"])


# -------------------------------------- main --------------------------------------- #
if __name__ == "__main__":
    # N deliberately NOT tile-aligned so the padding path is exercised; tiles chosen so
    # Kernel A has 4 row tiles and Kernel B has a (4, 2) grid (online softmax over 2
    # source blocks).
    N, IN_DIM, OUT_DIM, HEADS = 200, 12, 16, 4
    HD = HEADS * OUT_DIM

    key = jax.random.PRNGKey(0)
    ks = jax.random.split(key, 12)

    # Input points on the Lorentz manifold: random tangent at the origin -> expmap0.
    u0 = 0.5 * jax.random.normal(ks[0], (N, IN_DIM), jnp.float32)
    m_in = _space_mask(IN_DIM)
    x = _expmap0(jnp.where(m_in, u0, 0.0), m_in)

    # Dense symmetric adjacency mask (adj[i, j] == 1 means edge j -> i).
    a = (jax.random.uniform(ks[1], (N, N)) < 0.05).astype(jnp.float32)
    adj = jnp.maximum(a, a.T)

    # Deterministic synthetic parameters (shapes follow the module __init__). LayerNorm
    # params act on the space columns only; padded to full width, column 0 ignored.
    params = dict(
        w_lin=jax.random.normal(ks[2], (IN_DIM, OUT_DIM), jnp.float32) / jnp.sqrt(IN_DIM),
        b_hyp=0.05 * jax.random.normal(ks[3], (1, OUT_DIM), jnp.float32),
        ln1_g=1.0 + 0.1 * jax.random.normal(ks[4], (1, OUT_DIM), jnp.float32),
        ln1_b=0.1 * jax.random.normal(ks[5], (1, OUT_DIM), jnp.float32),
        w_gat=jax.random.normal(ks[6], (OUT_DIM, HD), jnp.float32) / jnp.sqrt(OUT_DIM),
        att_src=jax.random.normal(ks[7], (HEADS, OUT_DIM), jnp.float32) / jnp.sqrt(OUT_DIM),
        att_dst=jax.random.normal(ks[8], (HEADS, OUT_DIM), jnp.float32) / jnp.sqrt(OUT_DIM),
        b_gat=0.05 * jax.random.normal(ks[9], (1, HD), jnp.float32),
        ln2_g=1.0 + 0.1 * jax.random.normal(ks[10], (1, HD), jnp.float32),
        ln2_b=0.1 * jax.random.normal(ks[11], (1, HD), jnp.float32),
    )

    fwd = jax.jit(functools.partial(hat_layer, heads=HEADS, out_dim=OUT_DIM,
                                    tile_a=64, tile_i=64, tile_j=128))
    out = jax.block_until_ready(fwd(x, adj, params))

    ref = _hat_reference(x, adj, params, heads=HEADS, out_dim=OUT_DIM)
    rel = float(jnp.max(jnp.abs(out - ref)) / jnp.maximum(jnp.max(jnp.abs(ref)), 1.0))
    if rel > 5e-2:
        print(f"WARNING: relative max-abs diff vs reference = {rel:.3e}")

    print("KERNEL_OK")
</pallas_src>

<mosaic_0001>
module attributes {stable_mosaic.version = 11 : i64} {
  func.func @gat_attn_kernel(%arg0: i32, %arg1: i32, %arg2: memref<64x128xbf16, #tpu.memory_space<vmem>>, %arg3: memref<64x4xf32, #tpu.memory_space<vmem>>, %arg4: memref<4x128xf32, #tpu.memory_space<vmem>>, %arg5: memref<128x64xbf16, #tpu.memory_space<vmem>>, %arg6: memref<1x64xf32, #tpu.memory_space<vmem>>, %arg7: memref<1x64xf32, #tpu.memory_space<vmem>>, %arg8: memref<1x64xf32, #tpu.memory_space<vmem>>, %arg9: memref<64x64xf32, #tpu.memory_space<vmem>>, %arg10: memref<64x4xf32, #tpu.memory_space<vmem>>, %arg11: memref<64x4xf32, #tpu.memory_space<vmem>>, %arg12: memref<64x64xf32, #tpu.memory_space<vmem>>) attributes {dimension_semantics = [#tpu.dimension_semantics<parallel>, #tpu.dimension_semantics<arbitrary>], iteration_bounds = array<i64: 4, 2>, scalar_prefetch = 0 : i64, scratch_operands = 3 : i64, tpu.core_type = #tpu.core_type<tc>, window_params = [{transform_indices = @transform_0, window_bounds = array<i64: 64, 128>}, {transform_indices = @transform_1, window_bounds = array<i64: 64, 4>}, {transform_indices = @transform_2, window_bounds = array<i64: 4, 128>}, {transform_indices = @transform_3, window_bounds = array<i64: 128, 64>}, {pipeline_mode = #tpu.pipeline_mode<synchronous>, transform_indices = @transform_4, window_bounds = array<i64: 1, 64>}, {pipeline_mode = #tpu.pipeline_mode<synchronous>, transform_indices = @transform_5, window_bounds = array<i64: 1, 64>}, {pipeline_mode = #tpu.pipeline_mode<synchronous>, transform_indices = @transform_6, window_bounds = array<i64: 1, 64>}, {transform_indices = @transform_7, window_bounds = array<i64: 64, 64>}]} {
    %c0_i32 = arith.constant 0 : i32
    %0 = arith.cmpi eq, %arg1, %c0_i32 : i32
    %1 = arith.extui %0 : i1 to i32
    %c0_i32_0 = arith.constant 0 : i32
    %2 = arith.cmpi ne, %1, %c0_i32_0 : i32
    scf.if %2 {
      %cst_88 = arith.constant 0xFF800000 : f32
      %148 = vector.broadcast %cst_88 : f32 to vector<64x4xf32>
      %c0_89 = arith.constant 0 : index
      %c0_90 = arith.constant 0 : index
      %149 = vector.load %arg10[%c0_89, %c0_90] : memref<64x4xf32, #tpu.memory_space<vmem>>, vector<64x4xf32>
      tpu.vector_store %arg10[%c0_89, %c0_90], %148 {strides = array<i32>} : memref<64x4xf32, #tpu.memory_space<vmem>>, vector<64x4xf32>,
      %cst_91 = arith.constant 0.000000e+00 : f32
      %150 = vector.broadcast %cst_91 : f32 to vector<64x4xf32>
      %c0_92 = arith.constant 0 : index
      %c0_93 = arith.constant 0 : index
      %151 = vector.load %arg11[%c0_92, %c0_93] : memref<64x4xf32, #tpu.memory_space<vmem>>, vector<64x4xf32>
      tpu.vector_store %arg11[%c0_92, %c0_93], %150 {strides = array<i32>} : memref<64x4xf32, #tpu.memory_space<vmem>>, vector<64x4xf32>,
      %cst_94 = arith.constant 0.000000e+00 : f32
      %152 = vector.broadcast %cst_94 : f32 to vector<64x64xf32>
      %c0_95 = arith.constant 0 : index
      %c0_96 = arith.constant 0 : index
      %153 = vector.load %arg12[%c0_95, %c0_96] : memref<64x64xf32, #tpu.memory_space<vmem>>, vector<64x64xf32>
      tpu.vector_store %arg12[%c0_95, %c0_96], %152 {strides = array<i32>} : memref<64x64xf32, #tpu.memory_space<vmem>>, vector<64x64xf32>,
    } else {
    }
    %c0 = arith.constant 0 : index
    %c0_1 = arith.constant 0 : index
    %3 = vector.load %arg2[%c0, %c0_1] : memref<64x128xbf16, #tpu.memory_space<vmem>>, vector<64x128xbf16>
    %4 = arith.extf %3 : vector<64x128xbf16> to vector<64x128xf32>
    %c0_2 = arith.constant 0 : index
    %c0_3 = arith.constant 0 : index
    %5 = vector.load %arg5[%c0_2, %c0_3] : memref<128x64xbf16, #tpu.memory_space<vmem>>, vector<128x16xbf16>
    %c0_4 = arith.constant 0 : index
    %c0_5 = arith.constant 0 : index
    %6 = vector.load %arg3[%c0_4, %c0_5] : memref<64x4xf32, #tpu.memory_space<vmem>>, vector<64x1xf32>
    %c0_6 = arith.constant 0 : index
    %c0_7 = arith.constant 0 : index
    %7 = vector.load %arg4[%c0_6, %c0_7] : memref<4x128xf32, #tpu.memory_space<vmem>>, vector<1x128xf32>
    %8 = vector.broadcast %6 : vector<64x1xf32> to vector<64x128xf32>
    %9 = vector.broadcast %7 : vector<1x128xf32> to vector<64x128xf32>
    %10 = arith.addf %8, %9 : vector<64x128xf32>
    %cst = arith.constant 0.000000e+00 : f32
    %11 = vector.broadcast %cst : f32 to vector<64x128xf32>
    %12 = arith.cmpf ogt, %10, %11 : vector<64x128xf32>
    %cst_8 = arith.constant 2.000000e-01 : f32
    %13 = vector.broadcast %cst_8 : f32 to vector<64x128xf32>
    %14 = arith.mulf %13, %10 : vector<64x128xf32>
    %15 = arith.select %12, %10, %14 : vector<64x128xi1>, vector<64x128xf32>
    %16 = arith.addf %15, %4 : vector<64x128xf32>
    %c0_9 = arith.constant 0 : index
    %c0_10 = arith.constant 0 : index
    %17 = vector.load %arg10[%c0_9, %c0_10] : memref<64x4xf32, #tpu.memory_space<vmem>>, vector<64x1xf32>
    %cst_11 = arith.constant dense<0xFF800000> : vector<64xf32>
    %18 = vector.multi_reduction <maximumf>, %16, %cst_11 [1] : vector<64x128xf32> to vector<64xf32>
    %19 = vector.shape_cast %18 : vector<64xf32> to vector<64x1xf32>
    %20 = arith.maximumf %17, %19 : vector<64x1xf32>
    %21 = arith.subf %17, %20 : vector<64x1xf32>
    %22 = math.exp %21 : vector<64x1xf32>
    %23 = vector.broadcast %20 : vector<64x1xf32> to vector<64x128xf32>
    %24 = arith.subf %16, %23 : vector<64x128xf32>
    %25 = math.exp %24 : vector<64x128xf32>
    %c0_12 = arith.constant 0 : index
    %c0_13 = arith.constant 0 : index
    %26 = vector.load %arg11[%c0_12, %c0_13] : memref<64x4xf32, #tpu.memory_space<vmem>>, vector<64x1xf32>
    %27 = arith.mulf %22, %26 : vector<64x1xf32>
    %cst_14 = arith.constant dense<0.000000e+00> : vector<64xf32>
    %28 = vector.multi_reduction <add>, %25, %cst_14 [1] : vector<64x128xf32> to vector<64xf32>
    %29 = vector.shape_cast %28 : vector<64xf32> to vector<64x1xf32>
    %30 = arith.addf %27, %29 : vector<64x1xf32>
    %c0_15 = arith.constant 0 : index
    %c0_16 = arith.constant 0 : index
    %31 = vector.load %arg11[%c0_15, %c0_16] : memref<64x4xf32, #tpu.memory_space<vmem>>, vector<64x1xf32>
    tpu.vector_store %arg11[%c0_15, %c0_16], %30 {strides = array<i32>} : memref<64x4xf32, #tpu.memory_space<vmem>>, vector<64x1xf32>,
    %c0_17 = arith.constant 0 : index
    %c0_18 = arith.constant 0 : index
    %32 = vector.load %arg12[%c0_17, %c0_18] : memref<64x64xf32, #tpu.memory_space<vmem>>, vector<64x16xf32>
    %33 = vector.broadcast %22 : vector<64x1xf32> to vector<64x16xf32>
    %34 = arith.mulf %33, %32 : vector<64x16xf32>
    %35 = arith.truncf %25 : vector<64x128xf32> to vector<64x128xbf16>
    %cst_19 = arith.constant dense<0.000000e+00> : vector<64x16xf32>
    %36 = tpu.matmul %35, %5, %cst_19 {dimension_numbers = #tpu.dot_dimension_numbers<[1], [0], [0], [1], [0, 0, 1, 1], [], []>} : vector<64x128xbf16>, vector<128x16xbf16>, vector<64x16xf32> -> vector<64x16xf32>
    %37 = arith.addf %34, %36 : vector<64x16xf32>
    %c0_20 = arith.constant 0 : index
    %c0_21 = arith.constant 0 : index
    %38 = vector.load %arg12[%c0_20, %c0_21] : memref<64x64xf32, #tpu.memory_space<vmem>>, vector<64x16xf32>
    tpu.vector_store %arg12[%c0_20, %c0_21], %37 {strides = array<i32>} : memref<64x64xf32, #tpu.memory_space<vmem>>, vector<64x16xf32>,
    %c0_22 = arith.constant 0 : index
    %c0_23 = arith.constant 0 : index
    %39 = vector.load %arg10[%c0_22, %c0_23] : memref<64x4xf32, #tpu.memory_space<vmem>>, vector<64x1xf32>
    tpu.vector_store %arg10[%c0_22, %c0_23], %20 {strides = array<i32>} : memref<64x4xf32, #tpu.memory_space<vmem>>, vector<64x1xf32>,
    %c0_24 = arith.constant 0 : index
    %c16 = arith.constant 16 : index
    %40 = vector.load %arg5[%c0_24, %c16] : memref<128x64xbf16, #tpu.memory_space<vmem>>, vector<128x16xbf16>
    %c0_25 = arith.constant 0 : index
    %c1 = arith.constant 1 : index
    %41 = vector.load %arg3[%c0_25, %c1] : memref<64x4xf32, #tpu.memory_space<vmem>>, vector<64x1xf32>
    %c1_26 = arith.constant 1 : index
    %c0_27 = arith.constant 0 : index
    %42 = vector.load %arg4[%c1_26, %c0_27] : memref<4x128xf32, #tpu.memory_space<vmem>>, vector<1x128xf32>
    %43 = vector.broadcast %41 : vector<64x1xf32> to vector<64x128xf32>
    %44 = vector.broadcast %42 : vector<1x128xf32> to vector<64x128xf32>
    %45 = arith.addf %43, %44 : vector<64x128xf32>
    %cst_28 = arith.constant 0.000000e+00 : f32
    %46 = vector.broadcast %cst_28 : f32 to vector<64x128xf32>
    %47 = arith.cmpf ogt, %45, %46 : vector<64x128xf32>
    %cst_29 = arith.constant 2.000000e-01 : f32
    %48 = vector.broadcast %cst_29 : f32 to vector<64x128xf32>
    %49 = arith.mulf %48, %45 : vector<64x128xf32>
    %50 = arith.select %47, %45, %49 : vector<64x128xi1>, vector<64x128xf32>
    %51 = arith.addf %50, %4 : vector<64x128xf32>
    %c0_30 = arith.constant 0 : index
    %c1_31 = arith.constant 1 : index
    %52 = vector.load %arg10[%c0_30, %c1_31] : memref<64x4xf32, #tpu.memory_space<vmem>>, vector<64x1xf32>
    %cst_32 = arith.constant dense<0xFF800000> : vector<64xf32>
    %53 = vector.multi_reduction <maximumf>, %51, %cst_32 [1] : vector<64x128xf32> to vector<64xf32>
    %54 = vector.shape_cast %53 : vector<64xf32> to vector<64x1xf32>
    %55 = arith.maximumf %52, %54 : vector<64x1xf32>
    %56 = arith.subf %52, %55 : vector<64x1xf32>
    %57 = math.exp %56 : vector<64x1xf32>
    %58 = vector.broadcast %55 : vector<64x1xf32> to vector<64x128xf32>
    %59 = arith.subf %51, %58 : vector<64x128xf32>
    %60 = math.exp %59 : vector<64x128xf32>
    %c0_33 = arith.constant 0 : index
    %c1_34 = arith.constant 1 : index
    %61 = vector.load %arg11[%c0_33, %c1_34] : memref<64x4xf32, #tpu.memory_space<vmem>>, vector<64x1xf32>
    %62 = arith.mulf %57, %61 : vector<64x1xf32>
    %cst_35 = arith.constant dense<0.000000e+00> : vector<64xf32>
    %63 = vector.multi_reduction <add>, %60, %cst_35 [1] : vector<64x128xf32> to vector<64xf32>
    %64 = vector.shape_cast %63 : vector<64xf32> to vector<64x1xf32>
    %65 = arith.addf %62, %64 : vector<64x1xf32>
    %c0_36 = arith.constant 0 : index
    %c1_37 = arith.constant 1 : index
    %66 = vector.load %arg11[%c0_36, %c1_37] : memref<64x4xf32, #tpu.memory_space<vmem>>, vector<64x1xf32>
    tpu.vector_store %arg11[%c0_36, %c1_37], %65 {strides = array<i32>} : memref<64x4xf32, #tpu.memory_space<vmem>>, vector<64x1xf32>,
    %c0_38 = arith.constant 0 : index
    %c16_39 = arith.constant 16 : index
    %67 = vector.load %arg12[%c0_38, %c16_39] : memref<64x64xf32, #tpu.memory_space<vmem>>, vector<64x16xf32>
    %68 = vector.broadcast %57 : vector<64x1xf32> to vector<64x16xf32>
    %69 = arith.mulf %68, %67 : vector<64x16xf32>
    %70 = arith.truncf %60 : vector<64x128xf32> to vector<64x128xbf16>
    %cst_40 = arith.constant dense<0.000000e+00> : vector<64x16xf32>
    %71 = tpu.matmul %70, %40, %cst_40 {dimension_numbers = #tpu.dot_dimension_numbers<[1], [0], [0], [1], [0, 0, 1, 1], [], []>} : vector<64x128xbf16>, vector<128x16xbf16>, vector<64x16xf32> -> vector<64x16xf32>
    %72 = arith.addf %69, %71 : vector<64x16xf32>
    %c0_41 = arith.constant 0 : index
    %c16_42 = arith.constant 16 : index
    %73 = vector.load %arg12[%c0_41, %c16_42] : memref<64x64xf32, #tpu.memory_space<vmem>>, vector<64x16xf32>
    tpu.vector_store %arg12[%c0_41, %c16_42], %72 {strides = array<i32>} : memref<64x64xf32, #tpu.memory_space<vmem>>, vector<64x16xf32>,
    %c0_43 = arith.constant 0 : index
    %c1_44 = arith.constant 1 : index
    %74 = vector.load %arg10[%c0_43, %c1_44] : memref<64x4xf32, #tpu.memory_space<vmem>>, vector<64x1xf32>
    tpu.vector_store %arg10[%c0_43, %c1_44], %55 {strides = array<i32>} : memref<64x4xf32, #tpu.memory_space<vmem>>, vector<64x1xf32>,
    %c0_45 = arith.constant 0 : index
    %c32 = arith.constant 32 : index
    %75 = vector.load %arg5[%c0_45, %c32] : memref<128x64xbf16, #tpu.memory_space<vmem>>, vector<128x16xbf16>
    %c0_46 = arith.constant 0 : index
    %c2 = arith.constant 2 : index
    %76 = vector.load %arg3[%c0_46, %c2] : memref<64x4xf32, #tpu.memory_space<vmem>>, vector<64x1xf32>
    %c2_47 = arith.constant 2 : index
    %c0_48 = arith.constant 0 : index
    %77 = vector.load %arg4[%c2_47, %c0_48] : memref<4x128xf32, #tpu.memory_space<vmem>>, vector<1x128xf32>
    %78 = vector.broadcast %76 : vector<64x1xf32> to vector<64x128xf32>
    %79 = vector.broadcast %77 : vector<1x128xf32> to vector<64x128xf32>
    %80 = arith.addf %78, %79 : vector<64x128xf32>
    %cst_49 = arith.constant 0.000000e+00 : f32
    %81 = vector.broadcast %cst_49 : f32 to vector<64x128xf32>
    %82 = arith.cmpf ogt, %80, %81 : vector<64x128xf32>
    %cst_50 = arith.constant 2.000000e-01 : f32
    %83 = vector.broadcast %cst_50 : f32 to vector<64x128xf32>
    %84 = arith.mulf %83, %80 : vector<64x128xf32>
    %85 = arith.select %82, %80, %84 : vector<64x128xi1>, vector<64x128xf32>
    %86 = arith.addf %85, %4 : vector<64x128xf32>
    %c0_51 = arith.constant 0 : index
    %c2_52 = arith.constant 2 : index
    %87 = vector.load %arg10[%c0_51, %c2_52] : memref<64x4xf32, #tpu.memory_space<vmem>>, vector<64x1xf32>
    %cst_53 = arith.constant dense<0xFF800000> : vector<64xf32>
    %88 = vector.multi_reduction <maximumf>, %86, %cst_53 [1] : vector<64x128xf32> to vector<64xf32>
    %89 = vector.shape_cast %88 : vector<64xf32> to vector<64x1xf32>
    %90 = arith.maximumf %87, %89 : vector<64x1xf32>
    %91 = arith.subf %87, %90 : vector<64x1xf32>
    %92 = math.exp %91 : vector<64x1xf32>
    %93 = vector.broadcast %90 : vector<64x1xf32> to vector<64x128xf32>
    %94 = arith.subf %86, %93 : vector<64x128xf32>
    %95 = math.exp %94 : vector<64x128xf32>
    %c0_54 = arith.constant 0 : index
    %c2_55 = arith.constant 2 : index
    %96 = vector.load %arg11[%c0_54, %c2_55] : memref<64x4xf32, #tpu.memory_space<vmem>>, vector<64x1xf32>
    %97 = arith.mulf %92, %96 : vector<64x1xf32>
    %cst_56 = arith.constant dense<0.000000e+00> : vector<64xf32>
    %98 = vector.multi_reduction <add>, %95, %cst_56 [1] : vector<64x128xf32> to vector<64xf32>
    %99 = vector.shape_cast %98 : vector<64xf32> to vector<64x1xf32>
    %100 = arith.addf %97, %99 : vector<64x1xf32>
    %c0_57 = arith.constant 0 : index
    %c2_58 = arith.constant 2 : index
    %101 = vector.load %arg11[%c0_57, %c2_58] : memref<64x4xf32, #tpu.memory_space<vmem>>, vector<64x1xf32>
    tpu.vector_store %arg11[%c0_57, %c2_58], %100 {strides = array<i32>} : memref<64x4xf32, #tpu.memory_space<vmem>>, vector<64x1xf32>,
    %c0_59 = arith.constant 0 : index
    %c32_60 = arith.constant 32 : index
    %102 = vector.load %arg12[%c0_59, %c32_60] : memref<64x64xf32, #tpu.memory_space<vmem>>, vector<64x16xf32>
    %103 = vector.broadcast %92 : vector<64x1xf32> to vector<64x16xf32>
    %104 = arith.mulf %103, %102 : vector<64x16xf32>
    %105 = arith.truncf %95 : vector<64x128xf32> to vector<64x128xbf16>
    %cst_61 = arith.constant dense<0.000000e+00> : vector<64x16xf32>
    %106 = tpu.matmul %105, %75, %cst_61 {dimension_numbers = #tpu.dot_dimension_numbers<[1], [0], [0], [1], [0, 0, 1, 1], [], []>} : vector<64x128xbf16>, vector<128x16xbf16>, vector<64x16xf32> -> vector<64x16xf32>
    %107 = arith.addf %104, %106 : vector<64x16xf32>
    %c0_62 = arith.constant 0 : index
    %c32_63 = arith.constant 32 : index
    %108 = vector.load %arg12[%c0_62, %c32_63] : memref<64x64xf32, #tpu.memory_space<vmem>>, vector<64x16xf32>
    tpu.vector_store %arg12[%c0_62, %c32_63], %107 {strides = array<i32>} : memref<64x64xf32, #tpu.memory_space<vmem>>, vector<64x16xf32>,
    %c0_64 = arith.constant 0 : index
    %c2_65 = arith.constant 2 : index
    %109 = vector.load %arg10[%c0_64, %c2_65] : memref<64x4xf32, #tpu.memory_space<vmem>>, vector<64x1xf32>
    tpu.vector_store %arg10[%c0_64, %c2_65], %90 {strides = array<i32>} : memref<64x4xf32, #tpu.memory_space<vmem>>, vector<64x1xf32>,
    %c0_66 = arith.constant 0 : index
    %c48 = arith.constant 48 : index
    %110 = vector.load %arg5[%c0_66, %c48] : memref<128x64xbf16, #tpu.memory_space<vmem>>, vector<128x16xbf16>
    %c0_67 = arith.constant 0 : index
    %c3 = arith.constant 3 : index
    %111 = vector.load %arg3[%c0_67, %c3] : memref<64x4xf32, #tpu.memory_space<vmem>>, vector<64x1xf32>
    %c3_68 = arith.constant 3 : index
    %c0_69 = arith.constant 0 : index
    %112 = vector.load %arg4[%c3_68, %c0_69] : memref<4x128xf32, #tpu.memory_space<vmem>>, vector<1x128xf32>
    %113 = vector.broadcast %111 : vector<64x1xf32> to vector<64x128xf32>
    %114 = vector.broadcast %112 : vector<1x128xf32> to vector<64x128xf32>
    %115 = arith.addf %113, %114 : vector<64x128xf32>
    %cst_70 = arith.constant 0.000000e+00 : f32
    %116 = vector.broadcast %cst_70 : f32 to vector<64x128xf32>
    %117 = arith.cmpf ogt, %115, %116 : vector<64x128xf32>
    %cst_71 = arith.constant 2.000000e-01 : f32
    %118 = vector.broadcast %cst_71 : f32 to vector<64x128xf32>
    %119 = arith.mulf %118, %115 : vector<64x128xf32>
    %120 = arith.select %117, %115, %119 : vector<64x128xi1>, vector<64x128xf32>
    %121 = arith.addf %120, %4 : vector<64x128xf32>
    %c0_72 = arith.constant 0 : index
    %c3_73 = arith.constant 3 : index
    %122 = vector.load %arg10[%c0_72, %c3_73] : memref<64x4xf32, #tpu.memory_space<vmem>>, vector<64x1xf32>
    %cst_74 = arith.constant dense<0xFF800000> : vector<64xf32>
    %123 = vector.multi_reduction <maximumf>, %121, %cst_74 [1] : vector<64x128xf32> to vector<64xf32>
    %124 = vector.shape_cast %123 : vector<64xf32> to vector<64x1xf32>
    %125 = arith.maximumf %122, %124 : vector<64x1xf32>
    %126 = arith.subf %122, %125 : vector<64x1xf32>
    %127 = math.exp %126 : vector<64x1xf32>
    %128 = vector.broadcast %125 : vector<64x1xf32> to vector<64x128xf32>
    %129 = arith.subf %121, %128 : vector<64x128xf32>
    %130 = math.exp %129 : vector<64x128xf32>
    %c0_75 = arith.constant 0 : index
    %c3_76 = arith.constant 3 : index
    %131 = vector.load %arg11[%c0_75, %c3_76] : memref<64x4xf32, #tpu.memory_space<vmem>>, vector<64x1xf32>
    %132 = arith.mulf %127, %131 : vector<64x1xf32>
    %cst_77 = arith.constant dense<0.000000e+00> : vector<64xf32>
    %133 = vector.multi_reduction <add>, %130, %cst_77 [1] : vector<64x128xf32> to vector<64xf32>
    %134 = vector.shape_cast %133 : vector<64xf32> to vector<64x1xf32>
    %135 = arith.addf %132, %134 : vector<64x1xf32>
    %c0_78 = arith.constant 0 : index
    %c3_79 = arith.constant 3 : index
    %136 = vector.load %arg11[%c0_78, %c3_79] : memref<64x4xf32, #tpu.memory_space<vmem>>, vector<64x1xf32>
    tpu.vector_store %arg11[%c0_78, %c3_79], %135 {strides = array<i32>} : memref<64x4xf32, #tpu.memory_space<vmem>>, vector<64x1xf32>,
    %c0_80 = arith.constant 0 : index
    %c48_81 = arith.constant 48 : index
    %137 = vector.load %arg12[%c0_80, %c48_81] : memref<64x64xf32, #tpu.memory_space<vmem>>, vector<64x16xf32>
    %138 = vector.broadcast %127 : vector<64x1xf32> to vector<64x16xf32>
    %139 = arith.mulf %138, %137 : vector<64x16xf32>
    %140 = arith.truncf %130 : vector<64x128xf32> to vector<64x128xbf16>
    %cst_82 = arith.constant dense<0.000000e+00> : vector<64x16xf32>
    %141 = tpu.matmul %140, %110, %cst_82 {dimension_numbers = #tpu.dot_dimension_numbers<[1], [0], [0], [1], [0, 0, 1, 1], [], []>} : vector<64x128xbf16>, vector<128x16xbf16>, vector<64x16xf32> -> vector<64x16xf32>
    %142 = arith.addf %139, %141 : vector<64x16xf32>
    %c0_83 = arith.constant 0 : index
    %c48_84 = arith.constant 48 : index
    %143 = vector.load %arg12[%c0_83, %c48_84] : memref<64x64xf32, #tpu.memory_space<vmem>>, vector<64x16xf32>
    tpu.vector_store %arg12[%c0_83, %c48_84], %142 {strides = array<i32>} : memref<64x64xf32, #tpu.memory_space<vmem>>, vector<64x16xf32>,
    %c0_85 = arith.constant 0 : index
    %c3_86 = arith.constant 3 : index
    %144 = vector.load %arg10[%c0_85, %c3_86] : memref<64x4xf32, #tpu.memory_space<vmem>>, vector<64x1xf32>
    tpu.vector_store %arg10[%c0_85, %c3_86], %125 {strides = array<i32>} : memref<64x4xf32, #tpu.memory_space<vmem>>, vector<64x1xf32>,
    %c1_i32 = arith.constant 1 : i32
    %145 = arith.cmpi eq, %arg1, %c1_i32 : i32
    %146 = arith.extui %145 : i1 to i32
    %c0_i32_87 = arith.constant 0 : i32
    %147 = arith.cmpi ne, %146, %c0_i32_87 : i32
    scf.if %147 {
      %c0_88 = arith.constant 0 : index
      %c0_89 = arith.constant 0 : index
      %148 = vector.load %arg11[%c0_88, %c0_89] : memref<64x4xf32, #tpu.memory_space<vmem>>, vector<64x1xf32>
      %149 = tpu.reciprocal %148 {approx = true} : vector<64x1xf32> -> vector<64x1xf32>
      %c0_90 = arith.constant 0 : index
      %c0_91 = arith.constant 0 : index
      %150 = vector.load %arg12[%c0_90, %c0_91] : memref<64x64xf32, #tpu.memory_space<vmem>>, vector<64x16xf32>
      %151 = vector.broadcast %149 : vector<64x1xf32> to vector<64x16xf32>
      %152 = arith.mulf %150, %151 : vector<64x16xf32>
      %c0_92 = arith.constant 0 : index
      %c0_93 = arith.constant 0 : index
      %153 = vector.load %arg12[%c0_92, %c0_93] : memref<64x64xf32, #tpu.memory_space<vmem>>, vector<64x16xf32>
      tpu.vector_store %arg12[%c0_92, %c0_93], %152 {strides = array<i32>} : memref<64x64xf32, #tpu.memory_space<vmem>>, vector<64x16xf32>,
      %c0_94 = arith.constant 0 : index
      %c1_95 = arith.constant 1 : index
      %154 = vector.load %arg11[%c0_94, %c1_95] : memref<64x4xf32, #tpu.memory_space<vmem>>, vector<64x1xf32>
      %155 = tpu.reciprocal %154 {approx = true} : vector<64x1xf32> -> vector<64x1xf32>
      %c0_96 = arith.constant 0 : index
      %c16_97 = arith.constant 16 : index
      %156 = vector.load %arg12[%c0_96, %c16_97] : memref<64x64xf32, #tpu.memory_space<vmem>>, vector<64x16xf32>
      %157 = vector.broadcast %155 : vector<64x1xf32> to vector<64x16xf32>
      %158 = arith.mulf %156, %157 : vector<64x16xf32>
      %c0_98 = arith.constant 0 : index
      %c16_99 = arith.constant 16 : index
      %159 = vector.load %arg12[%c0_98, %c16_99] : memref<64x64xf32, #tpu.memory_space<vmem>>, vector<64x16xf32>
      tpu.vector_store %arg12[%c0_98, %c16_99], %158 {strides = array<i32>} : memref<64x64xf32, #tpu.memory_space<vmem>>, vector<64x16xf32>,
      %c0_100 = arith.constant 0 : index
      %c2_101 = arith.constant 2 : index
      %160 = vector.load %arg11[%c0_100, %c2_101] : memref<64x4xf32, #tpu.memory_space<vmem>>, vector<64x1xf32>
      %161 = tpu.reciprocal %160 {approx = true} : vector<64x1xf32> -> vector<64x1xf32>
      %c0_102 = arith.constant 0 : index
      %c32_103 = arith.constant 32 : index
      %162 = vector.load %arg12[%c0_102, %c32_103] : memref<64x64xf32, #tpu.memory_space<vmem>>, vector<64x16xf32>
      %163 = vector.broadcast %161 : vector<64x1xf32> to vector<64x16xf32>
      %164 = arith.mulf %162, %163 : vector<64x16xf32>
      %c0_104 = arith.constant 0 : index
      %c32_105 = arith.constant 32 : index
      %165 = vector.load %arg12[%c0_104, %c32_105] : memref<64x64xf32, #tpu.memory_space<vmem>>, vector<64x16xf32>
      tpu.vector_store %arg12[%c0_104, %c32_105], %164 {strides = array<i32>} : memref<64x64xf32, #tpu.memory_space<vmem>>, vector<64x16xf32>,
      %c0_106 = arith.constant 0 : index
      %c3_107 = arith.constant 3 : index
      %166 = vector.load %arg11[%c0_106, %c3_107] : memref<64x4xf32, #tpu.memory_space<vmem>>, vector<64x1xf32>
      %167 = tpu.reciprocal %166 {approx = true} : vector<64x1xf32> -> vector<64x1xf32>
      %c0_108 = arith.constant 0 : index
      %c48_109 = arith.constant 48 : index
      %168 = vector.load %arg12[%c0_108, %c48_109] : memref<64x64xf32, #tpu.memory_space<vmem>>, vector<64x16xf32>
      %169 = vector.broadcast %167 : vector<64x1xf32> to vector<64x16xf32>
      %170 = arith.mulf %168, %169 : vector<64x16xf32>
      %c0_110 = arith.constant 0 : index
      %c48_111 = arith.constant 48 : index
      %171 = vector.load %arg12[%c0_110, %c48_111] : memref<64x64xf32, #tpu.memory_space<vmem>>, vector<64x16xf32>
      tpu.vector_store %arg12[%c0_110, %c48_111], %170 {strides = array<i32>} : memref<64x64xf32, #tpu.memory_space<vmem>>, vector<64x16xf32>,
      %c0_112 = arith.constant 0 : index
      %c0_113 = arith.constant 0 : index
      %172 = vector.load %arg12[%c0_112, %c0_113] : memref<64x64xf32, #tpu.memory_space<vmem>>, vector<64x64xf32>
      %c0_114 = arith.constant 0 : index
      %c0_115 = arith.constant 0 : index
      %173 = vector.load %arg6[%c0_114, %c0_115] : memref<1x64xf32, #tpu.memory_space<vmem>>, vector<1x64xf32>
      %174 = vector.broadcast %173 : vector<1x64xf32> to vector<64x64xf32>
      %175 = arith.addf %172, %174 : vector<64x64xf32>
      %c0_116 = arith.constant 0 : index
      %c0_117 = arith.constant 0 : index
      %176 = vector.load %arg7[%c0_116, %c0_117] : memref<1x64xf32, #tpu.memory_space<vmem>>, vector<1x64xf32>
      %c0_118 = arith.constant 0 : index
      %c0_119 = arith.constant 0 : index
      %177 = vector.load %arg8[%c0_118, %c0_119] : memref<1x64xf32, #tpu.memory_space<vmem>>, vector<1x64xf32>
      %178 = tpu.iota {dimensions = array<i32: 1>} : vector<1x64xi32>
      %c0_i32_120 = arith.constant 0 : i32
      %179 = vector.broadcast %c0_i32_120 : i32 to vector<1x64xi32>
      %180 = arith.cmpi sgt, %178, %179 : vector<1x64xi32>
      %181 = vector.extract_strided_slice %175 {offsets = [0, 0], sizes = [64, 1], strides = [1, 1]} : vector<64x64xf32> to vector<64x1xf32>
      %cst_121 = arith.constant 1.000000e+00 : f32
      %182 = vector.broadcast %cst_121 : f32 to vector<64x1xf32>
      %183 = arith.divf %181, %182 : vector<64x1xf32>
      %cst_122 = arith.constant 1.00000012 : f32
      %184 = vector.broadcast %cst_122 : f32 to vector<64x1xf32>
      %185 = arith.maximumf %183, %184 : vector<64x1xf32>
      %cst_123 = arith.constant 0.000000e+00 : f32
      %186 = vector.shape_cast %180 : vector<1x64xi1> to vector<1x64xi1>
      %187 = vector.broadcast %186 : vector<1x64xi1> to vector<64x64xi1>
      %188 = vector.broadcast %cst_123 : f32 to vector<64x64xf32>
      %189 = arith.select %187, %175, %188 : vector<64x64xi1>, vector<64x64xf32>
      %190 = arith.mulf %189, %189 : vector<64x64xf32>
      %cst_124 = arith.constant dense<0.000000e+00> : vector<64xf32>
      %191 = vector.multi_reduction <add>, %190, %cst_124 [1] : vector<64x64xf32> to vector<64xf32>
      %192 = vector.shape_cast %191 : vector<64xf32> to vector<64x1xf32>
      %cst_125 = arith.constant 1.000000e-15 : f32
      %193 = vector.broadcast %cst_125 : f32 to vector<64x1xf32>
      %194 = arith.maximumf %192, %193 : vector<64x1xf32>
      %cst_126 = arith.constant 1.000000e+00 : f32
      %195 = vector.broadcast %cst_126 : f32 to vector<64x1xf32>
      %196 = arith.divf %195, %185 : vector<64x1xf32>
      %197 = arith.mulf %196, %196 : vector<64x1xf32>
      %cst_127 = arith.constant 1.000000e+00 : f32
      %198 = vector.broadcast %cst_127 : f32 to vector<64x1xf32>
      %199 = arith.subf %198, %197 : vector<64x1xf32>
      %cst_128 = arith.constant 0.000000e+00 : f32
      %200 = vector.broadcast %cst_128 : f32 to vector<64x1xf32>
      %201 = arith.maximumf %199, %200 : vector<64x1xf32>
      %202 = math.sqrt %201 : vector<64x1xf32>
      %cst_129 = arith.constant 1.000000e+00 : f32
      %203 = vector.broadcast %cst_129 : f32 to vector<64x1xf32>
      %204 = arith.addf %203, %202 : vector<64x1xf32>
      %205 = arith.mulf %185, %204 : vector<64x1xf32>
      %206 = math.log %205 : vector<64x1xf32>
      %cst_130 = arith.constant 1.000000e+00 : f32
      %207 = vector.broadcast %cst_130 : f32 to vector<64x1xf32>
      %208 = arith.mulf %207, %206 : vector<64x1xf32>
      %209 = math.rsqrt %194 : vector<64x1xf32>
      %210 = arith.mulf %208, %209 : vector<64x1xf32>
      %211 = vector.broadcast %210 : vector<64x1xf32> to vector<64x64xf32>
      %212 = arith.mulf %211, %189 : vector<64x64xf32>
      %cst_131 = arith.constant 0.000000e+00 : f32
      %213 = vector.shape_cast %180 : vector<1x64xi1> to vector<1x64xi1>
      %214 = vector.broadcast %213 : vector<1x64xi1> to vector<64x64xi1>
      %215 = vector.broadcast %cst_131 : f32 to vector<64x64xf32>
      %216 = arith.select %214, %212, %215 : vector<64x64xi1>, vector<64x64xf32>
      %cst_132 = arith.constant dense<0.000000e+00> : vector<64xf32>
      %217 = vector.multi_reduction <add>, %216, %cst_132 [1] : vector<64x64xf32> to vector<64xf32>
      %218 = vector.shape_cast %217 : vector<64xf32> to vector<64x1xf32>
      %cst_133 = arith.constant 0.0158730168 : f32
      %219 = vector.broadcast %cst_133 : f32 to vector<64x1xf32>
      %220 = arith.mulf %218, %219 : vector<64x1xf32>
      %221 = vector.broadcast %220 : vector<64x1xf32> to vector<64x64xf32>
      %222 = arith.subf %216, %221 : vector<64x64xf32>
      %cst_134 = arith.constant 0.000000e+00 : f32
      %223 = vector.shape_cast %180 : vector<1x64xi1> to vector<1x64xi1>
      %224 = vector.broadcast %223 : vector<1x64xi1> to vector<64x64xi1>
      %225 = vector.broadcast %cst_134 : f32 to vector<64x64xf32>
      %226 = arith.select %224, %222, %225 : vector<64x64xi1>, vector<64x64xf32>
      %227 = arith.mulf %226, %226 : vector<64x64xf32>
      %cst_135 = arith.constant dense<0.000000e+00> : vector<64xf32>
      %228 = vector.multi_reduction <add>, %227, %cst_135 [1] : vector<64x64xf32> to vector<64xf32>
      %229 = vector.shape_cast %228 : vector<64xf32> to vector<64x1xf32>
      %cst_136 = arith.constant 0.0158730168 : f32
      %230 = vector.broadcast %cst_136 : f32 to vector<64x1xf32>
      %231 = arith.mulf %229, %230 : vector<64x1xf32>
      %cst_137 = arith.constant 9.99999974E-6 : f32
      %232 = vector.broadcast %cst_137 : f32 to vector<64x1xf32>
      %233 = arith.addf %231, %232 : vector<64x1xf32>
      %234 = math.rsqrt %233 : vector<64x1xf32>
      %235 = vector.broadcast %234 : vector<64x1xf32> to vector<64x64xf32>
      %236 = arith.mulf %226, %235 : vector<64x64xf32>
      %237 = vector.broadcast %176 : vector<1x64xf32> to vector<64x64xf32>
      %238 = arith.mulf %236, %237 : vector<64x64xf32>
      %239 = vector.broadcast %177 : vector<1x64xf32> to vector<64x64xf32>
      %240 = arith.addf %238, %239 : vector<64x64xf32>
      %241 = vector.shape_cast %180 : vector<1x64xi1> to vector<1x64xi1>
      %242 = vector.broadcast %241 : vector<1x64xi1> to vector<64x64xi1>
      %243 = arith.select %242, %240, %212 : vector<64x64xi1>, vector<64x64xf32>
      %cst_138 = arith.constant 0.000000e+00 : f32
      %244 = vector.shape_cast %180 : vector<1x64xi1> to vector<1x64xi1>
      %245 = vector.broadcast %244 : vector<1x64xi1> to vector<64x64xi1>
      %246 = vector.broadcast %cst_138 : f32 to vector<64x64xf32>
      %247 = arith.select %245, %243, %246 : vector<64x64xi1>, vector<64x64xf32>
      %248 = arith.mulf %247, %247 : vector<64x64xf32>
      %cst_139 = arith.constant dense<0.000000e+00> : vector<64xf32>
      %249 = vector.multi_reduction <add>, %248, %cst_139 [1] : vector<64x64xf32> to vector<64xf32>
      %250 = vector.shape_cast %249 : vector<64xf32> to vector<64x1xf32>
      %cst_140 = arith.constant 1.000000e-15 : f32
      %251 = vector.broadcast %cst_140 : f32 to vector<64x1xf32>
      %252 = arith.maximumf %250, %251 : vector<64x1xf32>
      %253 = math.sqrt %252 : vector<64x1xf32>
      %cst_141 = arith.constant 1.000000e+00 : f32
      %254 = vector.broadcast %cst_141 : f32 to vector<64x1xf32>
      %255 = arith.divf %253, %254 : vector<64x1xf32>
      %cst_142 = arith.constant 5.000000e+01 : f32
      %256 = vector.broadcast %cst_142 : f32 to vector<64x1xf32>
      %257 = arith.minimumf %255, %256 : vector<64x1xf32>
      %258 = math.exp %257 : vector<64x1xf32>
      %cst_143 = arith.constant 0.000000e+00 : f32
      %259 = vector.broadcast %cst_143 : f32 to vector<64x1xf32>
      %260 = arith.subf %259, %257 : vector<64x1xf32>
      %261 = math.exp %260 : vector<64x1xf32>
      %262 = arith.addf %258, %261 : vector<64x1xf32>
      %cst_144 = arith.constant 5.000000e-01 : f32
      %263 = vector.broadcast %cst_144 : f32 to vector<64x1xf32>
      %264 = arith.mulf %263, %262 : vector<64x1xf32>
      %265 = arith.subf %258, %261 : vector<64x1xf32>
      %cst_145 = arith.constant 5.000000e-01 : f32
      %266 = vector.broadcast %cst_145 : f32 to vector<64x1xf32>
      %267 = arith.mulf %266, %265 : vector<64x1xf32>
      %cst_146 = arith.constant 1.000000e+00 : f32
      %268 = vector.broadcast %cst_146 : f32 to vector<64x1xf32>
      %269 = arith.mulf %268, %264 : vector<64x1xf32>
      %cst_147 = arith.constant 1.000000e+00 : f32
      %270 = vector.broadcast %cst_147 : f32 to vector<64x1xf32>
      %271 = arith.mulf %270, %267 : vector<64x1xf32>
      %272 = math.rsqrt %252 : vector<64x1xf32>
      %273 = arith.mulf %271, %272 : vector<64x1xf32>
      %274 = vector.broadcast %273 : vector<64x1xf32> to vector<64x64xf32>
      %275 = arith.mulf %274, %247 : vector<64x64xf32>
      %276 = vector.shape_cast %180 : vector<1x64xi1> to vector<1x64xi1>
      %277 = vector.broadcast %276 : vector<1x64xi1> to vector<64x64xi1>
      %278 = vector.shape_cast %269 : vector<64x1xf32> to vector<64x1xf32>
      %279 = vector.broadcast %278 : vector<64x1xf32> to vector<64x64xf32>
      %280 = arith.select %277, %275, %279 : vector<64x64xi1>, vector<64x64xf32>
      %281 = vector.extract_strided_slice %280 {offsets = [0, 0], sizes = [64, 1], strides = [1, 1]} : vector<64x64xf32> to vector<64x1xf32>
      %cst_148 = arith.constant 1.000000e+00 : f32
      %282 = vector.broadcast %cst_148 : f32 to vector<64x1xf32>
      %283 = arith.divf %281, %282 : vector<64x1xf32>
      %cst_149 = arith.constant 1.00000012 : f32
      %284 = vector.broadcast %cst_149 : f32 to vector<64x1xf32>
      %285 = arith.maximumf %283, %284 : vector<64x1xf32>
      %cst_150 = arith.constant 0.000000e+00 : f32
      %286 = vector.shape_cast %180 : vector<1x64xi1> to vector<1x64xi1>
      %287 = vector.broadcast %286 : vector<1x64xi1> to vector<64x64xi1>
      %288 = vector.broadcast %cst_150 : f32 to vector<64x64xf32>
      %289 = arith.select %287, %280, %288 : vector<64x64xi1>, vector<64x64xf32>
      %290 = arith.mulf %289, %289 : vector<64x64xf32>
      %cst_151 = arith.constant dense<0.000000e+00> : vector<64xf32>
      %291 = vector.multi_reduction <add>, %290, %cst_151 [1] : vector<64x64xf32> to vector<64xf32>
      %292 = vector.shape_cast %291 : vector<64xf32> to vector<64x1xf32>
      %cst_152 = arith.constant 1.000000e-15 : f32
      %293 = vector.broadcast %cst_152 : f32 to vector<64x1xf32>
      %294 = arith.maximumf %292, %293 : vector<64x1xf32>
      %cst_153 = arith.constant 1.000000e+00 : f32
      %295 = vector.broadcast %cst_153 : f32 to vector<64x1xf32>
      %296 = arith.divf %295, %285 : vector<64x1xf32>
      %297 = arith.mulf %296, %296 : vector<64x1xf32>
      %cst_154 = arith.constant 1.000000e+00 : f32
      %298 = vector.broadcast %cst_154 : f32 to vector<64x1xf32>
      %299 = arith.subf %298, %297 : vector<64x1xf32>
      %cst_155 = arith.constant 0.000000e+00 : f32
      %300 = vector.broadcast %cst_155 : f32 to vector<64x1xf32>
      %301 = arith.maximumf %299, %300 : vector<64x1xf32>
      %302 = math.sqrt %301 : vector<64x1xf32>
      %cst_156 = arith.constant 1.000000e+00 : f32
      %303 = vector.broadcast %cst_156 : f32 to vector<64x1xf32>
      %304 = arith.addf %303, %302 : vector<64x1xf32>
      %305 = arith.mulf %285, %304 : vector<64x1xf32>
      %306 = math.log %305 : vector<64x1xf32>
      %cst_157 = arith.constant 1.000000e+00 : f32
      %307 = vector.broadcast %cst_157 : f32 to vector<64x1xf32>
      %308 = arith.mulf %307, %306 : vector<64x1xf32>
      %309 = math.rsqrt %294 : vector<64x1xf32>
      %310 = arith.mulf %308, %309 : vector<64x1xf32>
      %311 = vector.broadcast %310 : vector<64x1xf32> to vector<64x64xf32>
      %312 = arith.mulf %311, %289 : vector<64x64xf32>
      %cst_158 = arith.constant 0.000000e+00 : f32
      %313 = vector.broadcast %cst_158 : f32 to vector<64x64xf32>
      %314 = arith.maximumf %312, %313 : vector<64x64xf32>
      %cst_159 = arith.constant 0.000000e+00 : f32
      %315 = vector.shape_cast %180 : vector<1x64xi1> to vector<1x64xi1>
      %316 = vector.broadcast %315 : vector<1x64xi1> to vector<64x64xi1>
      %317 = vector.broadcast %cst_159 : f32 to vector<64x64xf32>
      %318 = arith.select %316, %314, %317 : vector<64x64xi1>, vector<64x64xf32>
      %319 = arith.mulf %318, %318 : vector<64x64xf32>
      %cst_160 = arith.constant dense<0.000000e+00> : vector<64xf32>
      %320 = vector.multi_reduction <add>, %319, %cst_160 [1] : vector<64x64xf32> to vector<64xf32>
      %321 = vector.shape_cast %320 : vector<64xf32> to vector<64x1xf32>
      %cst_161 = arith.constant 1.000000e-15 : f32
      %322 = vector.broadcast %cst_161 : f32 to vector<64x1xf32>
      %323 = arith.maximumf %321, %322 : vector<64x1xf32>
      %324 = math.sqrt %323 : vector<64x1xf32>
      %cst_162 = arith.constant 1.000000e+00 : f32
      %325 = vector.broadcast %cst_162 : f32 to vector<64x1xf32>
      %326 = arith.divf %324, %325 : vector<64x1xf32>
      %cst_163 = arith.constant 5.000000e+01 : f32
      %327 = vector.broadcast %cst_163 : f32 to vector<64x1xf32>
      %328 = arith.minimumf %326, %327 : vector<64x1xf32>
      %329 = math.exp %328 : vector<64x1xf32>
      %cst_164 = arith.constant 0.000000e+00 : f32
      %330 = vector.broadcast %cst_164 : f32 to vector<64x1xf32>
      %331 = arith.subf %330, %328 : vector<64x1xf32>
      %332 = math.exp %331 : vector<64x1xf32>
      %333 = arith.addf %329, %332 : vector<64x1xf32>
      %cst_165 = arith.constant 5.000000e-01 : f32
      %334 = vector.broadcast %cst_165 : f32 to vector<64x1xf32>
      %335 = arith.mulf %334, %333 : vector<64x1xf32>
      %336 = arith.subf %329, %332 : vector<64x1xf32>
      %cst_166 = arith.constant 5.000000e-01 : f32
      %337 = vector.broadcast %cst_166 : f32 to vector<64x1xf32>
      %338 = arith.mulf %337, %336 : vector<64x1xf32>
      %cst_167 = arith.constant 1.000000e+00 : f32
      %339 = vector.broadcast %cst_167 : f32 to vector<64x1xf32>
      %340 = arith.mulf %339, %335 : vector<64x1xf32>
      %cst_168 = arith.constant 1.000000e+00 : f32
      %341 = vector.broadcast %cst_168 : f32 to vector<64x1xf32>
      %342 = arith.mulf %341, %338 : vector<64x1xf32>
      %343 = math.rsqrt %323 : vector<64x1xf32>
      %344 = arith.mulf %342, %343 : vector<64x1xf32>
      %345 = vector.broadcast %344 : vector<64x1xf32> to vector<64x64xf32>
      %346 = arith.mulf %345, %318 : vector<64x64xf32>
      %347 = vector.shape_cast %180 : vector<1x64xi1> to vector<1x64xi1>
      %348 = vector.broadcast %347 : vector<1x64xi1> to vector<64x64xi1>
      %349 = vector.shape_cast %340 : vector<64x1xf32> to vector<64x1xf32>
      %350 = vector.broadcast %349 : vector<64x1xf32> to vector<64x64xf32>
      %351 = arith.select %348, %346, %350 : vector<64x64xi1>, vector<64x64xf32>
      %c0_169 = arith.constant 0 : index
      %c0_170 = arith.constant 0 : index
      %352 = vector.load %arg9[%c0_169, %c0_170] : memref<64x64xf32, #tpu.memory_space<vmem>>, vector<64x64xf32>
      tpu.vector_store %arg9[%c0_169, %c0_170], %351 {strides = array<i32>} : memref<64x64xf32, #tpu.memory_space<vmem>>, vector<64x64xf32>,
    } else {
    }
    return
  }
  func.func @transform_0(%arg0: i32, %arg1: i32) -> (i32, i32) {
    %c0_i32 = arith.constant 0 : i32
    return %arg0, %arg1 : i32, i32
  }
  func.func @transform_1(%arg0: i32, %arg1: i32) -> (i32, i32) {
    %c0_i32 = arith.constant 0 : i32
    %c0_i32_0 = arith.constant 0 : i32
    return %arg0, %c0_i32 : i32, i32
  }
  func.func @transform_2(%arg0: i32, %arg1: i32) -> (i32, i32) {
    %c0_i32 = arith.constant 0 : i32
    %c0_i32_0 = arith.constant 0 : i32
    return %c0_i32, %arg1 : i32, i32
  }
  func.func @transform_3(%arg0: i32, %arg1: i32) -> (i32, i32) {
    %c0_i32 = arith.constant 0 : i32
    %c0_i32_0 = arith.constant 0 : i32
    return %arg1, %c0_i32 : i32, i32
  }
  func.func @transform_4(%arg0: i32, %arg1: i32) -> (i32, i32) {
    %c0_i32 = arith.constant 0 : i32
    %c0_i32_0 = arith.constant 0 : i32
    %c0_i32_1 = arith.constant 0 : i32
    return %c0_i32, %c0_i32_0 : i32, i32
  }
  func.func @transform_5(%arg0: i32, %arg1: i32) -> (i32, i32) {
    %c0_i32 = arith.constant 0 : i32
    %c0_i32_0 = arith.constant 0 : i32
    %c0_i32_1 = arith.constant 0 : i32
    return %c0_i32, %c0_i32_0 : i32, i32
  }
  func.func @transform_6(%arg0: i32, %arg1: i32) -> (i32, i32) {
    %c0_i32 = arith.constant 0 : i32
    %c0_i32_0 = arith.constant 0 : i32
    %c0_i32_1 = arith.constant 0 : i32
    return %c0_i32, %c0_i32_0 : i32, i32
  }
  func.func @transform_7(%arg0: i32, %arg1: i32) -> (i32, i32) {
    %c0_i32 = arith.constant 0 : i32
    %c0_i32_0 = arith.constant 0 : i32
    return %arg0, %c0_i32 : i32, i32
  }
}

module attributes {stable_mosaic.version = 11 : i64} {
  func.func @hnn_proj_kernel(%arg0: i32, %arg1: memref<64x12xf32, #tpu.memory_space<vmem>>, %arg2: memref<12x16xf32, #tpu.memory_space<vmem>>, %arg3: memref<1x16xf32, #tpu.memory_space<vmem>>, %arg4: memref<1x16xf32, #tpu.memory_space<vmem>>, %arg5: memref<1x16xf32, #tpu.memory_space<vmem>>, %arg6: memref<16x72xf32, #tpu.memory_space<vmem>>, %arg7: memref<64x72xf32, #tpu.memory_space<vmem>>) attributes {dimension_semantics = [#tpu.dimension_semantics<parallel>], iteration_bounds = array<i64: 4>, scalar_prefetch = 0 : i64, scratch_operands = 0 : i64, tpu.core_type = #tpu.core_type<tc>, window_params = [{transform_indices = @transform_0, window_bounds = array<i64: 64, 12>}, {pipeline_mode = #tpu.pipeline_mode<synchronous>, transform_indices = @transform_1, window_bounds = array<i64: 12, 16>}, {pipeline_mode = #tpu.pipeline_mode<synchronous>, transform_indices = @transform_2, window_bounds = array<i64: 1, 16>}, {pipeline_mode = #tpu.pipeline_mode<synchronous>, transform_indices = @transform_3, window_bounds = array<i64: 1, 16>}, {pipeline_mode = #tpu.pipeline_mode<synchronous>, transform_indices = @transform_4, window_bounds = array<i64: 1, 16>}, {pipeline_mode = #tpu.pipeline_mode<synchronous>, transform_indices = @transform_5, window_bounds = array<i64: 16, 72>}, {transform_indices = @transform_6, window_bounds = array<i64: 64, 72>}]} {
    %c0 = arith.constant 0 : index
    %c0_0 = arith.constant 0 : index
    %0 = vector.load %arg1[%c0, %c0_0] : memref<64x12xf32, #tpu.memory_space<vmem>>, vector<64x12xf32>
    %c0_1 = arith.constant 0 : index
    %c0_2 = arith.constant 0 : index
    %1 = vector.load %arg2[%c0_1, %c0_2] : memref<12x16xf32, #tpu.memory_space<vmem>>, vector<12x16xf32>
    %c0_3 = arith.constant 0 : index
    %c0_4 = arith.constant 0 : index
    %2 = vector.load %arg3[%c0_3, %c0_4] : memref<1x16xf32, #tpu.memory_space<vmem>>, vector<1x16xf32>
    %c0_5 = arith.constant 0 : index
    %c0_6 = arith.constant 0 : index
    %3 = vector.load %arg4[%c0_5, %c0_6] : memref<1x16xf32, #tpu.memory_space<vmem>>, vector<1x16xf32>
    %c0_7 = arith.constant 0 : index
    %c0_8 = arith.constant 0 : index
    %4 = vector.load %arg5[%c0_7, %c0_8] : memref<1x16xf32, #tpu.memory_space<vmem>>, vector<1x16xf32>
    %5 = tpu.iota {dimensions = array<i32: 1>} : vector<1x12xi32>
    %c0_i32 = arith.constant 0 : i32
    %6 = vector.broadcast %c0_i32 : i32 to vector<1x12xi32>
    %7 = arith.cmpi sgt, %5, %6 : vector<1x12xi32>
    %8 = tpu.iota {dimensions = array<i32: 1>} : vector<1x16xi32>
    %c0_i32_9 = arith.constant 0 : i32
    %9 = vector.broadcast %c0_i32_9 : i32 to vector<1x16xi32>
    %10 = arith.cmpi sgt, %8, %9 : vector<1x16xi32>
    %11 = vector.extract_strided_slice %0 {offsets = [0, 0], sizes = [64, 1], strides = [1, 1]} : vector<64x12xf32> to vector<64x1xf32>
    %cst = arith.constant 1.000000e+00 : f32
    %12 = vector.broadcast %cst : f32 to vector<64x1xf32>
    %13 = arith.divf %11, %12 : vector<64x1xf32>
    %cst_10 = arith.constant 1.00000012 : f32
    %14 = vector.broadcast %cst_10 : f32 to vector<64x1xf32>
    %15 = arith.maximumf %13, %14 : vector<64x1xf32>
    %cst_11 = arith.constant 0.000000e+00 : f32
    %16 = vector.shape_cast %7 : vector<1x12xi1> to vector<1x12xi1>
    %17 = vector.broadcast %16 : vector<1x12xi1> to vector<64x12xi1>
    %18 = vector.broadcast %cst_11 : f32 to vector<64x12xf32>
    %19 = arith.select %17, %0, %18 : vector<64x12xi1>, vector<64x12xf32>
    %20 = arith.mulf %19, %19 : vector<64x12xf32>
    %cst_12 = arith.constant dense<0.000000e+00> : vector<64xf32>
    %21 = vector.multi_reduction <add>, %20, %cst_12 [1] : vector<64x12xf32> to vector<64xf32>
    %22 = vector.shape_cast %21 : vector<64xf32> to vector<64x1xf32>
    %cst_13 = arith.constant 1.000000e-15 : f32
    %23 = vector.broadcast %cst_13 : f32 to vector<64x1xf32>
    %24 = arith.maximumf %22, %23 : vector<64x1xf32>
    %cst_14 = arith.constant 1.000000e+00 : f32
    %25 = vector.broadcast %cst_14 : f32 to vector<64x1xf32>
    %26 = arith.divf %25, %15 : vector<64x1xf32>
    %27 = arith.mulf %26, %26 : vector<64x1xf32>
    %cst_15 = arith.constant 1.000000e+00 : f32
    %28 = vector.broadcast %cst_15 : f32 to vector<64x1xf32>
    %29 = arith.subf %28, %27 : vector<64x1xf32>
    %cst_16 = arith.constant 0.000000e+00 : f32
    %30 = vector.broadcast %cst_16 : f32 to vector<64x1xf32>
    %31 = arith.maximumf %29, %30 : vector<64x1xf32>
    %32 = math.sqrt %31 : vector<64x1xf32>
    %cst_17 = arith.constant 1.000000e+00 : f32
    %33 = vector.broadcast %cst_17 : f32 to vector<64x1xf32>
    %34 = arith.addf %33, %32 : vector<64x1xf32>
    %35 = arith.mulf %15, %34 : vector<64x1xf32>
    %36 = math.log %35 : vector<64x1xf32>
    %cst_18 = arith.constant 1.000000e+00 : f32
    %37 = vector.broadcast %cst_18 : f32 to vector<64x1xf32>
    %38 = arith.mulf %37, %36 : vector<64x1xf32>
    %39 = math.rsqrt %24 : vector<64x1xf32>
    %40 = arith.mulf %38, %39 : vector<64x1xf32>
    %41 = vector.broadcast %40 : vector<64x1xf32> to vector<64x12xf32>
    %42 = arith.mulf %41, %19 : vector<64x12xf32>
    %cst_19 = arith.constant dense<0.000000e+00> : vector<64x16xf32>
    %43 = tpu.matmul %42, %1, %cst_19 {dimension_numbers = #tpu.dot_dimension_numbers<[1], [0], [0], [1], [0, 0, 1, 1], [], []>} : vector<64x12xf32>, vector<12x16xf32>, vector<64x16xf32> -> vector<64x16xf32>
    %cst_20 = arith.constant 0.000000e+00 : f32
    %44 = vector.shape_cast %10 : vector<1x16xi1> to vector<1x16xi1>
    %45 = vector.broadcast %44 : vector<1x16xi1> to vector<64x16xi1>
    %46 = vector.broadcast %cst_20 : f32 to vector<64x16xf32>
    %47 = arith.select %45, %43, %46 : vector<64x16xi1>, vector<64x16xf32>
    %cst_21 = arith.constant 0.000000e+00 : f32
    %48 = vector.shape_cast %10 : vector<1x16xi1> to vector<1x16xi1>
    %49 = vector.broadcast %48 : vector<1x16xi1> to vector<64x16xi1>
    %50 = vector.broadcast %cst_21 : f32 to vector<64x16xf32>
    %51 = arith.select %49, %47, %50 : vector<64x16xi1>, vector<64x16xf32>
    %52 = arith.mulf %51, %51 : vector<64x16xf32>
    %cst_22 = arith.constant dense<0.000000e+00> : vector<64xf32>
    %53 = vector.multi_reduction <add>, %52, %cst_22 [1] : vector<64x16xf32> to vector<64xf32>
    %54 = vector.shape_cast %53 : vector<64xf32> to vector<64x1xf32>
    %cst_23 = arith.constant 1.000000e-15 : f32
    %55 = vector.broadcast %cst_23 : f32 to vector<64x1xf32>
    %56 = arith.maximumf %54, %55 : vector<64x1xf32>
    %57 = math.sqrt %56 : vector<64x1xf32>
    %cst_24 = arith.constant 1.000000e+00 : f32
    %58 = vector.broadcast %cst_24 : f32 to vector<64x1xf32>
    %59 = arith.divf %57, %58 : vector<64x1xf32>
    %cst_25 = arith.constant 5.000000e+01 : f32
    %60 = vector.broadcast %cst_25 : f32 to vector<64x1xf32>
    %61 = arith.minimumf %59, %60 : vector<64x1xf32>
    %62 = math.exp %61 : vector<64x1xf32>
    %cst_26 = arith.constant 0.000000e+00 : f32
    %63 = vector.broadcast %cst_26 : f32 to vector<64x1xf32>
    %64 = arith.subf %63, %61 : vector<64x1xf32>
    %65 = math.exp %64 : vector<64x1xf32>
    %66 = arith.addf %62, %65 : vector<64x1xf32>
    %cst_27 = arith.constant 5.000000e-01 : f32
    %67 = vector.broadcast %cst_27 : f32 to vector<64x1xf32>
    %68 = arith.mulf %67, %66 : vector<64x1xf32>
    %69 = arith.subf %62, %65 : vector<64x1xf32>
    %cst_28 = arith.constant 5.000000e-01 : f32
    %70 = vector.broadcast %cst_28 : f32 to vector<64x1xf32>
    %71 = arith.mulf %70, %69 : vector<64x1xf32>
    %cst_29 = arith.constant 1.000000e+00 : f32
    %72 = vector.broadcast %cst_29 : f32 to vector<64x1xf32>
    %73 = arith.mulf %72, %68 : vector<64x1xf32>
    %cst_30 = arith.constant 1.000000e+00 : f32
    %74 = vector.broadcast %cst_30 : f32 to vector<64x1xf32>
    %75 = arith.mulf %74, %71 : vector<64x1xf32>
    %76 = math.rsqrt %56 : vector<64x1xf32>
    %77 = arith.mulf %75, %76 : vector<64x1xf32>
    %78 = vector.broadcast %77 : vector<64x1xf32> to vector<64x16xf32>
    %79 = arith.mulf %78, %51 : vector<64x16xf32>
    %80 = vector.shape_cast %10 : vector<1x16xi1> to vector<1x16xi1>
    %81 = vector.broadcast %80 : vector<1x16xi1> to vector<64x16xi1>
    %82 = vector.shape_cast %73 : vector<64x1xf32> to vector<64x1xf32>
    %83 = vector.broadcast %82 : vector<64x1xf32> to vector<64x16xf32>
    %84 = arith.select %81, %79, %83 : vector<64x16xi1>, vector<64x16xf32>
    %cst_31 = arith.constant 0.000000e+00 : f32
    %85 = vector.broadcast %cst_31 : f32 to vector<1x16xf32>
    %86 = arith.select %10, %2, %85 : vector<1x16xi1>, vector<1x16xf32>
    %87 = vector.extract_strided_slice %84 {offsets = [0, 0], sizes = [64, 1], strides = [1, 1]} : vector<64x16xf32> to vector<64x1xf32>
    %88 = vector.broadcast %86 : vector<1x16xf32> to vector<64x16xf32>
    %89 = arith.mulf %84, %88 : vector<64x16xf32>
    %cst_32 = arith.constant 0.000000e+00 : f32
    %90 = vector.broadcast %cst_32 : f32 to vector<64x16xf32>
    %91 = arith.subf %90, %89 : vector<64x16xf32>
    %92 = vector.shape_cast %10 : vector<1x16xi1> to vector<1x16xi1>
    %93 = vector.broadcast %92 : vector<1x16xi1> to vector<64x16xi1>
    %94 = arith.select %93, %89, %91 : vector<64x16xi1>, vector<64x16xf32>
    %cst_33 = arith.constant dense<0.000000e+00> : vector<64xf32>
    %95 = vector.multi_reduction <add>, %94, %cst_33 [1] : vector<64x16xf32> to vector<64xf32>
    %96 = vector.shape_cast %95 : vector<64xf32> to vector<64x1xf32>
    %cst_34 = arith.constant 1.000000e+00 : f32
    %97 = vector.broadcast %cst_34 : f32 to vector<64x1xf32>
    %98 = arith.mulf %97, %87 : vector<64x1xf32>
    %cst_35 = arith.constant 1.000000e+00 : f32
    %99 = vector.broadcast %cst_35 : f32 to vector<64x1xf32>
    %100 = arith.addf %99, %98 : vector<64x1xf32>
    %cst_36 = arith.constant 0.000000e+00 : f32
    %cst_37 = arith.constant 1.000000e+00 : f32
    %101 = vector.broadcast %cst_36 : f32 to vector<1x16xf32>
    %102 = vector.broadcast %cst_37 : f32 to vector<1x16xf32>
    %103 = arith.select %10, %101, %102 : vector<1x16xi1>, vector<1x16xf32>
    %104 = vector.broadcast %103 : vector<1x16xf32> to vector<64x16xf32>
    %105 = arith.addf %84, %104 : vector<64x16xf32>
    %106 = arith.divf %96, %100 : vector<64x1xf32>
    %107 = vector.broadcast %106 : vector<64x1xf32> to vector<64x16xf32>
    %108 = arith.mulf %107, %105 : vector<64x16xf32>
    %109 = vector.broadcast %86 : vector<1x16xf32> to vector<64x16xf32>
    %110 = arith.addf %109, %108 : vector<64x16xf32>
    %111 = arith.mulf %110, %110 : vector<64x16xf32>
    %cst_38 = arith.constant 0.000000e+00 : f32
    %112 = vector.broadcast %cst_38 : f32 to vector<64x16xf32>
    %113 = arith.subf %112, %111 : vector<64x16xf32>
    %114 = vector.shape_cast %10 : vector<1x16xi1> to vector<1x16xi1>
    %115 = vector.broadcast %114 : vector<1x16xi1> to vector<64x16xi1>
    %116 = arith.select %115, %111, %113 : vector<64x16xi1>, vector<64x16xf32>
    %cst_39 = arith.constant dense<0.000000e+00> : vector<64xf32>
    %117 = vector.multi_reduction <add>, %116, %cst_39 [1] : vector<64x16xf32> to vector<64xf32>
    %118 = vector.shape_cast %117 : vector<64xf32> to vector<64x1xf32>
    %cst_40 = arith.constant 1.000000e-15 : f32
    %119 = vector.broadcast %cst_40 : f32 to vector<64x1xf32>
    %120 = arith.maximumf %118, %119 : vector<64x1xf32>
    %121 = math.sqrt %120 : vector<64x1xf32>
    %cst_41 = arith.constant 1.000000e+00 : f32
    %122 = vector.broadcast %cst_41 : f32 to vector<64x1xf32>
    %123 = arith.divf %121, %122 : vector<64x1xf32>
    %cst_42 = arith.constant 5.000000e+01 : f32
    %124 = vector.broadcast %cst_42 : f32 to vector<64x1xf32>
    %125 = arith.minimumf %123, %124 : vector<64x1xf32>
    %126 = math.exp %125 : vector<64x1xf32>
    %cst_43 = arith.constant 0.000000e+00 : f32
    %127 = vector.broadcast %cst_43 : f32 to vector<64x1xf32>
    %128 = arith.subf %127, %125 : vector<64x1xf32>
    %129 = math.exp %128 : vector<64x1xf32>
    %130 = arith.addf %126, %129 : vector<64x1xf32>
    %cst_44 = arith.constant 5.000000e-01 : f32
    %131 = vector.broadcast %cst_44 : f32 to vector<64x1xf32>
    %132 = arith.mulf %131, %130 : vector<64x1xf32>
    %133 = arith.subf %126, %129 : vector<64x1xf32>
    %cst_45 = arith.constant 5.000000e-01 : f32
    %134 = vector.broadcast %cst_45 : f32 to vector<64x1xf32>
    %135 = arith.mulf %134, %133 : vector<64x1xf32>
    %136 = vector.broadcast %132 : vector<64x1xf32> to vector<64x16xf32>
    %137 = arith.mulf %136, %84 : vector<64x16xf32>
    %cst_46 = arith.constant 1.000000e+00 : f32
    %138 = vector.broadcast %cst_46 : f32 to vector<64x1xf32>
    %139 = arith.mulf %138, %135 : vector<64x1xf32>
    %140 = math.rsqrt %120 : vector<64x1xf32>
    %141 = arith.mulf %139, %140 : vector<64x1xf32>
    %142 = vector.broadcast %141 : vector<64x1xf32> to vector<64x16xf32>
    %143 = arith.mulf %142, %110 : vector<64x16xf32>
    %144 = arith.addf %137, %143 : vector<64x16xf32>
    %145 = vector.extract_strided_slice %144 {offsets = [0, 0], sizes = [64, 1], strides = [1, 1]} : vector<64x16xf32> to vector<64x1xf32>
    %cst_47 = arith.constant 1.000000e+00 : f32
    %146 = vector.broadcast %cst_47 : f32 to vector<64x1xf32>
    %147 = arith.divf %145, %146 : vector<64x1xf32>
    %cst_48 = arith.constant 1.00000012 : f32
    %148 = vector.broadcast %cst_48 : f32 to vector<64x1xf32>
    %149 = arith.maximumf %147, %148 : vector<64x1xf32>
    %cst_49 = arith.constant 0.000000e+00 : f32
    %150 = vector.shape_cast %10 : vector<1x16xi1> to vector<1x16xi1>
    %151 = vector.broadcast %150 : vector<1x16xi1> to vector<64x16xi1>
    %152 = vector.broadcast %cst_49 : f32 to vector<64x16xf32>
    %153 = arith.select %151, %144, %152 : vector<64x16xi1>, vector<64x16xf32>
    %154 = arith.mulf %153, %153 : vector<64x16xf32>
    %cst_50 = arith.constant dense<0.000000e+00> : vector<64xf32>
    %155 = vector.multi_reduction <add>, %154, %cst_50 [1] : vector<64x16xf32> to vector<64xf32>
    %156 = vector.shape_cast %155 : vector<64xf32> to vector<64x1xf32>
    %cst_51 = arith.constant 1.000000e-15 : f32
    %157 = vector.broadcast %cst_51 : f32 to vector<64x1xf32>
    %158 = arith.maximumf %156, %157 : vector<64x1xf32>
    %cst_52 = arith.constant 1.000000e+00 : f32
    %159 = vector.broadcast %cst_52 : f32 to vector<64x1xf32>
    %160 = arith.divf %159, %149 : vector<64x1xf32>
    %161 = arith.mulf %160, %160 : vector<64x1xf32>
    %cst_53 = arith.constant 1.000000e+00 : f32
    %162 = vector.broadcast %cst_53 : f32 to vector<64x1xf32>
    %163 = arith.subf %162, %161 : vector<64x1xf32>
    %cst_54 = arith.constant 0.000000e+00 : f32
    %164 = vector.broadcast %cst_54 : f32 to vector<64x1xf32>
    %165 = arith.maximumf %163, %164 : vector<64x1xf32>
    %166 = math.sqrt %165 : vector<64x1xf32>
    %cst_55 = arith.constant 1.000000e+00 : f32
    %167 = vector.broadcast %cst_55 : f32 to vector<64x1xf32>
    %168 = arith.addf %167, %166 : vector<64x1xf32>
    %169 = arith.mulf %149, %168 : vector<64x1xf32>
    %170 = math.log %169 : vector<64x1xf32>
    %cst_56 = arith.constant 1.000000e+00 : f32
    %171 = vector.broadcast %cst_56 : f32 to vector<64x1xf32>
    %172 = arith.mulf %171, %170 : vector<64x1xf32>
    %173 = math.rsqrt %158 : vector<64x1xf32>
    %174 = arith.mulf %172, %173 : vector<64x1xf32>
    %175 = vector.broadcast %174 : vector<64x1xf32> to vector<64x16xf32>
    %176 = arith.mulf %175, %153 : vector<64x16xf32>
    %cst_57 = arith.constant 0.000000e+00 : f32
    %177 = vector.shape_cast %10 : vector<1x16xi1> to vector<1x16xi1>
    %178 = vector.broadcast %177 : vector<1x16xi1> to vector<64x16xi1>
    %179 = vector.broadcast %cst_57 : f32 to vector<64x16xf32>
    %180 = arith.select %178, %176, %179 : vector<64x16xi1>, vector<64x16xf32>
    %cst_58 = arith.constant dense<0.000000e+00> : vector<64xf32>
    %181 = vector.multi_reduction <add>, %180, %cst_58 [1] : vector<64x16xf32> to vector<64xf32>
    %182 = vector.shape_cast %181 : vector<64xf32> to vector<64x1xf32>
    %cst_59 = arith.constant 0.0666666701 : f32
    %183 = vector.broadcast %cst_59 : f32 to vector<64x1xf32>
    %184 = arith.mulf %182, %183 : vector<64x1xf32>
    %185 = vector.broadcast %184 : vector<64x1xf32> to vector<64x16xf32>
    %186 = arith.subf %180, %185 : vector<64x16xf32>
    %cst_60 = arith.constant 0.000000e+00 : f32
    %187 = vector.shape_cast %10 : vector<1x16xi1> to vector<1x16xi1>
    %188 = vector.broadcast %187 : vector<1x16xi1> to vector<64x16xi1>
    %189 = vector.broadcast %cst_60 : f32 to vector<64x16xf32>
    %190 = arith.select %188, %186, %189 : vector<64x16xi1>, vector<64x16xf32>
    %191 = arith.mulf %190, %190 : vector<64x16xf32>
    %cst_61 = arith.constant dense<0.000000e+00> : vector<64xf32>
    %192 = vector.multi_reduction <add>, %191, %cst_61 [1] : vector<64x16xf32> to vector<64xf32>
    %193 = vector.shape_cast %192 : vector<64xf32> to vector<64x1xf32>
    %cst_62 = arith.constant 0.0666666701 : f32
    %194 = vector.broadcast %cst_62 : f32 to vector<64x1xf32>
    %195 = arith.mulf %193, %194 : vector<64x1xf32>
    %cst_63 = arith.constant 9.99999974E-6 : f32
    %196 = vector.broadcast %cst_63 : f32 to vector<64x1xf32>
    %197 = arith.addf %195, %196 : vector<64x1xf32>
    %198 = math.rsqrt %197 : vector<64x1xf32>
    %199 = vector.broadcast %198 : vector<64x1xf32> to vector<64x16xf32>
    %200 = arith.mulf %190, %199 : vector<64x16xf32>
    %201 = vector.broadcast %3 : vector<1x16xf32> to vector<64x16xf32>
    %202 = arith.mulf %200, %201 : vector<64x16xf32>
    %203 = vector.broadcast %4 : vector<1x16xf32> to vector<64x16xf32>
    %204 = arith.addf %202, %203 : vector<64x16xf32>
    %205 = vector.shape_cast %10 : vector<1x16xi1> to vector<1x16xi1>
    %206 = vector.broadcast %205 : vector<1x16xi1> to vector<64x16xi1>
    %207 = arith.select %206, %204, %176 : vector<64x16xi1>, vector<64x16xf32>
    %cst_64 = arith.constant 0.000000e+00 : f32
    %208 = vector.shape_cast %10 : vector<1x16xi1> to vector<1x16xi1>
    %209 = vector.broadcast %208 : vector<1x16xi1> to vector<64x16xi1>
    %210 = vector.broadcast %cst_64 : f32 to vector<64x16xf32>
    %211 = arith.select %209, %207, %210 : vector<64x16xi1>, vector<64x16xf32>
    %212 = arith.mulf %211, %211 : vector<64x16xf32>
    %cst_65 = arith.constant dense<0.000000e+00> : vector<64xf32>
    %213 = vector.multi_reduction <add>, %212, %cst_65 [1] : vector<64x16xf32> to vector<64xf32>
    %214 = vector.shape_cast %213 : vector<64xf32> to vector<64x1xf32>
    %cst_66 = arith.constant 1.000000e-15 : f32
    %215 = vector.broadcast %cst_66 : f32 to vector<64x1xf32>
    %216 = arith.maximumf %214, %215 : vector<64x1xf32>
    %217 = math.sqrt %216 : vector<64x1xf32>
    %cst_67 = arith.constant 1.000000e+00 : f32
    %218 = vector.broadcast %cst_67 : f32 to vector<64x1xf32>
    %219 = arith.divf %217, %218 : vector<64x1xf32>
    %cst_68 = arith.constant 5.000000e+01 : f32
    %220 = vector.broadcast %cst_68 : f32 to vector<64x1xf32>
    %221 = arith.minimumf %219, %220 : vector<64x1xf32>
    %222 = math.exp %221 : vector<64x1xf32>
    %cst_69 = arith.constant 0.000000e+00 : f32
    %223 = vector.broadcast %cst_69 : f32 to vector<64x1xf32>
    %224 = arith.subf %223, %221 : vector<64x1xf32>
    %225 = math.exp %224 : vector<64x1xf32>
    %226 = arith.addf %222, %225 : vector<64x1xf32>
    %cst_70 = arith.constant 5.000000e-01 : f32
    %227 = vector.broadcast %cst_70 : f32 to vector<64x1xf32>
    %228 = arith.mulf %227, %226 : vector<64x1xf32>
    %229 = arith.subf %222, %225 : vector<64x1xf32>
    %cst_71 = arith.constant 5.000000e-01 : f32
    %230 = vector.broadcast %cst_71 : f32 to vector<64x1xf32>
    %231 = arith.mulf %230, %229 : vector<64x1xf32>
    %cst_72 = arith.constant 1.000000e+00 : f32
    %232 = vector.broadcast %cst_72 : f32 to vector<64x1xf32>
    %233 = arith.mulf %232, %228 : vector<64x1xf32>
    %cst_73 = arith.constant 1.000000e+00 : f32
    %234 = vector.broadcast %cst_73 : f32 to vector<64x1xf32>
    %235 = arith.mulf %234, %231 : vector<64x1xf32>
    %236 = math.rsqrt %216 : vector<64x1xf32>
    %237 = arith.mulf %235, %236 : vector<64x1xf32>
    %238 = vector.broadcast %237 : vector<64x1xf32> to vector<64x16xf32>
    %239 = arith.mulf %238, %211 : vector<64x16xf32>
    %240 = vector.shape_cast %10 : vector<1x16xi1> to vector<1x16xi1>
    %241 = vector.broadcast %240 : vector<1x16xi1> to vector<64x16xi1>
    %242 = vector.shape_cast %233 : vector<64x1xf32> to vector<64x1xf32>
    %243 = vector.broadcast %242 : vector<64x1xf32> to vector<64x16xf32>
    %244 = arith.select %241, %239, %243 : vector<64x16xi1>, vector<64x16xf32>
    %245 = vector.extract_strided_slice %244 {offsets = [0, 0], sizes = [64, 1], strides = [1, 1]} : vector<64x16xf32> to vector<64x1xf32>
    %cst_74 = arith.constant 1.000000e+00 : f32
    %246 = vector.broadcast %cst_74 : f32 to vector<64x1xf32>
    %247 = arith.divf %245, %246 : vector<64x1xf32>
    %cst_75 = arith.constant 1.00000012 : f32
    %248 = vector.broadcast %cst_75 : f32 to vector<64x1xf32>
    %249 = arith.maximumf %247, %248 : vector<64x1xf32>
    %cst_76 = arith.constant 0.000000e+00 : f32
    %250 = vector.shape_cast %10 : vector<1x16xi1> to vector<1x16xi1>
    %251 = vector.broadcast %250 : vector<1x16xi1> to vector<64x16xi1>
    %252 = vector.broadcast %cst_76 : f32 to vector<64x16xf32>
    %253 = arith.select %251, %244, %252 : vector<64x16xi1>, vector<64x16xf32>
    %254 = arith.mulf %253, %253 : vector<64x16xf32>
    %cst_77 = arith.constant dense<0.000000e+00> : vector<64xf32>
    %255 = vector.multi_reduction <add>, %254, %cst_77 [1] : vector<64x16xf32> to vector<64xf32>
    %256 = vector.shape_cast %255 : vector<64xf32> to vector<64x1xf32>
    %cst_78 = arith.constant 1.000000e-15 : f32
    %257 = vector.broadcast %cst_78 : f32 to vector<64x1xf32>
    %258 = arith.maximumf %256, %257 : vector<64x1xf32>
    %cst_79 = arith.constant 1.000000e+00 : f32
    %259 = vector.broadcast %cst_79 : f32 to vector<64x1xf32>
    %260 = arith.divf %259, %249 : vector<64x1xf32>
    %261 = arith.mulf %260, %260 : vector<64x1xf32>
    %cst_80 = arith.constant 1.000000e+00 : f32
    %262 = vector.broadcast %cst_80 : f32 to vector<64x1xf32>
    %263 = arith.subf %262, %261 : vector<64x1xf32>
    %cst_81 = arith.constant 0.000000e+00 : f32
    %264 = vector.broadcast %cst_81 : f32 to vector<64x1xf32>
    %265 = arith.maximumf %263, %264 : vector<64x1xf32>
    %266 = math.sqrt %265 : vector<64x1xf32>
    %cst_82 = arith.constant 1.000000e+00 : f32
    %267 = vector.broadcast %cst_82 : f32 to vector<64x1xf32>
    %268 = arith.addf %267, %266 : vector<64x1xf32>
    %269 = arith.mulf %249, %268 : vector<64x1xf32>
    %270 = math.log %269 : vector<64x1xf32>
    %cst_83 = arith.constant 1.000000e+00 : f32
    %271 = vector.broadcast %cst_83 : f32 to vector<64x1xf32>
    %272 = arith.mulf %271, %270 : vector<64x1xf32>
    %273 = math.rsqrt %258 : vector<64x1xf32>
    %274 = arith.mulf %272, %273 : vector<64x1xf32>
    %275 = vector.broadcast %274 : vector<64x1xf32> to vector<64x16xf32>
    %276 = arith.mulf %275, %253 : vector<64x16xf32>
    %cst_84 = arith.constant 0.000000e+00 : f32
    %277 = vector.broadcast %cst_84 : f32 to vector<64x16xf32>
    %278 = arith.maximumf %276, %277 : vector<64x16xf32>
    %cst_85 = arith.constant 0.000000e+00 : f32
    %279 = vector.shape_cast %10 : vector<1x16xi1> to vector<1x16xi1>
    %280 = vector.broadcast %279 : vector<1x16xi1> to vector<64x16xi1>
    %281 = vector.broadcast %cst_85 : f32 to vector<64x16xf32>
    %282 = arith.select %280, %278, %281 : vector<64x16xi1>, vector<64x16xf32>
    %283 = arith.mulf %282, %282 : vector<64x16xf32>
    %cst_86 = arith.constant dense<0.000000e+00> : vector<64xf32>
    %284 = vector.multi_reduction <add>, %283, %cst_86 [1] : vector<64x16xf32> to vector<64xf32>
    %285 = vector.shape_cast %284 : vector<64xf32> to vector<64x1xf32>
    %cst_87 = arith.constant 1.000000e-15 : f32
    %286 = vector.broadcast %cst_87 : f32 to vector<64x1xf32>
    %287 = arith.maximumf %285, %286 : vector<64x1xf32>
    %288 = math.sqrt %287 : vector<64x1xf32>
    %cst_88 = arith.constant 1.000000e+00 : f32
    %289 = vector.broadcast %cst_88 : f32 to vector<64x1xf32>
    %290 = arith.divf %288, %289 : vector<64x1xf32>
    %cst_89 = arith.constant 5.000000e+01 : f32
    %291 = vector.broadcast %cst_89 : f32 to vector<64x1xf32>
    %292 = arith.minimumf %290, %291 : vector<64x1xf32>
    %293 = math.exp %292 : vector<64x1xf32>
    %cst_90 = arith.constant 0.000000e+00 : f32
    %294 = vector.broadcast %cst_90 : f32 to vector<64x1xf32>
    %295 = arith.subf %294, %292 : vector<64x1xf32>
    %296 = math.exp %295 : vector<64x1xf32>
    %297 = arith.addf %293, %296 : vector<64x1xf32>
    %cst_91 = arith.constant 5.000000e-01 : f32
    %298 = vector.broadcast %cst_91 : f32 to vector<64x1xf32>
    %299 = arith.mulf %298, %297 : vector<64x1xf32>
    %300 = arith.subf %293, %296 : vector<64x1xf32>
    %cst_92 = arith.constant 5.000000e-01 : f32
    %301 = vector.broadcast %cst_92 : f32 to vector<64x1xf32>
    %302 = arith.mulf %301, %300 : vector<64x1xf32>
    %cst_93 = arith.constant 1.000000e+00 : f32
    %303 = vector.broadcast %cst_93 : f32 to vector<64x1xf32>
    %304 = arith.mulf %303, %299 : vector<64x1xf32>
    %cst_94 = arith.constant 1.000000e+00 : f32
    %305 = vector.broadcast %cst_94 : f32 to vector<64x1xf32>
    %306 = arith.mulf %305, %302 : vector<64x1xf32>
    %307 = math.rsqrt %287 : vector<64x1xf32>
    %308 = arith.mulf %306, %307 : vector<64x1xf32>
    %309 = vector.broadcast %308 : vector<64x1xf32> to vector<64x16xf32>
    %310 = arith.mulf %309, %282 : vector<64x16xf32>
    %311 = vector.shape_cast %10 : vector<1x16xi1> to vector<1x16xi1>
    %312 = vector.broadcast %311 : vector<1x16xi1> to vector<64x16xi1>
    %313 = vector.shape_cast %304 : vector<64x1xf32> to vector<64x1xf32>
    %314 = vector.broadcast %313 : vector<64x1xf32> to vector<64x16xf32>
    %315 = arith.select %312, %310, %314 : vector<64x16xi1>, vector<64x16xf32>
    %c0_95 = arith.constant 0 : index
    %c0_96 = arith.constant 0 : index
    %316 = vector.load %arg6[%c0_95, %c0_96] : memref<16x72xf32, #tpu.memory_space<vmem>>, vector<16x72xf32>
    %cst_97 = arith.constant dense<0.000000e+00> : vector<64x72xf32>
    %317 = tpu.matmul %315, %316, %cst_97 {dimension_numbers = #tpu.dot_dimension_numbers<[1], [0], [0], [1], [0, 0, 1, 1], [], []>} : vector<64x16xf32>, vector<16x72xf32>, vector<64x72xf32> -> vector<64x72xf32>
    %c0_98 = arith.constant 0 : index
    %c0_99 = arith.constant 0 : index
    %318 = vector.load %arg7[%c0_98, %c0_99] : memref<64x72xf32, #tpu.memory_space<vmem>>, vector<64x72xf32>
    tpu.vector_store %arg7[%c0_98, %c0_99], %317 {strides = array<i32>} : memref<64x72xf32, #tpu.memory_space<vmem>>, vector<64x72xf32>,
    return
  }
  func.func @transform_0(%arg0: i32) -> (i32, i32) {
    %c0_i32 = arith.constant 0 : i32
    %c0_i32_0 = arith.constant 0 : i32
    return %arg0, %c0_i32 : i32, i32
  }
  func.func @transform_1(%arg0: i32) -> (i32, i32) {
    %c0_i32 = arith.constant 0 : i32
    %c0_i32_0 = arith.constant 0 : i32
    %c0_i32_1 = arith.constant 0 : i32
    return %c0_i32, %c0_i32_0 : i32, i32
  }
  func.func @transform_2(%arg0: i32) -> (i32, i32) {
    %c0_i32 = arith.constant 0 : i32
    %c0_i32_0 = arith.constant 0 : i32
    %c0_i32_1 = arith.constant 0 : i32
    return %c0_i32, %c0_i32_0 : i32, i32
  }
  func.func @transform_3(%arg0: i32) -> (i32, i32) {
    %c0_i32 = arith.constant 0 : i32
    %c0_i32_0 = arith.constant 0 : i32
    %c0_i32_1 = arith.constant 0 : i32
    return %c0_i32, %c0_i32_0 : i32, i32
  }
  func.func @transform_4(%arg0: i32) -> (i32, i32) {
    %c0_i32 = arith.constant 0 : i32
    %c0_i32_0 = arith.constant 0 : i32
    %c0_i32_1 = arith.constant 0 : i32
    return %c0_i32, %c0_i32_0 : i32, i32
  }
  func.func @transform_5(%arg0: i32) -> (i32, i32) {
    %c0_i32 = arith.constant 0 : i32
    %c0_i32_0 = arith.constant 0 : i32
    %c0_i32_1 = arith.constant 0 : i32
    return %c0_i32, %c0_i32_0 : i32, i32
  }
  func.func @transform_6(%arg0: i32) -> (i32, i32) {
    %c0_i32 = arith.constant 0 : i32
    %c0_i32_0 = arith.constant 0 : i32
    return %arg0, %c0_i32 : i32, i32
  }
}

</mosaic_0001>

<llo_original>
// kernel: hat_layer.2
$region0: #{hat_layer.2}
  #allocation0 [shape = 'u32[]', space=smem, size = 0x4, offset = 0x4, fixed_abs, tag = 'smem constant byte address 0x4 - core index']
  #allocation1 [shape = 'u32[144,128]{1,0:T(1,128)}', space=vmem, size = 0x12000, scoped, tag = 'internal scratch']
  %s0 = inlined_call_operand.hbm [shape: f32[256,12], index: 0, kind: input, shape index: {}]
  %s1 = inlined_call_operand.hbm [shape: f32[12,16], index: 1, kind: input, shape index: {}]
  %s2 = inlined_call_operand.hbm [shape: f32[1,16], index: 2, kind: input, shape index: {}]
  %s3 = inlined_call_operand.hbm [shape: f32[1,16], index: 3, kind: input, shape index: {}]
  %s4 = inlined_call_operand.hbm [shape: f32[1,16], index: 4, kind: input, shape index: {}]
  %s5 = inlined_call_operand.hbm [shape: f32[16,72], index: 5, kind: input, shape index: {}]
  %s6 = inlined_call_operand.hbm [shape: f32[256,72], index: 6, kind: output, shape index: {}]
  %s7 = sld [smem:[#allocation0]]
  $region81: #{hat_layer.2} parent=0
    _
  %s9 = ssub.s32 1, %s7
  %s10 = scalar_select 0, %s9, %s7
  $region1: #{hat_layer.2} parent=0
    #allocation2 [shape = 'u8[65536]{0}', space=vmem, size = 0x10000, scoped, tag = 'input window, operand 0']
    #allocation3 [shape = 's32[2]{0}', space=sflag, size = 0x8, scoped, tag = 'scoped memory for hat_layer.2']
    #allocation4 [shape = 's32[2]{0}', space=sflag, size = 0x8, scoped, tag = 'scoped memory for hat_layer.2']
    #allocation5 [shape = 'u8[8192]{0}', space=vmem, size = 0x2000, scoped, tag = 'input window, operand 1, single buffered']
    #allocation6 [shape = 's32[1]{0}', space=sflag, size = 0x4, scoped, tag = 'scoped memory for hat_layer.2']
    #allocation7 [shape = 'u8[512]{0}', space=vmem, size = 0x400, scoped, tag = 'input window, operand 2, single buffered']
    #allocation8 [shape = 'u8[512]{0}', space=vmem, size = 0x400, scoped, tag = 'input window, operand 3, single buffered']
    #allocation9 [shape = 's32[1]{0}', space=sflag, size = 0x4, scoped, tag = 'scoped memory for hat_layer.2']
    #allocation10 [shape = 'u8[512]{0}', space=vmem, size = 0x400, scoped, tag = 'input window, operand 4, single buffered']
    #allocation11 [shape = 'u8[8192]{0}', space=vmem, size = 0x2000, scoped, tag = 'input window, operand 5, single buffered']
    #allocation12 [shape = 's32[1]{0}', space=sflag, size = 0x4, scoped, tag = 'scoped memory for hat_layer.2']
    #allocation13 [shape = 'u8[65536]{0}', space=vmem, size = 0x10000, scoped, tag = 'output window, operand 0']
    %11 = vsyncpa [#allocation3], 0
    %s12 = scalar_lea.sflag [#allocation3], 1
    %13 = vsyncpa %s12, 0
    %14 = vsyncpa [#allocation6], 0
    %15 = vsyncpa [#allocation9], 0
    %16 = vsyncpa [#allocation12], 0
    %17 = vsyncpa [#allocation4], 0
    %s18 = scalar_lea.sflag [#allocation4], 1
    %19 = vsyncpa %s18, 0
    loop: start=0, step=1, limit=6
    $region2: #{hat_layer.2} parent=1 // loop_pre_header
      _
    $region3: #{hat_layer.2} parent=1 // loop_header
      %s21 = sphi 0, %s25
      %p22 = scmp.ge.s32.totalorder %s21, 6
      %s31 = sphi 0, %s33
      %s34 = sphi 0, %s31
      %s35 = sphi 0, %s34
      %s51 = sphi 0, %s35
      %s55 = sphi 0, %s55
      %s57 = sphi 0, %s55
      %s58 = sphi 0, %s57
      %s72 = sphi 0, %s58
      %s76 = sphi 0, %s76
      %s78 = sphi 0, %s76
      %s79 = sphi 0, %s78
      %s93 = sphi 0, %s79
      %s97 = sphi 0, %s97
      %s99 = sphi 0, %s97
      %s100 = sphi 0, %s99
      %s114 = sphi 0, %s100
      %s118 = sphi 0, %s118
      %s120 = sphi 0, %s118
      %s121 = sphi 0, %s120
      %s135 = sphi 0, %s121
      %s139 = sphi 0, %s139
      %s141 = sphi 0, %s139
      %s142 = sphi 0, %s141
      %s156 = sphi 0, %s142
      %s162 = sphi 0, %s164
      %s165 = sphi 0, %s162
      %s166 = sphi 0, %s165
      %s182 = sphi 0, %s166
    $region4: #{hat_layer.2} parent=1 // loop_header_branch
      %24 = sbr.rel (%p22) target = $region8
    $region5: #{hat_layer.2} parent=1 // loop_body
      %s26 = ssub.s32 %s21, 1
      %s27 = ssub.s32 %s21, 2
      %s28 = sadd.s32 %s21, 1
      %s29 = ssub.s32 %s21, %s28
      %p30 = scmp.eq.s32.totalorder %s29, 0
      %s32 = sadd.s32 %s31, 1
      %s33 = scalar_select %p30, %s31, %s32
      %p36 = pneg %p30
      %p37 = scmp.eq.s32.totalorder %s21, 3
      %p38 = por %p36, %p37
      %p39 = scmp.ne.s32.totalorder %s31, %s34
      %p40 = scmp.eq.s32.totalorder %s21, 0
      %p41 = por %p39, %p40
      %p42 = scmp.ne.s32.totalorder %s31, %s34
      %p43 = scmp.eq.s32.totalorder %s26, 3
      %p44 = por %p42, %p43
      %p45 = scmp.ne.s32.totalorder %s34, %s35
      %p46 = scmp.eq.s32.totalorder %s26, 0
      %p47 = por %p45, %p46
      %p48 = scmp.ne.s32.totalorder %s34, %s35
      %p49 = scmp.eq.s32.totalorder %s27, 3
      %p50 = por %p48, %p49
      %p52 = scmp.ne.s32.totalorder %s35, %s51
      %p53 = scmp.eq.s32.totalorder %s27, 0
      %p54 = por %p52, %p53
      %s56 = sadd.s32 %s55, 1
      %p59 = scmp.eq.s32.totalorder %s21, 3
      %p60 = scmp.ne.s32.totalorder %s55, %s57
      %p61 = scmp.eq.s32.totalorder %s21, 0
      %p62 = por %p60, %p61
      %p63 = scmp.ne.s32.totalorder %s55, %s57
      %p64 = scmp.eq.s32.totalorder %s26, 3
      %p65 = por %p63, %p64
      %p66 = scmp.ne.s32.totalorder %s57, %s58
      %p67 = scmp.eq.s32.totalorder %s26, 0
      %p68 = por %p66, %p67
      %p69 = scmp.ne.s32.totalorder %s57, %s58
      %p70 = scmp.eq.s32.totalorder %s27, 3
      %p71 = por %p69, %p70
      %p73 = scmp.ne.s32.totalorder %s58, %s72
      %p74 = scmp.eq.s32.totalorder %s27, 0
      %p75 = por %p73, %p74
      %s77 = sadd.s32 %s76, 1
      %p80 = scmp.eq.s32.totalorder %s21, 3
      %p81 = scmp.ne.s32.totalorder %s76, %s78
      %p82 = scmp.eq.s32.totalorder %s21, 0
      %p83 = por %p81, %p82
      %p84 = scmp.ne.s32.totalorder %s76, %s78
      %p85 = scmp.eq.s32.totalorder %s26, 3
      %p86 = por %p84, %p85
      %p87 = scmp.ne.s32.totalorder %s78, %s79
      %p88 = scmp.eq.s32.totalorder %s26, 0
      %p89 = por %p87, %p88
      %p90 = scmp.ne.s32.totalorder %s78, %s79
      %p91 = scmp.eq.s32.totalorder %s27, 3
      %p92 = por %p90, %p91
      %p94 = scmp.ne.s32.totalorder %s79, %s93
      %p95 = scmp.eq.s32.totalorder %s27, 0
      %p96 = por %p94, %p95
      %s98 = sadd.s32 %s97, 1
      %p101 = scmp.eq.s32.totalorder %s21, 3
      %p102 = scmp.ne.s32.totalorder %s97, %s99
      %p103 = scmp.eq.s32.totalorder %s21, 0
      %p104 = por %p102, %p103
      %p105 = scmp.ne.s32.totalorder %s97, %s99
      %p106 = scmp.eq.s32.totalorder %s26, 3
      %p107 = por %p105, %p106
      %p108 = scmp.ne.s32.totalorder %s99, %s100
      %p109 = scmp.eq.s32.totalorder %s26, 0
      %p110 = por %p108, %p109
      %p111 = scmp.ne.s32.totalorder %s99, %s100
      %p112 = scmp.eq.s32.totalorder %s27, 3
      %p113 = por %p111, %p112
      %p115 = scmp.ne.s32.totalorder %s100, %s114
      %p116 = scmp.eq.s32.totalorder %s27, 0
      %p117 = por %p115, %p116
      %s119 = sadd.s32 %s118, 1
      %p122 = scmp.eq.s32.totalorder %s21, 3
      %p123 = scmp.ne.s32.totalorder %s118, %s120
      %p124 = scmp.eq.s32.totalorder %s21, 0
      %p125 = por %p123, %p124
      %p126 = scmp.ne.s32.totalorder %s118, %s120
      %p127 = scmp.eq.s32.totalorder %s26, 3
      %p128 = por %p126, %p127
      %p129 = scmp.ne.s32.totalorder %s120, %s121
      %p130 = scmp.eq.s32.totalorder %s26, 0
      %p131 = por %p129, %p130
      %p132 = scmp.ne.s32.totalorder %s120, %s121
      %p133 = scmp.eq.s32.totalorder %s27, 3
      %p134 = por %p132, %p133
      %p136 = scmp.ne.s32.totalorder %s121, %s135
      %p137 = scmp.eq.s32.totalorder %s27, 0
      %p138 = por %p136, %p137
      %s140 = sadd.s32 %s139, 1
      %p143 = scmp.eq.s32.totalorder %s21, 3
      %p144 = scmp.ne.s32.totalorder %s139, %s141
      %p145 = scmp.eq.s32.totalorder %s21, 0
      %p146 = por %p144, %p145
      %p147 = scmp.ne.s32.totalorder %s139, %s141
      %p148 = scmp.eq.s32.totalorder %s26, 3
      %p149 = por %p147, %p148
      %p150 = scmp.ne.s32.totalorder %s141, %s142
      %p151 = scmp.eq.s32.totalorder %s26, 0
      %p152 = por %p150, %p151
      %p153 = scmp.ne.s32.totalorder %s141, %s142
      %p154 = scmp.eq.s32.totalorder %s27, 3
      %p155 = por %p153, %p154
      %p157 = scmp.ne.s32.totalorder %s142, %s156
      %p158 = scmp.eq.s32.totalorder %s27, 0
      %p159 = por %p157, %p158
      %s160 = ssub.s32 %s21, %s28
      %p161 = scmp.eq.s32.totalorder %s160, 0
      %s163 = sadd.s32 %s162, 1
      %s164 = scalar_select %p161, %s162, %s163
      %p167 = pneg %p161
      %p168 = scmp.eq.s32.totalorder %s21, 3
      %p169 = por %p167, %p168
      %p170 = scmp.ne.s32.totalorder %s162, %s165
      %p171 = scmp.eq.s32.totalorder %s21, 0
      %p172 = por %p170, %p171
      %p173 = scmp.ne.s32.totalorder %s162, %s165
      %p174 = scmp.eq.s32.totalorder %s26, 3
      %p175 = por %p173, %p174
      %p176 = scmp.ne.s32.totalorder %s165, %s166
      %p177 = scmp.eq.s32.totalorder %s26, 0
      %p178 = por %p176, %p177
      %p179 = scmp.ne.s32.totalorder %s165, %s166
      %p180 = scmp.eq.s32.totalorder %s27, 3
      %p181 = por %p179, %p180
      %p183 = scmp.ne.s32.totalorder %s166, %s182
      %p184 = scmp.eq.s32.totalorder %s27, 0
      %p185 = por %p183, %p184
      %p186 = scmp.le.s32.totalorder 1, %s21
      %p187 = scmp.lt.s32.totalorder %s21, 5
      %p188 = pnand %p186, %p187
      %p189 = pneg %p188
      // Predicated region
      $region9: #{hat_layer.2} parent=5 // pred_check
        _
      $region10: #{hat_layer.2} parent=5 // pred_check_branch
        %191 = sbr.rel (%p188) target = $region12
      $region11: #{hat_layer.2} parent=5 // pred_region
        %s192 = ssub.s32 %s21, 1
        // Predicated region
        $region13: #{hat_layer.2} parent=11 // pred_check
          %p193 = pneg %p68
        $region14: #{hat_layer.2} parent=11 // pred_check_branch
          %195 = sbr.rel (%p193) target = $region16
        $region15: #{hat_layer.2} parent=11 // pred_region
          %s197 = ssub.s32 256, 256
          %198 = vsyncadd [#allocation6], %s197
          %s199 = sshll.u32 [#allocation5], 4
          %s200 = int_to_ptr.vmem [resolvable:$true] %s199
          %205 = dma.hbm_to_vmem [thread:$0]  %s1, 256, %s200, [#allocation6], 128, 128, 8
        $region16: #{hat_layer.2} parent=11 // pred_fallthru
          _
        // Predicated region
        $region17: #{hat_layer.2} parent=11 // pred_check
          %p206 = pneg %p89
        $region18: #{hat_layer.2} parent=11 // pred_check_branch
          %208 = sbr.rel (%p206) target = $region20
        $region19: #{hat_layer.2} parent=11 // pred_region
          %s210 = ssub.s32 16, 16
          %211 = vsyncadd [#allocation6], %s210
          %s213 = sshll.u32 [#allocation7], 4
          %s214 = int_to_ptr.vmem [resolvable:$true] %s213
          %216 = dma.hbm_to_vmem [thread:$0]  %s2, 16, %s214, [#allocation6]
        $region20: #{hat_layer.2} parent=11 // pred_fallthru
          _
        // Predicated region
        $region21: #{hat_layer.2} parent=11 // pred_check
          %p217 = pneg %p110
        $region22: #{hat_layer.2} parent=11 // pred_check_branch
          %219 = sbr.rel (%p217) target = $region24
        $region23: #{hat_layer.2} parent=11 // pred_region
          %s221 = ssub.s32 16, 16
          %222 = vsyncadd [#allocation9], %s221
          %s224 = sshll.u32 [#allocation8], 4
          %s225 = int_to_ptr.vmem [resolvable:$true] %s224
          %227 = dma.hbm_to_vmem [thread:$0]  %s3, 16, %s225, [#allocation9]
        $region24: #{hat_layer.2} parent=11 // pred_fallthru
          _
        // Predicated region
        $region25: #{hat_layer.2} parent=11 // pred_check
          %p228 = pneg %p131
        $region26: #{hat_layer.2} parent=11 // pred_check_branch
          %230 = sbr.rel (%p228) target = $region28
        $region27: #{hat_layer.2} parent=11 // pred_region
          %s232 = ssub.s32 16, 16
          %233 = vsyncadd [#allocation9], %s232
          %s235 = sshll.u32 [#allocation10], 4
          %s236 = int_to_ptr.vmem [resolvable:$true] %s235
          %238 = dma.hbm_to_vmem [thread:$0]  %s4, 16, %s236, [#allocation9]
        $region28: #{hat_layer.2} parent=11 // pred_fallthru
          _
        // Predicated region
        $region29: #{hat_layer.2} parent=11 // pred_check
          %p239 = pneg %p152
        $region30: #{hat_layer.2} parent=11 // pred_check_branch
          %241 = sbr.rel (%p239) target = $region32
        $region31: #{hat_layer.2} parent=11 // pred_region
          %s243 = ssub.s32 256, 256
          %244 = vsyncadd [#allocation12], %s243
          %s245 = sshll.u32 [#allocation11], 4
          %s246 = int_to_ptr.vmem [resolvable:$true] %s245
          %251 = dma.hbm_to_vmem [thread:$0]  %s5, 256, %s246, [#allocation12], 128, 128, 8
        $region32: #{hat_layer.2} parent=11 // pred_fallthru
          _
      $region12: #{hat_layer.2} parent=5 // pred_fallthru
        _
      %p252 = scmp.lt.s32.totalorder %s21, 4
      // Predicated region
      $region33: #{hat_layer.2} parent=5 // pred_check
        %p253 = pneg %p252
      $region34: #{hat_layer.2} parent=5 // pred_check_branch
        %255 = sbr.rel (%p253) target = $region36
      $region35: #{hat_layer.2} parent=5 // pred_region
        // Predicated region
        $region37: #{hat_layer.2} parent=35 // pred_check
          %p256 = pneg %p41
        $region38: #{hat_layer.2} parent=35 // pred_check_branch
          %258 = sbr.rel (%p256) target = $region40
        $region39: #{hat_layer.2} parent=35 // pred_region
          %s259 = sand.u32 %s31, 1
          %s260 = scalar_lea.sflag [#allocation3], %s259
          %s261 = sand.u32 %s31, 1
          %s262 = smul.addr %s261, 64
          %s263 = scalar_lea.vmem [#allocation2], %s262
          %s264 = smul.u32 8, %s21
          %s266 = ssub.s32 1024, 1024
          %267 = vsyncadd %s260, %s266
          %s268 = smul.addr %s264, 128
          %s269 = scalar_lea.hbm %s0, %s268
          %s270 = sshll.u32 %s263, 4
          %s271 = int_to_ptr.vmem [resolvable:$true] %s270
          %276 = dma.hbm_to_vmem [thread:$0]  %s269, 1024, %s271, %s260, 128, 128, 8
        $region40: #{hat_layer.2} parent=35 // pred_fallthru
          _
      $region36: #{hat_layer.2} parent=5 // pred_fallthru
        _
      %p277 = scmp.le.s32.totalorder 1, %s21
      %p278 = scmp.lt.s32.totalorder %s21, 5
      %p279 = pnand %p277, %p278
      %p280 = pneg %p279
      // Predicated region
      $region41: #{hat_layer.2} parent=5 // pred_check
        _
      $region42: #{hat_layer.2} parent=5 // pred_check_branch
        %282 = sbr.rel (%p279) target = $region44
      $region43: #{hat_layer.2} parent=5 // pred_region
        %s283 = ssub.s32 %s21, 1
        %s284 = sand.u32 %s34, 1
        %s285 = scalar_lea.sflag [#allocation3], %s284
        %s286 = sand.u32 %s34, 1
        %s287 = smul.addr %s286, 64
        %s288 = scalar_lea.vmem [#allocation2], %s287
        // Predicated region
        $region45: #{hat_layer.2} parent=43 // pred_check
          %p289 = pneg %p47
        $region46: #{hat_layer.2} parent=43 // pred_check_branch
          %291 = sbr.rel (%p289) target = $region48
        $region47: #{hat_layer.2} parent=43 // pred_region
          %292 = dma.done %s285, 1024
        $region48: #{hat_layer.2} parent=43 // pred_fallthru
          _
        // Predicated region
        $region49: #{hat_layer.2} parent=43 // pred_check
          %p293 = pneg %p68
        $region50: #{hat_layer.2} parent=43 // pred_check_branch
          %295 = sbr.rel (%p293) target = $region52
        $region51: #{hat_layer.2} parent=43 // pred_region
          %296 = dma.done [#allocation6], 256
        $region52: #{hat_layer.2} parent=43 // pred_fallthru
          _
        // Predicated region
        $region53: #{hat_layer.2} parent=43 // pred_check
          %p297 = pneg %p89
        $region54: #{hat_layer.2} parent=43 // pred_check_branch
          %299 = sbr.rel (%p297) target = $region56
        $region55: #{hat_layer.2} parent=43 // pred_region
          %300 = dma.done [#allocation6], 16
        $region56: #{hat_layer.2} parent=43 // pred_fallthru
          _
        // Predicated region
        $region57: #{hat_layer.2} parent=43 // pred_check
          %p301 = pneg %p110
        $region58: #{hat_layer.2} parent=43 // pred_check_branch
          %303 = sbr.rel (%p301) target = $region60
        $region59: #{hat_layer.2} parent=43 // pred_region
          %304 = dma.done [#allocation9], 16
        $region60: #{hat_layer.2} parent=43 // pred_fallthru
          _
        // Predicated region
        $region61: #{hat_layer.2} parent=43 // pred_check
          %p305 = pneg %p131
        $region62: #{hat_layer.2} parent=43 // pred_check_branch
          %307 = sbr.rel (%p305) target = $region64
        $region63: #{hat_layer.2} parent=43 // pred_region
          %308 = dma.done [#allocation9], 16
        $region64: #{hat_layer.2} parent=43 // pred_fallthru
          _
        // Predicated region
        $region65: #{hat_layer.2} parent=43 // pred_check
          %p309 = pneg %p152
        $region66: #{hat_layer.2} parent=43 // pred_check_branch
          %311 = sbr.rel (%p309) target = $region68
        $region67: #{hat_layer.2} parent=43 // pred_region
          %312 = dma.done [#allocation12], 256
        $region68: #{hat_layer.2} parent=43 // pred_fallthru
          _
        %s313 = sand.u32 %s34, 1
        %s314 = scalar_lea.sflag [#allocation3], %s313
        %s315 = sand.u32 %s34, 1
        %s316 = smul.addr %s315, 64
        %s317 = scalar_lea.vmem [#allocation2], %s316
        %p318 = pneg %p47
        %p319 = pneg %p44
        %p320 = pneg %p68
        %p321 = pneg %p65
        %p322 = pneg %p89
        %p323 = pneg %p86
        %p324 = pneg %p110
        %p325 = pneg %p107
        %p326 = pneg %p131
        %p327 = pneg %p128
        %p328 = pneg %p152
        %p329 = pneg %p149
        %p330 = pneg %p178
        %p331 = pneg %p175
        %s332 = sand.u32 %s165, 1
        %s333 = scalar_lea.sflag [#allocation4], %s332
        %s334 = sand.u32 %s165, 1
        %s335 = smul.addr %s334, 64
        %s336 = scalar_lea.vmem [#allocation13], %s335
        %s337 = smul.u32 8, %s26
        %s338 = smul.u32 8, %s26
        %v339 = vld [vmem:[%s288] sm:$0xff]
        %v340 = vld [vmem:[%s288 + $0x8] sm:$0xff]
        %v341 = vld [vmem:[%s288 + $0x10] sm:$0xff]
        %v342 = vld [vmem:[%s288 + $0x18] sm:$0xff]
        %v343 = vld [vmem:[%s288 + $0x20] sm:$0xff]
        %v344 = vld [vmem:[%s288 + $0x28] sm:$0xff]
        %v345 = vld [vmem:[%s288 + $0x30] sm:$0xff]
        %v346 = vld [vmem:[%s288 + $0x38] sm:$0xff]
        %v347 = vld [vmem:[#allocation5] sm:$0xff]
        %v348 = vld [vmem:[#allocation5 + $0x8] sm:$0xf]
        %v349 = vld [vmem:[#allocation7] sm:$0x1]
        %v350 = vld [vmem:[#allocation8] sm:$0x1]
        %v351 = vld [vmem:[#allocation10] sm:$0x1]
        %v352 = vlaneseq
        %v353 = vand.u32 %v352, 127
        %vm354 = vcmp.gt.s32.totalorder %v353, 0
        %v355 = vmax.f32 %v339, 1.0000001
        %v356 = vmax.f32 %v340, 1.0000001
        %v357 = vmax.f32 %v341, 1.0000001
        %v358 = vmax.f32 %v342, 1.0000001
        %v359 = vmax.f32 %v343, 1.0000001
        %v360 = vmax.f32 %v344, 1.0000001
        %v361 = vmax.f32 %v345, 1.0000001
        %v362 = vmax.f32 %v346, 1.0000001
        %v363 = vsel %vm354, 1, 0
        %vm364 = vcmp.eq.s32.totalorder %v363, 1
        %v365 = vsel %vm364, %v339, 0.0
        %v366 = vsel %vm364, %v340, 0.0
        %v367 = vsel %vm364, %v341, 0.0
        %v368 = vsel %vm364, %v342, 0.0
        %v369 = vsel %vm364, %v343, 0.0
        %v370 = vsel %vm364, %v344, 0.0
        %v371 = vsel %vm364, %v345, 0.0
        %v372 = vsel %vm364, %v346, 0.0
        %v373 = vmul.f32 %v365, %v365
        %v374 = vmul.f32 %v366, %v366
        %v375 = vmul.f32 %v367, %v367
        %v376 = vmul.f32 %v368, %v368
        %v377 = vmul.f32 %v369, %v369
        %v378 = vmul.f32 %v370, %v370
        %v379 = vmul.f32 %v371, %v371
        %v380 = vmul.f32 %v372, %v372
        %vm381 = vcmask 97280
        %v382 = vsel %vm381, %v373, 0.0
        %383 = vadd.xlane.f32.xlu0 %v382
        %v384 = vpop.xlane.xlu0 %383
        %v385 = vsel %vm381, %v374, 0.0
        %386 = vadd.xlane.f32.xlu0 %v385
        %v387 = vpop.xlane.xlu0 %386
        %v388 = vsel %vm381, %v375, 0.0
        %389 = vadd.xlane.f32.xlu0 %v388
        %v390 = vpop.xlane.xlu0 %389
        %v391 = vsel %vm381, %v376, 0.0
        %392 = vadd.xlane.f32.xlu0 %v391
        %v393 = vpop.xlane.xlu0 %392
        %v394 = vsel %vm381, %v377, 0.0
        %395 = vadd.xlane.f32.xlu0 %v394
        %v396 = vpop.xlane.xlu0 %395
        %v397 = vsel %vm381, %v378, 0.0
        %398 = vadd.xlane.f32.xlu0 %v397
        %v399 = vpop.xlane.xlu0 %398
        %v400 = vsel %vm381, %v379, 0.0
        %401 = vadd.xlane.f32.xlu0 %v400
        %v402 = vpop.xlane.xlu0 %401
        %v403 = vsel %vm381, %v380, 0.0
        %404 = vadd.xlane.f32.xlu0 %v403
        %v405 = vpop.xlane.xlu0 %404
        %v406 = vmax.f32 %v384, 1e-15
        %v407 = vmax.f32 %v387, 1e-15
        %v408 = vmax.f32 %v390, 1e-15
        %v409 = vmax.f32 %v393, 1e-15
        %v410 = vmax.f32 %v396, 1e-15
        %v411 = vmax.f32 %v399, 1e-15
        %v412 = vmax.f32 %v402, 1e-15
        %v413 = vmax.f32 %v405, 1e-15
        %v414 = vrcp.pop %v355
        %v415 = vmul.f32 1.0, %v414
        %v416 = vrcp.pop %v356
        %v417 = vmul.f32 1.0, %v416
        %v418 = vrcp.pop %v357
        %v419 = vmul.f32 1.0, %v418
        %v420 = vrcp.pop %v358
        %v421 = vmul.f32 1.0, %v420
        %v422 = vrcp.pop %v359
        %v423 = vmul.f32 1.0, %v422
        %v424 = vrcp.pop %v360
        %v425 = vmul.f32 1.0, %v424
        %v426 = vrcp.pop %v361
        %v427 = vmul.f32 1.0, %v426
        %v428 = vrcp.pop %v362
        %v429 = vmul.f32 1.0, %v428
        %v430 = vmul.f32 %v415, %v415
        %v431 = vmul.f32 %v417, %v417
        %v432 = vmul.f32 %v419, %v419
        %v433 = vmul.f32 %v421, %v421
        %v434 = vmul.f32 %v423, %v423
        %v435 = vmul.f32 %v425, %v425
        %v436 = vmul.f32 %v427, %v427
        %v437 = vmul.f32 %v429, %v429
        %v438 = vsub.f32 1.0, %v430
        %v439 = vsub.f32 1.0, %v431
        %v440 = vsub.f32 1.0, %v432
        %v441 = vsub.f32 1.0, %v433
        %v442 = vsub.f32 1.0, %v434
        %v443 = vsub.f32 1.0, %v435
        %v444 = vsub.f32 1.0, %v436
        %v445 = vsub.f32 1.0, %v437
        %v446 = vmax.f32 %v438, 0.0
        %v447 = vmax.f32 %v439, 0.0
        %v448 = vmax.f32 %v440, 0.0
        %v449 = vmax.f32 %v441, 0.0
        %v450 = vmax.f32 %v442, 0.0
        %v451 = vmax.f32 %v443, 0.0
        %v452 = vmax.f32 %v444, 0.0
        %v453 = vmax.f32 %v445, 0.0
        %v454 = vrsqrt.pop %v446
        %v455 = vmul.f32 %v446, %v454
        %vm456 = vcmp.eq.f32.partialorder %v446, inf
        %v457 = vsel %vm456, %v446, %v455
        %vm458 = vcmp.eq.f32.partialorder %v446, 0.0
        %v459 = vand.u32 %v446, 2147483648
        %v460 = vsel %vm458, %v459, %v457
        %v461 = vrsqrt.pop %v447
        %v462 = vmul.f32 %v447, %v461
        %vm463 = vcmp.eq.f32.partialorder %v447, inf
        %v464 = vsel %vm463, %v447, %v462
        %vm465 = vcmp.eq.f32.partialorder %v447, 0.0
        %v466 = vand.u32 %v447, 2147483648
        %v467 = vsel %vm465, %v466, %v464
        %v468 = vrsqrt.pop %v448
        %v469 = vmul.f32 %v448, %v468
        %vm470 = vcmp.eq.f32.partialorder %v448, inf
        %v471 = vsel %vm470, %v448, %v469
        %vm472 = vcmp.eq.f32.partialorder %v448, 0.0
        %v473 = vand.u32 %v448, 2147483648
        %v474 = vsel %vm472, %v473, %v471
        %v475 = vrsqrt.pop %v449
        %v476 = vmul.f32 %v449, %v475
        %vm477 = vcmp.eq.f32.partialorder %v449, inf
        %v478 = vsel %vm477, %v449, %v476
        %vm479 = vcmp.eq.f32.partialorder %v449, 0.0
        %v480 = vand.u32 %v449, 2147483648
        %v481 = vsel %vm479, %v480, %v478
        %v482 = vrsqrt.pop %v450
        %v483 = vmul.f32 %v450, %v482
        %vm484 = vcmp.eq.f32.partialorder %v450, inf
        %v485 = vsel %vm484, %v450, %v483
        %vm486 = vcmp.eq.f32.partialorder %v450, 0.0
        %v487 = vand.u32 %v450, 2147483648
        %v488 = vsel %vm486, %v487, %v485
        %v489 = vrsqrt.pop %v451
        %v490 = vmul.f32 %v451, %v489
        %vm491 = vcmp.eq.f32.partialorder %v451, inf
        %v492 = vsel %vm491, %v451, %v490
        %vm493 = vcmp.eq.f32.partialorder %v451, 0.0
        %v494 = vand.u32 %v451, 2147483648
        %v495 = vsel %vm493, %v494, %v492
        %v496 = vrsqrt.pop %v452
        %v497 = vmul.f32 %v452, %v496
        %vm498 = vcmp.eq.f32.partialorder %v452, inf
        %v499 = vsel %vm498, %v452, %v497
        %vm500 = vcmp.eq.f32.partialorder %v452, 0.0
        %v501 = vand.u32 %v452, 2147483648
        %v502 = vsel %vm500, %v501, %v499
        %v503 = vrsqrt.pop %v453
        %v504 = vmul.f32 %v453, %v503
        %vm505 = vcmp.eq.f32.partialorder %v453, inf
        %v506 = vsel %vm505, %v453, %v504
        %vm507 = vcmp.eq.f32.partialorder %v453, 0.0
        %v508 = vand.u32 %v453, 2147483648
        %v509 = vsel %vm507, %v508, %v506
        %v510 = vadd.f32 %v460, 1.0
        %v511 = vadd.f32 %v467, 1.0
        %v512 = vadd.f32 %v474, 1.0
        %v513 = vadd.f32 %v481, 1.0
        %v514 = vadd.f32 %v488, 1.0
        %v515 = vadd.f32 %v495, 1.0
        %v516 = vadd.f32 %v502, 1.0
        %v517 = vadd.f32 %v509, 1.0
        %v518 = vmul.f32 %v355, %v510
        %v519 = vmul.f32 %v356, %v511
        %v520 = vmul.f32 %v357, %v512
        %v521 = vmul.f32 %v358, %v513
        %v522 = vmul.f32 %v359, %v514
        %v523 = vmul.f32 %v360, %v515
        %v524 = vmul.f32 %v361, %v516
        %v525 = vmul.f32 %v362, %v517
        %v526 = vlog2.pop %v518
        %v527 = vmul.f32 %v526, 0.6931472
        %v528 = vlog2.pop %v519
        %v529 = vmul.f32 %v528, 0.6931472
        %v530 = vlog2.pop %v520
        %v531 = vmul.f32 %v530, 0.6931472
        %v532 = vlog2.pop %v521
        %v533 = vmul.f32 %v532, 0.6931472
        %v534 = vlog2.pop %v522
        %v535 = vmul.f32 %v534, 0.6931472
        %v536 = vlog2.pop %v523
        %v537 = vmul.f32 %v536, 0.6931472
        %v538 = vlog2.pop %v524
        %v539 = vmul.f32 %v538, 0.6931472
        %v540 = vlog2.pop %v525
        %v541 = vmul.f32 %v540, 0.6931472
        %v542 = vrsqrt.pop %v406
        %v543 = vrsqrt.pop %v407
        %v544 = vrsqrt.pop %v408
        %v545 = vrsqrt.pop %v409
        %v546 = vrsqrt.pop %v410
        %v547 = vrsqrt.pop %v411
        %v548 = vrsqrt.pop %v412
        %v549 = vrsqrt.pop %v413
        %v550 = vmul.f32 %v527, %v542
        %v551 = vmul.f32 %v529, %v543
        %v552 = vmul.f32 %v531, %v544
        %v553 = vmul.f32 %v533, %v545
        %v554 = vmul.f32 %v535, %v546
        %v555 = vmul.f32 %v537, %v547
        %v556 = vmul.f32 %v539, %v548
        %v557 = vmul.f32 %v541, %v549
        %559 = vset.pattern.permute.xlu0 0
        %560 = vperm.xlu0 %559, %v550
        %v561 = vpop.permute.xlu0 %560
        %564 = vset.pattern.permute.xlu0 0
        %565 = vperm.xlu0 %564, %v551
        %v566 = vpop.permute.xlu0 %565
        %569 = vset.pattern.permute.xlu0 0
        %570 = vperm.xlu0 %569, %v552
        %v571 = vpop.permute.xlu0 %570
        %574 = vset.pattern.permute.xlu0 0
        %575 = vperm.xlu0 %574, %v553
        %v576 = vpop.permute.xlu0 %575
        %579 = vset.pattern.permute.xlu0 0
        %580 = vperm.xlu0 %579, %v554
        %v581 = vpop.permute.xlu0 %580
        %584 = vset.pattern.permute.xlu0 0
        %585 = vperm.xlu0 %584, %v555
        %v586 = vpop.permute.xlu0 %585
        %589 = vset.pattern.permute.xlu0 0
        %590 = vperm.xlu0 %589, %v556
        %v591 = vpop.permute.xlu0 %590
        %594 = vset.pattern.permute.xlu0 0
        %595 = vperm.xlu0 %594, %v557
        %v596 = vpop.permute.xlu0 %595
        %v598 = vmul.f32 %v561, %v365
        %v599 = vmul.f32 %v566, %v366
        %v600 = vmul.f32 %v571, %v367
        %v601 = vmul.f32 %v576, %v368
        %v602 = vmul.f32 %v581, %v369
        %v603 = vmul.f32 %v586, %v370
        %v604 = vmul.f32 %v591, %v371
        %v605 = vmul.f32 %v596, %v372
        %v607 = vsel %vm381, %v598, 0
        %v610 = vsel %vm381, %v599, 0
        %v613 = vsel %vm381, %v600, 0
        %v616 = vsel %vm381, %v601, 0
        %v619 = vsel %vm381, %v602, 0
        %v622 = vsel %vm381, %v603, 0
        %v625 = vsel %vm381, %v604, 0
        %v628 = vsel %vm381, %v605, 0
        %vm630 = vcmask 1043456
        %v632 = vsel %vm630, %v348, 0
        %634 = vmatprep.subr.mxu0 0.0
        %635 = vmatpush1.msra.mxu0 %v347
        %636 = vmatprep.subr.mxu0 0.0
        %637 = vmatpush1.msra.mxu0 %v632
        %638 = vmatprep.subr.mxu0 0.0
        %639 = vmatpush1.msra.mxu0 0.0
        %640 = vmatprep.subr.mxu0 0.0
        %641 = vmatpush1.msra.mxu0 0.0
        %642 = vmatprep.subr.mxu0 0.0
        %643 = vmatpush1.msra.mxu0 0.0
        %644 = vmatprep.subr.mxu0 0.0
        %645 = vmatpush1.msra.mxu0 0.0
        %646 = vmatprep.subr.mxu0 0.0
        %647 = vmatpush1.msra.mxu0 0.0
        %648 = vmatprep.subr.mxu0 0.0
        %649 = vmatpush1.msra.mxu0 0.0
        %650 = vmatprep.subr.mxu0 0.0
        %651 = vmatpush1.msra.mxu0 0.0
        %652 = vmatprep.subr.mxu0 0.0
        %653 = vmatpush1.msra.mxu0 0.0
        %654 = vmatprep.subr.mxu0 0.0
        %655 = vmatpush1.msra.mxu0 0.0
        %656 = vmatprep.subr.mxu0 0.0
        %657 = vmatpush1.msra.mxu0 0.0
        %658 = vmatprep.subr.mxu0 0.0
        %659 = vmatpush1.msra.mxu0 0.0
        %660 = vmatprep.subr.mxu0 0.0
        %661 = vmatpush1.msra.mxu0 0.0
        %662 = vmatprep.subr.mxu0 0.0
        %663 = vmatpush1.msra.mxu0 0.0
        %664 = vmatprep.subr.mxu0 0.0
        %665 = vmatpush1.msra.mxu0 0.0
        %666 = vmatprep.subr.mxu0 0.0
        %667 = vmatpush1.msra.mxu0 0.0
        %668 = vmatprep.subr.mxu0 0.0
        %669 = vmatpush1.msra.mxu0 0.0
        %670 = vmatprep.subr.mxu0 0.0
        %671 = vmatpush1.msra.mxu0 0.0
        %672 = vmatprep.subr.mxu0 0.0
        %673 = vmatpush1.msra.mxu0 0.0
        %674 = vmatprep.subr.mxu0 0.0
        %675 = vmatpush1.msra.mxu0 0.0
        %676 = vmatprep.subr.mxu0 0.0
        %677 = vmatpush1.msra.mxu0 0.0
        %678 = vmatprep.subr.mxu0 0.0
        %679 = vmatpush1.msra.mxu0 0.0
        %680 = vmatprep.subr.mxu0 0.0
        %681 = vmatpush1.msra.mxu0 0.0
        %682 = vmatprep.subr.mxu0 0.0
        %683 = vmatpush1.msra.mxu0 0.0
        %684 = vmatprep.subr.mxu0 0.0
        %685 = vmatpush1.msra.mxu0 0.0
        %686 = vmatprep.subr.mxu0 0.0
        %687 = vmatpush1.msra.mxu0 0.0
        %688 = vmatprep.subr.mxu0 0.0
        %689 = vmatpush1.msra.mxu0 0.0
        %690 = vmatprep.subr.mxu0 0.0
        %691 = vmatpush1.msra.mxu0 0.0
        %692 = vmatprep.subr.mxu0 0.0
        %693 = vmatpush1.msra.mxu0 0.0
        %694 = vmatprep.subr.mxu0 0.0
        %695 = vmatpush1.msra.mxu0 0.0
        %696 = vmatprep.subr.mxu0 0.0
        %697 = vmatpush1.msra.mxu0 0.0
        %698 = vmatprep.mubr.f32.mxu0 0.0
        %699 = vmatmul.mubr.f32.gmra.mrb[0].mxu0 %v607
        %v700 = vpop.f32.mrb[0].mxu0
        %v701 = vadd.f32 0.0, %v700
        %v702 = vpop.f32.mrb[0].mxu0
        %703 = vmatprep.mubr.f32.mxu0 0.0
        %704 = vmatmul.mubr.f32.gmra.mrb[0].mxu0 %v610
        %v705 = vpop.f32.mrb[0].mxu0
        %v706 = vadd.f32 0.0, %v705
        %v707 = vpop.f32.mrb[0].mxu0
        %708 = vmatprep.mubr.f32.mxu0 0.0
        %709 = vmatmul.mubr.f32.gmra.mrb[0].mxu0 %v613
        %v710 = vpop.f32.mrb[0].mxu0
        %v711 = vadd.f32 0.0, %v710
        %v712 = vpop.f32.mrb[0].mxu0
        %713 = vmatprep.mubr.f32.mxu0 0.0
        %714 = vmatmul.mubr.f32.gmra.mrb[0].mxu0 %v616
        %v715 = vpop.f32.mrb[0].mxu0
        %v716 = vadd.f32 0.0, %v715
        %v717 = vpop.f32.mrb[0].mxu0
        %718 = vmatprep.mubr.f32.mxu0 0.0
        %719 = vmatmul.mubr.f32.gmra.mrb[0].mxu0 %v619
        %v720 = vpop.f32.mrb[0].mxu0
        %v721 = vadd.f32 0.0, %v720
        %v722 = vpop.f32.mrb[0].mxu0
        %723 = vmatprep.mubr.f32.mxu0 0.0
        %724 = vmatmul.mubr.f32.gmra.mrb[0].mxu0 %v622
        %v725 = vpop.f32.mrb[0].mxu0
        %v726 = vadd.f32 0.0, %v725
        %v727 = vpop.f32.mrb[0].mxu0
        %728 = vmatprep.mubr.f32.mxu0 0.0
        %729 = vmatmul.mubr.f32.gmra.mrb[0].mxu0 %v625
        %v730 = vpop.f32.mrb[0].mxu0
        %v731 = vadd.f32 0.0, %v730
        %v732 = vpop.f32.mrb[0].mxu0
        %733 = vmatprep.mubr.f32.mxu0 0.0
        %734 = vmatmul.mubr.f32.gmra.mrb[0].mxu0 %v628
        %v735 = vpop.f32.mrb[0].mxu0
        %v736 = vadd.f32 0.0, %v735
        %v737 = vpop.f32.mrb[0].mxu0
        %738 = vdwg.mxu0
        %v739 = vsel %vm364, %v701, 0.0
        %v740 = vsel %vm364, %v706, 0.0
        %v741 = vsel %vm364, %v711, 0.0
        %v742 = vsel %vm364, %v716, 0.0
        %v743 = vsel %vm364, %v721, 0.0
        %v744 = vsel %vm364, %v726, 0.0
        %v745 = vsel %vm364, %v731, 0.0
        %v746 = vsel %vm364, %v736, 0.0
        %v747 = vmul.f32 %v739, %v739
        %v748 = vmul.f32 %v740, %v740
        %v749 = vmul.f32 %v741, %v741
        %v750 = vmul.f32 %v742, %v742
        %v751 = vmul.f32 %v743, %v743
        %v752 = vmul.f32 %v744, %v744
        %v753 = vmul.f32 %v745, %v745
        %v754 = vmul.f32 %v746, %v746
        %vm755 = vcmask 130048
        %v756 = vsel %vm755, %v747, 0.0
        %757 = vadd.xlane.f32.xlu0 %v756
        %v758 = vpop.xlane.xlu0 %757
        %v759 = vsel %vm755, %v748, 0.0
        %760 = vadd.xlane.f32.xlu0 %v759
        %v761 = vpop.xlane.xlu0 %760
        %v762 = vsel %vm755, %v749, 0.0
        %763 = vadd.xlane.f32.xlu0 %v762
        %v764 = vpop.xlane.xlu0 %763
        %v765 = vsel %vm755, %v750, 0.0
        %766 = vadd.xlane.f32.xlu0 %v765
        %v767 = vpop.xlane.xlu0 %766
        %v768 = vsel %vm755, %v751, 0.0
        %769 = vadd.xlane.f32.xlu0 %v768
        %v770 = vpop.xlane.xlu0 %769
        %v771 = vsel %vm755, %v752, 0.0
        %772 = vadd.xlane.f32.xlu0 %v771
        %v773 = vpop.xlane.xlu0 %772
        %v774 = vsel %vm755, %v753, 0.0
        %775 = vadd.xlane.f32.xlu0 %v774
        %v776 = vpop.xlane.xlu0 %775
        %v777 = vsel %vm755, %v754, 0.0
        %778 = vadd.xlane.f32.xlu0 %v777
        %v779 = vpop.xlane.xlu0 %778
        %v780 = vmax.f32 %v758, 1e-15
        %v781 = vmax.f32 %v761, 1e-15
        %v782 = vmax.f32 %v764, 1e-15
        %v783 = vmax.f32 %v767, 1e-15
        %v784 = vmax.f32 %v770, 1e-15
        %v785 = vmax.f32 %v773, 1e-15
        %v786 = vmax.f32 %v776, 1e-15
        %v787 = vmax.f32 %v779, 1e-15
        %v788 = vrsqrt.pop %v780
        %v789 = vmul.f32 %v780, %v788
        %vm790 = vcmp.eq.f32.partialorder %v780, inf
        %v791 = vsel %vm790, %v780, %v789
        %vm792 = vcmp.eq.f32.partialorder %v780, 0.0
        %v793 = vand.u32 %v780, 2147483648
        %v794 = vsel %vm792, %v793, %v791
        %v795 = vrsqrt.pop %v781
        %v796 = vmul.f32 %v781, %v795
        %vm797 = vcmp.eq.f32.partialorder %v781, inf
        %v798 = vsel %vm797, %v781, %v796
        %vm799 = vcmp.eq.f32.partialorder %v781, 0.0
        %v800 = vand.u32 %v781, 2147483648
        %v801 = vsel %vm799, %v800, %v798
        %v802 = vrsqrt.pop %v782
        %v803 = vmul.f32 %v782, %v802
        %vm804 = vcmp.eq.f32.partialorder %v782, inf
        %v805 = vsel %vm804, %v782, %v803
        %vm806 = vcmp.eq.f32.partialorder %v782, 0.0
        %v807 = vand.u32 %v782, 2147483648
        %v808 = vsel %vm806, %v807, %v805
        %v809 = vrsqrt.pop %v783
        %v810 = vmul.f32 %v783, %v809
        %vm811 = vcmp.eq.f32.partialorder %v783, inf
        %v812 = vsel %vm811, %v783, %v810
        %vm813 = vcmp.eq.f32.partialorder %v783, 0.0
        %v814 = vand.u32 %v783, 2147483648
        %v815 = vsel %vm813, %v814, %v812
        %v816 = vrsqrt.pop %v784
        %v817 = vmul.f32 %v784, %v816
        %vm818 = vcmp.eq.f32.partialorder %v784, inf
        %v819 = vsel %vm818, %v784, %v817
        %vm820 = vcmp.eq.f32.partialorder %v784, 0.0
        %v821 = vand.u32 %v784, 2147483648
        %v822 = vsel %vm820, %v821, %v819
        %v823 = vrsqrt.pop %v785
        %v824 = vmul.f32 %v785, %v823
        %vm825 = vcmp.eq.f32.partialorder %v785, inf
        %v826 = vsel %vm825, %v785, %v824
        %vm827 = vcmp.eq.f32.partialorder %v785, 0.0
        %v828 = vand.u32 %v785, 2147483648
        %v829 = vsel %vm827, %v828, %v826
        %v830 = vrsqrt.pop %v786
        %v831 = vmul.f32 %v786, %v830
        %vm832 = vcmp.eq.f32.partialorder %v786, inf
        %v833 = vsel %vm832, %v786, %v831
        %vm834 = vcmp.eq.f32.partialorder %v786, 0.0
        %v835 = vand.u32 %v786, 2147483648
        %v836 = vsel %vm834, %v835, %v833
        %v837 = vrsqrt.pop %v787
        %v838 = vmul.f32 %v787, %v837
        %vm839 = vcmp.eq.f32.partialorder %v787, inf
        %v840 = vsel %vm839, %v787, %v838
        %vm841 = vcmp.eq.f32.partialorder %v787, 0.0
        %v842 = vand.u32 %v787, 2147483648
        %v843 = vsel %vm841, %v842, %v840
        %v844 = vmin.f32 %v794, 50.0
        %v845 = vmin.f32 %v801, 50.0
        %v846 = vmin.f32 %v808, 50.0
        %v847 = vmin.f32 %v815, 50.0
        %v848 = vmin.f32 %v822, 50.0
        %v849 = vmin.f32 %v829, 50.0
        %v850 = vmin.f32 %v836, 50.0
        %v851 = vmin.f32 %v843, 50.0
        %v852 = vmul.f32 %v844, 1.442695
        %v853 = vpow.pop %v852
        %v854 = vmul.f32 %v845, 1.442695
        %v855 = vpow.pop %v854
        %v856 = vmul.f32 %v846, 1.442695
        %v857 = vpow.pop %v856
        %v858 = vmul.f32 %v847, 1.442695
        %v859 = vpow.pop %v858
        %v860 = vmul.f32 %v848, 1.442695
        %v861 = vpow.pop %v860
        %v862 = vmul.f32 %v849, 1.442695
        %v863 = vpow.pop %v862
        %v864 = vmul.f32 %v850, 1.442695
        %v865 = vpow.pop %v864
        %v866 = vmul.f32 %v851, 1.442695
        %v867 = vpow.pop %v866
        %v868 = vsub.f32 0.0, %v844
        %v869 = vsub.f32 0.0, %v845
        %v870 = vsub.f32 0.0, %v846
        %v871 = vsub.f32 0.0, %v847
        %v872 = vsub.f32 0.0, %v848
        %v873 = vsub.f32 0.0, %v849
        %v874 = vsub.f32 0.0, %v850
        %v875 = vsub.f32 0.0, %v851
        %v876 = vmul.f32 %v868, 1.442695
        %v877 = vpow.pop %v876
        %v878 = vmul.f32 %v869, 1.442695
        %v879 = vpow.pop %v878
        %v880 = vmul.f32 %v870, 1.442695
        %v881 = vpow.pop %v880
        %v882 = vmul.f32 %v871, 1.442695
        %v883 = vpow.pop %v882
        %v884 = vmul.f32 %v872, 1.442695
        %v885 = vpow.pop %v884
        %v886 = vmul.f32 %v873, 1.442695
        %v887 = vpow.pop %v886
        %v888 = vmul.f32 %v874, 1.442695
        %v889 = vpow.pop %v888
        %v890 = vmul.f32 %v875, 1.442695
        %v891 = vpow.pop %v890
        %v892 = vadd.f32 %v853, %v877
        %v893 = vadd.f32 %v855, %v879
        %v894 = vadd.f32 %v857, %v881
        %v895 = vadd.f32 %v859, %v883
        %v896 = vadd.f32 %v861, %v885
        %v897 = vadd.f32 %v863, %v887
        %v898 = vadd.f32 %v865, %v889
        %v899 = vadd.f32 %v867, %v891
        %v900 = vmul.f32 %v892, 0.5
        %v901 = vmul.f32 %v893, 0.5
        %v902 = vmul.f32 %v894, 0.5
        %v903 = vmul.f32 %v895, 0.5
        %v904 = vmul.f32 %v896, 0.5
        %v905 = vmul.f32 %v897, 0.5
        %v906 = vmul.f32 %v898, 0.5
        %v907 = vmul.f32 %v899, 0.5
        %v908 = vsub.f32 %v853, %v877
        %v909 = vsub.f32 %v855, %v879
        %v910 = vsub.f32 %v857, %v881
        %v911 = vsub.f32 %v859, %v883
        %v912 = vsub.f32 %v861, %v885
        %v913 = vsub.f32 %v863, %v887
        %v914 = vsub.f32 %v865, %v889
        %v915 = vsub.f32 %v867, %v891
        %v916 = vmul.f32 %v908, 0.5
        %v917 = vmul.f32 %v909, 0.5
        %v918 = vmul.f32 %v910, 0.5
        %v919 = vmul.f32 %v911, 0.5
        %v920 = vmul.f32 %v912, 0.5
        %v921 = vmul.f32 %v913, 0.5
        %v922 = vmul.f32 %v914, 0.5
        %v923 = vmul.f32 %v915, 0.5
        %v924 = vrsqrt.pop %v780
        %v925 = vrsqrt.pop %v781
        %v926 = vrsqrt.pop %v782
        %v927 = vrsqrt.pop %v783
        %v928 = vrsqrt.pop %v784
        %v929 = vrsqrt.pop %v785
        %v930 = vrsqrt.pop %v786
        %v931 = vrsqrt.pop %v787
        %v932 = vmul.f32 %v916, %v924
        %v933 = vmul.f32 %v917, %v925
        %v934 = vmul.f32 %v918, %v926
        %v935 = vmul.f32 %v919, %v927
        %v936 = vmul.f32 %v920, %v928
        %v937 = vmul.f32 %v921, %v929
        %v938 = vmul.f32 %v922, %v930
        %v939 = vmul.f32 %v923, %v931
        %v940 = vmul.f32 %v932, %v739
        %v941 = vmul.f32 %v933, %v740
        %v942 = vmul.f32 %v934, %v741
        %v943 = vmul.f32 %v935, %v742
        %v944 = vmul.f32 %v936, %v743
        %v945 = vmul.f32 %v937, %v744
        %v946 = vmul.f32 %v938, %v745
        %v947 = vmul.f32 %v939, %v746
        %v948 = vsel %vm364, %v940, %v900
        %v949 = vsel %vm364, %v941, %v901
        %v950 = vsel %vm364, %v942, %v902
        %v951 = vsel %vm364, %v943, %v903
        %v952 = vsel %vm364, %v944, %v904
        %v953 = vsel %vm364, %v945, %v905
        %v954 = vsel %vm364, %v946, %v906
        %v955 = vsel %vm364, %v947, %v907
        %v956 = vsel %vm354, %v349, 0.0
        %v957 = vlaneseq
        %v958 = vshrl.u32 %v957, 7
        %v959 = vsub.s32 0, %v958
        %v960 = vrot.slane %v956, %v959
        %v961 = vmul.f32 %v948, %v960
        %v962 = vmul.f32 %v949, %v960
        %v963 = vmul.f32 %v950, %v960
        %v964 = vmul.f32 %v951, %v960
        %v965 = vmul.f32 %v952, %v960
        %v966 = vmul.f32 %v953, %v960
        %v967 = vmul.f32 %v954, %v960
        %v968 = vmul.f32 %v955, %v960
        %v969 = vsub.f32 0.0, %v961
        %v970 = vsub.f32 0.0, %v962
        %v971 = vsub.f32 0.0, %v963
        %v972 = vsub.f32 0.0, %v964
        %v973 = vsub.f32 0.0, %v965
        %v974 = vsub.f32 0.0, %v966
        %v975 = vsub.f32 0.0, %v967
        %v976 = vsub.f32 0.0, %v968
        %v977 = vsel %vm364, %v961, %v969
        %v978 = vsel %vm364, %v962, %v970
        %v979 = vsel %vm364, %v963, %v971
        %v980 = vsel %vm364, %v964, %v972
        %v981 = vsel %vm364, %v965, %v973
        %v982 = vsel %vm364, %v966, %v974
        %v983 = vsel %vm364, %v967, %v975
        %v984 = vsel %vm364, %v968, %v976
        %v985 = vsel %vm755, %v977, 0.0
        %986 = vadd.xlane.f32.xlu0 %v985
        %v987 = vpop.xlane.xlu0 %986
        %v988 = vsel %vm755, %v978, 0.0
        %989 = vadd.xlane.f32.xlu0 %v988
        %v990 = vpop.xlane.xlu0 %989
        %v991 = vsel %vm755, %v979, 0.0
        %992 = vadd.xlane.f32.xlu0 %v991
        %v993 = vpop.xlane.xlu0 %992
        %v994 = vsel %vm755, %v980, 0.0
        %995 = vadd.xlane.f32.xlu0 %v994
        %v996 = vpop.xlane.xlu0 %995
        %v997 = vsel %vm755, %v981, 0.0
        %998 = vadd.xlane.f32.xlu0 %v997
        %v999 = vpop.xlane.xlu0 %998
        %v1000 = vsel %vm755, %v982, 0.0
        %1001 = vadd.xlane.f32.xlu0 %v1000
        %v1002 = vpop.xlane.xlu0 %1001
        %v1003 = vsel %vm755, %v983, 0.0
        %1004 = vadd.xlane.f32.xlu0 %v1003
        %v1005 = vpop.xlane.xlu0 %1004
        %v1006 = vsel %vm755, %v984, 0.0
        %1007 = vadd.xlane.f32.xlu0 %v1006
        %v1008 = vpop.xlane.xlu0 %1007
        %v1009 = vadd.f32 %v948, 1.0
        %v1010 = vadd.f32 %v949, 1.0
        %v1011 = vadd.f32 %v950, 1.0
        %v1012 = vadd.f32 %v951, 1.0
        %v1013 = vadd.f32 %v952, 1.0
        %v1014 = vadd.f32 %v953, 1.0
        %v1015 = vadd.f32 %v954, 1.0
        %v1016 = vadd.f32 %v955, 1.0
        %v1017 = vsel %vm354, 0.0, 1.0
        %v1018 = vadd.f32 %v948, %v1017
        %v1019 = vadd.f32 %v949, %v1017
        %v1020 = vadd.f32 %v950, %v1017
        %v1021 = vadd.f32 %v951, %v1017
        %v1022 = vadd.f32 %v952, %v1017
        %v1023 = vadd.f32 %v953, %v1017
        %v1024 = vadd.f32 %v954, %v1017
        %v1025 = vadd.f32 %v955, %v1017
        %v1026 = vrcp.pop %v1009
        %v1027 = vmul.f32 %v987, %v1026
        %v1028 = vrcp.pop %v1010
        %v1029 = vmul.f32 %v990, %v1028
        %v1030 = vrcp.pop %v1011
        %v1031 = vmul.f32 %v993, %v1030
        %v1032 = vrcp.pop %v1012
        %v1033 = vmul.f32 %v996, %v1032
        %v1034 = vrcp.pop %v1013
        %v1035 = vmul.f32 %v999, %v1034
        %v1036 = vrcp.pop %v1014
        %v1037 = vmul.f32 %v1002, %v1036
        %v1038 = vrcp.pop %v1015
        %v1039 = vmul.f32 %v1005, %v1038
        %v1040 = vrcp.pop %v1016
        %v1041 = vmul.f32 %v1008, %v1040
        %1043 = vset.pattern.permute.xlu0 0
        %1044 = vperm.xlu0 %1043, %v1027
        %v1045 = vpop.permute.xlu0 %1044
        %1048 = vset.pattern.permute.xlu0 0
        %1049 = vperm.xlu0 %1048, %v1029
        %v1050 = vpop.permute.xlu0 %1049
        %1053 = vset.pattern.permute.xlu0 0
        %1054 = vperm.xlu0 %1053, %v1031
        %v1055 = vpop.permute.xlu0 %1054
        %1058 = vset.pattern.permute.xlu0 0
        %1059 = vperm.xlu0 %1058, %v1033
        %v1060 = vpop.permute.xlu0 %1059
        %1063 = vset.pattern.permute.xlu0 0
        %1064 = vperm.xlu0 %1063, %v1035
        %v1065 = vpop.permute.xlu0 %1064
        %1068 = vset.pattern.permute.xlu0 0
        %1069 = vperm.xlu0 %1068, %v1037
        %v1070 = vpop.permute.xlu0 %1069
        %1073 = vset.pattern.permute.xlu0 0
        %1074 = vperm.xlu0 %1073, %v1039
        %v1075 = vpop.permute.xlu0 %1074
        %1078 = vset.pattern.permute.xlu0 0
        %1079 = vperm.xlu0 %1078, %v1041
        %v1080 = vpop.permute.xlu0 %1079
        %v1082 = vmul.f32 %v1045, %v1018
        %v1083 = vmul.f32 %v1050, %v1019
        %v1084 = vmul.f32 %v1055, %v1020
        %v1085 = vmul.f32 %v1060, %v1021
        %v1086 = vmul.f32 %v1065, %v1022
        %v1087 = vmul.f32 %v1070, %v1023
        %v1088 = vmul.f32 %v1075, %v1024
        %v1089 = vmul.f32 %v1080, %v1025
        %v1090 = vadd.f32 %v960, %v1082
        %v1091 = vadd.f32 %v960, %v1083
        %v1092 = vadd.f32 %v960, %v1084
        %v1093 = vadd.f32 %v960, %v1085
        %v1094 = vadd.f32 %v960, %v1086
        %v1095 = vadd.f32 %v960, %v1087
        %v1096 = vadd.f32 %v960, %v1088
        %v1097 = vadd.f32 %v960, %v1089
        %v1098 = vmul.f32 %v1090, %v1090
        %v1099 = vmul.f32 %v1091, %v1091
        %v1100 = vmul.f32 %v1092, %v1092
        %v1101 = vmul.f32 %v1093, %v1093
        %v1102 = vmul.f32 %v1094, %v1094
        %v1103 = vmul.f32 %v1095, %v1095
        %v1104 = vmul.f32 %v1096, %v1096
        %v1105 = vmul.f32 %v1097, %v1097
        %v1106 = vsub.f32 0.0, %v1098
        %v1107 = vsub.f32 0.0, %v1099
        %v1108 = vsub.f32 0.0, %v1100
        %v1109 = vsub.f32 0.0, %v1101
        %v1110 = vsub.f32 0.0, %v1102
        %v1111 = vsub.f32 0.0, %v1103
        %v1112 = vsub.f32 0.0, %v1104
        %v1113 = vsub.f32 0.0, %v1105
        %v1114 = vsel %vm364, %v1098, %v1106
        %v1115 = vsel %vm364, %v1099, %v1107
        %v1116 = vsel %vm364, %v1100, %v1108
        %v1117 = vsel %vm364, %v1101, %v1109
        %v1118 = vsel %vm364, %v1102, %v1110
        %v1119 = vsel %vm364, %v1103, %v1111
        %v1120 = vsel %vm364, %v1104, %v1112
        %v1121 = vsel %vm364, %v1105, %v1113
        %v1122 = vsel %vm755, %v1114, 0.0
        %1123 = vadd.xlane.f32.xlu0 %v1122
        %v1124 = vpop.xlane.xlu0 %1123
        %v1125 = vsel %vm755, %v1115, 0.0
        %1126 = vadd.xlane.f32.xlu0 %v1125
        %v1127 = vpop.xlane.xlu0 %1126
        %v1128 = vsel %vm755, %v1116, 0.0
        %1129 = vadd.xlane.f32.xlu0 %v1128
        %v1130 = vpop.xlane.xlu0 %1129
        %v1131 = vsel %vm755, %v1117, 0.0
        %1132 = vadd.xlane.f32.xlu0 %v1131
        %v1133 = vpop.xlane.xlu0 %1132
        %v1134 = vsel %vm755, %v1118, 0.0
        %1135 = vadd.xlane.f32.xlu0 %v1134
        %v1136 = vpop.xlane.xlu0 %1135
        %v1137 = vsel %vm755, %v1119, 0.0
        %1138 = vadd.xlane.f32.xlu0 %v1137
        %v1139 = vpop.xlane.xlu0 %1138
        %v1140 = vsel %vm755, %v1120, 0.0
        %1141 = vadd.xlane.f32.xlu0 %v1140
        %v1142 = vpop.xlane.xlu0 %1141
        %v1143 = vsel %vm755, %v1121, 0.0
        %1144 = vadd.xlane.f32.xlu0 %v1143
        %v1145 = vpop.xlane.xlu0 %1144
        %v1146 = vmax.f32 %v1124, 1e-15
        %v1147 = vmax.f32 %v1127, 1e-15
        %v1148 = vmax.f32 %v1130, 1e-15
        %v1149 = vmax.f32 %v1133, 1e-15
        %v1150 = vmax.f32 %v1136, 1e-15
        %v1151 = vmax.f32 %v1139, 1e-15
        %v1152 = vmax.f32 %v1142, 1e-15
        %v1153 = vmax.f32 %v1145, 1e-15
        %v1154 = vrsqrt.pop %v1146
        %v1155 = vmul.f32 %v1146, %v1154
        %vm1156 = vcmp.eq.f32.partialorder %v1146, inf
        %v1157 = vsel %vm1156, %v1146, %v1155
        %vm1158 = vcmp.eq.f32.partialorder %v1146, 0.0
        %v1159 = vand.u32 %v1146, 2147483648
        %v1160 = vsel %vm1158, %v1159, %v1157
        %v1161 = vrsqrt.pop %v1147
        %v1162 = vmul.f32 %v1147, %v1161
        %vm1163 = vcmp.eq.f32.partialorder %v1147, inf
        %v1164 = vsel %vm1163, %v1147, %v1162
        %vm1165 = vcmp.eq.f32.partialorder %v1147, 0.0
        %v1166 = vand.u32 %v1147, 2147483648
        %v1167 = vsel %vm1165, %v1166, %v1164
        %v1168 = vrsqrt.pop %v1148
        %v1169 = vmul.f32 %v1148, %v1168
        %vm1170 = vcmp.eq.f32.partialorder %v1148, inf
        %v1171 = vsel %vm1170, %v1148, %v1169
        %vm1172 = vcmp.eq.f32.partialorder %v1148, 0.0
        %v1173 = vand.u32 %v1148, 2147483648
        %v1174 = vsel %vm1172, %v1173, %v1171
        %v1175 = vrsqrt.pop %v1149
        %v1176 = vmul.f32 %v1149, %v1175
        %vm1177 = vcmp.eq.f32.partialorder %v1149, inf
        %v1178 = vsel %vm1177, %v1149, %v1176
        %vm1179 = vcmp.eq.f32.partialorder %v1149, 0.0
        %v1180 = vand.u32 %v1149, 2147483648
        %v1181 = vsel %vm1179, %v1180, %v1178
        %v1182 = vrsqrt.pop %v1150
        %v1183 = vmul.f32 %v1150, %v1182
        %vm1184 = vcmp.eq.f32.partialorder %v1150, inf
        %v1185 = vsel %vm1184, %v1150, %v1183
        %vm1186 = vcmp.eq.f32.partialorder %v1150, 0.0
        %v1187 = vand.u32 %v1150, 2147483648
        %v1188 = vsel %vm1186, %v1187, %v1185
        %v1189 = vrsqrt.pop %v1151
        %v1190 = vmul.f32 %v1151, %v1189
        %vm1191 = vcmp.eq.f32.partialorder %v1151, inf
        %v1192 = vsel %vm1191, %v1151, %v1190
        %vm1193 = vcmp.eq.f32.partialorder %v1151, 0.0
        %v1194 = vand.u32 %v1151, 2147483648
        %v1195 = vsel %vm1193, %v1194, %v1192
        %v1196 = vrsqrt.pop %v1152
        %v1197 = vmul.f32 %v1152, %v1196
        %vm1198 = vcmp.eq.f32.partialorder %v1152, inf
        %v1199 = vsel %vm1198, %v1152, %v1197
        %vm1200 = vcmp.eq.f32.partialorder %v1152, 0.0
        %v1201 = vand.u32 %v1152, 2147483648
        %v1202 = vsel %vm1200, %v1201, %v1199
        %v1203 = vrsqrt.pop %v1153
        %v1204 = vmul.f32 %v1153, %v1203
        %vm1205 = vcmp.eq.f32.partialorder %v1153, inf
        %v1206 = vsel %vm1205, %v1153, %v1204
        %vm1207 = vcmp.eq.f32.partialorder %v1153, 0.0
        %v1208 = vand.u32 %v1153, 2147483648
        %v1209 = vsel %vm1207, %v1208, %v1206
        %v1210 = vmin.f32 %v1160, 50.0
        %v1211 = vmin.f32 %v1167, 50.0
        %v1212 = vmin.f32 %v1174, 50.0
        %v1213 = vmin.f32 %v1181, 50.0
        %v1214 = vmin.f32 %v1188, 50.0
        %v1215 = vmin.f32 %v1195, 50.0
        %v1216 = vmin.f32 %v1202, 50.0
        %v1217 = vmin.f32 %v1209, 50.0
        %v1218 = vmul.f32 %v1210, 1.442695
        %v1219 = vpow.pop %v1218
        %v1220 = vmul.f32 %v1211, 1.442695
        %v1221 = vpow.pop %v1220
        %v1222 = vmul.f32 %v1212, 1.442695
        %v1223 = vpow.pop %v1222
        %v1224 = vmul.f32 %v1213, 1.442695
        %v1225 = vpow.pop %v1224
        %v1226 = vmul.f32 %v1214, 1.442695
        %v1227 = vpow.pop %v1226
        %v1228 = vmul.f32 %v1215, 1.442695
        %v1229 = vpow.pop %v1228
        %v1230 = vmul.f32 %v1216, 1.442695
        %v1231 = vpow.pop %v1230
        %v1232 = vmul.f32 %v1217, 1.442695
        %v1233 = vpow.pop %v1232
        %v1234 = vsub.f32 0.0, %v1210
        %v1235 = vsub.f32 0.0, %v1211
        %v1236 = vsub.f32 0.0, %v1212
        %v1237 = vsub.f32 0.0, %v1213
        %v1238 = vsub.f32 0.0, %v1214
        %v1239 = vsub.f32 0.0, %v1215
        %v1240 = vsub.f32 0.0, %v1216
        %v1241 = vsub.f32 0.0, %v1217
        %v1242 = vmul.f32 %v1234, 1.442695
        %v1243 = vpow.pop %v1242
        %v1244 = vmul.f32 %v1235, 1.442695
        %v1245 = vpow.pop %v1244
        %v1246 = vmul.f32 %v1236, 1.442695
        %v1247 = vpow.pop %v1246
        %v1248 = vmul.f32 %v1237, 1.442695
        %v1249 = vpow.pop %v1248
        %v1250 = vmul.f32 %v1238, 1.442695
        %v1251 = vpow.pop %v1250
        %v1252 = vmul.f32 %v1239, 1.442695
        %v1253 = vpow.pop %v1252
        %v1254 = vmul.f32 %v1240, 1.442695
        %v1255 = vpow.pop %v1254
        %v1256 = vmul.f32 %v1241, 1.442695
        %v1257 = vpow.pop %v1256
        %v1258 = vadd.f32 %v1219, %v1243
        %v1259 = vadd.f32 %v1221, %v1245
        %v1260 = vadd.f32 %v1223, %v1247
        %v1261 = vadd.f32 %v1225, %v1249
        %v1262 = vadd.f32 %v1227, %v1251
        %v1263 = vadd.f32 %v1229, %v1253
        %v1264 = vadd.f32 %v1231, %v1255
        %v1265 = vadd.f32 %v1233, %v1257
        %v1266 = vmul.f32 %v1258, 0.5
        %v1267 = vmul.f32 %v1259, 0.5
        %v1268 = vmul.f32 %v1260, 0.5
        %v1269 = vmul.f32 %v1261, 0.5
        %v1270 = vmul.f32 %v1262, 0.5
        %v1271 = vmul.f32 %v1263, 0.5
        %v1272 = vmul.f32 %v1264, 0.5
        %v1273 = vmul.f32 %v1265, 0.5
        %v1274 = vsub.f32 %v1219, %v1243
        %v1275 = vsub.f32 %v1221, %v1245
        %v1276 = vsub.f32 %v1223, %v1247
        %v1277 = vsub.f32 %v1225, %v1249
        %v1278 = vsub.f32 %v1227, %v1251
        %v1279 = vsub.f32 %v1229, %v1253
        %v1280 = vsub.f32 %v1231, %v1255
        %v1281 = vsub.f32 %v1233, %v1257
        %v1282 = vmul.f32 %v1274, 0.5
        %v1283 = vmul.f32 %v1275, 0.5
        %v1284 = vmul.f32 %v1276, 0.5
        %v1285 = vmul.f32 %v1277, 0.5
        %v1286 = vmul.f32 %v1278, 0.5
        %v1287 = vmul.f32 %v1279, 0.5
        %v1288 = vmul.f32 %v1280, 0.5
        %v1289 = vmul.f32 %v1281, 0.5
        %v1290 = vmul.f32 %v1266, %v948
        %v1291 = vmul.f32 %v1267, %v949
        %v1292 = vmul.f32 %v1268, %v950
        %v1293 = vmul.f32 %v1269, %v951
        %v1294 = vmul.f32 %v1270, %v952
        %v1295 = vmul.f32 %v1271, %v953
        %v1296 = vmul.f32 %v1272, %v954
        %v1297 = vmul.f32 %v1273, %v955
        %v1298 = vrsqrt.pop %v1146
        %v1299 = vrsqrt.pop %v1147
        %v1300 = vrsqrt.pop %v1148
        %v1301 = vrsqrt.pop %v1149
        %v1302 = vrsqrt.pop %v1150
        %v1303 = vrsqrt.pop %v1151
        %v1304 = vrsqrt.pop %v1152
        %v1305 = vrsqrt.pop %v1153
        %v1306 = vmul.f32 %v1282, %v1298
        %v1307 = vmul.f32 %v1283, %v1299
        %v1308 = vmul.f32 %v1284, %v1300
        %v1309 = vmul.f32 %v1285, %v1301
        %v1310 = vmul.f32 %v1286, %v1302
        %v1311 = vmul.f32 %v1287, %v1303
        %v1312 = vmul.f32 %v1288, %v1304
        %v1313 = vmul.f32 %v1289, %v1305
        %v1314 = vmul.f32 %v1306, %v1090
        %v1315 = vmul.f32 %v1307, %v1091
        %v1316 = vmul.f32 %v1308, %v1092
        %v1317 = vmul.f32 %v1309, %v1093
        %v1318 = vmul.f32 %v1310, %v1094
        %v1319 = vmul.f32 %v1311, %v1095
        %v1320 = vmul.f32 %v1312, %v1096
        %v1321 = vmul.f32 %v1313, %v1097
        %v1322 = vadd.f32 %v1290, %v1314
        %v1323 = vadd.f32 %v1291, %v1315
        %v1324 = vadd.f32 %v1292, %v1316
        %v1325 = vadd.f32 %v1293, %v1317
        %v1326 = vadd.f32 %v1294, %v1318
        %v1327 = vadd.f32 %v1295, %v1319
        %v1328 = vadd.f32 %v1296, %v1320
        %v1329 = vadd.f32 %v1297, %v1321
        %v1330 = vmax.f32 %v1322, 1.0000001
        %v1331 = vmax.f32 %v1323, 1.0000001
        %v1332 = vmax.f32 %v1324, 1.0000001
        %v1333 = vmax.f32 %v1325, 1.0000001
        %v1334 = vmax.f32 %v1326, 1.0000001
        %v1335 = vmax.f32 %v1327, 1.0000001
        %v1336 = vmax.f32 %v1328, 1.0000001
        %v1337 = vmax.f32 %v1329, 1.0000001
        %v1338 = vsel %vm364, %v1322, 0.0
        %v1339 = vsel %vm364, %v1323, 0.0
        %v1340 = vsel %vm364, %v1324, 0.0
        %v1341 = vsel %vm364, %v1325, 0.0
        %v1342 = vsel %vm364, %v1326, 0.0
        %v1343 = vsel %vm364, %v1327, 0.0
        %v1344 = vsel %vm364, %v1328, 0.0
        %v1345 = vsel %vm364, %v1329, 0.0
        %v1346 = vmul.f32 %v1338, %v1338
        %v1347 = vmul.f32 %v1339, %v1339
        %v1348 = vmul.f32 %v1340, %v1340
        %v1349 = vmul.f32 %v1341, %v1341
        %v1350 = vmul.f32 %v1342, %v1342
        %v1351 = vmul.f32 %v1343, %v1343
        %v1352 = vmul.f32 %v1344, %v1344
        %v1353 = vmul.f32 %v1345, %v1345
        %v1354 = vsel %vm755, %v1346, 0.0
        %1355 = vadd.xlane.f32.xlu0 %v1354
        %v1356 = vpop.xlane.xlu0 %1355
        %v1357 = vsel %vm755, %v1347, 0.0
        %1358 = vadd.xlane.f32.xlu0 %v1357
        %v1359 = vpop.xlane.xlu0 %1358
        %v1360 = vsel %vm755, %v1348, 0.0
        %1361 = vadd.xlane.f32.xlu0 %v1360
        %v1362 = vpop.xlane.xlu0 %1361
        %v1363 = vsel %vm755, %v1349, 0.0
        %1364 = vadd.xlane.f32.xlu0 %v1363
        %v1365 = vpop.xlane.xlu0 %1364
        %v1366 = vsel %vm755, %v1350, 0.0
        %1367 = vadd.xlane.f32.xlu0 %v1366
        %v1368 = vpop.xlane.xlu0 %1367
        %v1369 = vsel %vm755, %v1351, 0.0
        %1370 = vadd.xlane.f32.xlu0 %v1369
        %v1371 = vpop.xlane.xlu0 %1370
        %v1372 = vsel %vm755, %v1352, 0.0
        %1373 = vadd.xlane.f32.xlu0 %v1372
        %v1374 = vpop.xlane.xlu0 %1373
        %v1375 = vsel %vm755, %v1353, 0.0
        %1376 = vadd.xlane.f32.xlu0 %v1375
        %v1377 = vpop.xlane.xlu0 %1376
        %v1378 = vmax.f32 %v1356, 1e-15
        %v1379 = vmax.f32 %v1359, 1e-15
        %v1380 = vmax.f32 %v1362, 1e-15
        %v1381 = vmax.f32 %v1365, 1e-15
        %v1382 = vmax.f32 %v1368, 1e-15
        %v1383 = vmax.f32 %v1371, 1e-15
        %v1384 = vmax.f32 %v1374, 1e-15
        %v1385 = vmax.f32 %v1377, 1e-15
        %v1386 = vrcp.pop %v1330
        %v1387 = vmul.f32 1.0, %v1386
        %v1388 = vrcp.pop %v1331
        %v1389 = vmul.f32 1.0, %v1388
        %v1390 = vrcp.pop %v1332
        %v1391 = vmul.f32 1.0, %v1390
        %v1392 = vrcp.pop %v1333
        %v1393 = vmul.f32 1.0, %v1392
        %v1394 = vrcp.pop %v1334
        %v1395 = vmul.f32 1.0, %v1394
        %v1396 = vrcp.pop %v1335
        %v1397 = vmul.f32 1.0, %v1396
        %v1398 = vrcp.pop %v1336
        %v1399 = vmul.f32 1.0, %v1398
        %v1400 = vrcp.pop %v1337
        %v1401 = vmul.f32 1.0, %v1400
        %v1402 = vmul.f32 %v1387, %v1387
        %v1403 = vmul.f32 %v1389, %v1389
        %v1404 = vmul.f32 %v1391, %v1391
        %v1405 = vmul.f32 %v1393, %v1393
        %v1406 = vmul.f32 %v1395, %v1395
        %v1407 = vmul.f32 %v1397, %v1397
        %v1408 = vmul.f32 %v1399, %v1399
        %v1409 = vmul.f32 %v1401, %v1401
        %v1410 = vsub.f32 1.0, %v1402
        %v1411 = vsub.f32 1.0, %v1403
        %v1412 = vsub.f32 1.0, %v1404
        %v1413 = vsub.f32 1.0, %v1405
        %v1414 = vsub.f32 1.0, %v1406
        %v1415 = vsub.f32 1.0, %v1407
        %v1416 = vsub.f32 1.0, %v1408
        %v1417 = vsub.f32 1.0, %v1409
        %v1418 = vmax.f32 %v1410, 0.0
        %v1419 = vmax.f32 %v1411, 0.0
        %v1420 = vmax.f32 %v1412, 0.0
        %v1421 = vmax.f32 %v1413, 0.0
        %v1422 = vmax.f32 %v1414, 0.0
        %v1423 = vmax.f32 %v1415, 0.0
        %v1424 = vmax.f32 %v1416, 0.0
        %v1425 = vmax.f32 %v1417, 0.0
        %v1426 = vrsqrt.pop %v1418
        %v1427 = vmul.f32 %v1418, %v1426
        %vm1428 = vcmp.eq.f32.partialorder %v1418, inf
        %v1429 = vsel %vm1428, %v1418, %v1427
        %vm1430 = vcmp.eq.f32.partialorder %v1418, 0.0
        %v1431 = vand.u32 %v1418, 2147483648
        %v1432 = vsel %vm1430, %v1431, %v1429
        %v1433 = vrsqrt.pop %v1419
        %v1434 = vmul.f32 %v1419, %v1433
        %vm1435 = vcmp.eq.f32.partialorder %v1419, inf
        %v1436 = vsel %vm1435, %v1419, %v1434
        %vm1437 = vcmp.eq.f32.partialorder %v1419, 0.0
        %v1438 = vand.u32 %v1419, 2147483648
        %v1439 = vsel %vm1437, %v1438, %v1436
        %v1440 = vrsqrt.pop %v1420
        %v1441 = vmul.f32 %v1420, %v1440
        %vm1442 = vcmp.eq.f32.partialorder %v1420, inf
        %v1443 = vsel %vm1442, %v1420, %v1441
        %vm1444 = vcmp.eq.f32.partialorder %v1420, 0.0
        %v1445 = vand.u32 %v1420, 2147483648
        %v1446 = vsel %vm1444, %v1445, %v1443
        %v1447 = vrsqrt.pop %v1421
        %v1448 = vmul.f32 %v1421, %v1447
        %vm1449 = vcmp.eq.f32.partialorder %v1421, inf
        %v1450 = vsel %vm1449, %v1421, %v1448
        %vm1451 = vcmp.eq.f32.partialorder %v1421, 0.0
        %v1452 = vand.u32 %v1421, 2147483648
        %v1453 = vsel %vm1451, %v1452, %v1450
        %v1454 = vrsqrt.pop %v1422
        %v1455 = vmul.f32 %v1422, %v1454
        %vm1456 = vcmp.eq.f32.partialorder %v1422, inf
        %v1457 = vsel %vm1456, %v1422, %v1455
        %vm1458 = vcmp.eq.f32.partialorder %v1422, 0.0
        %v1459 = vand.u32 %v1422, 2147483648
        %v1460 = vsel %vm1458, %v1459, %v1457
        %v1461 = vrsqrt.pop %v1423
        %v1462 = vmul.f32 %v1423, %v1461
        %vm1463 = vcmp.eq.f32.partialorder %v1423, inf
        %v1464 = vsel %vm1463, %v1423, %v1462
        %vm1465 = vcmp.eq.f32.partialorder %v1423, 0.0
        %v1466 = vand.u32 %v1423, 2147483648
        %v1467 = vsel %vm1465, %v1466, %v1464
        %v1468 = vrsqrt.pop %v1424
        %v1469 = vmul.f32 %v1424, %v1468
        %vm1470 = vcmp.eq.f32.partialorder %v1424, inf
        %v1471 = vsel %vm1470, %v1424, %v1469
        %vm1472 = vcmp.eq.f32.partialorder %v1424, 0.0
        %v1473 = vand.u32 %v1424, 2147483648
        %v1474 = vsel %vm1472, %v1473, %v1471
        %v1475 = vrsqrt.pop %v1425
        %v1476 = vmul.f32 %v1425, %v1475
        %vm1477 = vcmp.eq.f32.partialorder %v1425, inf
        %v1478 = vsel %vm1477, %v1425, %v1476
        %vm1479 = vcmp.eq.f32.partialorder %v1425, 0.0
        %v1480 = vand.u32 %v1425, 2147483648
        %v1481 = vsel %vm1479, %v1480, %v1478
        %v1482 = vadd.f32 %v1432, 1.0
        %v1483 = vadd.f32 %v1439, 1.0
        %v1484 = vadd.f32 %v1446, 1.0
        %v1485 = vadd.f32 %v1453, 1.0
        %v1486 = vadd.f32 %v1460, 1.0
        %v1487 = vadd.f32 %v1467, 1.0
        %v1488 = vadd.f32 %v1474, 1.0
        %v1489 = vadd.f32 %v1481, 1.0
        %v1490 = vmul.f32 %v1330, %v1482
        %v1491 = vmul.f32 %v1331, %v1483
        %v1492 = vmul.f32 %v1332, %v1484
        %v1493 = vmul.f32 %v1333, %v1485
        %v1494 = vmul.f32 %v1334, %v1486
        %v1495 = vmul.f32 %v1335, %v1487
        %v1496 = vmul.f32 %v1336, %v1488
        %v1497 = vmul.f32 %v1337, %v1489
        %v1498 = vlog2.pop %v1490
        %v1499 = vmul.f32 %v1498, 0.6931472
        %v1500 = vlog2.pop %v1491
        %v1501 = vmul.f32 %v1500, 0.6931472
        %v1502 = vlog2.pop %v1492
        %v1503 = vmul.f32 %v1502, 0.6931472
        %v1504 = vlog2.pop %v1493
        %v1505 = vmul.f32 %v1504, 0.6931472
        %v1506 = vlog2.pop %v1494
        %v1507 = vmul.f32 %v1506, 0.6931472
        %v1508 = vlog2.pop %v1495
        %v1509 = vmul.f32 %v1508, 0.6931472
        %v1510 = vlog2.pop %v1496
        %v1511 = vmul.f32 %v1510, 0.6931472
        %v1512 = vlog2.pop %v1497
        %v1513 = vmul.f32 %v1512, 0.6931472
        %v1514 = vrsqrt.pop %v1378
        %v1515 = vrsqrt.pop %v1379
        %v1516 = vrsqrt.pop %v1380
        %v1517 = vrsqrt.pop %v1381
        %v1518 = vrsqrt.pop %v1382
        %v1519 = vrsqrt.pop %v1383
        %v1520 = vrsqrt.pop %v1384
        %v1521 = vrsqrt.pop %v1385
        %v1522 = vmul.f32 %v1499, %v1514
        %v1523 = vmul.f32 %v1501, %v1515
        %v1524 = vmul.f32 %v1503, %v1516
        %v1525 = vmul.f32 %v1505, %v1517
        %v1526 = vmul.f32 %v1507, %v1518
        %v1527 = vmul.f32 %v1509, %v1519
        %v1528 = vmul.f32 %v1511, %v1520
        %v1529 = vmul.f32 %v1513, %v1521
        %1531 = vset.pattern.permute.xlu0 0
        %1532 = vperm.xlu0 %1531, %v1522
        %v1533 = vpop.permute.xlu0 %1532
        %1536 = vset.pattern.permute.xlu0 0
        %1537 = vperm.xlu0 %1536, %v1523
        %v1538 = vpop.permute.xlu0 %1537
        %1541 = vset.pattern.permute.xlu0 0
        %1542 = vperm.xlu0 %1541, %v1524
        %v1543 = vpop.permute.xlu0 %1542
        %1546 = vset.pattern.permute.xlu0 0
        %1547 = vperm.xlu0 %1546, %v1525
        %v1548 = vpop.permute.xlu0 %1547
        %1551 = vset.pattern.permute.xlu0 0
        %1552 = vperm.xlu0 %1551, %v1526
        %v1553 = vpop.permute.xlu0 %1552
        %1556 = vset.pattern.permute.xlu0 0
        %1557 = vperm.xlu0 %1556, %v1527
        %v1558 = vpop.permute.xlu0 %1557
        %1561 = vset.pattern.permute.xlu0 0
        %1562 = vperm.xlu0 %1561, %v1528
        %v1563 = vpop.permute.xlu0 %1562
        %1566 = vset.pattern.permute.xlu0 0
        %1567 = vperm.xlu0 %1566, %v1529
        %v1568 = vpop.permute.xlu0 %1567
        %v1570 = vmul.f32 %v1533, %v1338
        %v1571 = vmul.f32 %v1538, %v1339
        %v1572 = vmul.f32 %v1543, %v1340
        %v1573 = vmul.f32 %v1548, %v1341
        %v1574 = vmul.f32 %v1553, %v1342
        %v1575 = vmul.f32 %v1558, %v1343
        %v1576 = vmul.f32 %v1563, %v1344
        %v1577 = vmul.f32 %v1568, %v1345
        %v1578 = vsel %vm364, %v1570, 0.0
        %v1579 = vsel %vm364, %v1571, 0.0
        %v1580 = vsel %vm364, %v1572, 0.0
        %v1581 = vsel %vm364, %v1573, 0.0
        %v1582 = vsel %vm364, %v1574, 0.0
        %v1583 = vsel %vm364, %v1575, 0.0
        %v1584 = vsel %vm364, %v1576, 0.0
        %v1585 = vsel %vm364, %v1577, 0.0
        %v1586 = vsel %vm755, %v1578, 0.0
        %1587 = vadd.xlane.f32.xlu0 %v1586
        %v1588 = vpop.xlane.xlu0 %1587
        %v1589 = vsel %vm755, %v1579, 0.0
        %1590 = vadd.xlane.f32.xlu0 %v1589
        %v1591 = vpop.xlane.xlu0 %1590
        %v1592 = vsel %vm755, %v1580, 0.0
        %1593 = vadd.xlane.f32.xlu0 %v1592
        %v1594 = vpop.xlane.xlu0 %1593
        %v1595 = vsel %vm755, %v1581, 0.0
        %1596 = vadd.xlane.f32.xlu0 %v1595
        %v1597 = vpop.xlane.xlu0 %1596
        %v1598 = vsel %vm755, %v1582, 0.0
        %1599 = vadd.xlane.f32.xlu0 %v1598
        %v1600 = vpop.xlane.xlu0 %1599
        %v1601 = vsel %vm755, %v1583, 0.0
        %1602 = vadd.xlane.f32.xlu0 %v1601
        %v1603 = vpop.xlane.xlu0 %1602
        %v1604 = vsel %vm755, %v1584, 0.0
        %1605 = vadd.xlane.f32.xlu0 %v1604
        %v1606 = vpop.xlane.xlu0 %1605
        %v1607 = vsel %vm755, %v1585, 0.0
        %1608 = vadd.xlane.f32.xlu0 %v1607
        %v1609 = vpop.xlane.xlu0 %1608
        %v1610 = vmul.f32 %v1588, 0.06666667
        %v1611 = vmul.f32 %v1591, 0.06666667
        %v1612 = vmul.f32 %v1594, 0.06666667
        %v1613 = vmul.f32 %v1597, 0.06666667
        %v1614 = vmul.f32 %v1600, 0.06666667
        %v1615 = vmul.f32 %v1603, 0.06666667
        %v1616 = vmul.f32 %v1606, 0.06666667
        %v1617 = vmul.f32 %v1609, 0.06666667
        %v1618 = vsub.f32 %v1578, %v1610
        %v1619 = vsub.f32 %v1579, %v1611
        %v1620 = vsub.f32 %v1580, %v1612
        %v1621 = vsub.f32 %v1581, %v1613
        %v1622 = vsub.f32 %v1582, %v1614
        %v1623 = vsub.f32 %v1583, %v1615
        %v1624 = vsub.f32 %v1584, %v1616
        %v1625 = vsub.f32 %v1585, %v1617
        %v1626 = vsel %vm364, %v1618, 0.0
        %v1627 = vsel %vm364, %v1619, 0.0
        %v1628 = vsel %vm364, %v1620, 0.0
        %v1629 = vsel %vm364, %v1621, 0.0
        %v1630 = vsel %vm364, %v1622, 0.0
        %v1631 = vsel %vm364, %v1623, 0.0
        %v1632 = vsel %vm364, %v1624, 0.0
        %v1633 = vsel %vm364, %v1625, 0.0
        %v1634 = vmul.f32 %v1626, %v1626
        %v1635 = vmul.f32 %v1627, %v1627
        %v1636 = vmul.f32 %v1628, %v1628
        %v1637 = vmul.f32 %v1629, %v1629
        %v1638 = vmul.f32 %v1630, %v1630
        %v1639 = vmul.f32 %v1631, %v1631
        %v1640 = vmul.f32 %v1632, %v1632
        %v1641 = vmul.f32 %v1633, %v1633
        %v1642 = vsel %vm755, %v1634, 0.0
        %1643 = vadd.xlane.f32.xlu0 %v1642
        %v1644 = vpop.xlane.xlu0 %1643
        %v1645 = vsel %vm755, %v1635, 0.0
        %1646 = vadd.xlane.f32.xlu0 %v1645
        %v1647 = vpop.xlane.xlu0 %1646
        %v1648 = vsel %vm755, %v1636, 0.0
        %1649 = vadd.xlane.f32.xlu0 %v1648
        %v1650 = vpop.xlane.xlu0 %1649
        %v1651 = vsel %vm755, %v1637, 0.0
        %1652 = vadd.xlane.f32.xlu0 %v1651
        %v1653 = vpop.xlane.xlu0 %1652
        %v1654 = vsel %vm755, %v1638, 0.0
        %1655 = vadd.xlane.f32.xlu0 %v1654
        %v1656 = vpop.xlane.xlu0 %1655
        %v1657 = vsel %vm755, %v1639, 0.0
        %1658 = vadd.xlane.f32.xlu0 %v1657
        %v1659 = vpop.xlane.xlu0 %1658
        %v1660 = vsel %vm755, %v1640, 0.0
        %1661 = vadd.xlane.f32.xlu0 %v1660
        %v1662 = vpop.xlane.xlu0 %1661
        %v1663 = vsel %vm755, %v1641, 0.0
        %1664 = vadd.xlane.f32.xlu0 %v1663
        %v1665 = vpop.xlane.xlu0 %1664
        %v1666 = vmul.f32 %v1644, 0.06666667
        %v1667 = vmul.f32 %v1647, 0.06666667
        %v1668 = vmul.f32 %v1650, 0.06666667
        %v1669 = vmul.f32 %v1653, 0.06666667
        %v1670 = vmul.f32 %v1656, 0.06666667
        %v1671 = vmul.f32 %v1659, 0.06666667
        %v1672 = vmul.f32 %v1662, 0.06666667
        %v1673 = vmul.f32 %v1665, 0.06666667
        %v1674 = vadd.f32 %v1666, 1e-05
        %v1675 = vadd.f32 %v1667, 1e-05
        %v1676 = vadd.f32 %v1668, 1e-05
        %v1677 = vadd.f32 %v1669, 1e-05
        %v1678 = vadd.f32 %v1670, 1e-05
        %v1679 = vadd.f32 %v1671, 1e-05
        %v1680 = vadd.f32 %v1672, 1e-05
        %v1681 = vadd.f32 %v1673, 1e-05
        %v1682 = vrsqrt.pop %v1674
        %v1683 = vrsqrt.pop %v1675
        %v1684 = vrsqrt.pop %v1676
        %v1685 = vrsqrt.pop %v1677
        %v1686 = vrsqrt.pop %v1678
        %v1687 = vrsqrt.pop %v1679
        %v1688 = vrsqrt.pop %v1680
        %v1689 = vrsqrt.pop %v1681
        %v1690 = vmul.f32 %v1626, %v1682
        %v1691 = vmul.f32 %v1627, %v1683
        %v1692 = vmul.f32 %v1628, %v1684
        %v1693 = vmul.f32 %v1629, %v1685
        %v1694 = vmul.f32 %v1630, %v1686
        %v1695 = vmul.f32 %v1631, %v1687
        %v1696 = vmul.f32 %v1632, %v1688
        %v1697 = vmul.f32 %v1633, %v1689
        %v1699 = vlaneseq
        %v1700 = vshrl.u32 %v1699, 7
        %v1701 = vsub.s32 0, %v1700
        %v1702 = vrot.slane %v350, %v1701
        %v1704 = vmul.f32 %v1690, %v1702
        %v1705 = vmul.f32 %v1691, %v1702
        %v1706 = vmul.f32 %v1692, %v1702
        %v1707 = vmul.f32 %v1693, %v1702
        %v1708 = vmul.f32 %v1694, %v1702
        %v1709 = vmul.f32 %v1695, %v1702
        %v1710 = vmul.f32 %v1696, %v1702
        %v1711 = vmul.f32 %v1697, %v1702
        %v1713 = vlaneseq
        %v1714 = vshrl.u32 %v1713, 7
        %v1715 = vsub.s32 0, %v1714
        %v1716 = vrot.slane %v351, %v1715
        %v1718 = vadd.f32 %v1704, %v1716
        %v1719 = vadd.f32 %v1705, %v1716
        %v1720 = vadd.f32 %v1706, %v1716
        %v1721 = vadd.f32 %v1707, %v1716
        %v1722 = vadd.f32 %v1708, %v1716
        %v1723 = vadd.f32 %v1709, %v1716
        %v1724 = vadd.f32 %v1710, %v1716
        %v1725 = vadd.f32 %v1711, %v1716
        %v1726 = vsel %vm364, %v1718, 0.0
        %v1727 = vsel %vm364, %v1719, 0.0
        %v1728 = vsel %vm364, %v1720, 0.0
        %v1729 = vsel %vm364, %v1721, 0.0
        %v1730 = vsel %vm364, %v1722, 0.0
        %v1731 = vsel %vm364, %v1723, 0.0
        %v1732 = vsel %vm364, %v1724, 0.0
        %v1733 = vsel %vm364, %v1725, 0.0
        %v1734 = vmul.f32 %v1726, %v1726
        %v1735 = vmul.f32 %v1727, %v1727
        %v1736 = vmul.f32 %v1728, %v1728
        %v1737 = vmul.f32 %v1729, %v1729
        %v1738 = vmul.f32 %v1730, %v1730
        %v1739 = vmul.f32 %v1731, %v1731
        %v1740 = vmul.f32 %v1732, %v1732
        %v1741 = vmul.f32 %v1733, %v1733
        %v1742 = vsel %vm755, %v1734, 0.0
        %1743 = vadd.xlane.f32.xlu0 %v1742
        %v1744 = vpop.xlane.xlu0 %1743
        %v1745 = vsel %vm755, %v1735, 0.0
        %1746 = vadd.xlane.f32.xlu0 %v1745
        %v1747 = vpop.xlane.xlu0 %1746
        %v1748 = vsel %vm755, %v1736, 0.0
        %1749 = vadd.xlane.f32.xlu0 %v1748
        %v1750 = vpop.xlane.xlu0 %1749
        %v1751 = vsel %vm755, %v1737, 0.0
        %1752 = vadd.xlane.f32.xlu0 %v1751
        %v1753 = vpop.xlane.xlu0 %1752
        %v1754 = vsel %vm755, %v1738, 0.0
        %1755 = vadd.xlane.f32.xlu0 %v1754
        %v1756 = vpop.xlane.xlu0 %1755
        %v1757 = vsel %vm755, %v1739, 0.0
        %1758 = vadd.xlane.f32.xlu0 %v1757
        %v1759 = vpop.xlane.xlu0 %1758
        %v1760 = vsel %vm755, %v1740, 0.0
        %1761 = vadd.xlane.f32.xlu0 %v1760
        %v1762 = vpop.xlane.xlu0 %1761
        %v1763 = vsel %vm755, %v1741, 0.0
        %1764 = vadd.xlane.f32.xlu0 %v1763
        %v1765 = vpop.xlane.xlu0 %1764
        %v1766 = vmax.f32 %v1744, 1e-15
        %v1767 = vmax.f32 %v1747, 1e-15
        %v1768 = vmax.f32 %v1750, 1e-15
        %v1769 = vmax.f32 %v1753, 1e-15
        %v1770 = vmax.f32 %v1756, 1e-15
        %v1771 = vmax.f32 %v1759, 1e-15
        %v1772 = vmax.f32 %v1762, 1e-15
        %v1773 = vmax.f32 %v1765, 1e-15
        %v1774 = vrsqrt.pop %v1766
        %v1775 = vmul.f32 %v1766, %v1774
        %vm1776 = vcmp.eq.f32.partialorder %v1766, inf
        %v1777 = vsel %vm1776, %v1766, %v1775
        %vm1778 = vcmp.eq.f32.partialorder %v1766, 0.0
        %v1779 = vand.u32 %v1766, 2147483648
        %v1780 = vsel %vm1778, %v1779, %v1777
        %v1781 = vrsqrt.pop %v1767
        %v1782 = vmul.f32 %v1767, %v1781
        %vm1783 = vcmp.eq.f32.partialorder %v1767, inf
        %v1784 = vsel %vm1783, %v1767, %v1782
        %vm1785 = vcmp.eq.f32.partialorder %v1767, 0.0
        %v1786 = vand.u32 %v1767, 2147483648
        %v1787 = vsel %vm1785, %v1786, %v1784
        %v1788 = vrsqrt.pop %v1768
        %v1789 = vmul.f32 %v1768, %v1788
        %vm1790 = vcmp.eq.f32.partialorder %v1768, inf
        %v1791 = vsel %vm1790, %v1768, %v1789
        %vm1792 = vcmp.eq.f32.partialorder %v1768, 0.0
        %v1793 = vand.u32 %v1768, 2147483648
        %v1794 = vsel %vm1792, %v1793, %v1791
        %v1795 = vrsqrt.pop %v1769
        %v1796 = vmul.f32 %v1769, %v1795
        %vm1797 = vcmp.eq.f32.partialorder %v1769, inf
        %v1798 = vsel %vm1797, %v1769, %v1796
        %vm1799 = vcmp.eq.f32.partialorder %v1769, 0.0
        %v1800 = vand.u32 %v1769, 2147483648
        %v1801 = vsel %vm1799, %v1800, %v1798
        %v1802 = vrsqrt.pop %v1770
        %v1803 = vmul.f32 %v1770, %v1802
        %vm1804 = vcmp.eq.f32.partialorder %v1770, inf
        %v1805 = vsel %vm1804, %v1770, %v1803
        %vm1806 = vcmp.eq.f32.partialorder %v1770, 0.0
        %v1807 = vand.u32 %v1770, 2147483648
        %v1808 = vsel %vm1806, %v1807, %v1805
        %v1809 = vrsqrt.pop %v1771
        %v1810 = vmul.f32 %v1771, %v1809
        %vm1811 = vcmp.eq.f32.partialorder %v1771, inf
        %v1812 = vsel %vm1811, %v1771, %v1810
        %vm1813 = vcmp.eq.f32.partialorder %v1771, 0.0
        %v1814 = vand.u32 %v1771, 2147483648
        %v1815 = vsel %vm1813, %v1814, %v1812
        %v1816 = vrsqrt.pop %v1772
        %v1817 = vmul.f32 %v1772, %v1816
        %vm1818 = vcmp.eq.f32.partialorder %v1772, inf
        %v1819 = vsel %vm1818, %v1772, %v1817
        %vm1820 = vcmp.eq.f32.partialorder %v1772, 0.0
        %v1821 = vand.u32 %v1772, 2147483648
        %v1822 = vsel %vm1820, %v1821, %v1819
        %v1823 = vrsqrt.pop %v1773
        %v1824 = vmul.f32 %v1773, %v1823
        %vm1825 = vcmp.eq.f32.partialorder %v1773, inf
        %v1826 = vsel %vm1825, %v1773, %v1824
        %vm1827 = vcmp.eq.f32.partialorder %v1773, 0.0
        %v1828 = vand.u32 %v1773, 2147483648
        %v1829 = vsel %vm1827, %v1828, %v1826
        %v1830 = vmin.f32 %v1780, 50.0
        %v1831 = vmin.f32 %v1787, 50.0
        %v1832 = vmin.f32 %v1794, 50.0
        %v1833 = vmin.f32 %v1801, 50.0
        %v1834 = vmin.f32 %v1808, 50.0
        %v1835 = vmin.f32 %v1815, 50.0
        %v1836 = vmin.f32 %v1822, 50.0
        %v1837 = vmin.f32 %v1829, 50.0
        %v1838 = vmul.f32 %v1830, 1.442695
        %v1839 = vpow.pop %v1838
        %v1840 = vmul.f32 %v1831, 1.442695
        %v1841 = vpow.pop %v1840
        %v1842 = vmul.f32 %v1832, 1.442695
        %v1843 = vpow.pop %v1842
        %v1844 = vmul.f32 %v1833, 1.442695
        %v1845 = vpow.pop %v1844
        %v1846 = vmul.f32 %v1834, 1.442695
        %v1847 = vpow.pop %v1846
        %v1848 = vmul.f32 %v1835, 1.442695
        %v1849 = vpow.pop %v1848
        %v1850 = vmul.f32 %v1836, 1.442695
        %v1851 = vpow.pop %v1850
        %v1852 = vmul.f32 %v1837, 1.442695
        %v1853 = vpow.pop %v1852
        %v1854 = vsub.f32 0.0, %v1830
        %v1855 = vsub.f32 0.0, %v1831
        %v1856 = vsub.f32 0.0, %v1832
        %v1857 = vsub.f32 0.0, %v1833
        %v1858 = vsub.f32 0.0, %v1834
        %v1859 = vsub.f32 0.0, %v1835
        %v1860 = vsub.f32 0.0, %v1836
        %v1861 = vsub.f32 0.0, %v1837
        %v1862 = vmul.f32 %v1854, 1.442695
        %v1863 = vpow.pop %v1862
        %v1864 = vmul.f32 %v1855, 1.442695
        %v1865 = vpow.pop %v1864
        %v1866 = vmul.f32 %v1856, 1.442695
        %v1867 = vpow.pop %v1866
        %v1868 = vmul.f32 %v1857, 1.442695
        %v1869 = vpow.pop %v1868
        %v1870 = vmul.f32 %v1858, 1.442695
        %v1871 = vpow.pop %v1870
        %v1872 = vmul.f32 %v1859, 1.442695
        %v1873 = vpow.pop %v1872
        %v1874 = vmul.f32 %v1860, 1.442695
        %v1875 = vpow.pop %v1874
        %v1876 = vmul.f32 %v1861, 1.442695
        %v1877 = vpow.pop %v1876
        %v1878 = vadd.f32 %v1839, %v1863
        %v1879 = vadd.f32 %v1841, %v1865
        %v1880 = vadd.f32 %v1843, %v1867
        %v1881 = vadd.f32 %v1845, %v1869
        %v1882 = vadd.f32 %v1847, %v1871
        %v1883 = vadd.f32 %v1849, %v1873
        %v1884 = vadd.f32 %v1851, %v1875
        %v1885 = vadd.f32 %v1853, %v1877
        %v1886 = vmul.f32 %v1878, 0.5
        %v1887 = vmul.f32 %v1879, 0.5
        %v1888 = vmul.f32 %v1880, 0.5
        %v1889 = vmul.f32 %v1881, 0.5
        %v1890 = vmul.f32 %v1882, 0.5
        %v1891 = vmul.f32 %v1883, 0.5
        %v1892 = vmul.f32 %v1884, 0.5
        %v1893 = vmul.f32 %v1885, 0.5
        %v1894 = vsub.f32 %v1839, %v1863
        %v1895 = vsub.f32 %v1841, %v1865
        %v1896 = vsub.f32 %v1843, %v1867
        %v1897 = vsub.f32 %v1845, %v1869
        %v1898 = vsub.f32 %v1847, %v1871
        %v1899 = vsub.f32 %v1849, %v1873
        %v1900 = vsub.f32 %v1851, %v1875
        %v1901 = vsub.f32 %v1853, %v1877
        %v1902 = vmul.f32 %v1894, 0.5
        %v1903 = vmul.f32 %v1895, 0.5
        %v1904 = vmul.f32 %v1896, 0.5
        %v1905 = vmul.f32 %v1897, 0.5
        %v1906 = vmul.f32 %v1898, 0.5
        %v1907 = vmul.f32 %v1899, 0.5
        %v1908 = vmul.f32 %v1900, 0.5
        %v1909 = vmul.f32 %v1901, 0.5
        %v1910 = vrsqrt.pop %v1766
        %v1911 = vrsqrt.pop %v1767
        %v1912 = vrsqrt.pop %v1768
        %v1913 = vrsqrt.pop %v1769
        %v1914 = vrsqrt.pop %v1770
        %v1915 = vrsqrt.pop %v1771
        %v1916 = vrsqrt.pop %v1772
        %v1917 = vrsqrt.pop %v1773
        %v1918 = vmul.f32 %v1902, %v1910
        %v1919 = vmul.f32 %v1903, %v1911
        %v1920 = vmul.f32 %v1904, %v1912
        %v1921 = vmul.f32 %v1905, %v1913
        %v1922 = vmul.f32 %v1906, %v1914
        %v1923 = vmul.f32 %v1907, %v1915
        %v1924 = vmul.f32 %v1908, %v1916
        %v1925 = vmul.f32 %v1909, %v1917
        %v1926 = vmul.f32 %v1918, %v1726
        %v1927 = vmul.f32 %v1919, %v1727
        %v1928 = vmul.f32 %v1920, %v1728
        %v1929 = vmul.f32 %v1921, %v1729
        %v1930 = vmul.f32 %v1922, %v1730
        %v1931 = vmul.f32 %v1923, %v1731
        %v1932 = vmul.f32 %v1924, %v1732
        %v1933 = vmul.f32 %v1925, %v1733
        %v1934 = vsel %vm364, %v1926, %v1886
        %v1935 = vsel %vm364, %v1927, %v1887
        %v1936 = vsel %vm364, %v1928, %v1888
        %v1937 = vsel %vm364, %v1929, %v1889
        %v1938 = vsel %vm364, %v1930, %v1890
        %v1939 = vsel %vm364, %v1931, %v1891
        %v1940 = vsel %vm364, %v1932, %v1892
        %v1941 = vsel %vm364, %v1933, %v1893
        %v1942 = vmax.f32 %v1934, 1.0000001
        %v1943 = vmax.f32 %v1935, 1.0000001
        %v1944 = vmax.f32 %v1936, 1.0000001
        %v1945 = vmax.f32 %v1937, 1.0000001
        %v1946 = vmax.f32 %v1938, 1.0000001
        %v1947 = vmax.f32 %v1939, 1.0000001
        %v1948 = vmax.f32 %v1940, 1.0000001
        %v1949 = vmax.f32 %v1941, 1.0000001
        %v1950 = vsel %vm364, %v1926, 0.0
        %v1951 = vsel %vm364, %v1927, 0.0
        %v1952 = vsel %vm364, %v1928, 0.0
        %v1953 = vsel %vm364, %v1929, 0.0
        %v1954 = vsel %vm364, %v1930, 0.0
        %v1955 = vsel %vm364, %v1931, 0.0
        %v1956 = vsel %vm364, %v1932, 0.0
        %v1957 = vsel %vm364, %v1933, 0.0
        %v1958 = vmul.f32 %v1950, %v1950
        %v1959 = vmul.f32 %v1951, %v1951
        %v1960 = vmul.f32 %v1952, %v1952
        %v1961 = vmul.f32 %v1953, %v1953
        %v1962 = vmul.f32 %v1954, %v1954
        %v1963 = vmul.f32 %v1955, %v1955
        %v1964 = vmul.f32 %v1956, %v1956
        %v1965 = vmul.f32 %v1957, %v1957
        %v1966 = vsel %vm755, %v1958, 0.0
        %1967 = vadd.xlane.f32.xlu0 %v1966
        %v1968 = vpop.xlane.xlu0 %1967
        %v1969 = vsel %vm755, %v1959, 0.0
        %1970 = vadd.xlane.f32.xlu0 %v1969
        %v1971 = vpop.xlane.xlu0 %1970
        %v1972 = vsel %vm755, %v1960, 0.0
        %1973 = vadd.xlane.f32.xlu0 %v1972
        %v1974 = vpop.xlane.xlu0 %1973
        %v1975 = vsel %vm755, %v1961, 0.0
        %1976 = vadd.xlane.f32.xlu0 %v1975
        %v1977 = vpop.xlane.xlu0 %1976
        %v1978 = vsel %vm755, %v1962, 0.0
        %1979 = vadd.xlane.f32.xlu0 %v1978
        %v1980 = vpop.xlane.xlu0 %1979
        %v1981 = vsel %vm755, %v1963, 0.0
        %1982 = vadd.xlane.f32.xlu0 %v1981
        %v1983 = vpop.xlane.xlu0 %1982
        %v1984 = vsel %vm755, %v1964, 0.0
        %1985 = vadd.xlane.f32.xlu0 %v1984
        %v1986 = vpop.xlane.xlu0 %1985
        %v1987 = vsel %vm755, %v1965, 0.0
        %1988 = vadd.xlane.f32.xlu0 %v1987
        %v1989 = vpop.xlane.xlu0 %1988
        %v1990 = vmax.f32 %v1968, 1e-15
        %v1991 = vmax.f32 %v1971, 1e-15
        %v1992 = vmax.f32 %v1974, 1e-15
        %v1993 = vmax.f32 %v1977, 1e-15
        %v1994 = vmax.f32 %v1980, 1e-15
        %v1995 = vmax.f32 %v1983, 1e-15
        %v1996 = vmax.f32 %v1986, 1e-15
        %v1997 = vmax.f32 %v1989, 1e-15
        %v1998 = vrcp.pop %v1942
        %v1999 = vmul.f32 1.0, %v1998
        %v2000 = vrcp.pop %v1943
        %v2001 = vmul.f32 1.0, %v2000
        %v2002 = vrcp.pop %v1944
        %v2003 = vmul.f32 1.0, %v2002
        %v2004 = vrcp.pop %v1945
        %v2005 = vmul.f32 1.0, %v2004
        %v2006 = vrcp.pop %v1946
        %v2007 = vmul.f32 1.0, %v2006
        %v2008 = vrcp.pop %v1947
        %v2009 = vmul.f32 1.0, %v2008
        %v2010 = vrcp.pop %v1948
        %v2011 = vmul.f32 1.0, %v2010
        %v2012 = vrcp.pop %v1949
        %v2013 = vmul.f32 1.0, %v2012
        %v2014 = vmul.f32 %v1999, %v1999
        %v2015 = vmul.f32 %v2001, %v2001
        %v2016 = vmul.f32 %v2003, %v2003
        %v2017 = vmul.f32 %v2005, %v2005
        %v2018 = vmul.f32 %v2007, %v2007
        %v2019 = vmul.f32 %v2009, %v2009
        %v2020 = vmul.f32 %v2011, %v2011
        %v2021 = vmul.f32 %v2013, %v2013
        %v2022 = vsub.f32 1.0, %v2014
        %v2023 = vsub.f32 1.0, %v2015
        %v2024 = vsub.f32 1.0, %v2016
        %v2025 = vsub.f32 1.0, %v2017
        %v2026 = vsub.f32 1.0, %v2018
        %v2027 = vsub.f32 1.0, %v2019
        %v2028 = vsub.f32 1.0, %v2020
        %v2029 = vsub.f32 1.0, %v2021
        %v2030 = vmax.f32 %v2022, 0.0
        %v2031 = vmax.f32 %v2023, 0.0
        %v2032 = vmax.f32 %v2024, 0.0
        %v2033 = vmax.f32 %v2025, 0.0
        %v2034 = vmax.f32 %v2026, 0.0
        %v2035 = vmax.f32 %v2027, 0.0
        %v2036 = vmax.f32 %v2028, 0.0
        %v2037 = vmax.f32 %v2029, 0.0
        %v2038 = vrsqrt.pop %v2030
        %v2039 = vmul.f32 %v2030, %v2038
        %vm2040 = vcmp.eq.f32.partialorder %v2030, inf
        %v2041 = vsel %vm2040, %v2030, %v2039
        %vm2042 = vcmp.eq.f32.partialorder %v2030, 0.0
        %v2043 = vand.u32 %v2030, 2147483648
        %v2044 = vsel %vm2042, %v2043, %v2041
        %v2045 = vrsqrt.pop %v2031
        %v2046 = vmul.f32 %v2031, %v2045
        %vm2047 = vcmp.eq.f32.partialorder %v2031, inf
        %v2048 = vsel %vm2047, %v2031, %v2046
        %vm2049 = vcmp.eq.f32.partialorder %v2031, 0.0
        %v2050 = vand.u32 %v2031, 2147483648
        %v2051 = vsel %vm2049, %v2050, %v2048
        %v2052 = vrsqrt.pop %v2032
        %v2053 = vmul.f32 %v2032, %v2052
        %vm2054 = vcmp.eq.f32.partialorder %v2032, inf
        %v2055 = vsel %vm2054, %v2032, %v2053
        %vm2056 = vcmp.eq.f32.partialorder %v2032, 0.0
        %v2057 = vand.u32 %v2032, 2147483648
        %v2058 = vsel %vm2056, %v2057, %v2055
        %v2059 = vrsqrt.pop %v2033
        %v2060 = vmul.f32 %v2033, %v2059
        %vm2061 = vcmp.eq.f32.partialorder %v2033, inf
        %v2062 = vsel %vm2061, %v2033, %v2060
        %vm2063 = vcmp.eq.f32.partialorder %v2033, 0.0
        %v2064 = vand.u32 %v2033, 2147483648
        %v2065 = vsel %vm2063, %v2064, %v2062
        %v2066 = vrsqrt.pop %v2034
        %v2067 = vmul.f32 %v2034, %v2066
        %vm2068 = vcmp.eq.f32.partialorder %v2034, inf
        %v2069 = vsel %vm2068, %v2034, %v2067
        %vm2070 = vcmp.eq.f32.partialorder %v2034, 0.0
        %v2071 = vand.u32 %v2034, 2147483648
        %v2072 = vsel %vm2070, %v2071, %v2069
        %v2073 = vrsqrt.pop %v2035
        %v2074 = vmul.f32 %v2035, %v2073
        %vm2075 = vcmp.eq.f32.partialorder %v2035, inf
        %v2076 = vsel %vm2075, %v2035, %v2074
        %vm2077 = vcmp.eq.f32.partialorder %v2035, 0.0
        %v2078 = vand.u32 %v2035, 2147483648
        %v2079 = vsel %vm2077, %v2078, %v2076
        %v2080 = vrsqrt.pop %v2036
        %v2081 = vmul.f32 %v2036, %v2080
        %vm2082 = vcmp.eq.f32.partialorder %v2036, inf
        %v2083 = vsel %vm2082, %v2036, %v2081
        %vm2084 = vcmp.eq.f32.partialorder %v2036, 0.0
        %v2085 = vand.u32 %v2036, 2147483648
        %v2086 = vsel %vm2084, %v2085, %v2083
        %v2087 = vrsqrt.pop %v2037
        %v2088 = vmul.f32 %v2037, %v2087
        %vm2089 = vcmp.eq.f32.partialorder %v2037, inf
        %v2090 = vsel %vm2089, %v2037, %v2088
        %vm2091 = vcmp.eq.f32.partialorder %v2037, 0.0
        %v2092 = vand.u32 %v2037, 2147483648
        %v2093 = vsel %vm2091, %v2092, %v2090
        %v2094 = vadd.f32 %v2044, 1.0
        %v2095 = vadd.f32 %v2051, 1.0
        %v2096 = vadd.f32 %v2058, 1.0
        %v2097 = vadd.f32 %v2065, 1.0
        %v2098 = vadd.f32 %v2072, 1.0
        %v2099 = vadd.f32 %v2079, 1.0
        %v2100 = vadd.f32 %v2086, 1.0
        %v2101 = vadd.f32 %v2093, 1.0
        %v2102 = vmul.f32 %v1942, %v2094
        %v2103 = vmul.f32 %v1943, %v2095
        %v2104 = vmul.f32 %v1944, %v2096
        %v2105 = vmul.f32 %v1945, %v2097
        %v2106 = vmul.f32 %v1946, %v2098
        %v2107 = vmul.f32 %v1947, %v2099
        %v2108 = vmul.f32 %v1948, %v2100
        %v2109 = vmul.f32 %v1949, %v2101
        %v2110 = vlog2.pop %v2102
        %v2111 = vmul.f32 %v2110, 0.6931472
        %v2112 = vlog2.pop %v2103
        %v2113 = vmul.f32 %v2112, 0.6931472
        %v2114 = vlog2.pop %v2104
        %v2115 = vmul.f32 %v2114, 0.6931472
        %v2116 = vlog2.pop %v2105
        %v2117 = vmul.f32 %v2116, 0.6931472
        %v2118 = vlog2.pop %v2106
        %v2119 = vmul.f32 %v2118, 0.6931472
        %v2120 = vlog2.pop %v2107
        %v2121 = vmul.f32 %v2120, 0.6931472
        %v2122 = vlog2.pop %v2108
        %v2123 = vmul.f32 %v2122, 0.6931472
        %v2124 = vlog2.pop %v2109
        %v2125 = vmul.f32 %v2124, 0.6931472
        %v2126 = vrsqrt.pop %v1990
        %v2127 = vrsqrt.pop %v1991
        %v2128 = vrsqrt.pop %v1992
        %v2129 = vrsqrt.pop %v1993
        %v2130 = vrsqrt.pop %v1994
        %v2131 = vrsqrt.pop %v1995
        %v2132 = vrsqrt.pop %v1996
        %v2133 = vrsqrt.pop %v1997
        %v2134 = vmul.f32 %v2111, %v2126
        %v2135 = vmul.f32 %v2113, %v2127
        %v2136 = vmul.f32 %v2115, %v2128
        %v2137 = vmul.f32 %v2117, %v2129
        %v2138 = vmul.f32 %v2119, %v2130
        %v2139 = vmul.f32 %v2121, %v2131
        %v2140 = vmul.f32 %v2123, %v2132
        %v2141 = vmul.f32 %v2125, %v2133
        %2143 = vset.pattern.permute.xlu0 0
        %2144 = vperm.xlu0 %2143, %v2134
        %v2145 = vpop.permute.xlu0 %2144
        %2148 = vset.pattern.permute.xlu0 0
        %2149 = vperm.xlu0 %2148, %v2135
        %v2150 = vpop.permute.xlu0 %2149
        %2153 = vset.pattern.permute.xlu0 0
        %2154 = vperm.xlu0 %2153, %v2136
        %v2155 = vpop.permute.xlu0 %2154
        %2158 = vset.pattern.permute.xlu0 0
        %2159 = vperm.xlu0 %2158, %v2137
        %v2160 = vpop.permute.xlu0 %2159
        %2163 = vset.pattern.permute.xlu0 0
        %2164 = vperm.xlu0 %2163, %v2138
        %v2165 = vpop.permute.xlu0 %2164
        %2168 = vset.pattern.permute.xlu0 0
        %2169 = vperm.xlu0 %2168, %v2139
        %v2170 = vpop.permute.xlu0 %2169
        %2173 = vset.pattern.permute.xlu0 0
        %2174 = vperm.xlu0 %2173, %v2140
        %v2175 = vpop.permute.xlu0 %2174
        %2178 = vset.pattern.permute.xlu0 0
        %2179 = vperm.xlu0 %2178, %v2141
        %v2180 = vpop.permute.xlu0 %2179
        %v2182 = vmul.f32 %v2145, %v1950
        %v2183 = vmul.f32 %v2150, %v1951
        %v2184 = vmul.f32 %v2155, %v1952
        %v2185 = vmul.f32 %v2160, %v1953
        %v2186 = vmul.f32 %v2165, %v1954
        %v2187 = vmul.f32 %v2170, %v1955
        %v2188 = vmul.f32 %v2175, %v1956
        %v2189 = vmul.f32 %v2180, %v1957
        %v2190 = vmax.f32 %v2182, 0.0
        %v2191 = vmax.f32 %v2183, 0.0
        %v2192 = vmax.f32 %v2184, 0.0
        %v2193 = vmax.f32 %v2185, 0.0
        %v2194 = vmax.f32 %v2186, 0.0
        %v2195 = vmax.f32 %v2187, 0.0
        %v2196 = vmax.f32 %v2188, 0.0
        %v2197 = vmax.f32 %v2189, 0.0
        %v2198 = vsel %vm364, %v2190, 0.0
        %v2199 = vsel %vm364, %v2191, 0.0
        %v2200 = vsel %vm364, %v2192, 0.0
        %v2201 = vsel %vm364, %v2193, 0.0
        %v2202 = vsel %vm364, %v2194, 0.0
        %v2203 = vsel %vm364, %v2195, 0.0
        %v2204 = vsel %vm364, %v2196, 0.0
        %v2205 = vsel %vm364, %v2197, 0.0
        %v2206 = vmul.f32 %v2198, %v2198
        %v2207 = vmul.f32 %v2199, %v2199
        %v2208 = vmul.f32 %v2200, %v2200
        %v2209 = vmul.f32 %v2201, %v2201
        %v2210 = vmul.f32 %v2202, %v2202
        %v2211 = vmul.f32 %v2203, %v2203
        %v2212 = vmul.f32 %v2204, %v2204
        %v2213 = vmul.f32 %v2205, %v2205
        %v2214 = vsel %vm755, %v2206, 0.0
        %2215 = vadd.xlane.f32.xlu0 %v2214
        %v2216 = vpop.xlane.xlu0 %2215
        %v2217 = vsel %vm755, %v2207, 0.0
        %2218 = vadd.xlane.f32.xlu0 %v2217
        %v2219 = vpop.xlane.xlu0 %2218
        %v2220 = vsel %vm755, %v2208, 0.0
        %2221 = vadd.xlane.f32.xlu0 %v2220
        %v2222 = vpop.xlane.xlu0 %2221
        %v2223 = vsel %vm755, %v2209, 0.0
        %2224 = vadd.xlane.f32.xlu0 %v2223
        %v2225 = vpop.xlane.xlu0 %2224
        %v2226 = vsel %vm755, %v2210, 0.0
        %2227 = vadd.xlane.f32.xlu0 %v2226
        %v2228 = vpop.xlane.xlu0 %2227
        %v2229 = vsel %vm755, %v2211, 0.0
        %2230 = vadd.xlane.f32.xlu0 %v2229
        %v2231 = vpop.xlane.xlu0 %2230
        %v2232 = vsel %vm755, %v2212, 0.0
        %2233 = vadd.xlane.f32.xlu0 %v2232
        %v2234 = vpop.xlane.xlu0 %2233
        %v2235 = vsel %vm755, %v2213, 0.0
        %2236 = vadd.xlane.f32.xlu0 %v2235
        %v2237 = vpop.xlane.xlu0 %2236
        %v2238 = vmax.f32 %v2216, 1e-15
        %v2239 = vmax.f32 %v2219, 1e-15
        %v2240 = vmax.f32 %v2222, 1e-15
        %v2241 = vmax.f32 %v2225, 1e-15
        %v2242 = vmax.f32 %v2228, 1e-15
        %v2243 = vmax.f32 %v2231, 1e-15
        %v2244 = vmax.f32 %v2234, 1e-15
        %v2245 = vmax.f32 %v2237, 1e-15
        %v2246 = vrsqrt.pop %v2238
        %v2247 = vmul.f32 %v2238, %v2246
        %vm2248 = vcmp.eq.f32.partialorder %v2238, inf
        %v2249 = vsel %vm2248, %v2238, %v2247
        %vm2250 = vcmp.eq.f32.partialorder %v2238, 0.0
        %v2251 = vand.u32 %v2238, 2147483648
        %v2252 = vsel %vm2250, %v2251, %v2249
        %v2253 = vrsqrt.pop %v2239
        %v2254 = vmul.f32 %v2239, %v2253
        %vm2255 = vcmp.eq.f32.partialorder %v2239, inf
        %v2256 = vsel %vm2255, %v2239, %v2254
        %vm2257 = vcmp.eq.f32.partialorder %v2239, 0.0
        %v2258 = vand.u32 %v2239, 2147483648
        %v2259 = vsel %vm2257, %v2258, %v2256
        %v2260 = vrsqrt.pop %v2240
        %v2261 = vmul.f32 %v2240, %v2260
        %vm2262 = vcmp.eq.f32.partialorder %v2240, inf
        %v2263 = vsel %vm2262, %v2240, %v2261
        %vm2264 = vcmp.eq.f32.partialorder %v2240, 0.0
        %v2265 = vand.u32 %v2240, 2147483648
        %v2266 = vsel %vm2264, %v2265, %v2263
        %v2267 = vrsqrt.pop %v2241
        %v2268 = vmul.f32 %v2241, %v2267
        %vm2269 = vcmp.eq.f32.partialorder %v2241, inf
        %v2270 = vsel %vm2269, %v2241, %v2268
        %vm2271 = vcmp.eq.f32.partialorder %v2241, 0.0
        %v2272 = vand.u32 %v2241, 2147483648
        %v2273 = vsel %vm2271, %v2272, %v2270
        %v2274 = vrsqrt.pop %v2242
        %v2275 = vmul.f32 %v2242, %v2274
        %vm2276 = vcmp.eq.f32.partialorder %v2242, inf
        %v2277 = vsel %vm2276, %v2242, %v2275
        %vm2278 = vcmp.eq.f32.partialorder %v2242, 0.0
        %v2279 = vand.u32 %v2242, 2147483648
        %v2280 = vsel %vm2278, %v2279, %v2277
        %v2281 = vrsqrt.pop %v2243
        %v2282 = vmul.f32 %v2243, %v2281
        %vm2283 = vcmp.eq.f32.partialorder %v2243, inf
        %v2284 = vsel %vm2283, %v2243, %v2282
        %vm2285 = vcmp.eq.f32.partialorder %v2243, 0.0
        %v2286 = vand.u32 %v2243, 2147483648
        %v2287 = vsel %vm2285, %v2286, %v2284
        %v2288 = vrsqrt.pop %v2244
        %v2289 = vmul.f32 %v2244, %v2288
        %vm2290 = vcmp.eq.f32.partialorder %v2244, inf
        %v2291 = vsel %vm2290, %v2244, %v2289
        %vm2292 = vcmp.eq.f32.partialorder %v2244, 0.0
        %v2293 = vand.u32 %v2244, 2147483648
        %v2294 = vsel %vm2292, %v2293, %v2291
        %v2295 = vrsqrt.pop %v2245
        %v2296 = vmul.f32 %v2245, %v2295
        %vm2297 = vcmp.eq.f32.partialorder %v2245, inf
        %v2298 = vsel %vm2297, %v2245, %v2296
        %vm2299 = vcmp.eq.f32.partialorder %v2245, 0.0
        %v2300 = vand.u32 %v2245, 2147483648
        %v2301 = vsel %vm2299, %v2300, %v2298
        %v2302 = vmin.f32 %v2252, 50.0
        %v2303 = vmin.f32 %v2259, 50.0
        %v2304 = vmin.f32 %v2266, 50.0
        %v2305 = vmin.f32 %v2273, 50.0
        %v2306 = vmin.f32 %v2280, 50.0
        %v2307 = vmin.f32 %v2287, 50.0
        %v2308 = vmin.f32 %v2294, 50.0
        %v2309 = vmin.f32 %v2301, 50.0
        %v2310 = vmul.f32 %v2302, 1.442695
        %v2311 = vpow.pop %v2310
        %v2312 = vmul.f32 %v2303, 1.442695
        %v2313 = vpow.pop %v2312
        %v2314 = vmul.f32 %v2304, 1.442695
        %v2315 = vpow.pop %v2314
        %v2316 = vmul.f32 %v2305, 1.442695
        %v2317 = vpow.pop %v2316
        %v2318 = vmul.f32 %v2306, 1.442695
        %v2319 = vpow.pop %v2318
        %v2320 = vmul.f32 %v2307, 1.442695
        %v2321 = vpow.pop %v2320
        %v2322 = vmul.f32 %v2308, 1.442695
        %v2323 = vpow.pop %v2322
        %v2324 = vmul.f32 %v2309, 1.442695
        %v2325 = vpow.pop %v2324
        %v2326 = vsub.f32 0.0, %v2302
        %v2327 = vsub.f32 0.0, %v2303
        %v2328 = vsub.f32 0.0, %v2304
        %v2329 = vsub.f32 0.0, %v2305
        %v2330 = vsub.f32 0.0, %v2306
        %v2331 = vsub.f32 0.0, %v2307
        %v2332 = vsub.f32 0.0, %v2308
        %v2333 = vsub.f32 0.0, %v2309
        %v2334 = vmul.f32 %v2326, 1.442695
        %v2335 = vpow.pop %v2334
        %v2336 = vmul.f32 %v2327, 1.442695
        %v2337 = vpow.pop %v2336
        %v2338 = vmul.f32 %v2328, 1.442695
        %v2339 = vpow.pop %v2338
        %v2340 = vmul.f32 %v2329, 1.442695
        %v2341 = vpow.pop %v2340
        %v2342 = vmul.f32 %v2330, 1.442695
        %v2343 = vpow.pop %v2342
        %v2344 = vmul.f32 %v2331, 1.442695
        %v2345 = vpow.pop %v2344
        %v2346 = vmul.f32 %v2332, 1.442695
        %v2347 = vpow.pop %v2346
        %v2348 = vmul.f32 %v2333, 1.442695
        %v2349 = vpow.pop %v2348
        %v2350 = vadd.f32 %v2311, %v2335
        %v2351 = vadd.f32 %v2313, %v2337
        %v2352 = vadd.f32 %v2315, %v2339
        %v2353 = vadd.f32 %v2317, %v2341
        %v2354 = vadd.f32 %v2319, %v2343
        %v2355 = vadd.f32 %v2321, %v2345
        %v2356 = vadd.f32 %v2323, %v2347
        %v2357 = vadd.f32 %v2325, %v2349
        %v2358 = vmul.f32 %v2350, 0.5
        %v2359 = vmul.f32 %v2351, 0.5
        %v2360 = vmul.f32 %v2352, 0.5
        %v2361 = vmul.f32 %v2353, 0.5
        %v2362 = vmul.f32 %v2354, 0.5
        %v2363 = vmul.f32 %v2355, 0.5
        %v2364 = vmul.f32 %v2356, 0.5
        %v2365 = vmul.f32 %v2357, 0.5
        %v2366 = vsub.f32 %v2311, %v2335
        %v2367 = vsub.f32 %v2313, %v2337
        %v2368 = vsub.f32 %v2315, %v2339
        %v2369 = vsub.f32 %v2317, %v2341
        %v2370 = vsub.f32 %v2319, %v2343
        %v2371 = vsub.f32 %v2321, %v2345
        %v2372 = vsub.f32 %v2323, %v2347
        %v2373 = vsub.f32 %v2325, %v2349
        %v2374 = vmul.f32 %v2366, 0.5
        %v2375 = vmul.f32 %v2367, 0.5
        %v2376 = vmul.f32 %v2368, 0.5
        %v2377 = vmul.f32 %v2369, 0.5
        %v2378 = vmul.f32 %v2370, 0.5
        %v2379 = vmul.f32 %v2371, 0.5
        %v2380 = vmul.f32 %v2372, 0.5
        %v2381 = vmul.f32 %v2373, 0.5
        %v2382 = vrsqrt.pop %v2238
        %v2383 = vrsqrt.pop %v2239
        %v2384 = vrsqrt.pop %v2240
        %v2385 = vrsqrt.pop %v2241
        %v2386 = vrsqrt.pop %v2242
        %v2387 = vrsqrt.pop %v2243
        %v2388 = vrsqrt.pop %v2244
        %v2389 = vrsqrt.pop %v2245
        %v2390 = vmul.f32 %v2374, %v2382
        %v2391 = vmul.f32 %v2375, %v2383
        %v2392 = vmul.f32 %v2376, %v2384
        %v2393 = vmul.f32 %v2377, %v2385
        %v2394 = vmul.f32 %v2378, %v2386
        %v2395 = vmul.f32 %v2379, %v2387
        %v2396 = vmul.f32 %v2380, %v2388
        %v2397 = vmul.f32 %v2381, %v2389
        %v2398 = vmul.f32 %v2390, %v2198
        %v2399 = vmul.f32 %v2391, %v2199
        %v2400 = vmul.f32 %v2392, %v2200
        %v2401 = vmul.f32 %v2393, %v2201
        %v2402 = vmul.f32 %v2394, %v2202
        %v2403 = vmul.f32 %v2395, %v2203
        %v2404 = vmul.f32 %v2396, %v2204
        %v2405 = vmul.f32 %v2397, %v2205
        %v2406 = vsel %vm364, %v2398, %v2358
        %v2407 = vsel %vm364, %v2399, %v2359
        %v2408 = vsel %vm364, %v2400, %v2360
        %v2409 = vsel %vm364, %v2401, %v2361
        %v2410 = vsel %vm364, %v2402, %v2362
        %v2411 = vsel %vm364, %v2403, %v2363
        %v2412 = vsel %vm364, %v2404, %v2364
        %v2413 = vsel %vm364, %v2405, %v2365
        %v2414 = vld [vmem:[#allocation11] sm:$0xff]
        %v2415 = vld [vmem:[#allocation11 + $0x8] sm:$0xff]
        %v2417 = vsel %vm755, %v2406, 0
        %v2420 = vsel %vm755, %v2407, 0
        %v2423 = vsel %vm755, %v2408, 0
        %v2426 = vsel %vm755, %v2409, 0
        %v2429 = vsel %vm755, %v2410, 0
        %v2432 = vsel %vm755, %v2411, 0
        %v2435 = vsel %vm755, %v2412, 0
        %v2438 = vsel %vm755, %v2413, 0
        %2440 = vmatprep.subr.mxu0 0.0
        %2441 = vmatpush1.msra.mxu0 %v2414
        %2442 = vmatprep.subr.mxu0 0.0
        %2443 = vmatpush1.msra.mxu0 %v2415
        %2444 = vmatprep.subr.mxu0 0.0
        %2445 = vmatpush1.msra.mxu0 0.0
        %2446 = vmatprep.subr.mxu0 0.0
        %2447 = vmatpush1.msra.mxu0 0.0
        %2448 = vmatprep.subr.mxu0 0.0
        %2449 = vmatpush1.msra.mxu0 0.0
        %2450 = vmatprep.subr.mxu0 0.0
        %2451 = vmatpush1.msra.mxu0 0.0
        %2452 = vmatprep.subr.mxu0 0.0
        %2453 = vmatpush1.msra.mxu0 0.0
        %2454 = vmatprep.subr.mxu0 0.0
        %2455 = vmatpush1.msra.mxu0 0.0
        %2456 = vmatprep.subr.mxu0 0.0
        %2457 = vmatpush1.msra.mxu0 0.0
        %2458 = vmatprep.subr.mxu0 0.0
        %2459 = vmatpush1.msra.mxu0 0.0
        %2460 = vmatprep.subr.mxu0 0.0
        %2461 = vmatpush1.msra.mxu0 0.0
        %2462 = vmatprep.subr.mxu0 0.0
        %2463 = vmatpush1.msra.mxu0 0.0
        %2464 = vmatprep.subr.mxu0 0.0
        %2465 = vmatpush1.msra.mxu0 0.0
        %2466 = vmatprep.subr.mxu0 0.0
        %2467 = vmatpush1.msra.mxu0 0.0
        %2468 = vmatprep.subr.mxu0 0.0
        %2469 = vmatpush1.msra.mxu0 0.0
        %2470 = vmatprep.subr.mxu0 0.0
        %2471 = vmatpush1.msra.mxu0 0.0
        %2472 = vmatprep.subr.mxu0 0.0
        %2473 = vmatpush1.msra.mxu0 0.0
        %2474 = vmatprep.subr.mxu0 0.0
        %2475 = vmatpush1.msra.mxu0 0.0
        %2476 = vmatprep.subr.mxu0 0.0
        %2477 = vmatpush1.msra.mxu0 0.0
        %2478 = vmatprep.subr.mxu0 0.0
        %2479 = vmatpush1.msra.mxu0 0.0
        %2480 = vmatprep.subr.mxu0 0.0
        %2481 = vmatpush1.msra.mxu0 0.0
        %2482 = vmatprep.subr.mxu0 0.0
        %2483 = vmatpush1.msra.mxu0 0.0
        %2484 = vmatprep.subr.mxu0 0.0
        %2485 = vmatpush1.msra.mxu0 0.0
        %2486 = vmatprep.subr.mxu0 0.0
        %2487 = vmatpush1.msra.mxu0 0.0
        %2488 = vmatprep.subr.mxu0 0.0
        %2489 = vmatpush1.msra.mxu0 0.0
        %2490 = vmatprep.subr.mxu0 0.0
        %2491 = vmatpush1.msra.mxu0 0.0
        %2492 = vmatprep.subr.mxu0 0.0
        %2493 = vmatpush1.msra.mxu0 0.0
        %2494 = vmatprep.subr.mxu0 0.0
        %2495 = vmatpush1.msra.mxu0 0.0
        %2496 = vmatprep.subr.mxu0 0.0
        %2497 = vmatpush1.msra.mxu0 0.0
        %2498 = vmatprep.subr.mxu0 0.0
        %2499 = vmatpush1.msra.mxu0 0.0
        %2500 = vmatprep.subr.mxu0 0.0
        %2501 = vmatpush1.msra.mxu0 0.0
        %2502 = vmatprep.subr.mxu0 0.0
        %2503 = vmatpush1.msra.mxu0 0.0
        %2504 = vmatprep.mubr.f32.mxu0 0.0
        %2505 = vmatmul.mubr.f32.gmra.mrb[0].mxu0 %v2417
        %v2506 = vpop.f32.mrb[0].mxu0
        %v2507 = vadd.f32 0.0, %v2506
        %v2508 = vpop.f32.mrb[0].mxu0
        %2509 = vmatprep.mubr.f32.mxu0 0.0
        %2510 = vmatmul.mubr.f32.gmra.mrb[0].mxu0 %v2420
        %v2511 = vpop.f32.mrb[0].mxu0
        %v2512 = vadd.f32 0.0, %v2511
        %v2513 = vpop.f32.mrb[0].mxu0
        %2514 = vmatprep.mubr.f32.mxu0 0.0
        %2515 = vmatmul.mubr.f32.gmra.mrb[0].mxu0 %v2423
        %v2516 = vpop.f32.mrb[0].mxu0
        %v2517 = vadd.f32 0.0, %v2516
        %v2518 = vpop.f32.mrb[0].mxu0
        %2519 = vmatprep.mubr.f32.mxu0 0.0
        %2520 = vmatmul.mubr.f32.gmra.mrb[0].mxu0 %v2426
        %v2521 = vpop.f32.mrb[0].mxu0
        %v2522 = vadd.f32 0.0, %v2521
        %v2523 = vpop.f32.mrb[0].mxu0
        %2524 = vmatprep.mubr.f32.mxu0 0.0
        %2525 = vmatmul.mubr.f32.gmra.mrb[0].mxu0 %v2429
        %v2526 = vpop.f32.mrb[0].mxu0
        %v2527 = vadd.f32 0.0, %v2526
        %v2528 = vpop.f32.mrb[0].mxu0
        %2529 = vmatprep.mubr.f32.mxu0 0.0
        %2530 = vmatmul.mubr.f32.gmra.mrb[0].mxu0 %v2432
        %v2531 = vpop.f32.mrb[0].mxu0
        %v2532 = vadd.f32 0.0, %v2531
        %v2533 = vpop.f32.mrb[0].mxu0
        %2534 = vmatprep.mubr.f32.mxu0 0.0
        %2535 = vmatmul.mubr.f32.gmra.mrb[0].mxu0 %v2435
        %v2536 = vpop.f32.mrb[0].mxu0
        %v2537 = vadd.f32 0.0, %v2536
        %v2538 = vpop.f32.mrb[0].mxu0
        %2539 = vmatprep.mubr.f32.mxu0 0.0
        %2540 = vmatmul.mubr.f32.gmra.mrb[0].mxu0 %v2438
        %v2541 = vpop.f32.mrb[0].mxu0
        %v2542 = vadd.f32 0.0, %v2541
        %v2543 = vpop.f32.mrb[0].mxu0
        %2544 = vdwg.mxu0
        %vm2545 = vcmask 588800
        %2546 = vst.msk [vmem:[%s336] sm:$0xff] %vm2545, %v2507
        %2547 = vst.msk [vmem:[%s336 + $0x8] sm:$0xff] %vm2545, %v2512
        %2548 = vst.msk [vmem:[%s336 + $0x10] sm:$0xff] %vm2545, %v2517
        %2549 = vst.msk [vmem:[%s336 + $0x18] sm:$0xff] %vm2545, %v2522
        %2550 = vst.msk [vmem:[%s336 + $0x20] sm:$0xff] %vm2545, %v2527
        %2551 = vst.msk [vmem:[%s336 + $0x28] sm:$0xff] %vm2545, %v2532
        %2552 = vst.msk [vmem:[%s336 + $0x30] sm:$0xff] %vm2545, %v2537
        %2553 = vst.msk [vmem:[%s336 + $0x38] sm:$0xff] %vm2545, %v2542
        %s2554 = sand.u32 %s165, 1
        %s2555 = scalar_lea.sflag [#allocation4], %s2554
        %s2556 = sand.u32 %s165, 1
        %s2557 = smul.addr %s2556, 64
        %s2558 = scalar_lea.vmem [#allocation13], %s2557
        // Predicated region
        $region69: #{hat_layer.2} parent=43 // pred_check
          %p2559 = pneg %p175
        $region70: #{hat_layer.2} parent=43 // pred_check_branch
          %2561 = sbr.rel (%p2559) target = $region72
        $region71: #{hat_layer.2} parent=43 // pred_region
          %s2562 = smul.u32 8, %s26
          %s2564 = ssub.s32 1024, 1024
          %2565 = vsyncadd %s2555, %s2564
          %s2566 = smul.addr %s2562, 128
          %s2567 = scalar_lea.hbm %s6, %s2566
          %s2568 = sshll.u32 %s2558, 4
          %s2569 = int_to_ptr.vmem [resolvable:$true] %s2568
          %2574 = dma.vmem_to_hbm [thread:$0]  %s2569, 1024, %s2567, %s2555, 128, 128, 8
        $region72: #{hat_layer.2} parent=43 // pred_fallthru
          _
      $region44: #{hat_layer.2} parent=5 // pred_fallthru
        _
      %p2575 = scmp.le.s32.totalorder 2, %s21
      // Predicated region
      $region73: #{hat_layer.2} parent=5 // pred_check
        %p2576 = pneg %p2575
      $region74: #{hat_layer.2} parent=5 // pred_check_branch
        %2578 = sbr.rel (%p2576) target = $region76
      $region75: #{hat_layer.2} parent=5 // pred_region
        %s2579 = ssub.s32 %s21, 2
        // Predicated region
        $region77: #{hat_layer.2} parent=75 // pred_check
          %p2580 = pneg %p181
        $region78: #{hat_layer.2} parent=75 // pred_check_branch
          %2582 = sbr.rel (%p2580) target = $region80
        $region79: #{hat_layer.2} parent=75 // pred_region
          %s2583 = sand.u32 %s166, 1
          %s2584 = scalar_lea.sflag [#allocation4], %s2583
          %s2585 = sand.u32 %s166, 1
          %s2586 = smul.addr %s2585, 64
          %s2587 = scalar_lea.vmem [#allocation13], %s2586
          %2588 = dma.done %s2584, 1024
        $region80: #{hat_layer.2} parent=75 // pred_fallthru
          _
      $region76: #{hat_layer.2} parent=5 // pred_fallthru
        _
    $region6: #{hat_layer.2} parent=1 // loop_footer
      %s25 = sadd.s32 1, %s21
    $region7: #{hat_layer.2} parent=1 // loop_footer_branch
      %20 = sbr.rel target = $region3
    $region8: #{hat_layer.2} parent=1 // loop_exit
      _
    %2589 = vsyncpa [#allocation3], 1
    %s2590 = scalar_lea.sflag [#allocation3], 1
    %2591 = vsyncpa %s2590, 1
    %2592 = vsyncpa [#allocation6], 1
    %2593 = vsyncpa [#allocation9], 1
    %2594 = vsyncpa [#allocation12], 1
    %2595 = vsyncpa [#allocation4], 1
    %s2596 = scalar_lea.sflag [#allocation4], 1
    %2597 = vsyncpa %s2596, 1

// kernel: hat_layer.3
$region0: #{hat_layer.3}
  #allocation0 [shape = 'u32[]', space=smem, size = 0x4, offset = 0x4, fixed_abs, tag = 'smem constant byte address 0x4 - core index']
  #allocation1 [shape = 'u32[144,128]{1,0:T(1,128)}', space=vmem, size = 0x12000, scoped, tag = 'internal scratch']
  #allocation2 [shape = 'f32[64,4]{1,0:T(8,128)}', space=vmem, size = 0x8000, scoped, tag = 'scratch operand']
  #allocation3 [shape = 'f32[64,4]{1,0:T(8,128)}', space=vmem, size = 0x8000, scoped, tag = 'scratch operand']
  #allocation4 [shape = 'f32[64,64]{1,0:T(8,128)}', space=vmem, size = 0x8000, scoped, tag = 'scratch operand']
  %s0 = inlined_call_operand.hbm [shape: bf16[256,256], index: 0, kind: input, shape index: {}]
  %s1 = inlined_call_operand.hbm [shape: f32[256,4], index: 1, kind: input, shape index: {}]
  %s2 = inlined_call_operand.hbm [shape: f32[4,256], index: 2, kind: input, shape index: {}]
  %s3 = inlined_call_operand.hbm [shape: bf16[256,64], index: 3, kind: input, shape index: {}]
  %s4 = inlined_call_operand.hbm [shape: f32[1,64], index: 4, kind: input, shape index: {}]
  %s5 = inlined_call_operand.hbm [shape: f32[1,64], index: 5, kind: input, shape index: {}]
  %s6 = inlined_call_operand.hbm [shape: f32[1,64], index: 6, kind: input, shape index: {}]
  %s7 = inlined_call_operand.hbm [shape: f32[256,64], index: 7, kind: output, shape index: {}]
  %s8 = sld [smem:[#allocation0]]
  $region97: #{hat_layer.3} parent=0
    _
  %s10 = ssub.s32 1, %s8
  %s11 = scalar_select 0, %s10, %s8
  $region1: #{hat_layer.3} parent=0
    #allocation5 [shape = 'u8[32768]{0}', space=vmem, size = 0x8000, scoped, tag = 'input window, operand 0']
    #allocation6 [shape = 's32[2]{0}', space=sflag, size = 0x8, scoped, tag = 'scoped memory for hat_layer.3']
    #allocation7 [shape = 's32[2]{0}', space=sflag, size = 0x8, scoped, tag = 'scoped memory for hat_layer.3']
    #allocation8 [shape = 'u8[65536]{0}', space=vmem, size = 0x10000, scoped, tag = 'input window, operand 1']
    #allocation9 [shape = 's32[2]{0}', space=sflag, size = 0x8, scoped, tag = 'scoped memory for hat_layer.3']
    #allocation10 [shape = 'u8[4096]{0}', space=vmem, size = 0x1000, scoped, tag = 'input window, operand 2']
    #allocation11 [shape = 'u8[65536]{0}', space=vmem, size = 0x10000, scoped, tag = 'input window, operand 3']
    #allocation12 [shape = 's32[2]{0}', space=sflag, size = 0x8, scoped, tag = 'scoped memory for hat_layer.3']
    #allocation13 [shape = 'u8[512]{0}', space=vmem, size = 0x400, scoped, tag = 'input window, operand 4, single buffered']
    #allocation14 [shape = 'u8[512]{0}', space=vmem, size = 0x400, scoped, tag = 'input window, operand 5, single buffered']
    #allocation15 [shape = 's32[1]{0}', space=sflag, size = 0x4, scoped, tag = 'scoped memory for hat_layer.3']
    #allocation16 [shape = 'u8[512]{0}', space=vmem, size = 0x400, scoped, tag = 'input window, operand 6, single buffered']
    #allocation17 [shape = 'u8[65536]{0}', space=vmem, size = 0x10000, scoped, tag = 'output window, operand 0']
    %12 = vsyncpa [#allocation6], 0
    %s13 = scalar_lea.sflag [#allocation6], 1
    %14 = vsyncpa %s13, 0
    %15 = vsyncpa [#allocation9], 0
    %s16 = scalar_lea.sflag [#allocation9], 1
    %17 = vsyncpa %s16, 0
    %18 = vsyncpa [#allocation12], 0
    %s19 = scalar_lea.sflag [#allocation12], 1
    %20 = vsyncpa %s19, 0
    %21 = vsyncpa [#allocation15], 0
    %22 = vsyncpa [#allocation7], 0
    %s23 = scalar_lea.sflag [#allocation7], 1
    %24 = vsyncpa %s23, 0
    loop: start=0, step=1, limit=10
    $region2: #{hat_layer.3} parent=1 // loop_pre_header
      _
    $region3: #{hat_layer.3} parent=1 // loop_header
      %s26 = sphi 0, %s30
      %p27 = scmp.ge.s32.totalorder %s26, 10
      %s33 = sphi 0, %s45
      %s34 = sphi 0, %s41
      %s35 = sphi 0, %s33
      %s36 = sphi 0, %s34
      %s37 = sphi 0, %s35
      %s38 = sphi 0, %s36
      %s50 = sphi 0, %s52
      %s53 = sphi 0, %s50
      %s54 = sphi 0, %s53
      %s70 = sphi 0, %s54
      %s76 = sphi 0, %s78
      %s79 = sphi 0, %s76
      %s80 = sphi 0, %s79
      %s96 = sphi 0, %s80
      %s102 = sphi 0, %s104
      %s105 = sphi 0, %s102
      %s106 = sphi 0, %s105
      %s122 = sphi 0, %s106
      %s128 = sphi 0, %s130
      %s131 = sphi 0, %s128
      %s132 = sphi 0, %s131
      %s148 = sphi 0, %s132
      %s152 = sphi 0, %s152
      %s154 = sphi 0, %s152
      %s155 = sphi 0, %s154
      %s169 = sphi 0, %s155
      %s173 = sphi 0, %s173
      %s175 = sphi 0, %s173
      %s176 = sphi 0, %s175
      %s190 = sphi 0, %s176
      %s194 = sphi 0, %s194
      %s196 = sphi 0, %s194
      %s197 = sphi 0, %s196
      %s211 = sphi 0, %s197
      %s217 = sphi 0, %s219
      %s220 = sphi 0, %s217
      %s221 = sphi 0, %s220
      %s237 = sphi 0, %s221
    $region4: #{hat_layer.3} parent=1 // loop_header_branch
      %29 = sbr.rel (%p27) target = $region8
    $region5: #{hat_layer.3} parent=1 // loop_body
      %s31 = ssub.s32 %s26, 1
      %s32 = ssub.s32 %s26, 2
      %s39 = sadd.s32 1, %s34
      %p40 = scmp.ge.s32.totalorder %s39, 2
      %s41 = scalar_select %p40, 0, %s39
      %s42 = sadd.s32 1, %s33
      %s43 = scalar_select %p40, %s42, %s33
      %p44 = scmp.ge.s32.totalorder %s43, 4
      %s45 = scalar_select %p44, 0, %s43
      %s46 = ssub.s32 %s33, %s45
      %s47 = ssub.s32 %s34, %s41
      %s48 = sor.u32 %s46, %s47
      %p49 = scmp.eq.s32.totalorder %s48, 0
      %s51 = sadd.s32 %s50, 1
      %s52 = scalar_select %p49, %s50, %s51
      %p55 = pneg %p49
      %p56 = scmp.eq.s32.totalorder %s26, 7
      %p57 = por %p55, %p56
      %p58 = scmp.ne.s32.totalorder %s50, %s53
      %p59 = scmp.eq.s32.totalorder %s26, 0
      %p60 = por %p58, %p59
      %p61 = scmp.ne.s32.totalorder %s50, %s53
      %p62 = scmp.eq.s32.totalorder %s31, 7
      %p63 = por %p61, %p62
      %p64 = scmp.ne.s32.totalorder %s53, %s54
      %p65 = scmp.eq.s32.totalorder %s31, 0
      %p66 = por %p64, %p65
      %p67 = scmp.ne.s32.totalorder %s53, %s54
      %p68 = scmp.eq.s32.totalorder %s32, 7
      %p69 = por %p67, %p68
      %p71 = scmp.ne.s32.totalorder %s54, %s70
      %p72 = scmp.eq.s32.totalorder %s32, 0
      %p73 = por %p71, %p72
      %s74 = ssub.s32 %s33, %s45
      %p75 = scmp.eq.s32.totalorder %s74, 0
      %s77 = sadd.s32 %s76, 1
      %s78 = scalar_select %p75, %s76, %s77
      %p81 = pneg %p75
      %p82 = scmp.eq.s32.totalorder %s26, 7
      %p83 = por %p81, %p82
      %p84 = scmp.ne.s32.totalorder %s76, %s79
      %p85 = scmp.eq.s32.totalorder %s26, 0
      %p86 = por %p84, %p85
      %p87 = scmp.ne.s32.totalorder %s76, %s79
      %p88 = scmp.eq.s32.totalorder %s31, 7
      %p89 = por %p87, %p88
      %p90 = scmp.ne.s32.totalorder %s79, %s80
      %p91 = scmp.eq.s32.totalorder %s31, 0
      %p92 = por %p90, %p91
      %p93 = scmp.ne.s32.totalorder %s79, %s80
      %p94 = scmp.eq.s32.totalorder %s32, 7
      %p95 = por %p93, %p94
      %p97 = scmp.ne.s32.totalorder %s80, %s96
      %p98 = scmp.eq.s32.totalorder %s32, 0
      %p99 = por %p97, %p98
      %s100 = ssub.s32 %s34, %s41
      %p101 = scmp.eq.s32.totalorder %s100, 0
      %s103 = sadd.s32 %s102, 1
      %s104 = scalar_select %p101, %s102, %s103
      %p107 = pneg %p101
      %p108 = scmp.eq.s32.totalorder %s26, 7
      %p109 = por %p107, %p108
      %p110 = scmp.ne.s32.totalorder %s102, %s105
      %p111 = scmp.eq.s32.totalorder %s26, 0
      %p112 = por %p110, %p111
      %p113 = scmp.ne.s32.totalorder %s102, %s105
      %p114 = scmp.eq.s32.totalorder %s31, 7
      %p115 = por %p113, %p114
      %p116 = scmp.ne.s32.totalorder %s105, %s106
      %p117 = scmp.eq.s32.totalorder %s31, 0
      %p118 = por %p116, %p117
      %p119 = scmp.ne.s32.totalorder %s105, %s106
      %p120 = scmp.eq.s32.totalorder %s32, 7
      %p121 = por %p119, %p120
      %p123 = scmp.ne.s32.totalorder %s106, %s122
      %p124 = scmp.eq.s32.totalorder %s32, 0
      %p125 = por %p123, %p124
      %s126 = ssub.s32 %s34, %s41
      %p127 = scmp.eq.s32.totalorder %s126, 0
      %s129 = sadd.s32 %s128, 1
      %s130 = scalar_select %p127, %s128, %s129
      %p133 = pneg %p127
      %p134 = scmp.eq.s32.totalorder %s26, 7
      %p135 = por %p133, %p134
      %p136 = scmp.ne.s32.totalorder %s128, %s131
      %p137 = scmp.eq.s32.totalorder %s26, 0
      %p138 = por %p136, %p137
      %p139 = scmp.ne.s32.totalorder %s128, %s131
      %p140 = scmp.eq.s32.totalorder %s31, 7
      %p141 = por %p139, %p140
      %p142 = scmp.ne.s32.totalorder %s131, %s132
      %p143 = scmp.eq.s32.totalorder %s31, 0
      %p144 = por %p142, %p143
      %p145 = scmp.ne.s32.totalorder %s131, %s132
      %p146 = scmp.eq.s32.totalorder %s32, 7
      %p147 = por %p145, %p146
      %p149 = scmp.ne.s32.totalorder %s132, %s148
      %p150 = scmp.eq.s32.totalorder %s32, 0
      %p151 = por %p149, %p150
      %s153 = sadd.s32 %s152, 1
      %p156 = scmp.eq.s32.totalorder %s26, 7
      %p157 = scmp.ne.s32.totalorder %s152, %s154
      %p158 = scmp.eq.s32.totalorder %s26, 0
      %p159 = por %p157, %p158
      %p160 = scmp.ne.s32.totalorder %s152, %s154
      %p161 = scmp.eq.s32.totalorder %s31, 7
      %p162 = por %p160, %p161
      %p163 = scmp.ne.s32.totalorder %s154, %s155
      %p164 = scmp.eq.s32.totalorder %s31, 0
      %p165 = por %p163, %p164
      %p166 = scmp.ne.s32.totalorder %s154, %s155
      %p167 = scmp.eq.s32.totalorder %s32, 7
      %p168 = por %p166, %p167
      %p170 = scmp.ne.s32.totalorder %s155, %s169
      %p171 = scmp.eq.s32.totalorder %s32, 0
      %p172 = por %p170, %p171
      %s174 = sadd.s32 %s173, 1
      %p177 = scmp.eq.s32.totalorder %s26, 7
      %p178 = scmp.ne.s32.totalorder %s173, %s175
      %p179 = scmp.eq.s32.totalorder %s26, 0
      %p180 = por %p178, %p179
      %p181 = scmp.ne.s32.totalorder %s173, %s175
      %p182 = scmp.eq.s32.totalorder %s31, 7
      %p183 = por %p181, %p182
      %p184 = scmp.ne.s32.totalorder %s175, %s176
      %p185 = scmp.eq.s32.totalorder %s31, 0
      %p186 = por %p184, %p185
      %p187 = scmp.ne.s32.totalorder %s175, %s176
      %p188 = scmp.eq.s32.totalorder %s32, 7
      %p189 = por %p187, %p188
      %p191 = scmp.ne.s32.totalorder %s176, %s190
      %p192 = scmp.eq.s32.totalorder %s32, 0
      %p193 = por %p191, %p192
      %s195 = sadd.s32 %s194, 1
      %p198 = scmp.eq.s32.totalorder %s26, 7
      %p199 = scmp.ne.s32.totalorder %s194, %s196
      %p200 = scmp.eq.s32.totalorder %s26, 0
      %p201 = por %p199, %p200
      %p202 = scmp.ne.s32.totalorder %s194, %s196
      %p203 = scmp.eq.s32.totalorder %s31, 7
      %p204 = por %p202, %p203
      %p205 = scmp.ne.s32.totalorder %s196, %s197
      %p206 = scmp.eq.s32.totalorder %s31, 0
      %p207 = por %p205, %p206
      %p208 = scmp.ne.s32.totalorder %s196, %s197
      %p209 = scmp.eq.s32.totalorder %s32, 7
      %p210 = por %p208, %p209
      %p212 = scmp.ne.s32.totalorder %s197, %s211
      %p213 = scmp.eq.s32.totalorder %s32, 0
      %p214 = por %p212, %p213
      %s215 = ssub.s32 %s33, %s45
      %p216 = scmp.eq.s32.totalorder %s215, 0
      %s218 = sadd.s32 %s217, 1
      %s219 = scalar_select %p216, %s217, %s218
      %p222 = pneg %p216
      %p223 = scmp.eq.s32.totalorder %s26, 7
      %p224 = por %p222, %p223
      %p225 = scmp.ne.s32.totalorder %s217, %s220
      %p226 = scmp.eq.s32.totalorder %s26, 0
      %p227 = por %p225, %p226
      %p228 = scmp.ne.s32.totalorder %s217, %s220
      %p229 = scmp.eq.s32.totalorder %s31, 7
      %p230 = por %p228, %p229
      %p231 = scmp.ne.s32.totalorder %s220, %s221
      %p232 = scmp.eq.s32.totalorder %s31, 0
      %p233 = por %p231, %p232
      %p234 = scmp.ne.s32.totalorder %s220, %s221
      %p235 = scmp.eq.s32.totalorder %s32, 7
      %p236 = por %p234, %p235
      %p238 = scmp.ne.s32.totalorder %s221, %s237
      %p239 = scmp.eq.s32.totalorder %s32, 0
      %p240 = por %p238, %p239
      %p241 = scmp.le.s32.totalorder 1, %s26
      %p242 = scmp.lt.s32.totalorder %s26, 9
      %p243 = pnand %p241, %p242
      %p244 = pneg %p243
      // Predicated region
      $region9: #{hat_layer.3} parent=5 // pred_check
        _
      $region10: #{hat_layer.3} parent=5 // pred_check_branch
        %246 = sbr.rel (%p243) target = $region12
      $region11: #{hat_layer.3} parent=5 // pred_region
        %s247 = ssub.s32 %s26, 1
        // Predicated region
        $region13: #{hat_layer.3} parent=11 // pred_check
          %p248 = pneg %p165
        $region14: #{hat_layer.3} parent=11 // pred_check_branch
          %250 = sbr.rel (%p248) target = $region16
        $region15: #{hat_layer.3} parent=11 // pred_region
          %s252 = ssub.s32 16, 16
          %253 = vsyncadd [#allocation12], %s252
          %s255 = sshll.u32 [#allocation13], 4
          %s256 = int_to_ptr.vmem [resolvable:$true] %s255
          %258 = dma.hbm_to_vmem [thread:$0]  %s4, 16, %s256, [#allocation12]
        $region16: #{hat_layer.3} parent=11 // pred_fallthru
          _
        // Predicated region
        $region17: #{hat_layer.3} parent=11 // pred_check
          %p259 = pneg %p186
        $region18: #{hat_layer.3} parent=11 // pred_check_branch
          %261 = sbr.rel (%p259) target = $region20
        $region19: #{hat_layer.3} parent=11 // pred_region
          %s263 = ssub.s32 16, 16
          %264 = vsyncadd [#allocation15], %s263
          %s266 = sshll.u32 [#allocation14], 4
          %s267 = int_to_ptr.vmem [resolvable:$true] %s266
          %269 = dma.hbm_to_vmem [thread:$0]  %s5, 16, %s267, [#allocation15]
        $region20: #{hat_layer.3} parent=11 // pred_fallthru
          _
        // Predicated region
        $region21: #{hat_layer.3} parent=11 // pred_check
          %p270 = pneg %p207
        $region22: #{hat_layer.3} parent=11 // pred_check_branch
          %272 = sbr.rel (%p270) target = $region24
        $region23: #{hat_layer.3} parent=11 // pred_region
          %s274 = ssub.s32 16, 16
          %275 = vsyncadd [#allocation15], %s274
          %s277 = sshll.u32 [#allocation16], 4
          %s278 = int_to_ptr.vmem [resolvable:$true] %s277
          %280 = dma.hbm_to_vmem [thread:$0]  %s6, 16, %s278, [#allocation15]
        $region24: #{hat_layer.3} parent=11 // pred_fallthru
          _
      $region12: #{hat_layer.3} parent=5 // pred_fallthru
        _
      %p281 = scmp.lt.s32.totalorder %s26, 8
      // Predicated region
      $region25: #{hat_layer.3} parent=5 // pred_check
        %p282 = pneg %p281
      $region26: #{hat_layer.3} parent=5 // pred_check_branch
        %284 = sbr.rel (%p282) target = $region28
      $region27: #{hat_layer.3} parent=5 // pred_region
        // Predicated region
        $region29: #{hat_layer.3} parent=27 // pred_check
          %p285 = pneg %p60
        $region30: #{hat_layer.3} parent=27 // pred_check_branch
          %287 = sbr.rel (%p285) target = $region32
        $region31: #{hat_layer.3} parent=27 // pred_region
          %s288 = sand.u32 %s50, 1
          %s289 = scalar_lea.sflag [#allocation6], %s288
          %s290 = sand.u32 %s50, 1
          %s291 = smul.addr %s290, 32
          %s292 = scalar_lea.vmem [#allocation5], %s291
          %s293 = smul.u32 8, %s33
          %s295 = ssub.s32 512, 512
          %296 = vsyncadd %s289, %s295
          %s297 = smul.addr %s293, 2
          %s298 = sadd.s32 %s34, %s297
          %s299 = smul.addr %s298, 64
          %s300 = scalar_lea.hbm %s0, %s299
          %s301 = sshll.u32 %s292, 4
          %s302 = int_to_ptr.vmem [resolvable:$true] %s301
          %307 = dma.hbm_to_vmem [thread:$0]  %s300, 512, %s302, %s289, 128, 64, 4
        $region32: #{hat_layer.3} parent=27 // pred_fallthru
          _
        // Predicated region
        $region33: #{hat_layer.3} parent=27 // pred_check
          %p308 = pneg %p86
        $region34: #{hat_layer.3} parent=27 // pred_check_branch
          %310 = sbr.rel (%p308) target = $region36
        $region35: #{hat_layer.3} parent=27 // pred_region
          %s311 = sand.u32 %s26, 1
          %s312 = scalar_lea.sflag [#allocation9], %s311
          %s313 = sand.u32 %s76, 1
          %s314 = smul.addr %s313, 64
          %s315 = scalar_lea.vmem [#allocation8], %s314
          %s316 = smul.u32 8, %s33
          %s318 = ssub.s32 1024, 1024
          %319 = vsyncadd %s312, %s318
          %s320 = smul.addr %s316, 128
          %s321 = scalar_lea.hbm %s1, %s320
          %s322 = sshll.u32 %s315, 4
          %s323 = int_to_ptr.vmem [resolvable:$true] %s322
          %328 = dma.hbm_to_vmem [thread:$0]  %s321, 1024, %s323, %s312, 128, 128, 8
        $region36: #{hat_layer.3} parent=27 // pred_fallthru
          _
        // Predicated region
        $region37: #{hat_layer.3} parent=27 // pred_check
          %p329 = pneg %p112
        $region38: #{hat_layer.3} parent=27 // pred_check_branch
          %331 = sbr.rel (%p329) target = $region40
        $region39: #{hat_layer.3} parent=27 // pred_region
          %s332 = sand.u32 %s26, 1
          %s333 = scalar_lea.sflag [#allocation9], %s332
          %s334 = sand.u32 %s102, 1
          %s335 = smul.addr %s334, 4
          %s336 = scalar_lea.vmem [#allocation10], %s335
          %s338 = ssub.s32 64, 64
          %339 = vsyncadd %s333, %s338
          %s340 = smul.addr %s34, 64
          %s341 = scalar_lea.hbm %s2, %s340
          %s343 = sshll.u32 %s336, 4
          %s344 = int_to_ptr.vmem [resolvable:$true] %s343
          %346 = dma.hbm_to_vmem [thread:$0]  %s341, 64, %s344, %s333
        $region40: #{hat_layer.3} parent=27 // pred_fallthru
          _
        // Predicated region
        $region41: #{hat_layer.3} parent=27 // pred_check
          %p347 = pneg %p138
        $region42: #{hat_layer.3} parent=27 // pred_check_branch
          %349 = sbr.rel (%p347) target = $region44
        $region43: #{hat_layer.3} parent=27 // pred_region
          %s350 = sand.u32 %s26, 1
          %s351 = scalar_lea.sflag [#allocation12], %s350
          %s352 = sand.u32 %s128, 1
          %s353 = smul.addr %s352, 64
          %s354 = scalar_lea.vmem [#allocation11], %s353
          %s355 = smul.u32 16, %s34
          %s357 = ssub.s32 1024, 1024
          %358 = vsyncadd %s351, %s357
          %s359 = smul.addr %s355, 64
          %s360 = scalar_lea.hbm %s3, %s359
          %s361 = sshll.u32 %s354, 4
          %s362 = int_to_ptr.vmem [resolvable:$true] %s361
          %367 = dma.hbm_to_vmem [thread:$0]  %s360, 1024, %s362, %s351, 64, 64, 4
        $region44: #{hat_layer.3} parent=27 // pred_fallthru
          _
      $region28: #{hat_layer.3} parent=5 // pred_fallthru
        _
      %p368 = scmp.le.s32.totalorder 1, %s26
      %p369 = scmp.lt.s32.totalorder %s26, 9
      %p370 = pnand %p368, %p369
      %p371 = pneg %p370
      // Predicated region
      $region45: #{hat_layer.3} parent=5 // pred_check
        _
      $region46: #{hat_layer.3} parent=5 // pred_check_branch
        %373 = sbr.rel (%p370) target = $region48
      $region47: #{hat_layer.3} parent=5 // pred_region
        %s374 = ssub.s32 %s26, 1
        %s375 = sand.u32 %s53, 1
        %s376 = scalar_lea.sflag [#allocation6], %s375
        %s377 = sand.u32 %s53, 1
        %s378 = smul.addr %s377, 32
        %s379 = scalar_lea.vmem [#allocation5], %s378
        // Predicated region
        $region49: #{hat_layer.3} parent=47 // pred_check
          %p380 = pneg %p66
        $region50: #{hat_layer.3} parent=47 // pred_check_branch
          %382 = sbr.rel (%p380) target = $region52
        $region51: #{hat_layer.3} parent=47 // pred_region
          %383 = dma.done %s376, 512
        $region52: #{hat_layer.3} parent=47 // pred_fallthru
          _
        %s384 = sand.u32 %s31, 1
        %s385 = scalar_lea.sflag [#allocation9], %s384
        %s386 = sand.u32 %s79, 1
        %s387 = smul.addr %s386, 64
        %s388 = scalar_lea.vmem [#allocation8], %s387
        // Predicated region
        $region53: #{hat_layer.3} parent=47 // pred_check
          %p389 = pneg %p92
        $region54: #{hat_layer.3} parent=47 // pred_check_branch
          %391 = sbr.rel (%p389) target = $region56
        $region55: #{hat_layer.3} parent=47 // pred_region
          %392 = dma.done %s385, 1024
        $region56: #{hat_layer.3} parent=47 // pred_fallthru
          _
        %s393 = sand.u32 %s31, 1
        %s394 = scalar_lea.sflag [#allocation9], %s393
        %s395 = sand.u32 %s105, 1
        %s396 = smul.addr %s395, 4
        %s397 = scalar_lea.vmem [#allocation10], %s396
        // Predicated region
        $region57: #{hat_layer.3} parent=47 // pred_check
          %p398 = pneg %p118
        $region58: #{hat_layer.3} parent=47 // pred_check_branch
          %400 = sbr.rel (%p398) target = $region60
        $region59: #{hat_layer.3} parent=47 // pred_region
          %401 = dma.done %s394, 64
        $region60: #{hat_layer.3} parent=47 // pred_fallthru
          _
        %s402 = sand.u32 %s31, 1
        %s403 = scalar_lea.sflag [#allocation12], %s402
        %s404 = sand.u32 %s131, 1
        %s405 = smul.addr %s404, 64
        %s406 = scalar_lea.vmem [#allocation11], %s405
        // Predicated region
        $region61: #{hat_layer.3} parent=47 // pred_check
          %p407 = pneg %p144
        $region62: #{hat_layer.3} parent=47 // pred_check_branch
          %409 = sbr.rel (%p407) target = $region64
        $region63: #{hat_layer.3} parent=47 // pred_region
          %410 = dma.done %s403, 1024
        $region64: #{hat_layer.3} parent=47 // pred_fallthru
          _
        // Predicated region
        $region65: #{hat_layer.3} parent=47 // pred_check
          %p411 = pneg %p165
        $region66: #{hat_layer.3} parent=47 // pred_check_branch
          %413 = sbr.rel (%p411) target = $region68
        $region67: #{hat_layer.3} parent=47 // pred_region
          %414 = dma.done [#allocation12], 16
        $region68: #{hat_layer.3} parent=47 // pred_fallthru
          _
        // Predicated region
        $region69: #{hat_layer.3} parent=47 // pred_check
          %p415 = pneg %p186
        $region70: #{hat_layer.3} parent=47 // pred_check_branch
          %417 = sbr.rel (%p415) target = $region72
        $region71: #{hat_layer.3} parent=47 // pred_region
          %418 = dma.done [#allocation15], 16
        $region72: #{hat_layer.3} parent=47 // pred_fallthru
          _
        // Predicated region
        $region73: #{hat_layer.3} parent=47 // pred_check
          %p419 = pneg %p207
        $region74: #{hat_layer.3} parent=47 // pred_check_branch
          %421 = sbr.rel (%p419) target = $region76
        $region75: #{hat_layer.3} parent=47 // pred_region
          %422 = dma.done [#allocation15], 16
        $region76: #{hat_layer.3} parent=47 // pred_fallthru
          _
        %s423 = sand.u32 %s53, 1
        %s424 = scalar_lea.sflag [#allocation6], %s423
        %s425 = sand.u32 %s53, 1
        %s426 = smul.addr %s425, 32
        %s427 = scalar_lea.vmem [#allocation5], %s426
        %p428 = pneg %p66
        %p429 = pneg %p63
        %s430 = sand.u32 %s31, 1
        %s431 = scalar_lea.sflag [#allocation9], %s430
        %s432 = sand.u32 %s79, 1
        %s433 = smul.addr %s432, 64
        %s434 = scalar_lea.vmem [#allocation8], %s433
        %p435 = pneg %p92
        %p436 = pneg %p89
        %s437 = sand.u32 %s31, 1
        %s438 = scalar_lea.sflag [#allocation9], %s437
        %s439 = sand.u32 %s105, 1
        %s440 = smul.addr %s439, 4
        %s441 = scalar_lea.vmem [#allocation10], %s440
        %p442 = pneg %p118
        %p443 = pneg %p115
        %s444 = sand.u32 %s31, 1
        %s445 = scalar_lea.sflag [#allocation12], %s444
        %s446 = sand.u32 %s131, 1
        %s447 = smul.addr %s446, 64
        %s448 = scalar_lea.vmem [#allocation11], %s447
        %p449 = pneg %p144
        %p450 = pneg %p141
        %p451 = pneg %p165
        %p452 = pneg %p162
        %p453 = pneg %p186
        %p454 = pneg %p183
        %p455 = pneg %p207
        %p456 = pneg %p204
        %p457 = pneg %p233
        %p458 = pneg %p230
        %s459 = sand.u32 %s220, 1
        %s460 = scalar_lea.sflag [#allocation7], %s459
        %s461 = sand.u32 %s220, 1
        %s462 = smul.addr %s461, 64
        %s463 = scalar_lea.vmem [#allocation17], %s462
        %s464 = smul.u32 8, %s35
        %s465 = smul.u32 8, %s35
        %s466 = smul.u32 16, %s36
        %s467 = smul.u32 8, %s35
        %p469 = scmp.eq.s32.totalorder %s36, 0
        // Predicated region
        $region77: #{hat_layer.3} parent=47 // pred_check
          %p470 = pneg %p469
        $region78: #{hat_layer.3} parent=47 // pred_check_branch
          %472 = sbr.rel (%p470) target = $region80
        $region79: #{hat_layer.3} parent=47 // pred_region
          %vm473 = vcmask 31744
          %474 = vst.msk [vmem:[#allocation2] sm:$0xff] %vm473, -inf
          %475 = vst.msk [vmem:[#allocation2 + $0x8] sm:$0xff] %vm473, -inf
          %476 = vst.msk [vmem:[#allocation2 + $0x10] sm:$0xff] %vm473, -inf
          %477 = vst.msk [vmem:[#allocation2 + $0x18] sm:$0xff] %vm473, -inf
          %478 = vst.msk [vmem:[#allocation2 + $0x20] sm:$0xff] %vm473, -inf
          %479 = vst.msk [vmem:[#allocation2 + $0x28] sm:$0xff] %vm473, -inf
          %480 = vst.msk [vmem:[#allocation2 + $0x30] sm:$0xff] %vm473, -inf
          %481 = vst.msk [vmem:[#allocation2 + $0x38] sm:$0xff] %vm473, -inf
          %482 = vst.msk [vmem:[#allocation3] sm:$0xff] %vm473, 0.0
          %483 = vst.msk [vmem:[#allocation3 + $0x8] sm:$0xff] %vm473, 0.0
          %484 = vst.msk [vmem:[#allocation3 + $0x10] sm:$0xff] %vm473, 0.0
          %485 = vst.msk [vmem:[#allocation3 + $0x18] sm:$0xff] %vm473, 0.0
          %486 = vst.msk [vmem:[#allocation3 + $0x20] sm:$0xff] %vm473, 0.0
          %487 = vst.msk [vmem:[#allocation3 + $0x28] sm:$0xff] %vm473, 0.0
          %488 = vst.msk [vmem:[#allocation3 + $0x30] sm:$0xff] %vm473, 0.0
          %489 = vst.msk [vmem:[#allocation3 + $0x38] sm:$0xff] %vm473, 0.0
          %vm490 = vcmask 523264
          %491 = vst.msk [vmem:[#allocation4] sm:$0xff] %vm490, 0.0
          %492 = vst.msk [vmem:[#allocation4 + $0x8] sm:$0xff] %vm490, 0.0
          %493 = vst.msk [vmem:[#allocation4 + $0x10] sm:$0xff] %vm490, 0.0
          %494 = vst.msk [vmem:[#allocation4 + $0x18] sm:$0xff] %vm490, 0.0
          %495 = vst.msk [vmem:[#allocation4 + $0x20] sm:$0xff] %vm490, 0.0
          %496 = vst.msk [vmem:[#allocation4 + $0x28] sm:$0xff] %vm490, 0.0
          %497 = vst.msk [vmem:[#allocation4 + $0x30] sm:$0xff] %vm490, 0.0
          %498 = vst.msk [vmem:[#allocation4 + $0x38] sm:$0xff] %vm490, 0.0
        $region80: #{hat_layer.3} parent=47 // pred_fallthru
          _
        %v499 = vld [vmem:[%s379] sm:$0xf]
        %v500 = vld [vmem:[%s379 + $0x4] sm:$0xf]
        %v501 = vld [vmem:[%s379 + $0x8] sm:$0xf]
        %v502 = vld [vmem:[%s379 + $0xc] sm:$0xf]
        %v503 = vld [vmem:[%s379 + $0x10] sm:$0xf]
        %v504 = vld [vmem:[%s379 + $0x14] sm:$0xf]
        %v505 = vld [vmem:[%s379 + $0x18] sm:$0xf]
        %v506 = vld [vmem:[%s379 + $0x1c] sm:$0xf]
        %v507 = vunpack.c.l.bf16 %v499
        %v508 = vunpack.c.l.bf16 %v500
        %v509 = vunpack.c.l.bf16 %v501
        %v510 = vunpack.c.l.bf16 %v502
        %v511 = vunpack.c.l.bf16 %v503
        %v512 = vunpack.c.l.bf16 %v504
        %v513 = vunpack.c.l.bf16 %v505
        %v514 = vunpack.c.l.bf16 %v506
        %v515 = vld [vmem:[%s406] sm:$0xf]
        %v516 = vld [vmem:[%s406 + $0x4] sm:$0xf]
        %v517 = vld [vmem:[%s406 + $0x8] sm:$0xf]
        %v518 = vld [vmem:[%s406 + $0xc] sm:$0xf]
        %v519 = vld [vmem:[%s406 + $0x10] sm:$0xf]
        %v520 = vld [vmem:[%s406 + $0x14] sm:$0xf]
        %v521 = vld [vmem:[%s406 + $0x18] sm:$0xf]
        %v522 = vld [vmem:[%s406 + $0x1c] sm:$0xf]
        %v523 = vld [vmem:[%s406 + $0x20] sm:$0xf]
        %v524 = vld [vmem:[%s406 + $0x24] sm:$0xf]
        %v525 = vld [vmem:[%s406 + $0x28] sm:$0xf]
        %v526 = vld [vmem:[%s406 + $0x2c] sm:$0xf]
        %v527 = vld [vmem:[%s406 + $0x30] sm:$0xf]
        %v528 = vld [vmem:[%s406 + $0x34] sm:$0xf]
        %v529 = vld [vmem:[%s406 + $0x38] sm:$0xf]
        %v530 = vld [vmem:[%s406 + $0x3c] sm:$0xf]
        %v531 = vld [vmem:[%s388] sm:$0xff]
        %v532 = vld [vmem:[%s388 + $0x8] sm:$0xff]
        %v533 = vld [vmem:[%s388 + $0x10] sm:$0xff]
        %v534 = vld [vmem:[%s388 + $0x18] sm:$0xff]
        %v535 = vld [vmem:[%s388 + $0x20] sm:$0xff]
        %v536 = vld [vmem:[%s388 + $0x28] sm:$0xff]
        %v537 = vld [vmem:[%s388 + $0x30] sm:$0xff]
        %v538 = vld [vmem:[%s388 + $0x38] sm:$0xff]
        %v539 = vld [vmem:[%s397] sm:$0x1]
        %541 = vset.pattern.permute.xlu0 0
        %542 = vperm.xlu0 %541, %v531
        %v543 = vpop.permute.xlu0 %542
        %546 = vset.pattern.permute.xlu0 0
        %547 = vperm.xlu0 %546, %v532
        %v548 = vpop.permute.xlu0 %547
        %551 = vset.pattern.permute.xlu0 0
        %552 = vperm.xlu0 %551, %v533
        %v553 = vpop.permute.xlu0 %552
        %556 = vset.pattern.permute.xlu0 0
        %557 = vperm.xlu0 %556, %v534
        %v558 = vpop.permute.xlu0 %557
        %561 = vset.pattern.permute.xlu0 0
        %562 = vperm.xlu0 %561, %v535
        %v563 = vpop.permute.xlu0 %562
        %566 = vset.pattern.permute.xlu0 0
        %567 = vperm.xlu0 %566, %v536
        %v568 = vpop.permute.xlu0 %567
        %571 = vset.pattern.permute.xlu0 0
        %572 = vperm.xlu0 %571, %v537
        %v573 = vpop.permute.xlu0 %572
        %576 = vset.pattern.permute.xlu0 0
        %577 = vperm.xlu0 %576, %v538
        %v578 = vpop.permute.xlu0 %577
        %v580 = vlaneseq
        %v581 = vshrl.u32 %v580, 7
        %v582 = vsub.s32 0, %v581
        %v583 = vrot.slane %v539, %v582
        %v584 = vadd.f32 %v543, %v583
        %v585 = vadd.f32 %v548, %v583
        %v586 = vadd.f32 %v553, %v583
        %v587 = vadd.f32 %v558, %v583
        %v588 = vadd.f32 %v563, %v583
        %v589 = vadd.f32 %v568, %v583
        %v590 = vadd.f32 %v573, %v583
        %v591 = vadd.f32 %v578, %v583
        %vm592 = vcmp.gt.f32.partialorder %v584, 0.0
        %vm593 = vcmp.gt.f32.partialorder %v585, 0.0
        %vm594 = vcmp.gt.f32.partialorder %v586, 0.0
        %vm595 = vcmp.gt.f32.partialorder %v587, 0.0
        %vm596 = vcmp.gt.f32.partialorder %v588, 0.0
        %vm597 = vcmp.gt.f32.partialorder %v589, 0.0
        %vm598 = vcmp.gt.f32.partialorder %v590, 0.0
        %vm599 = vcmp.gt.f32.partialorder %v591, 0.0
        %v600 = vmul.f32 %v584, 0.2
        %v601 = vmul.f32 %v585, 0.2
        %v602 = vmul.f32 %v586, 0.2
        %v603 = vmul.f32 %v587, 0.2
        %v604 = vmul.f32 %v588, 0.2
        %v605 = vmul.f32 %v589, 0.2
        %v606 = vmul.f32 %v590, 0.2
        %v607 = vmul.f32 %v591, 0.2
        %v608 = vsel %vm592, %v584, %v600
        %v609 = vsel %vm593, %v585, %v601
        %v610 = vsel %vm594, %v586, %v602
        %v611 = vsel %vm595, %v587, %v603
        %v612 = vsel %vm596, %v588, %v604
        %v613 = vsel %vm597, %v589, %v605
        %v614 = vsel %vm598, %v590, %v606
        %v615 = vsel %vm599, %v591, %v607
        %v616 = vadd.f32 %v608, %v507
        %v617 = vadd.f32 %v609, %v508
        %v618 = vadd.f32 %v610, %v509
        %v619 = vadd.f32 %v611, %v510
        %v620 = vadd.f32 %v612, %v511
        %v621 = vadd.f32 %v613, %v512
        %v622 = vadd.f32 %v614, %v513
        %v623 = vadd.f32 %v615, %v514
        %v624 = vld [vmem:[#allocation2] sm:$0xff]
        %v625 = vld [vmem:[#allocation2 + $0x8] sm:$0xff]
        %v626 = vld [vmem:[#allocation2 + $0x10] sm:$0xff]
        %v627 = vld [vmem:[#allocation2 + $0x18] sm:$0xff]
        %v628 = vld [vmem:[#allocation2 + $0x20] sm:$0xff]
        %v629 = vld [vmem:[#allocation2 + $0x28] sm:$0xff]
        %v630 = vld [vmem:[#allocation2 + $0x30] sm:$0xff]
        %v631 = vld [vmem:[#allocation2 + $0x38] sm:$0xff]
        %632 = vmax.xlane.f32.xlu0 %v616
        %v633 = vpop.xlane.xlu0 %632
        %634 = vmax.xlane.f32.xlu0 %v617
        %v635 = vpop.xlane.xlu0 %634
        %636 = vmax.xlane.f32.xlu0 %v618
        %v637 = vpop.xlane.xlu0 %636
        %638 = vmax.xlane.f32.xlu0 %v619
        %v639 = vpop.xlane.xlu0 %638
        %640 = vmax.xlane.f32.xlu0 %v620
        %v641 = vpop.xlane.xlu0 %640
        %642 = vmax.xlane.f32.xlu0 %v621
        %v643 = vpop.xlane.xlu0 %642
        %644 = vmax.xlane.f32.xlu0 %v622
        %v645 = vpop.xlane.xlu0 %644
        %646 = vmax.xlane.f32.xlu0 %v623
        %v647 = vpop.xlane.xlu0 %646
        %v648 = vmax.f32 %v624, %v633
        %v649 = vmax.f32 %v625, %v635
        %v650 = vmax.f32 %v626, %v637
        %v651 = vmax.f32 %v627, %v639
        %v652 = vmax.f32 %v628, %v641
        %v653 = vmax.f32 %v629, %v643
        %v654 = vmax.f32 %v630, %v645
        %v655 = vmax.f32 %v631, %v647
        %v656 = vsub.f32 %v624, %v648
        %v657 = vsub.f32 %v625, %v649
        %v658 = vsub.f32 %v626, %v650
        %v659 = vsub.f32 %v627, %v651
        %v660 = vsub.f32 %v628, %v652
        %v661 = vsub.f32 %v629, %v653
        %v662 = vsub.f32 %v630, %v654
        %v663 = vsub.f32 %v631, %v655
        %v664 = vmul.f32 %v656, 1.442695
        %v665 = vpow.pop %v664
        %v666 = vmul.f32 %v657, 1.442695
        %v667 = vpow.pop %v666
        %v668 = vmul.f32 %v658, 1.442695
        %v669 = vpow.pop %v668
        %v670 = vmul.f32 %v659, 1.442695
        %v671 = vpow.pop %v670
        %v672 = vmul.f32 %v660, 1.442695
        %v673 = vpow.pop %v672
        %v674 = vmul.f32 %v661, 1.442695
        %v675 = vpow.pop %v674
        %v676 = vmul.f32 %v662, 1.442695
        %v677 = vpow.pop %v676
        %v678 = vmul.f32 %v663, 1.442695
        %v679 = vpow.pop %v678
        %681 = vset.pattern.permute.xlu0 0
        %682 = vperm.xlu0 %681, %v648
        %v683 = vpop.permute.xlu0 %682
        %686 = vset.pattern.permute.xlu0 0
        %687 = vperm.xlu0 %686, %v649
        %v688 = vpop.permute.xlu0 %687
        %691 = vset.pattern.permute.xlu0 0
        %692 = vperm.xlu0 %691, %v650
        %v693 = vpop.permute.xlu0 %692
        %696 = vset.pattern.permute.xlu0 0
        %697 = vperm.xlu0 %696, %v651
        %v698 = vpop.permute.xlu0 %697
        %701 = vset.pattern.permute.xlu0 0
        %702 = vperm.xlu0 %701, %v652
        %v703 = vpop.permute.xlu0 %702
        %706 = vset.pattern.permute.xlu0 0
        %707 = vperm.xlu0 %706, %v653
        %v708 = vpop.permute.xlu0 %707
        %711 = vset.pattern.permute.xlu0 0
        %712 = vperm.xlu0 %711, %v654
        %v713 = vpop.permute.xlu0 %712
        %716 = vset.pattern.permute.xlu0 0
        %717 = vperm.xlu0 %716, %v655
        %v718 = vpop.permute.xlu0 %717
        %v720 = vsub.f32 %v616, %v683
        %v721 = vsub.f32 %v617, %v688
        %v722 = vsub.f32 %v618, %v693
        %v723 = vsub.f32 %v619, %v698
        %v724 = vsub.f32 %v620, %v703
        %v725 = vsub.f32 %v621, %v708
        %v726 = vsub.f32 %v622, %v713
        %v727 = vsub.f32 %v623, %v718
        %v728 = vmul.f32 %v720, 1.442695
        %v729 = vpow.pop %v728
        %v730 = vmul.f32 %v721, 1.442695
        %v731 = vpow.pop %v730
        %v732 = vmul.f32 %v722, 1.442695
        %v733 = vpow.pop %v732
        %v734 = vmul.f32 %v723, 1.442695
        %v735 = vpow.pop %v734
        %v736 = vmul.f32 %v724, 1.442695
        %v737 = vpow.pop %v736
        %v738 = vmul.f32 %v725, 1.442695
        %v739 = vpow.pop %v738
        %v740 = vmul.f32 %v726, 1.442695
        %v741 = vpow.pop %v740
        %v742 = vmul.f32 %v727, 1.442695
        %v743 = vpow.pop %v742
        %v744 = vld [vmem:[#allocation3] sm:$0xff]
        %v745 = vld [vmem:[#allocation3 + $0x8] sm:$0xff]
        %v746 = vld [vmem:[#allocation3 + $0x10] sm:$0xff]
        %v747 = vld [vmem:[#allocation3 + $0x18] sm:$0xff]
        %v748 = vld [vmem:[#allocation3 + $0x20] sm:$0xff]
        %v749 = vld [vmem:[#allocation3 + $0x28] sm:$0xff]
        %v750 = vld [vmem:[#allocation3 + $0x30] sm:$0xff]
        %v751 = vld [vmem:[#allocation3 + $0x38] sm:$0xff]
        %v752 = vmul.f32 %v665, %v744
        %v753 = vmul.f32 %v667, %v745
        %v754 = vmul.f32 %v669, %v746
        %v755 = vmul.f32 %v671, %v747
        %v756 = vmul.f32 %v673, %v748
        %v757 = vmul.f32 %v675, %v749
        %v758 = vmul.f32 %v677, %v750
        %v759 = vmul.f32 %v679, %v751
        %760 = vadd.xlane.f32.xlu0 %v729
        %v761 = vpop.xlane.xlu0 %760
        %762 = vadd.xlane.f32.xlu0 %v731
        %v763 = vpop.xlane.xlu0 %762
        %764 = vadd.xlane.f32.xlu0 %v733
        %v765 = vpop.xlane.xlu0 %764
        %766 = vadd.xlane.f32.xlu0 %v735
        %v767 = vpop.xlane.xlu0 %766
        %768 = vadd.xlane.f32.xlu0 %v737
        %v769 = vpop.xlane.xlu0 %768
        %770 = vadd.xlane.f32.xlu0 %v739
        %v771 = vpop.xlane.xlu0 %770
        %772 = vadd.xlane.f32.xlu0 %v741
        %v773 = vpop.xlane.xlu0 %772
        %774 = vadd.xlane.f32.xlu0 %v743
        %v775 = vpop.xlane.xlu0 %774
        %v776 = vadd.f32 %v752, %v761
        %v777 = vadd.f32 %v753, %v763
        %v778 = vadd.f32 %v754, %v765
        %v779 = vadd.f32 %v755, %v767
        %v780 = vadd.f32 %v756, %v769
        %v781 = vadd.f32 %v757, %v771
        %v782 = vadd.f32 %v758, %v773
        %v783 = vadd.f32 %v759, %v775
        %vm784 = vcmask 7168
        %785 = vst.msk [vmem:[#allocation3] sm:$0xff] %vm784, %v776
        %786 = vst.msk [vmem:[#allocation3 + $0x8] sm:$0xff] %vm784, %v777
        %787 = vst.msk [vmem:[#allocation3 + $0x10] sm:$0xff] %vm784, %v778
        %788 = vst.msk [vmem:[#allocation3 + $0x18] sm:$0xff] %vm784, %v779
        %789 = vst.msk [vmem:[#allocation3 + $0x20] sm:$0xff] %vm784, %v780
        %790 = vst.msk [vmem:[#allocation3 + $0x28] sm:$0xff] %vm784, %v781
        %791 = vst.msk [vmem:[#allocation3 + $0x30] sm:$0xff] %vm784, %v782
        %792 = vst.msk [vmem:[#allocation3 + $0x38] sm:$0xff] %vm784, %v783
        %v793 = vld [vmem:[#allocation4] sm:$0xff]
        %v794 = vld [vmem:[#allocation4 + $0x8] sm:$0xff]
        %v795 = vld [vmem:[#allocation4 + $0x10] sm:$0xff]
        %v796 = vld [vmem:[#allocation4 + $0x18] sm:$0xff]
        %v797 = vld [vmem:[#allocation4 + $0x20] sm:$0xff]
        %v798 = vld [vmem:[#allocation4 + $0x28] sm:$0xff]
        %v799 = vld [vmem:[#allocation4 + $0x30] sm:$0xff]
        %v800 = vld [vmem:[#allocation4 + $0x38] sm:$0xff]
        %802 = vset.pattern.permute.xlu0 0
        %803 = vperm.xlu0 %802, %v665
        %v804 = vpop.permute.xlu0 %803
        %807 = vset.pattern.permute.xlu0 0
        %808 = vperm.xlu0 %807, %v667
        %v809 = vpop.permute.xlu0 %808
        %812 = vset.pattern.permute.xlu0 0
        %813 = vperm.xlu0 %812, %v669
        %v814 = vpop.permute.xlu0 %813
        %817 = vset.pattern.permute.xlu0 0
        %818 = vperm.xlu0 %817, %v671
        %v819 = vpop.permute.xlu0 %818
        %822 = vset.pattern.permute.xlu0 0
        %823 = vperm.xlu0 %822, %v673
        %v824 = vpop.permute.xlu0 %823
        %827 = vset.pattern.permute.xlu0 0
        %828 = vperm.xlu0 %827, %v675
        %v829 = vpop.permute.xlu0 %828
        %832 = vset.pattern.permute.xlu0 0
        %833 = vperm.xlu0 %832, %v677
        %v834 = vpop.permute.xlu0 %833
        %837 = vset.pattern.permute.xlu0 0
        %838 = vperm.xlu0 %837, %v679
        %v839 = vpop.permute.xlu0 %838
        %v841 = vmul.f32 %v804, %v793
        %v842 = vmul.f32 %v809, %v794
        %v843 = vmul.f32 %v814, %v795
        %v844 = vmul.f32 %v819, %v796
        %v845 = vmul.f32 %v824, %v797
        %v846 = vmul.f32 %v829, %v798
        %v847 = vmul.f32 %v834, %v799
        %v848 = vmul.f32 %v839, %v800
        %v849 = vpack.c.bf16 %v731, %v729
        %v850 = vpack.c.bf16 %v735, %v733
        %v851 = vpack.c.bf16 %v739, %v737
        %v852 = vpack.c.bf16 %v743, %v741
        %v869 = vunpack.c.l.b16 %v515
        %v870 = vunpack.c.l.b16 %v516
        %v871 = vunpack.c.l.b16 %v517
        %v872 = vunpack.c.l.b16 %v518
        %v873 = vunpack.c.l.b16 %v519
        %v874 = vunpack.c.l.b16 %v520
        %v875 = vunpack.c.l.b16 %v521
        %v876 = vunpack.c.l.b16 %v522
        %v877 = vunpack.c.l.b16 %v523
        %v878 = vunpack.c.l.b16 %v524
        %v879 = vunpack.c.l.b16 %v525
        %v880 = vunpack.c.l.b16 %v526
        %v881 = vunpack.c.l.b16 %v527
        %v882 = vunpack.c.l.b16 %v528
        %v883 = vunpack.c.l.b16 %v529
        %v884 = vunpack.c.l.b16 %v530
        %v885 = vpack.c.b16 %v870, %v869
        %v886 = vpack.c.b16 %v872, %v871
        %v887 = vpack.c.b16 %v874, %v873
        %v888 = vpack.c.b16 %v876, %v875
        %v889 = vpack.c.b16 %v878, %v877
        %v890 = vpack.c.b16 %v880, %v879
        %v891 = vpack.c.b16 %v882, %v881
        %v892 = vpack.c.b16 %v884, %v883
        %901 = vmatprep.subr.bf16.mxu0 0
        %902 = vmatpush1.bf16.msra.mxu0 %v885
        %903 = vmatprep.subr.bf16.mxu0 0
        %904 = vmatpush1.bf16.msra.mxu0 %v886
        %905 = vmatprep.subr.bf16.mxu0 0
        %906 = vmatpush1.bf16.msra.mxu0 %v887
        %907 = vmatprep.subr.bf16.mxu0 0
        %908 = vmatpush1.bf16.msra.mxu0 %v888
        %909 = vmatprep.subr.bf16.mxu0 0
        %910 = vmatpush1.bf16.msra.mxu0 %v889
        %911 = vmatprep.subr.bf16.mxu0 0
        %912 = vmatpush1.bf16.msra.mxu0 %v890
        %913 = vmatprep.subr.bf16.mxu0 0
        %914 = vmatpush1.bf16.msra.mxu0 %v891
        %915 = vmatprep.subr.bf16.mxu0 0
        %916 = vmatpush1.bf16.msra.mxu0 %v892
        %917 = vmatprep.subr.bf16.mxu0 0
        %918 = vmatpush1.bf16.msra.mxu0 0
        %919 = vmatprep.subr.bf16.mxu0 0
        %920 = vmatpush1.bf16.msra.mxu0 0
        %921 = vmatprep.subr.bf16.mxu0 0
        %922 = vmatpush1.bf16.msra.mxu0 0
        %923 = vmatprep.subr.bf16.mxu0 0
        %924 = vmatpush1.bf16.msra.mxu0 0
        %925 = vmatprep.subr.bf16.mxu0 0
        %926 = vmatpush1.bf16.msra.mxu0 0
        %927 = vmatprep.subr.bf16.mxu0 0
        %928 = vmatpush1.bf16.msra.mxu0 0
        %929 = vmatprep.subr.bf16.mxu0 0
        %930 = vmatpush1.bf16.msra.mxu0 0
        %931 = vmatprep.subr.bf16.mxu0 0
        %932 = vmatpush1.bf16.msra.mxu0 0
        %933 = vmatprep.mubr.bf16.mxu0 0
        %934 = vmatmul.mubr.bf16.gmra.mrb[0].mxu0 %v849
        %v935 = vpop.f32.mrb[0].mxu0
        %v936 = vadd.f32 0.0, %v935
        %v937 = vpop.f32.mrb[0].mxu0
        %v938 = vpop.f32.mrb[0].mxu0
        %v939 = vadd.f32 0.0, %v938
        %v940 = vpop.f32.mrb[0].mxu0
        %941 = vmatprep.mubr.bf16.mxu0 0
        %942 = vmatmul.mubr.bf16.gmra.mrb[0].mxu0 %v850
        %v943 = vpop.f32.mrb[0].mxu0
        %v944 = vadd.f32 0.0, %v943
        %v945 = vpop.f32.mrb[0].mxu0
        %v946 = vpop.f32.mrb[0].mxu0
        %v947 = vadd.f32 0.0, %v946
        %v948 = vpop.f32.mrb[0].mxu0
        %949 = vmatprep.mubr.bf16.mxu0 0
        %950 = vmatmul.mubr.bf16.gmra.mrb[0].mxu0 %v851
        %v951 = vpop.f32.mrb[0].mxu0
        %v952 = vadd.f32 0.0, %v951
        %v953 = vpop.f32.mrb[0].mxu0
        %v954 = vpop.f32.mrb[0].mxu0
        %v955 = vadd.f32 0.0, %v954
        %v956 = vpop.f32.mrb[0].mxu0
        %957 = vmatprep.mubr.bf16.mxu0 0
        %958 = vmatmul.mubr.bf16.gmra.mrb[0].mxu0 %v852
        %v959 = vpop.f32.mrb[0].mxu0
        %v960 = vadd.f32 0.0, %v959
        %v961 = vpop.f32.mrb[0].mxu0
        %v962 = vpop.f32.mrb[0].mxu0
        %v963 = vadd.f32 0.0, %v962
        %v964 = vpop.f32.mrb[0].mxu0
        %965 = vdwg.mxu0
        %v966 = vadd.f32 %v841, %v936
        %v967 = vadd.f32 %v842, %v939
        %v968 = vadd.f32 %v843, %v944
        %v969 = vadd.f32 %v844, %v947
        %v970 = vadd.f32 %v845, %v952
        %v971 = vadd.f32 %v846, %v955
        %v972 = vadd.f32 %v847, %v960
        %v973 = vadd.f32 %v848, %v963
        %vm974 = vcmask 130048
        %975 = vst.msk [vmem:[#allocation4] sm:$0xff] %vm974, %v966
        %976 = vst.msk [vmem:[#allocation4 + $0x8] sm:$0xff] %vm974, %v967
        %977 = vst.msk [vmem:[#allocation4 + $0x10] sm:$0xff] %vm974, %v968
        %978 = vst.msk [vmem:[#allocation4 + $0x18] sm:$0xff] %vm974, %v969
        %979 = vst.msk [vmem:[#allocation4 + $0x20] sm:$0xff] %vm974, %v970
        %980 = vst.msk [vmem:[#allocation4 + $0x28] sm:$0xff] %vm974, %v971
        %981 = vst.msk [vmem:[#allocation4 + $0x30] sm:$0xff] %vm974, %v972
        %982 = vst.msk [vmem:[#allocation4 + $0x38] sm:$0xff] %vm974, %v973
        %983 = vst.msk [vmem:[#allocation2] sm:$0xff] %vm784, %v648
        %984 = vst.msk [vmem:[#allocation2 + $0x8] sm:$0xff] %vm784, %v649
        %985 = vst.msk [vmem:[#allocation2 + $0x10] sm:$0xff] %vm784, %v650
        %986 = vst.msk [vmem:[#allocation2 + $0x18] sm:$0xff] %vm784, %v651
        %987 = vst.msk [vmem:[#allocation2 + $0x20] sm:$0xff] %vm784, %v652
        %988 = vst.msk [vmem:[#allocation2 + $0x28] sm:$0xff] %vm784, %v653
        %989 = vst.msk [vmem:[#allocation2 + $0x30] sm:$0xff] %vm784, %v654
        %990 = vst.msk [vmem:[#allocation2 + $0x38] sm:$0xff] %vm784, %v655
        %v991 = vld [vmem:[%s406] sm:$0xf]
        %v992 = vld [vmem:[%s406 + $0x4] sm:$0xf]
        %v993 = vld [vmem:[%s406 + $0x8] sm:$0xf]
        %v994 = vld [vmem:[%s406 + $0xc] sm:$0xf]
        %v995 = vld [vmem:[%s406 + $0x10] sm:$0xf]
        %v996 = vld [vmem:[%s406 + $0x14] sm:$0xf]
        %v997 = vld [vmem:[%s406 + $0x18] sm:$0xf]
        %v998 = vld [vmem:[%s406 + $0x1c] sm:$0xf]
        %v999 = vld [vmem:[%s406 + $0x20] sm:$0xf]
        %v1000 = vld [vmem:[%s406 + $0x24] sm:$0xf]
        %v1001 = vld [vmem:[%s406 + $0x28] sm:$0xf]
        %v1002 = vld [vmem:[%s406 + $0x2c] sm:$0xf]
        %v1003 = vld [vmem:[%s406 + $0x30] sm:$0xf]
        %v1004 = vld [vmem:[%s406 + $0x34] sm:$0xf]
        %v1005 = vld [vmem:[%s406 + $0x38] sm:$0xf]
        %v1006 = vld [vmem:[%s406 + $0x3c] sm:$0xf]
        %v1007 = vld [vmem:[%s388] sm:$0xff]
        %v1008 = vld [vmem:[%s388 + $0x8] sm:$0xff]
        %v1009 = vld [vmem:[%s388 + $0x10] sm:$0xff]
        %v1010 = vld [vmem:[%s388 + $0x18] sm:$0xff]
        %v1011 = vld [vmem:[%s388 + $0x20] sm:$0xff]
        %v1012 = vld [vmem:[%s388 + $0x28] sm:$0xff]
        %v1013 = vld [vmem:[%s388 + $0x30] sm:$0xff]
        %v1014 = vld [vmem:[%s388 + $0x38] sm:$0xff]
        %v1015 = vld [vmem:[%s397 + $0x1] sm:$0x1]
        %1017 = vset.pattern.permute.xlu0 1
        %1018 = vperm.xlu0 %1017, %v1007
        %v1019 = vpop.permute.xlu0 %1018
        %1022 = vset.pattern.permute.xlu0 1
        %1023 = vperm.xlu0 %1022, %v1008
        %v1024 = vpop.permute.xlu0 %1023
        %1027 = vset.pattern.permute.xlu0 1
        %1028 = vperm.xlu0 %1027, %v1009
        %v1029 = vpop.permute.xlu0 %1028
        %1032 = vset.pattern.permute.xlu0 1
        %1033 = vperm.xlu0 %1032, %v1010
        %v1034 = vpop.permute.xlu0 %1033
        %1037 = vset.pattern.permute.xlu0 1
        %1038 = vperm.xlu0 %1037, %v1011
        %v1039 = vpop.permute.xlu0 %1038
        %1042 = vset.pattern.permute.xlu0 1
        %1043 = vperm.xlu0 %1042, %v1012
        %v1044 = vpop.permute.xlu0 %1043
        %1047 = vset.pattern.permute.xlu0 1
        %1048 = vperm.xlu0 %1047, %v1013
        %v1049 = vpop.permute.xlu0 %1048
        %1052 = vset.pattern.permute.xlu0 1
        %1053 = vperm.xlu0 %1052, %v1014
        %v1054 = vpop.permute.xlu0 %1053
        %v1056 = vlaneseq
        %v1057 = vshrl.u32 %v1056, 7
        %v1058 = vsub.s32 0, %v1057
        %v1059 = vrot.slane %v1015, %v1058
        %v1060 = vadd.f32 %v1019, %v1059
        %v1061 = vadd.f32 %v1024, %v1059
        %v1062 = vadd.f32 %v1029, %v1059
        %v1063 = vadd.f32 %v1034, %v1059
        %v1064 = vadd.f32 %v1039, %v1059
        %v1065 = vadd.f32 %v1044, %v1059
        %v1066 = vadd.f32 %v1049, %v1059
        %v1067 = vadd.f32 %v1054, %v1059
        %vm1068 = vcmp.gt.f32.partialorder %v1060, 0.0
        %vm1069 = vcmp.gt.f32.partialorder %v1061, 0.0
        %vm1070 = vcmp.gt.f32.partialorder %v1062, 0.0
        %vm1071 = vcmp.gt.f32.partialorder %v1063, 0.0
        %vm1072 = vcmp.gt.f32.partialorder %v1064, 0.0
        %vm1073 = vcmp.gt.f32.partialorder %v1065, 0.0
        %vm1074 = vcmp.gt.f32.partialorder %v1066, 0.0
        %vm1075 = vcmp.gt.f32.partialorder %v1067, 0.0
        %v1076 = vmul.f32 %v1060, 0.2
        %v1077 = vmul.f32 %v1061, 0.2
        %v1078 = vmul.f32 %v1062, 0.2
        %v1079 = vmul.f32 %v1063, 0.2
        %v1080 = vmul.f32 %v1064, 0.2
        %v1081 = vmul.f32 %v1065, 0.2
        %v1082 = vmul.f32 %v1066, 0.2
        %v1083 = vmul.f32 %v1067, 0.2
        %v1084 = vsel %vm1068, %v1060, %v1076
        %v1085 = vsel %vm1069, %v1061, %v1077
        %v1086 = vsel %vm1070, %v1062, %v1078
        %v1087 = vsel %vm1071, %v1063, %v1079
        %v1088 = vsel %vm1072, %v1064, %v1080
        %v1089 = vsel %vm1073, %v1065, %v1081
        %v1090 = vsel %vm1074, %v1066, %v1082
        %v1091 = vsel %vm1075, %v1067, %v1083
        %v1092 = vadd.f32 %v1084, %v507
        %v1093 = vadd.f32 %v1085, %v508
        %v1094 = vadd.f32 %v1086, %v509
        %v1095 = vadd.f32 %v1087, %v510
        %v1096 = vadd.f32 %v1088, %v511
        %v1097 = vadd.f32 %v1089, %v512
        %v1098 = vadd.f32 %v1090, %v513
        %v1099 = vadd.f32 %v1091, %v514
        %v1100 = vld [vmem:[#allocation2] sm:$0xff]
        %v1101 = vld [vmem:[#allocation2 + $0x8] sm:$0xff]
        %v1102 = vld [vmem:[#allocation2 + $0x10] sm:$0xff]
        %v1103 = vld [vmem:[#allocation2 + $0x18] sm:$0xff]
        %v1104 = vld [vmem:[#allocation2 + $0x20] sm:$0xff]
        %v1105 = vld [vmem:[#allocation2 + $0x28] sm:$0xff]
        %v1106 = vld [vmem:[#allocation2 + $0x30] sm:$0xff]
        %v1107 = vld [vmem:[#allocation2 + $0x38] sm:$0xff]
        %1108 = vmax.xlane.f32.xlu0 %v1092
        %v1109 = vpop.xlane.xlu0 %1108
        %1110 = vmax.xlane.f32.xlu0 %v1093
        %v1111 = vpop.xlane.xlu0 %1110
        %1112 = vmax.xlane.f32.xlu0 %v1094
        %v1113 = vpop.xlane.xlu0 %1112
        %1114 = vmax.xlane.f32.xlu0 %v1095
        %v1115 = vpop.xlane.xlu0 %1114
        %1116 = vmax.xlane.f32.xlu0 %v1096
        %v1117 = vpop.xlane.xlu0 %1116
        %1118 = vmax.xlane.f32.xlu0 %v1097
        %v1119 = vpop.xlane.xlu0 %1118
        %1120 = vmax.xlane.f32.xlu0 %v1098
        %v1121 = vpop.xlane.xlu0 %1120
        %1122 = vmax.xlane.f32.xlu0 %v1099
        %v1123 = vpop.xlane.xlu0 %1122
        %v1124 = vmax.f32 %v1100, %v1109
        %v1125 = vmax.f32 %v1101, %v1111
        %v1126 = vmax.f32 %v1102, %v1113
        %v1127 = vmax.f32 %v1103, %v1115
        %v1128 = vmax.f32 %v1104, %v1117
        %v1129 = vmax.f32 %v1105, %v1119
        %v1130 = vmax.f32 %v1106, %v1121
        %v1131 = vmax.f32 %v1107, %v1123
        %v1132 = vsub.f32 %v1100, %v1124
        %v1133 = vsub.f32 %v1101, %v1125
        %v1134 = vsub.f32 %v1102, %v1126
        %v1135 = vsub.f32 %v1103, %v1127
        %v1136 = vsub.f32 %v1104, %v1128
        %v1137 = vsub.f32 %v1105, %v1129
        %v1138 = vsub.f32 %v1106, %v1130
        %v1139 = vsub.f32 %v1107, %v1131
        %v1140 = vmul.f32 %v1132, 1.442695
        %v1141 = vpow.pop %v1140
        %v1142 = vmul.f32 %v1133, 1.442695
        %v1143 = vpow.pop %v1142
        %v1144 = vmul.f32 %v1134, 1.442695
        %v1145 = vpow.pop %v1144
        %v1146 = vmul.f32 %v1135, 1.442695
        %v1147 = vpow.pop %v1146
        %v1148 = vmul.f32 %v1136, 1.442695
        %v1149 = vpow.pop %v1148
        %v1150 = vmul.f32 %v1137, 1.442695
        %v1151 = vpow.pop %v1150
        %v1152 = vmul.f32 %v1138, 1.442695
        %v1153 = vpow.pop %v1152
        %v1154 = vmul.f32 %v1139, 1.442695
        %v1155 = vpow.pop %v1154
        %1157 = vset.pattern.permute.xlu0 1
        %1158 = vperm.xlu0 %1157, %v1124
        %v1159 = vpop.permute.xlu0 %1158
        %1162 = vset.pattern.permute.xlu0 1
        %1163 = vperm.xlu0 %1162, %v1125
        %v1164 = vpop.permute.xlu0 %1163
        %1167 = vset.pattern.permute.xlu0 1
        %1168 = vperm.xlu0 %1167, %v1126
        %v1169 = vpop.permute.xlu0 %1168
        %1172 = vset.pattern.permute.xlu0 1
        %1173 = vperm.xlu0 %1172, %v1127
        %v1174 = vpop.permute.xlu0 %1173
        %1177 = vset.pattern.permute.xlu0 1
        %1178 = vperm.xlu0 %1177, %v1128
        %v1179 = vpop.permute.xlu0 %1178
        %1182 = vset.pattern.permute.xlu0 1
        %1183 = vperm.xlu0 %1182, %v1129
        %v1184 = vpop.permute.xlu0 %1183
        %1187 = vset.pattern.permute.xlu0 1
        %1188 = vperm.xlu0 %1187, %v1130
        %v1189 = vpop.permute.xlu0 %1188
        %1192 = vset.pattern.permute.xlu0 1
        %1193 = vperm.xlu0 %1192, %v1131
        %v1194 = vpop.permute.xlu0 %1193
        %v1196 = vsub.f32 %v1092, %v1159
        %v1197 = vsub.f32 %v1093, %v1164
        %v1198 = vsub.f32 %v1094, %v1169
        %v1199 = vsub.f32 %v1095, %v1174
        %v1200 = vsub.f32 %v1096, %v1179
        %v1201 = vsub.f32 %v1097, %v1184
        %v1202 = vsub.f32 %v1098, %v1189
        %v1203 = vsub.f32 %v1099, %v1194
        %v1204 = vmul.f32 %v1196, 1.442695
        %v1205 = vpow.pop %v1204
        %v1206 = vmul.f32 %v1197, 1.442695
        %v1207 = vpow.pop %v1206
        %v1208 = vmul.f32 %v1198, 1.442695
        %v1209 = vpow.pop %v1208
        %v1210 = vmul.f32 %v1199, 1.442695
        %v1211 = vpow.pop %v1210
        %v1212 = vmul.f32 %v1200, 1.442695
        %v1213 = vpow.pop %v1212
        %v1214 = vmul.f32 %v1201, 1.442695
        %v1215 = vpow.pop %v1214
        %v1216 = vmul.f32 %v1202, 1.442695
        %v1217 = vpow.pop %v1216
        %v1218 = vmul.f32 %v1203, 1.442695
        %v1219 = vpow.pop %v1218
        %v1220 = vld [vmem:[#allocation3] sm:$0xff]
        %v1221 = vld [vmem:[#allocation3 + $0x8] sm:$0xff]
        %v1222 = vld [vmem:[#allocation3 + $0x10] sm:$0xff]
        %v1223 = vld [vmem:[#allocation3 + $0x18] sm:$0xff]
        %v1224 = vld [vmem:[#allocation3 + $0x20] sm:$0xff]
        %v1225 = vld [vmem:[#allocation3 + $0x28] sm:$0xff]
        %v1226 = vld [vmem:[#allocation3 + $0x30] sm:$0xff]
        %v1227 = vld [vmem:[#allocation3 + $0x38] sm:$0xff]
        %v1228 = vmul.f32 %v1141, %v1220
        %v1229 = vmul.f32 %v1143, %v1221
        %v1230 = vmul.f32 %v1145, %v1222
        %v1231 = vmul.f32 %v1147, %v1223
        %v1232 = vmul.f32 %v1149, %v1224
        %v1233 = vmul.f32 %v1151, %v1225
        %v1234 = vmul.f32 %v1153, %v1226
        %v1235 = vmul.f32 %v1155, %v1227
        %1236 = vadd.xlane.f32.xlu0 %v1205
        %v1237 = vpop.xlane.xlu0 %1236
        %1238 = vadd.xlane.f32.xlu0 %v1207
        %v1239 = vpop.xlane.xlu0 %1238
        %1240 = vadd.xlane.f32.xlu0 %v1209
        %v1241 = vpop.xlane.xlu0 %1240
        %1242 = vadd.xlane.f32.xlu0 %v1211
        %v1243 = vpop.xlane.xlu0 %1242
        %1244 = vadd.xlane.f32.xlu0 %v1213
        %v1245 = vpop.xlane.xlu0 %1244
        %1246 = vadd.xlane.f32.xlu0 %v1215
        %v1247 = vpop.xlane.xlu0 %1246
        %1248 = vadd.xlane.f32.xlu0 %v1217
        %v1249 = vpop.xlane.xlu0 %1248
        %1250 = vadd.xlane.f32.xlu0 %v1219
        %v1251 = vpop.xlane.xlu0 %1250
        %v1252 = vadd.f32 %v1228, %v1237
        %v1253 = vadd.f32 %v1229, %v1239
        %v1254 = vadd.f32 %v1230, %v1241
        %v1255 = vadd.f32 %v1231, %v1243
        %v1256 = vadd.f32 %v1232, %v1245
        %v1257 = vadd.f32 %v1233, %v1247
        %v1258 = vadd.f32 %v1234, %v1249
        %v1259 = vadd.f32 %v1235, %v1251
        %vm1260 = vcmask 15368
        %1261 = vst.msk [vmem:[#allocation3] sm:$0xff] %vm1260, %v1252
        %1262 = vst.msk [vmem:[#allocation3 + $0x8] sm:$0xff] %vm1260, %v1253
        %1263 = vst.msk [vmem:[#allocation3 + $0x10] sm:$0xff] %vm1260, %v1254
        %1264 = vst.msk [vmem:[#allocation3 + $0x18] sm:$0xff] %vm1260, %v1255
        %1265 = vst.msk [vmem:[#allocation3 + $0x20] sm:$0xff] %vm1260, %v1256
        %1266 = vst.msk [vmem:[#allocation3 + $0x28] sm:$0xff] %vm1260, %v1257
        %1267 = vst.msk [vmem:[#allocation3 + $0x30] sm:$0xff] %vm1260, %v1258
        %1268 = vst.msk [vmem:[#allocation3 + $0x38] sm:$0xff] %vm1260, %v1259
        %v1269 = vld [vmem:[#allocation4] sm:$0xff]
        %v1270 = vld [vmem:[#allocation4 + $0x8] sm:$0xff]
        %v1271 = vld [vmem:[#allocation4 + $0x10] sm:$0xff]
        %v1272 = vld [vmem:[#allocation4 + $0x18] sm:$0xff]
        %v1273 = vld [vmem:[#allocation4 + $0x20] sm:$0xff]
        %v1274 = vld [vmem:[#allocation4 + $0x28] sm:$0xff]
        %v1275 = vld [vmem:[#allocation4 + $0x30] sm:$0xff]
        %v1276 = vld [vmem:[#allocation4 + $0x38] sm:$0xff]
        %1278 = vset.pattern.permute.xlu0 1
        %1279 = vperm.xlu0 %1278, %v1141
        %v1280 = vpop.permute.xlu0 %1279
        %1283 = vset.pattern.permute.xlu0 1
        %1284 = vperm.xlu0 %1283, %v1143
        %v1285 = vpop.permute.xlu0 %1284
        %1288 = vset.pattern.permute.xlu0 1
        %1289 = vperm.xlu0 %1288, %v1145
        %v1290 = vpop.permute.xlu0 %1289
        %1293 = vset.pattern.permute.xlu0 1
        %1294 = vperm.xlu0 %1293, %v1147
        %v1295 = vpop.permute.xlu0 %1294
        %1298 = vset.pattern.permute.xlu0 1
        %1299 = vperm.xlu0 %1298, %v1149
        %v1300 = vpop.permute.xlu0 %1299
        %1303 = vset.pattern.permute.xlu0 1
        %1304 = vperm.xlu0 %1303, %v1151
        %v1305 = vpop.permute.xlu0 %1304
        %1308 = vset.pattern.permute.xlu0 1
        %1309 = vperm.xlu0 %1308, %v1153
        %v1310 = vpop.permute.xlu0 %1309
        %1313 = vset.pattern.permute.xlu0 1
        %1314 = vperm.xlu0 %1313, %v1155
        %v1315 = vpop.permute.xlu0 %1314
        %v1317 = vmul.f32 %v1280, %v1269
        %v1318 = vmul.f32 %v1285, %v1270
        %v1319 = vmul.f32 %v1290, %v1271
        %v1320 = vmul.f32 %v1295, %v1272
        %v1321 = vmul.f32 %v1300, %v1273
        %v1322 = vmul.f32 %v1305, %v1274
        %v1323 = vmul.f32 %v1310, %v1275
        %v1324 = vmul.f32 %v1315, %v1276
        %v1325 = vpack.c.bf16 %v1207, %v1205
        %v1326 = vpack.c.bf16 %v1211, %v1209
        %v1327 = vpack.c.bf16 %v1215, %v1213
        %v1328 = vpack.c.bf16 %v1219, %v1217
        %v1345 = vunpack.c.l.b16 %v991
        %v1346 = vunpack.c.l.b16 %v992
        %v1347 = vunpack.c.l.b16 %v993
        %v1348 = vunpack.c.l.b16 %v994
        %v1349 = vunpack.c.l.b16 %v995
        %v1350 = vunpack.c.l.b16 %v996
        %v1351 = vunpack.c.l.b16 %v997
        %v1352 = vunpack.c.l.b16 %v998
        %v1353 = vunpack.c.l.b16 %v999
        %v1354 = vunpack.c.l.b16 %v1000
        %v1355 = vunpack.c.l.b16 %v1001
        %v1356 = vunpack.c.l.b16 %v1002
        %v1357 = vunpack.c.l.b16 %v1003
        %v1358 = vunpack.c.l.b16 %v1004
        %v1359 = vunpack.c.l.b16 %v1005
        %v1360 = vunpack.c.l.b16 %v1006
        %v1361 = vpack.c.b16 %v1346, %v1345
        %v1362 = vpack.c.b16 %v1348, %v1347
        %v1363 = vpack.c.b16 %v1350, %v1349
        %v1364 = vpack.c.b16 %v1352, %v1351
        %v1365 = vpack.c.b16 %v1354, %v1353
        %v1366 = vpack.c.b16 %v1356, %v1355
        %v1367 = vpack.c.b16 %v1358, %v1357
        %v1368 = vpack.c.b16 %v1360, %v1359
        %1369 = vrot.lane.b32.xlu0 %v1361, 112
        %v1370 = vpop.permute.xlu0 %1369
        %1371 = vrot.lane.b32.xlu0 %v1362, 112
        %v1372 = vpop.permute.xlu0 %1371
        %1373 = vrot.lane.b32.xlu0 %v1363, 112
        %v1374 = vpop.permute.xlu0 %1373
        %1375 = vrot.lane.b32.xlu0 %v1364, 112
        %v1376 = vpop.permute.xlu0 %1375
        %1377 = vrot.lane.b32.xlu0 %v1365, 112
        %v1378 = vpop.permute.xlu0 %1377
        %1379 = vrot.lane.b32.xlu0 %v1366, 112
        %v1380 = vpop.permute.xlu0 %1379
        %1381 = vrot.lane.b32.xlu0 %v1367, 112
        %v1382 = vpop.permute.xlu0 %1381
        %1383 = vrot.lane.b32.xlu0 %v1368, 112
        %v1384 = vpop.permute.xlu0 %1383
        %1393 = vmatprep.subr.bf16.mxu0 0
        %1394 = vmatpush1.bf16.msra.mxu0 %v1370
        %1395 = vmatprep.subr.bf16.mxu0 0
        %1396 = vmatpush1.bf16.msra.mxu0 %v1372
        %1397 = vmatprep.subr.bf16.mxu0 0
        %1398 = vmatpush1.bf16.msra.mxu0 %v1374
        %1399 = vmatprep.subr.bf16.mxu0 0
        %1400 = vmatpush1.bf16.msra.mxu0 %v1376
        %1401 = vmatprep.subr.bf16.mxu0 0
        %1402 = vmatpush1.bf16.msra.mxu0 %v1378
        %1403 = vmatprep.subr.bf16.mxu0 0
        %1404 = vmatpush1.bf16.msra.mxu0 %v1380
        %1405 = vmatprep.subr.bf16.mxu0 0
        %1406 = vmatpush1.bf16.msra.mxu0 %v1382
        %1407 = vmatprep.subr.bf16.mxu0 0
        %1408 = vmatpush1.bf16.msra.mxu0 %v1384
        %1409 = vmatprep.subr.bf16.mxu0 0
        %1410 = vmatpush1.bf16.msra.mxu0 0
        %1411 = vmatprep.subr.bf16.mxu0 0
        %1412 = vmatpush1.bf16.msra.mxu0 0
        %1413 = vmatprep.subr.bf16.mxu0 0
        %1414 = vmatpush1.bf16.msra.mxu0 0
        %1415 = vmatprep.subr.bf16.mxu0 0
        %1416 = vmatpush1.bf16.msra.mxu0 0
        %1417 = vmatprep.subr.bf16.mxu0 0
        %1418 = vmatpush1.bf16.msra.mxu0 0
        %1419 = vmatprep.subr.bf16.mxu0 0
        %1420 = vmatpush1.bf16.msra.mxu0 0
        %1421 = vmatprep.subr.bf16.mxu0 0
        %1422 = vmatpush1.bf16.msra.mxu0 0
        %1423 = vmatprep.subr.bf16.mxu0 0
        %1424 = vmatpush1.bf16.msra.mxu0 0
        %1425 = vmatprep.mubr.bf16.mxu0 0
        %1426 = vmatmul.mubr.bf16.gmra.mrb[0].mxu0 %v1325
        %v1427 = vpop.f32.mrb[0].mxu0
        %v1428 = vadd.f32 0.0, %v1427
        %v1429 = vpop.f32.mrb[0].mxu0
        %v1430 = vpop.f32.mrb[0].mxu0
        %v1431 = vadd.f32 0.0, %v1430
        %v1432 = vpop.f32.mrb[0].mxu0
        %1433 = vmatprep.mubr.bf16.mxu0 0
        %1434 = vmatmul.mubr.bf16.gmra.mrb[0].mxu0 %v1326
        %v1435 = vpop.f32.mrb[0].mxu0
        %v1436 = vadd.f32 0.0, %v1435
        %v1437 = vpop.f32.mrb[0].mxu0
        %v1438 = vpop.f32.mrb[0].mxu0
        %v1439 = vadd.f32 0.0, %v1438
        %v1440 = vpop.f32.mrb[0].mxu0
        %1441 = vmatprep.mubr.bf16.mxu0 0
        %1442 = vmatmul.mubr.bf16.gmra.mrb[0].mxu0 %v1327
        %v1443 = vpop.f32.mrb[0].mxu0
        %v1444 = vadd.f32 0.0, %v1443
        %v1445 = vpop.f32.mrb[0].mxu0
        %v1446 = vpop.f32.mrb[0].mxu0
        %v1447 = vadd.f32 0.0, %v1446
        %v1448 = vpop.f32.mrb[0].mxu0
        %1449 = vmatprep.mubr.bf16.mxu0 0
        %1450 = vmatmul.mubr.bf16.gmra.mrb[0].mxu0 %v1328
        %v1451 = vpop.f32.mrb[0].mxu0
        %v1452 = vadd.f32 0.0, %v1451
        %v1453 = vpop.f32.mrb[0].mxu0
        %v1454 = vpop.f32.mrb[0].mxu0
        %v1455 = vadd.f32 0.0, %v1454
        %v1456 = vpop.f32.mrb[0].mxu0
        %1457 = vdwg.mxu0
        %1466 = vrot.lane.b32.xlu0 %v1428, 16
        %v1467 = vpop.permute.xlu0 %1466
        %1468 = vrot.lane.b32.xlu0 %v1431, 16
        %v1469 = vpop.permute.xlu0 %1468
        %1470 = vrot.lane.b32.xlu0 %v1436, 16
        %v1471 = vpop.permute.xlu0 %1470
        %1472 = vrot.lane.b32.xlu0 %v1439, 16
        %v1473 = vpop.permute.xlu0 %1472
        %1474 = vrot.lane.b32.xlu0 %v1444, 16
        %v1475 = vpop.permute.xlu0 %1474
        %1476 = vrot.lane.b32.xlu0 %v1447, 16
        %v1477 = vpop.permute.xlu0 %1476
        %1478 = vrot.lane.b32.xlu0 %v1452, 16
        %v1479 = vpop.permute.xlu0 %1478
        %1480 = vrot.lane.b32.xlu0 %v1455, 16
        %v1481 = vpop.permute.xlu0 %1480
        %v1490 = vadd.f32 %v1317, %v1467
        %v1491 = vadd.f32 %v1318, %v1469
        %v1492 = vadd.f32 %v1319, %v1471
        %v1493 = vadd.f32 %v1320, %v1473
        %v1494 = vadd.f32 %v1321, %v1475
        %v1495 = vadd.f32 %v1322, %v1477
        %v1496 = vadd.f32 %v1323, %v1479
        %v1497 = vadd.f32 %v1324, %v1481
        %vm1498 = vcmask 261248
        %1499 = vst.msk [vmem:[#allocation4] sm:$0xff] %vm1498, %v1490
        %1500 = vst.msk [vmem:[#allocation4 + $0x8] sm:$0xff] %vm1498, %v1491
        %1501 = vst.msk [vmem:[#allocation4 + $0x10] sm:$0xff] %vm1498, %v1492
        %1502 = vst.msk [vmem:[#allocation4 + $0x18] sm:$0xff] %vm1498, %v1493
        %1503 = vst.msk [vmem:[#allocation4 + $0x20] sm:$0xff] %vm1498, %v1494
        %1504 = vst.msk [vmem:[#allocation4 + $0x28] sm:$0xff] %vm1498, %v1495
        %1505 = vst.msk [vmem:[#allocation4 + $0x30] sm:$0xff] %vm1498, %v1496
        %1506 = vst.msk [vmem:[#allocation4 + $0x38] sm:$0xff] %vm1498, %v1497
        %1507 = vst.msk [vmem:[#allocation2] sm:$0xff] %vm1260, %v1124
        %1508 = vst.msk [vmem:[#allocation2 + $0x8] sm:$0xff] %vm1260, %v1125
        %1509 = vst.msk [vmem:[#allocation2 + $0x10] sm:$0xff] %vm1260, %v1126
        %1510 = vst.msk [vmem:[#allocation2 + $0x18] sm:$0xff] %vm1260, %v1127
        %1511 = vst.msk [vmem:[#allocation2 + $0x20] sm:$0xff] %vm1260, %v1128
        %1512 = vst.msk [vmem:[#allocation2 + $0x28] sm:$0xff] %vm1260, %v1129
        %1513 = vst.msk [vmem:[#allocation2 + $0x30] sm:$0xff] %vm1260, %v1130
        %1514 = vst.msk [vmem:[#allocation2 + $0x38] sm:$0xff] %vm1260, %v1131
        %v1515 = vld [vmem:[%s406] sm:$0xf]
        %v1516 = vld [vmem:[%s406 + $0x4] sm:$0xf]
        %v1517 = vld [vmem:[%s406 + $0x8] sm:$0xf]
        %v1518 = vld [vmem:[%s406 + $0xc] sm:$0xf]
        %v1519 = vld [vmem:[%s406 + $0x10] sm:$0xf]
        %v1520 = vld [vmem:[%s406 + $0x14] sm:$0xf]
        %v1521 = vld [vmem:[%s406 + $0x18] sm:$0xf]
        %v1522 = vld [vmem:[%s406 + $0x1c] sm:$0xf]
        %v1523 = vld [vmem:[%s406 + $0x20] sm:$0xf]
        %v1524 = vld [vmem:[%s406 + $0x24] sm:$0xf]
        %v1525 = vld [vmem:[%s406 + $0x28] sm:$0xf]
        %v1526 = vld [vmem:[%s406 + $0x2c] sm:$0xf]
        %v1527 = vld [vmem:[%s406 + $0x30] sm:$0xf]
        %v1528 = vld [vmem:[%s406 + $0x34] sm:$0xf]
        %v1529 = vld [vmem:[%s406 + $0x38] sm:$0xf]
        %v1530 = vld [vmem:[%s406 + $0x3c] sm:$0xf]
        %v1531 = vld [vmem:[%s388] sm:$0xff]
        %v1532 = vld [vmem:[%s388 + $0x8] sm:$0xff]
        %v1533 = vld [vmem:[%s388 + $0x10] sm:$0xff]
        %v1534 = vld [vmem:[%s388 + $0x18] sm:$0xff]
        %v1535 = vld [vmem:[%s388 + $0x20] sm:$0xff]
        %v1536 = vld [vmem:[%s388 + $0x28] sm:$0xff]
        %v1537 = vld [vmem:[%s388 + $0x30] sm:$0xff]
        %v1538 = vld [vmem:[%s388 + $0x38] sm:$0xff]
        %v1539 = vld [vmem:[%s397 + $0x2] sm:$0x1]
        %1541 = vset.pattern.permute.xlu0 2
        %1542 = vperm.xlu0 %1541, %v1531
        %v1543 = vpop.permute.xlu0 %1542
        %1546 = vset.pattern.permute.xlu0 2
        %1547 = vperm.xlu0 %1546, %v1532
        %v1548 = vpop.permute.xlu0 %1547
        %1551 = vset.pattern.permute.xlu0 2
        %1552 = vperm.xlu0 %1551, %v1533
        %v1553 = vpop.permute.xlu0 %1552
        %1556 = vset.pattern.permute.xlu0 2
        %1557 = vperm.xlu0 %1556, %v1534
        %v1558 = vpop.permute.xlu0 %1557
        %1561 = vset.pattern.permute.xlu0 2
        %1562 = vperm.xlu0 %1561, %v1535
        %v1563 = vpop.permute.xlu0 %1562
        %1566 = vset.pattern.permute.xlu0 2
        %1567 = vperm.xlu0 %1566, %v1536
        %v1568 = vpop.permute.xlu0 %1567
        %1571 = vset.pattern.permute.xlu0 2
        %1572 = vperm.xlu0 %1571, %v1537
        %v1573 = vpop.permute.xlu0 %1572
        %1576 = vset.pattern.permute.xlu0 2
        %1577 = vperm.xlu0 %1576, %v1538
        %v1578 = vpop.permute.xlu0 %1577
        %v1580 = vlaneseq
        %v1581 = vshrl.u32 %v1580, 7
        %v1582 = vsub.s32 0, %v1581
        %v1583 = vrot.slane %v1539, %v1582
        %v1584 = vadd.f32 %v1543, %v1583
        %v1585 = vadd.f32 %v1548, %v1583
        %v1586 = vadd.f32 %v1553, %v1583
        %v1587 = vadd.f32 %v1558, %v1583
        %v1588 = vadd.f32 %v1563, %v1583
        %v1589 = vadd.f32 %v1568, %v1583
        %v1590 = vadd.f32 %v1573, %v1583
        %v1591 = vadd.f32 %v1578, %v1583
        %vm1592 = vcmp.gt.f32.partialorder %v1584, 0.0
        %vm1593 = vcmp.gt.f32.partialorder %v1585, 0.0
        %vm1594 = vcmp.gt.f32.partialorder %v1586, 0.0
        %vm1595 = vcmp.gt.f32.partialorder %v1587, 0.0
        %vm1596 = vcmp.gt.f32.partialorder %v1588, 0.0
        %vm1597 = vcmp.gt.f32.partialorder %v1589, 0.0
        %vm1598 = vcmp.gt.f32.partialorder %v1590, 0.0
        %vm1599 = vcmp.gt.f32.partialorder %v1591, 0.0
        %v1600 = vmul.f32 %v1584, 0.2
        %v1601 = vmul.f32 %v1585, 0.2
        %v1602 = vmul.f32 %v1586, 0.2
        %v1603 = vmul.f32 %v1587, 0.2
        %v1604 = vmul.f32 %v1588, 0.2
        %v1605 = vmul.f32 %v1589, 0.2
        %v1606 = vmul.f32 %v1590, 0.2
        %v1607 = vmul.f32 %v1591, 0.2
        %v1608 = vsel %vm1592, %v1584, %v1600
        %v1609 = vsel %vm1593, %v1585, %v1601
        %v1610 = vsel %vm1594, %v1586, %v1602
        %v1611 = vsel %vm1595, %v1587, %v1603
        %v1612 = vsel %vm1596, %v1588, %v1604
        %v1613 = vsel %vm1597, %v1589, %v1605
        %v1614 = vsel %vm1598, %v1590, %v1606
        %v1615 = vsel %vm1599, %v1591, %v1607
        %v1616 = vadd.f32 %v1608, %v507
        %v1617 = vadd.f32 %v1609, %v508
        %v1618 = vadd.f32 %v1610, %v509
        %v1619 = vadd.f32 %v1611, %v510
        %v1620 = vadd.f32 %v1612, %v511
        %v1621 = vadd.f32 %v1613, %v512
        %v1622 = vadd.f32 %v1614, %v513
        %v1623 = vadd.f32 %v1615, %v514
        %v1624 = vld [vmem:[#allocation2] sm:$0xff]
        %v1625 = vld [vmem:[#allocation2 + $0x8] sm:$0xff]
        %v1626 = vld [vmem:[#allocation2 + $0x10] sm:$0xff]
        %v1627 = vld [vmem:[#allocation2 + $0x18] sm:$0xff]
        %v1628 = vld [vmem:[#allocation2 + $0x20] sm:$0xff]
        %v1629 = vld [vmem:[#allocation2 + $0x28] sm:$0xff]
        %v1630 = vld [vmem:[#allocation2 + $0x30] sm:$0xff]
        %v1631 = vld [vmem:[#allocation2 + $0x38] sm:$0xff]
        %1632 = vmax.xlane.f32.xlu0 %v1616
        %v1633 = vpop.xlane.xlu0 %1632
        %1634 = vmax.xlane.f32.xlu0 %v1617
        %v1635 = vpop.xlane.xlu0 %1634
        %1636 = vmax.xlane.f32.xlu0 %v1618
        %v1637 = vpop.xlane.xlu0 %1636
        %1638 = vmax.xlane.f32.xlu0 %v1619
        %v1639 = vpop.xlane.xlu0 %1638
        %1640 = vmax.xlane.f32.xlu0 %v1620
        %v1641 = vpop.xlane.xlu0 %1640
        %1642 = vmax.xlane.f32.xlu0 %v1621
        %v1643 = vpop.xlane.xlu0 %1642
        %1644 = vmax.xlane.f32.xlu0 %v1622
        %v1645 = vpop.xlane.xlu0 %1644
        %1646 = vmax.xlane.f32.xlu0 %v1623
        %v1647 = vpop.xlane.xlu0 %1646
        %v1648 = vmax.f32 %v1624, %v1633
        %v1649 = vmax.f32 %v1625, %v1635
        %v1650 = vmax.f32 %v1626, %v1637
        %v1651 = vmax.f32 %v1627, %v1639
        %v1652 = vmax.f32 %v1628, %v1641
        %v1653 = vmax.f32 %v1629, %v1643
        %v1654 = vmax.f32 %v1630, %v1645
        %v1655 = vmax.f32 %v1631, %v1647
        %v1656 = vsub.f32 %v1624, %v1648
        %v1657 = vsub.f32 %v1625, %v1649
        %v1658 = vsub.f32 %v1626, %v1650
        %v1659 = vsub.f32 %v1627, %v1651
        %v1660 = vsub.f32 %v1628, %v1652
        %v1661 = vsub.f32 %v1629, %v1653
        %v1662 = vsub.f32 %v1630, %v1654
        %v1663 = vsub.f32 %v1631, %v1655
        %v1664 = vmul.f32 %v1656, 1.442695
        %v1665 = vpow.pop %v1664
        %v1666 = vmul.f32 %v1657, 1.442695
        %v1667 = vpow.pop %v1666
        %v1668 = vmul.f32 %v1658, 1.442695
        %v1669 = vpow.pop %v1668
        %v1670 = vmul.f32 %v1659, 1.442695
        %v1671 = vpow.pop %v1670
        %v1672 = vmul.f32 %v1660, 1.442695
        %v1673 = vpow.pop %v1672
        %v1674 = vmul.f32 %v1661, 1.442695
        %v1675 = vpow.pop %v1674
        %v1676 = vmul.f32 %v1662, 1.442695
        %v1677 = vpow.pop %v1676
        %v1678 = vmul.f32 %v1663, 1.442695
        %v1679 = vpow.pop %v1678
        %1681 = vset.pattern.permute.xlu0 2
        %1682 = vperm.xlu0 %1681, %v1648
        %v1683 = vpop.permute.xlu0 %1682
        %1686 = vset.pattern.permute.xlu0 2
        %1687 = vperm.xlu0 %1686, %v1649
        %v1688 = vpop.permute.xlu0 %1687
        %1691 = vset.pattern.permute.xlu0 2
        %1692 = vperm.xlu0 %1691, %v1650
        %v1693 = vpop.permute.xlu0 %1692
        %1696 = vset.pattern.permute.xlu0 2
        %1697 = vperm.xlu0 %1696, %v1651
        %v1698 = vpop.permute.xlu0 %1697
        %1701 = vset.pattern.permute.xlu0 2
        %1702 = vperm.xlu0 %1701, %v1652
        %v1703 = vpop.permute.xlu0 %1702
        %1706 = vset.pattern.permute.xlu0 2
        %1707 = vperm.xlu0 %1706, %v1653
        %v1708 = vpop.permute.xlu0 %1707
        %1711 = vset.pattern.permute.xlu0 2
        %1712 = vperm.xlu0 %1711, %v1654
        %v1713 = vpop.permute.xlu0 %1712
        %1716 = vset.pattern.permute.xlu0 2
        %1717 = vperm.xlu0 %1716, %v1655
        %v1718 = vpop.permute.xlu0 %1717
        %v1720 = vsub.f32 %v1616, %v1683
        %v1721 = vsub.f32 %v1617, %v1688
        %v1722 = vsub.f32 %v1618, %v1693
        %v1723 = vsub.f32 %v1619, %v1698
        %v1724 = vsub.f32 %v1620, %v1703
        %v1725 = vsub.f32 %v1621, %v1708
        %v1726 = vsub.f32 %v1622, %v1713
        %v1727 = vsub.f32 %v1623, %v1718
        %v1728 = vmul.f32 %v1720, 1.442695
        %v1729 = vpow.pop %v1728
        %v1730 = vmul.f32 %v1721, 1.442695
        %v1731 = vpow.pop %v1730
        %v1732 = vmul.f32 %v1722, 1.442695
        %v1733 = vpow.pop %v1732
        %v1734 = vmul.f32 %v1723, 1.442695
        %v1735 = vpow.pop %v1734
        %v1736 = vmul.f32 %v1724, 1.442695
        %v1737 = vpow.pop %v1736
        %v1738 = vmul.f32 %v1725, 1.442695
        %v1739 = vpow.pop %v1738
        %v1740 = vmul.f32 %v1726, 1.442695
        %v1741 = vpow.pop %v1740
        %v1742 = vmul.f32 %v1727, 1.442695
        %v1743 = vpow.pop %v1742
        %v1744 = vld [vmem:[#allocation3] sm:$0xff]
        %v1745 = vld [vmem:[#allocation3 + $0x8] sm:$0xff]
        %v1746 = vld [vmem:[#allocation3 + $0x10] sm:$0xff]
        %v1747 = vld [vmem:[#allocation3 + $0x18] sm:$0xff]
        %v1748 = vld [vmem:[#allocation3 + $0x20] sm:$0xff]
        %v1749 = vld [vmem:[#allocation3 + $0x28] sm:$0xff]
        %v1750 = vld [vmem:[#allocation3 + $0x30] sm:$0xff]
        %v1751 = vld [vmem:[#allocation3 + $0x38] sm:$0xff]
        %v1752 = vmul.f32 %v1665, %v1744
        %v1753 = vmul.f32 %v1667, %v1745
        %v1754 = vmul.f32 %v1669, %v1746
        %v1755 = vmul.f32 %v1671, %v1747
        %v1756 = vmul.f32 %v1673, %v1748
        %v1757 = vmul.f32 %v1675, %v1749
        %v1758 = vmul.f32 %v1677, %v1750
        %v1759 = vmul.f32 %v1679, %v1751
        %1760 = vadd.xlane.f32.xlu0 %v1729
        %v1761 = vpop.xlane.xlu0 %1760
        %1762 = vadd.xlane.f32.xlu0 %v1731
        %v1763 = vpop.xlane.xlu0 %1762
        %1764 = vadd.xlane.f32.xlu0 %v1733
        %v1765 = vpop.xlane.xlu0 %1764
        %1766 = vadd.xlane.f32.xlu0 %v1735
        %v1767 = vpop.xlane.xlu0 %1766
        %1768 = vadd.xlane.f32.xlu0 %v1737
        %v1769 = vpop.xlane.xlu0 %1768
        %1770 = vadd.xlane.f32.xlu0 %v1739
        %v1771 = vpop.xlane.xlu0 %1770
        %1772 = vadd.xlane.f32.xlu0 %v1741
        %v1773 = vpop.xlane.xlu0 %1772
        %1774 = vadd.xlane.f32.xlu0 %v1743
        %v1775 = vpop.xlane.xlu0 %1774
        %v1776 = vadd.f32 %v1752, %v1761
        %v1777 = vadd.f32 %v1753, %v1763
        %v1778 = vadd.f32 %v1754, %v1765
        %v1779 = vadd.f32 %v1755, %v1767
        %v1780 = vadd.f32 %v1756, %v1769
        %v1781 = vadd.f32 %v1757, %v1771
        %v1782 = vadd.f32 %v1758, %v1773
        %v1783 = vadd.f32 %v1759, %v1775
        %vm1784 = vcmask 23568
        %1785 = vst.msk [vmem:[#allocation3] sm:$0xff] %vm1784, %v1776
        %1786 = vst.msk [vmem:[#allocation3 + $0x8] sm:$0xff] %vm1784, %v1777
        %1787 = vst.msk [vmem:[#allocation3 + $0x10] sm:$0xff] %vm1784, %v1778
        %1788 = vst.msk [vmem:[#allocation3 + $0x18] sm:$0xff] %vm1784, %v1779
        %1789 = vst.msk [vmem:[#allocation3 + $0x20] sm:$0xff] %vm1784, %v1780
        %1790 = vst.msk [vmem:[#allocation3 + $0x28] sm:$0xff] %vm1784, %v1781
        %1791 = vst.msk [vmem:[#allocation3 + $0x30] sm:$0xff] %vm1784, %v1782
        %1792 = vst.msk [vmem:[#allocation3 + $0x38] sm:$0xff] %vm1784, %v1783
        %v1793 = vld [vmem:[#allocation4] sm:$0xff]
        %v1794 = vld [vmem:[#allocation4 + $0x8] sm:$0xff]
        %v1795 = vld [vmem:[#allocation4 + $0x10] sm:$0xff]
        %v1796 = vld [vmem:[#allocation4 + $0x18] sm:$0xff]
        %v1797 = vld [vmem:[#allocation4 + $0x20] sm:$0xff]
        %v1798 = vld [vmem:[#allocation4 + $0x28] sm:$0xff]
        %v1799 = vld [vmem:[#allocation4 + $0x30] sm:$0xff]
        %v1800 = vld [vmem:[#allocation4 + $0x38] sm:$0xff]
        %1802 = vset.pattern.permute.xlu0 2
        %1803 = vperm.xlu0 %1802, %v1665
        %v1804 = vpop.permute.xlu0 %1803
        %1807 = vset.pattern.permute.xlu0 2
        %1808 = vperm.xlu0 %1807, %v1667
        %v1809 = vpop.permute.xlu0 %1808
        %1812 = vset.pattern.permute.xlu0 2
        %1813 = vperm.xlu0 %1812, %v1669
        %v1814 = vpop.permute.xlu0 %1813
        %1817 = vset.pattern.permute.xlu0 2
        %1818 = vperm.xlu0 %1817, %v1671
        %v1819 = vpop.permute.xlu0 %1818
        %1822 = vset.pattern.permute.xlu0 2
        %1823 = vperm.xlu0 %1822, %v1673
        %v1824 = vpop.permute.xlu0 %1823
        %1827 = vset.pattern.permute.xlu0 2
        %1828 = vperm.xlu0 %1827, %v1675
        %v1829 = vpop.permute.xlu0 %1828
        %1832 = vset.pattern.permute.xlu0 2
        %1833 = vperm.xlu0 %1832, %v1677
        %v1834 = vpop.permute.xlu0 %1833
        %1837 = vset.pattern.permute.xlu0 2
        %1838 = vperm.xlu0 %1837, %v1679
        %v1839 = vpop.permute.xlu0 %1838
        %v1841 = vmul.f32 %v1804, %v1793
        %v1842 = vmul.f32 %v1809, %v1794
        %v1843 = vmul.f32 %v1814, %v1795
        %v1844 = vmul.f32 %v1819, %v1796
        %v1845 = vmul.f32 %v1824, %v1797
        %v1846 = vmul.f32 %v1829, %v1798
        %v1847 = vmul.f32 %v1834, %v1799
        %v1848 = vmul.f32 %v1839, %v1800
        %v1849 = vpack.c.bf16 %v1731, %v1729
        %v1850 = vpack.c.bf16 %v1735, %v1733
        %v1851 = vpack.c.bf16 %v1739, %v1737
        %v1852 = vpack.c.bf16 %v1743, %v1741
        %v1869 = vunpack.c.l.b16 %v1515
        %v1870 = vunpack.c.l.b16 %v1516
        %v1871 = vunpack.c.l.b16 %v1517
        %v1872 = vunpack.c.l.b16 %v1518
        %v1873 = vunpack.c.l.b16 %v1519
        %v1874 = vunpack.c.l.b16 %v1520
        %v1875 = vunpack.c.l.b16 %v1521
        %v1876 = vunpack.c.l.b16 %v1522
        %v1877 = vunpack.c.l.b16 %v1523
        %v1878 = vunpack.c.l.b16 %v1524
        %v1879 = vunpack.c.l.b16 %v1525
        %v1880 = vunpack.c.l.b16 %v1526
        %v1881 = vunpack.c.l.b16 %v1527
        %v1882 = vunpack.c.l.b16 %v1528
        %v1883 = vunpack.c.l.b16 %v1529
        %v1884 = vunpack.c.l.b16 %v1530
        %v1885 = vpack.c.b16 %v1870, %v1869
        %v1886 = vpack.c.b16 %v1872, %v1871
        %v1887 = vpack.c.b16 %v1874, %v1873
        %v1888 = vpack.c.b16 %v1876, %v1875
        %v1889 = vpack.c.b16 %v1878, %v1877
        %v1890 = vpack.c.b16 %v1880, %v1879
        %v1891 = vpack.c.b16 %v1882, %v1881
        %v1892 = vpack.c.b16 %v1884, %v1883
        %1893 = vrot.lane.b32.xlu0 %v1885, 96
        %v1894 = vpop.permute.xlu0 %1893
        %1895 = vrot.lane.b32.xlu0 %v1886, 96
        %v1896 = vpop.permute.xlu0 %1895
        %1897 = vrot.lane.b32.xlu0 %v1887, 96
        %v1898 = vpop.permute.xlu0 %1897
        %1899 = vrot.lane.b32.xlu0 %v1888, 96
        %v1900 = vpop.permute.xlu0 %1899
        %1901 = vrot.lane.b32.xlu0 %v1889, 96
        %v1902 = vpop.permute.xlu0 %1901
        %1903 = vrot.lane.b32.xlu0 %v1890, 96
        %v1904 = vpop.permute.xlu0 %1903
        %1905 = vrot.lane.b32.xlu0 %v1891, 96
        %v1906 = vpop.permute.xlu0 %1905
        %1907 = vrot.lane.b32.xlu0 %v1892, 96
        %v1908 = vpop.permute.xlu0 %1907
        %1917 = vmatprep.subr.bf16.mxu0 0
        %1918 = vmatpush1.bf16.msra.mxu0 %v1894
        %1919 = vmatprep.subr.bf16.mxu0 0
        %1920 = vmatpush1.bf16.msra.mxu0 %v1896
        %1921 = vmatprep.subr.bf16.mxu0 0
        %1922 = vmatpush1.bf16.msra.mxu0 %v1898
        %1923 = vmatprep.subr.bf16.mxu0 0
        %1924 = vmatpush1.bf16.msra.mxu0 %v1900
        %1925 = vmatprep.subr.bf16.mxu0 0
        %1926 = vmatpush1.bf16.msra.mxu0 %v1902
        %1927 = vmatprep.subr.bf16.mxu0 0
        %1928 = vmatpush1.bf16.msra.mxu0 %v1904
        %1929 = vmatprep.subr.bf16.mxu0 0
        %1930 = vmatpush1.bf16.msra.mxu0 %v1906
        %1931 = vmatprep.subr.bf16.mxu0 0
        %1932 = vmatpush1.bf16.msra.mxu0 %v1908
        %1933 = vmatprep.subr.bf16.mxu0 0
        %1934 = vmatpush1.bf16.msra.mxu0 0
        %1935 = vmatprep.subr.bf16.mxu0 0
        %1936 = vmatpush1.bf16.msra.mxu0 0
        %1937 = vmatprep.subr.bf16.mxu0 0
        %1938 = vmatpush1.bf16.msra.mxu0 0
        %1939 = vmatprep.subr.bf16.mxu0 0
        %1940 = vmatpush1.bf16.msra.mxu0 0
        %1941 = vmatprep.subr.bf16.mxu0 0
        %1942 = vmatpush1.bf16.msra.mxu0 0
        %1943 = vmatprep.subr.bf16.mxu0 0
        %1944 = vmatpush1.bf16.msra.mxu0 0
        %1945 = vmatprep.subr.bf16.mxu0 0
        %1946 = vmatpush1.bf16.msra.mxu0 0
        %1947 = vmatprep.subr.bf16.mxu0 0
        %1948 = vmatpush1.bf16.msra.mxu0 0
        %1949 = vmatprep.mubr.bf16.mxu0 0
        %1950 = vmatmul.mubr.bf16.gmra.mrb[0].mxu0 %v1849
        %v1951 = vpop.f32.mrb[0].mxu0
        %v1952 = vadd.f32 0.0, %v1951
        %v1953 = vpop.f32.mrb[0].mxu0
        %v1954 = vpop.f32.mrb[0].mxu0
        %v1955 = vadd.f32 0.0, %v1954
        %v1956 = vpop.f32.mrb[0].mxu0
        %1957 = vmatprep.mubr.bf16.mxu0 0
        %1958 = vmatmul.mubr.bf16.gmra.mrb[0].mxu0 %v1850
        %v1959 = vpop.f32.mrb[0].mxu0
        %v1960 = vadd.f32 0.0, %v1959
        %v1961 = vpop.f32.mrb[0].mxu0
        %v1962 = vpop.f32.mrb[0].mxu0
        %v1963 = vadd.f32 0.0, %v1962
        %v1964 = vpop.f32.mrb[0].mxu0
        %1965 = vmatprep.mubr.bf16.mxu0 0
        %1966 = vmatmul.mubr.bf16.gmra.mrb[0].mxu0 %v1851
        %v1967 = vpop.f32.mrb[0].mxu0
        %v1968 = vadd.f32 0.0, %v1967
        %v1969 = vpop.f32.mrb[0].mxu0
        %v1970 = vpop.f32.mrb[0].mxu0
        %v1971 = vadd.f32 0.0, %v1970
        %v1972 = vpop.f32.mrb[0].mxu0
        %1973 = vmatprep.mubr.bf16.mxu0 0
        %1974 = vmatmul.mubr.bf16.gmra.mrb[0].mxu0 %v1852
        %v1975 = vpop.f32.mrb[0].mxu0
        %v1976 = vadd.f32 0.0, %v1975
        %v1977 = vpop.f32.mrb[0].mxu0
        %v1978 = vpop.f32.mrb[0].mxu0
        %v1979 = vadd.f32 0.0, %v1978
        %v1980 = vpop.f32.mrb[0].mxu0
        %1981 = vdwg.mxu0
        %1990 = vrot.lane.b32.xlu0 %v1952, 32
        %v1991 = vpop.permute.xlu0 %1990
        %1992 = vrot.lane.b32.xlu0 %v1955, 32
        %v1993 = vpop.permute.xlu0 %1992
        %1994 = vrot.lane.b32.xlu0 %v1960, 32
        %v1995 = vpop.permute.xlu0 %1994
        %1996 = vrot.lane.b32.xlu0 %v1963, 32
        %v1997 = vpop.permute.xlu0 %1996
        %1998 = vrot.lane.b32.xlu0 %v1968, 32
        %v1999 = vpop.permute.xlu0 %1998
        %2000 = vrot.lane.b32.xlu0 %v1971, 32
        %v2001 = vpop.permute.xlu0 %2000
        %2002 = vrot.lane.b32.xlu0 %v1976, 32
        %v2003 = vpop.permute.xlu0 %2002
        %2004 = vrot.lane.b32.xlu0 %v1979, 32
        %v2005 = vpop.permute.xlu0 %2004
        %v2014 = vadd.f32 %v1841, %v1991
        %v2015 = vadd.f32 %v1842, %v1993
        %v2016 = vadd.f32 %v1843, %v1995
        %v2017 = vadd.f32 %v1844, %v1997
        %v2018 = vadd.f32 %v1845, %v1999
        %v2019 = vadd.f32 %v1846, %v2001
        %v2020 = vadd.f32 %v1847, %v2003
        %v2021 = vadd.f32 %v1848, %v2005
        %vm2022 = vcmask 392448
        %2023 = vst.msk [vmem:[#allocation4] sm:$0xff] %vm2022, %v2014
        %2024 = vst.msk [vmem:[#allocation4 + $0x8] sm:$0xff] %vm2022, %v2015
        %2025 = vst.msk [vmem:[#allocation4 + $0x10] sm:$0xff] %vm2022, %v2016
        %2026 = vst.msk [vmem:[#allocation4 + $0x18] sm:$0xff] %vm2022, %v2017
        %2027 = vst.msk [vmem:[#allocation4 + $0x20] sm:$0xff] %vm2022, %v2018
        %2028 = vst.msk [vmem:[#allocation4 + $0x28] sm:$0xff] %vm2022, %v2019
        %2029 = vst.msk [vmem:[#allocation4 + $0x30] sm:$0xff] %vm2022, %v2020
        %2030 = vst.msk [vmem:[#allocation4 + $0x38] sm:$0xff] %vm2022, %v2021
        %2031 = vst.msk [vmem:[#allocation2] sm:$0xff] %vm1784, %v1648
        %2032 = vst.msk [vmem:[#allocation2 + $0x8] sm:$0xff] %vm1784, %v1649
        %2033 = vst.msk [vmem:[#allocation2 + $0x10] sm:$0xff] %vm1784, %v1650
        %2034 = vst.msk [vmem:[#allocation2 + $0x18] sm:$0xff] %vm1784, %v1651
        %2035 = vst.msk [vmem:[#allocation2 + $0x20] sm:$0xff] %vm1784, %v1652
        %2036 = vst.msk [vmem:[#allocation2 + $0x28] sm:$0xff] %vm1784, %v1653
        %2037 = vst.msk [vmem:[#allocation2 + $0x30] sm:$0xff] %vm1784, %v1654
        %2038 = vst.msk [vmem:[#allocation2 + $0x38] sm:$0xff] %vm1784, %v1655
        %v2039 = vld [vmem:[%s406] sm:$0xf]
        %v2040 = vld [vmem:[%s406 + $0x4] sm:$0xf]
        %v2041 = vld [vmem:[%s406 + $0x8] sm:$0xf]
        %v2042 = vld [vmem:[%s406 + $0xc] sm:$0xf]
        %v2043 = vld [vmem:[%s406 + $0x10] sm:$0xf]
        %v2044 = vld [vmem:[%s406 + $0x14] sm:$0xf]
        %v2045 = vld [vmem:[%s406 + $0x18] sm:$0xf]
        %v2046 = vld [vmem:[%s406 + $0x1c] sm:$0xf]
        %v2047 = vld [vmem:[%s406 + $0x20] sm:$0xf]
        %v2048 = vld [vmem:[%s406 + $0x24] sm:$0xf]
        %v2049 = vld [vmem:[%s406 + $0x28] sm:$0xf]
        %v2050 = vld [vmem:[%s406 + $0x2c] sm:$0xf]
        %v2051 = vld [vmem:[%s406 + $0x30] sm:$0xf]
        %v2052 = vld [vmem:[%s406 + $0x34] sm:$0xf]
        %v2053 = vld [vmem:[%s406 + $0x38] sm:$0xf]
        %v2054 = vld [vmem:[%s406 + $0x3c] sm:$0xf]
        %v2055 = vld [vmem:[%s388] sm:$0xff]
        %v2056 = vld [vmem:[%s388 + $0x8] sm:$0xff]
        %v2057 = vld [vmem:[%s388 + $0x10] sm:$0xff]
        %v2058 = vld [vmem:[%s388 + $0x18] sm:$0xff]
        %v2059 = vld [vmem:[%s388 + $0x20] sm:$0xff]
        %v2060 = vld [vmem:[%s388 + $0x28] sm:$0xff]
        %v2061 = vld [vmem:[%s388 + $0x30] sm:$0xff]
        %v2062 = vld [vmem:[%s388 + $0x38] sm:$0xff]
        %v2063 = vld [vmem:[%s397 + $0x3] sm:$0x1]
        %2065 = vset.pattern.permute.xlu0 3
        %2066 = vperm.xlu0 %2065, %v2055
        %v2067 = vpop.permute.xlu0 %2066
        %2070 = vset.pattern.permute.xlu0 3
        %2071 = vperm.xlu0 %2070, %v2056
        %v2072 = vpop.permute.xlu0 %2071
        %2075 = vset.pattern.permute.xlu0 3
        %2076 = vperm.xlu0 %2075, %v2057
        %v2077 = vpop.permute.xlu0 %2076
        %2080 = vset.pattern.permute.xlu0 3
        %2081 = vperm.xlu0 %2080, %v2058
        %v2082 = vpop.permute.xlu0 %2081
        %2085 = vset.pattern.permute.xlu0 3
        %2086 = vperm.xlu0 %2085, %v2059
        %v2087 = vpop.permute.xlu0 %2086
        %2090 = vset.pattern.permute.xlu0 3
        %2091 = vperm.xlu0 %2090, %v2060
        %v2092 = vpop.permute.xlu0 %2091
        %2095 = vset.pattern.permute.xlu0 3
        %2096 = vperm.xlu0 %2095, %v2061
        %v2097 = vpop.permute.xlu0 %2096
        %2100 = vset.pattern.permute.xlu0 3
        %2101 = vperm.xlu0 %2100, %v2062
        %v2102 = vpop.permute.xlu0 %2101
        %v2104 = vlaneseq
        %v2105 = vshrl.u32 %v2104, 7
        %v2106 = vsub.s32 0, %v2105
        %v2107 = vrot.slane %v2063, %v2106
        %v2108 = vadd.f32 %v2067, %v2107
        %v2109 = vadd.f32 %v2072, %v2107
        %v2110 = vadd.f32 %v2077, %v2107
        %v2111 = vadd.f32 %v2082, %v2107
        %v2112 = vadd.f32 %v2087, %v2107
        %v2113 = vadd.f32 %v2092, %v2107
        %v2114 = vadd.f32 %v2097, %v2107
        %v2115 = vadd.f32 %v2102, %v2107
        %vm2116 = vcmp.gt.f32.partialorder %v2108, 0.0
        %vm2117 = vcmp.gt.f32.partialorder %v2109, 0.0
        %vm2118 = vcmp.gt.f32.partialorder %v2110, 0.0
        %vm2119 = vcmp.gt.f32.partialorder %v2111, 0.0
        %vm2120 = vcmp.gt.f32.partialorder %v2112, 0.0
        %vm2121 = vcmp.gt.f32.partialorder %v2113, 0.0
        %vm2122 = vcmp.gt.f32.partialorder %v2114, 0.0
        %vm2123 = vcmp.gt.f32.partialorder %v2115, 0.0
        %v2124 = vmul.f32 %v2108, 0.2
        %v2125 = vmul.f32 %v2109, 0.2
        %v2126 = vmul.f32 %v2110, 0.2
        %v2127 = vmul.f32 %v2111, 0.2
        %v2128 = vmul.f32 %v2112, 0.2
        %v2129 = vmul.f32 %v2113, 0.2
        %v2130 = vmul.f32 %v2114, 0.2
        %v2131 = vmul.f32 %v2115, 0.2
        %v2132 = vsel %vm2116, %v2108, %v2124
        %v2133 = vsel %vm2117, %v2109, %v2125
        %v2134 = vsel %vm2118, %v2110, %v2126
        %v2135 = vsel %vm2119, %v2111, %v2127
        %v2136 = vsel %vm2120, %v2112, %v2128
        %v2137 = vsel %vm2121, %v2113, %v2129
        %v2138 = vsel %vm2122, %v2114, %v2130
        %v2139 = vsel %vm2123, %v2115, %v2131
        %v2140 = vadd.f32 %v2132, %v507
        %v2141 = vadd.f32 %v2133, %v508
        %v2142 = vadd.f32 %v2134, %v509
        %v2143 = vadd.f32 %v2135, %v510
        %v2144 = vadd.f32 %v2136, %v511
        %v2145 = vadd.f32 %v2137, %v512
        %v2146 = vadd.f32 %v2138, %v513
        %v2147 = vadd.f32 %v2139, %v514
        %v2148 = vld [vmem:[#allocation2] sm:$0xff]
        %v2149 = vld [vmem:[#allocation2 + $0x8] sm:$0xff]
        %v2150 = vld [vmem:[#allocation2 + $0x10] sm:$0xff]
        %v2151 = vld [vmem:[#allocation2 + $0x18] sm:$0xff]
        %v2152 = vld [vmem:[#allocation2 + $0x20] sm:$0xff]
        %v2153 = vld [vmem:[#allocation2 + $0x28] sm:$0xff]
        %v2154 = vld [vmem:[#allocation2 + $0x30] sm:$0xff]
        %v2155 = vld [vmem:[#allocation2 + $0x38] sm:$0xff]
        %2156 = vmax.xlane.f32.xlu0 %v2140
        %v2157 = vpop.xlane.xlu0 %2156
        %2158 = vmax.xlane.f32.xlu0 %v2141
        %v2159 = vpop.xlane.xlu0 %2158
        %2160 = vmax.xlane.f32.xlu0 %v2142
        %v2161 = vpop.xlane.xlu0 %2160
        %2162 = vmax.xlane.f32.xlu0 %v2143
        %v2163 = vpop.xlane.xlu0 %2162
        %2164 = vmax.xlane.f32.xlu0 %v2144
        %v2165 = vpop.xlane.xlu0 %2164
        %2166 = vmax.xlane.f32.xlu0 %v2145
        %v2167 = vpop.xlane.xlu0 %2166
        %2168 = vmax.xlane.f32.xlu0 %v2146
        %v2169 = vpop.xlane.xlu0 %2168
        %2170 = vmax.xlane.f32.xlu0 %v2147
        %v2171 = vpop.xlane.xlu0 %2170
        %v2172 = vmax.f32 %v2148, %v2157
        %v2173 = vmax.f32 %v2149, %v2159
        %v2174 = vmax.f32 %v2150, %v2161
        %v2175 = vmax.f32 %v2151, %v2163
        %v2176 = vmax.f32 %v2152, %v2165
        %v2177 = vmax.f32 %v2153, %v2167
        %v2178 = vmax.f32 %v2154, %v2169
        %v2179 = vmax.f32 %v2155, %v2171
        %v2180 = vsub.f32 %v2148, %v2172
        %v2181 = vsub.f32 %v2149, %v2173
        %v2182 = vsub.f32 %v2150, %v2174
        %v2183 = vsub.f32 %v2151, %v2175
        %v2184 = vsub.f32 %v2152, %v2176
        %v2185 = vsub.f32 %v2153, %v2177
        %v2186 = vsub.f32 %v2154, %v2178
        %v2187 = vsub.f32 %v2155, %v2179
        %v2188 = vmul.f32 %v2180, 1.442695
        %v2189 = vpow.pop %v2188
        %v2190 = vmul.f32 %v2181, 1.442695
        %v2191 = vpow.pop %v2190
        %v2192 = vmul.f32 %v2182, 1.442695
        %v2193 = vpow.pop %v2192
        %v2194 = vmul.f32 %v2183, 1.442695
        %v2195 = vpow.pop %v2194
        %v2196 = vmul.f32 %v2184, 1.442695
        %v2197 = vpow.pop %v2196
        %v2198 = vmul.f32 %v2185, 1.442695
        %v2199 = vpow.pop %v2198
        %v2200 = vmul.f32 %v2186, 1.442695
        %v2201 = vpow.pop %v2200
        %v2202 = vmul.f32 %v2187, 1.442695
        %v2203 = vpow.pop %v2202
        %2205 = vset.pattern.permute.xlu0 3
        %2206 = vperm.xlu0 %2205, %v2172
        %v2207 = vpop.permute.xlu0 %2206
        %2210 = vset.pattern.permute.xlu0 3
        %2211 = vperm.xlu0 %2210, %v2173
        %v2212 = vpop.permute.xlu0 %2211
        %2215 = vset.pattern.permute.xlu0 3
        %2216 = vperm.xlu0 %2215, %v2174
        %v2217 = vpop.permute.xlu0 %2216
        %2220 = vset.pattern.permute.xlu0 3
        %2221 = vperm.xlu0 %2220, %v2175
        %v2222 = vpop.permute.xlu0 %2221
        %2225 = vset.pattern.permute.xlu0 3
        %2226 = vperm.xlu0 %2225, %v2176
        %v2227 = vpop.permute.xlu0 %2226
        %2230 = vset.pattern.permute.xlu0 3
        %2231 = vperm.xlu0 %2230, %v2177
        %v2232 = vpop.permute.xlu0 %2231
        %2235 = vset.pattern.permute.xlu0 3
        %2236 = vperm.xlu0 %2235, %v2178
        %v2237 = vpop.permute.xlu0 %2236
        %2240 = vset.pattern.permute.xlu0 3
        %2241 = vperm.xlu0 %2240, %v2179
        %v2242 = vpop.permute.xlu0 %2241
        %v2244 = vsub.f32 %v2140, %v2207
        %v2245 = vsub.f32 %v2141, %v2212
        %v2246 = vsub.f32 %v2142, %v2217
        %v2247 = vsub.f32 %v2143, %v2222
        %v2248 = vsub.f32 %v2144, %v2227
        %v2249 = vsub.f32 %v2145, %v2232
        %v2250 = vsub.f32 %v2146, %v2237
        %v2251 = vsub.f32 %v2147, %v2242
        %v2252 = vmul.f32 %v2244, 1.442695
        %v2253 = vpow.pop %v2252
        %v2254 = vmul.f32 %v2245, 1.442695
        %v2255 = vpow.pop %v2254
        %v2256 = vmul.f32 %v2246, 1.442695
        %v2257 = vpow.pop %v2256
        %v2258 = vmul.f32 %v2247, 1.442695
        %v2259 = vpow.pop %v2258
        %v2260 = vmul.f32 %v2248, 1.442695
        %v2261 = vpow.pop %v2260
        %v2262 = vmul.f32 %v2249, 1.442695
        %v2263 = vpow.pop %v2262
        %v2264 = vmul.f32 %v2250, 1.442695
        %v2265 = vpow.pop %v2264
        %v2266 = vmul.f32 %v2251, 1.442695
        %v2267 = vpow.pop %v2266
        %v2268 = vld [vmem:[#allocation3] sm:$0xff]
        %v2269 = vld [vmem:[#allocation3 + $0x8] sm:$0xff]
        %v2270 = vld [vmem:[#allocation3 + $0x10] sm:$0xff]
        %v2271 = vld [vmem:[#allocation3 + $0x18] sm:$0xff]
        %v2272 = vld [vmem:[#allocation3 + $0x20] sm:$0xff]
        %v2273 = vld [vmem:[#allocation3 + $0x28] sm:$0xff]
        %v2274 = vld [vmem:[#allocation3 + $0x30] sm:$0xff]
        %v2275 = vld [vmem:[#allocation3 + $0x38] sm:$0xff]
        %v2276 = vmul.f32 %v2189, %v2268
        %v2277 = vmul.f32 %v2191, %v2269
        %v2278 = vmul.f32 %v2193, %v2270
        %v2279 = vmul.f32 %v2195, %v2271
        %v2280 = vmul.f32 %v2197, %v2272
        %v2281 = vmul.f32 %v2199, %v2273
        %v2282 = vmul.f32 %v2201, %v2274
        %v2283 = vmul.f32 %v2203, %v2275
        %2284 = vadd.xlane.f32.xlu0 %v2253
        %v2285 = vpop.xlane.xlu0 %2284
        %2286 = vadd.xlane.f32.xlu0 %v2255
        %v2287 = vpop.xlane.xlu0 %2286
        %2288 = vadd.xlane.f32.xlu0 %v2257
        %v2289 = vpop.xlane.xlu0 %2288
        %2290 = vadd.xlane.f32.xlu0 %v2259
        %v2291 = vpop.xlane.xlu0 %2290
        %2292 = vadd.xlane.f32.xlu0 %v2261
        %v2293 = vpop.xlane.xlu0 %2292
        %2294 = vadd.xlane.f32.xlu0 %v2263
        %v2295 = vpop.xlane.xlu0 %2294
        %2296 = vadd.xlane.f32.xlu0 %v2265
        %v2297 = vpop.xlane.xlu0 %2296
        %2298 = vadd.xlane.f32.xlu0 %v2267
        %v2299 = vpop.xlane.xlu0 %2298
        %v2300 = vadd.f32 %v2276, %v2285
        %v2301 = vadd.f32 %v2277, %v2287
        %v2302 = vadd.f32 %v2278, %v2289
        %v2303 = vadd.f32 %v2279, %v2291
        %v2304 = vadd.f32 %v2280, %v2293
        %v2305 = vadd.f32 %v2281, %v2295
        %v2306 = vadd.f32 %v2282, %v2297
        %v2307 = vadd.f32 %v2283, %v2299
        %vm2308 = vcmask 31768
        %2309 = vst.msk [vmem:[#allocation3] sm:$0xff] %vm2308, %v2300
        %2310 = vst.msk [vmem:[#allocation3 + $0x8] sm:$0xff] %vm2308, %v2301
        %2311 = vst.msk [vmem:[#allocation3 + $0x10] sm:$0xff] %vm2308, %v2302
        %2312 = vst.msk [vmem:[#allocation3 + $0x18] sm:$0xff] %vm2308, %v2303
        %2313 = vst.msk [vmem:[#allocation3 + $0x20] sm:$0xff] %vm2308, %v2304
        %2314 = vst.msk [vmem:[#allocation3 + $0x28] sm:$0xff] %vm2308, %v2305
        %2315 = vst.msk [vmem:[#allocation3 + $0x30] sm:$0xff] %vm2308, %v2306
        %2316 = vst.msk [vmem:[#allocation3 + $0x38] sm:$0xff] %vm2308, %v2307
        %v2317 = vld [vmem:[#allocation4] sm:$0xff]
        %v2318 = vld [vmem:[#allocation4 + $0x8] sm:$0xff]
        %v2319 = vld [vmem:[#allocation4 + $0x10] sm:$0xff]
        %v2320 = vld [vmem:[#allocation4 + $0x18] sm:$0xff]
        %v2321 = vld [vmem:[#allocation4 + $0x20] sm:$0xff]
        %v2322 = vld [vmem:[#allocation4 + $0x28] sm:$0xff]
        %v2323 = vld [vmem:[#allocation4 + $0x30] sm:$0xff]
        %v2324 = vld [vmem:[#allocation4 + $0x38] sm:$0xff]
        %2326 = vset.pattern.permute.xlu0 3
        %2327 = vperm.xlu0 %2326, %v2189
        %v2328 = vpop.permute.xlu0 %2327
        %2331 = vset.pattern.permute.xlu0 3
        %2332 = vperm.xlu0 %2331, %v2191
        %v2333 = vpop.permute.xlu0 %2332
        %2336 = vset.pattern.permute.xlu0 3
        %2337 = vperm.xlu0 %2336, %v2193
        %v2338 = vpop.permute.xlu0 %2337
        %2341 = vset.pattern.permute.xlu0 3
        %2342 = vperm.xlu0 %2341, %v2195
        %v2343 = vpop.permute.xlu0 %2342
        %2346 = vset.pattern.permute.xlu0 3
        %2347 = vperm.xlu0 %2346, %v2197
        %v2348 = vpop.permute.xlu0 %2347
        %2351 = vset.pattern.permute.xlu0 3
        %2352 = vperm.xlu0 %2351, %v2199
        %v2353 = vpop.permute.xlu0 %2352
        %2356 = vset.pattern.permute.xlu0 3
        %2357 = vperm.xlu0 %2356, %v2201
        %v2358 = vpop.permute.xlu0 %2357
        %2361 = vset.pattern.permute.xlu0 3
        %2362 = vperm.xlu0 %2361, %v2203
        %v2363 = vpop.permute.xlu0 %2362
        %v2365 = vmul.f32 %v2328, %v2317
        %v2366 = vmul.f32 %v2333, %v2318
        %v2367 = vmul.f32 %v2338, %v2319
        %v2368 = vmul.f32 %v2343, %v2320
        %v2369 = vmul.f32 %v2348, %v2321
        %v2370 = vmul.f32 %v2353, %v2322
        %v2371 = vmul.f32 %v2358, %v2323
        %v2372 = vmul.f32 %v2363, %v2324
        %v2373 = vpack.c.bf16 %v2255, %v2253
        %v2374 = vpack.c.bf16 %v2259, %v2257
        %v2375 = vpack.c.bf16 %v2263, %v2261
        %v2376 = vpack.c.bf16 %v2267, %v2265
        %v2393 = vunpack.c.l.b16 %v2039
        %v2394 = vunpack.c.l.b16 %v2040
        %v2395 = vunpack.c.l.b16 %v2041
        %v2396 = vunpack.c.l.b16 %v2042
        %v2397 = vunpack.c.l.b16 %v2043
        %v2398 = vunpack.c.l.b16 %v2044
        %v2399 = vunpack.c.l.b16 %v2045
        %v2400 = vunpack.c.l.b16 %v2046
        %v2401 = vunpack.c.l.b16 %v2047
        %v2402 = vunpack.c.l.b16 %v2048
        %v2403 = vunpack.c.l.b16 %v2049
        %v2404 = vunpack.c.l.b16 %v2050
        %v2405 = vunpack.c.l.b16 %v2051
        %v2406 = vunpack.c.l.b16 %v2052
        %v2407 = vunpack.c.l.b16 %v2053
        %v2408 = vunpack.c.l.b16 %v2054
        %v2409 = vpack.c.b16 %v2394, %v2393
        %v2410 = vpack.c.b16 %v2396, %v2395
        %v2411 = vpack.c.b16 %v2398, %v2397
        %v2412 = vpack.c.b16 %v2400, %v2399
        %v2413 = vpack.c.b16 %v2402, %v2401
        %v2414 = vpack.c.b16 %v2404, %v2403
        %v2415 = vpack.c.b16 %v2406, %v2405
        %v2416 = vpack.c.b16 %v2408, %v2407
        %2417 = vrot.lane.b32.xlu0 %v2409, 80
        %v2418 = vpop.permute.xlu0 %2417
        %2419 = vrot.lane.b32.xlu0 %v2410, 80
        %v2420 = vpop.permute.xlu0 %2419
        %2421 = vrot.lane.b32.xlu0 %v2411, 80
        %v2422 = vpop.permute.xlu0 %2421
        %2423 = vrot.lane.b32.xlu0 %v2412, 80
        %v2424 = vpop.permute.xlu0 %2423
        %2425 = vrot.lane.b32.xlu0 %v2413, 80
        %v2426 = vpop.permute.xlu0 %2425
        %2427 = vrot.lane.b32.xlu0 %v2414, 80
        %v2428 = vpop.permute.xlu0 %2427
        %2429 = vrot.lane.b32.xlu0 %v2415, 80
        %v2430 = vpop.permute.xlu0 %2429
        %2431 = vrot.lane.b32.xlu0 %v2416, 80
        %v2432 = vpop.permute.xlu0 %2431
        %2441 = vmatprep.subr.bf16.mxu0 0
        %2442 = vmatpush1.bf16.msra.mxu0 %v2418
        %2443 = vmatprep.subr.bf16.mxu0 0
        %2444 = vmatpush1.bf16.msra.mxu0 %v2420
        %2445 = vmatprep.subr.bf16.mxu0 0
        %2446 = vmatpush1.bf16.msra.mxu0 %v2422
        %2447 = vmatprep.subr.bf16.mxu0 0
        %2448 = vmatpush1.bf16.msra.mxu0 %v2424
        %2449 = vmatprep.subr.bf16.mxu0 0
        %2450 = vmatpush1.bf16.msra.mxu0 %v2426
        %2451 = vmatprep.subr.bf16.mxu0 0
        %2452 = vmatpush1.bf16.msra.mxu0 %v2428
        %2453 = vmatprep.subr.bf16.mxu0 0
        %2454 = vmatpush1.bf16.msra.mxu0 %v2430
        %2455 = vmatprep.subr.bf16.mxu0 0
        %2456 = vmatpush1.bf16.msra.mxu0 %v2432
        %2457 = vmatprep.subr.bf16.mxu0 0
        %2458 = vmatpush1.bf16.msra.mxu0 0
        %2459 = vmatprep.subr.bf16.mxu0 0
        %2460 = vmatpush1.bf16.msra.mxu0 0
        %2461 = vmatprep.subr.bf16.mxu0 0
        %2462 = vmatpush1.bf16.msra.mxu0 0
        %2463 = vmatprep.subr.bf16.mxu0 0
        %2464 = vmatpush1.bf16.msra.mxu0 0
        %2465 = vmatprep.subr.bf16.mxu0 0
        %2466 = vmatpush1.bf16.msra.mxu0 0
        %2467 = vmatprep.subr.bf16.mxu0 0
        %2468 = vmatpush1.bf16.msra.mxu0 0
        %2469 = vmatprep.subr.bf16.mxu0 0
        %2470 = vmatpush1.bf16.msra.mxu0 0
        %2471 = vmatprep.subr.bf16.mxu0 0
        %2472 = vmatpush1.bf16.msra.mxu0 0
        %2473 = vmatprep.mubr.bf16.mxu0 0
        %2474 = vmatmul.mubr.bf16.gmra.mrb[0].mxu0 %v2373
        %v2475 = vpop.f32.mrb[0].mxu0
        %v2476 = vadd.f32 0.0, %v2475
        %v2477 = vpop.f32.mrb[0].mxu0
        %v2478 = vpop.f32.mrb[0].mxu0
        %v2479 = vadd.f32 0.0, %v2478
        %v2480 = vpop.f32.mrb[0].mxu0
        %2481 = vmatprep.mubr.bf16.mxu0 0
        %2482 = vmatmul.mubr.bf16.gmra.mrb[0].mxu0 %v2374
        %v2483 = vpop.f32.mrb[0].mxu0
        %v2484 = vadd.f32 0.0, %v2483
        %v2485 = vpop.f32.mrb[0].mxu0
        %v2486 = vpop.f32.mrb[0].mxu0
        %v2487 = vadd.f32 0.0, %v2486
        %v2488 = vpop.f32.mrb[0].mxu0
        %2489 = vmatprep.mubr.bf16.mxu0 0
        %2490 = vmatmul.mubr.bf16.gmra.mrb[0].mxu0 %v2375
        %v2491 = vpop.f32.mrb[0].mxu0
        %v2492 = vadd.f32 0.0, %v2491
        %v2493 = vpop.f32.mrb[0].mxu0
        %v2494 = vpop.f32.mrb[0].mxu0
        %v2495 = vadd.f32 0.0, %v2494
        %v2496 = vpop.f32.mrb[0].mxu0
        %2497 = vmatprep.mubr.bf16.mxu0 0
        %2498 = vmatmul.mubr.bf16.gmra.mrb[0].mxu0 %v2376
        %v2499 = vpop.f32.mrb[0].mxu0
        %v2500 = vadd.f32 0.0, %v2499
        %v2501 = vpop.f32.mrb[0].mxu0
        %v2502 = vpop.f32.mrb[0].mxu0
        %v2503 = vadd.f32 0.0, %v2502
        %v2504 = vpop.f32.mrb[0].mxu0
        %2505 = vdwg.mxu0
        %2514 = vrot.lane.b32.xlu0 %v2476, 48
        %v2515 = vpop.permute.xlu0 %2514
        %2516 = vrot.lane.b32.xlu0 %v2479, 48
        %v2517 = vpop.permute.xlu0 %2516
        %2518 = vrot.lane.b32.xlu0 %v2484, 48
        %v2519 = vpop.permute.xlu0 %2518
        %2520 = vrot.lane.b32.xlu0 %v2487, 48
        %v2521 = vpop.permute.xlu0 %2520
        %2522 = vrot.lane.b32.xlu0 %v2492, 48
        %v2523 = vpop.permute.xlu0 %2522
        %2524 = vrot.lane.b32.xlu0 %v2495, 48
        %v2525 = vpop.permute.xlu0 %2524
        %2526 = vrot.lane.b32.xlu0 %v2500, 48
        %v2527 = vpop.permute.xlu0 %2526
        %2528 = vrot.lane.b32.xlu0 %v2503, 48
        %v2529 = vpop.permute.xlu0 %2528
        %v2538 = vadd.f32 %v2365, %v2515
        %v2539 = vadd.f32 %v2366, %v2517
        %v2540 = vadd.f32 %v2367, %v2519
        %v2541 = vadd.f32 %v2368, %v2521
        %v2542 = vadd.f32 %v2369, %v2523
        %v2543 = vadd.f32 %v2370, %v2525
        %v2544 = vadd.f32 %v2371, %v2527
        %v2545 = vadd.f32 %v2372, %v2529
        %vm2546 = vcmask 523648
        %2547 = vst.msk [vmem:[#allocation4] sm:$0xff] %vm2546, %v2538
        %2548 = vst.msk [vmem:[#allocation4 + $0x8] sm:$0xff] %vm2546, %v2539
        %2549 = vst.msk [vmem:[#allocation4 + $0x10] sm:$0xff] %vm2546, %v2540
        %2550 = vst.msk [vmem:[#allocation4 + $0x18] sm:$0xff] %vm2546, %v2541
        %2551 = vst.msk [vmem:[#allocation4 + $0x20] sm:$0xff] %vm2546, %v2542
        %2552 = vst.msk [vmem:[#allocation4 + $0x28] sm:$0xff] %vm2546, %v2543
        %2553 = vst.msk [vmem:[#allocation4 + $0x30] sm:$0xff] %vm2546, %v2544
        %2554 = vst.msk [vmem:[#allocation4 + $0x38] sm:$0xff] %vm2546, %v2545
        %2555 = vst.msk [vmem:[#allocation2] sm:$0xff] %vm2308, %v2172
        %2556 = vst.msk [vmem:[#allocation2 + $0x8] sm:$0xff] %vm2308, %v2173
        %2557 = vst.msk [vmem:[#allocation2 + $0x10] sm:$0xff] %vm2308, %v2174
        %2558 = vst.msk [vmem:[#allocation2 + $0x18] sm:$0xff] %vm2308, %v2175
        %2559 = vst.msk [vmem:[#allocation2 + $0x20] sm:$0xff] %vm2308, %v2176
        %2560 = vst.msk [vmem:[#allocation2 + $0x28] sm:$0xff] %vm2308, %v2177
        %2561 = vst.msk [vmem:[#allocation2 + $0x30] sm:$0xff] %vm2308, %v2178
        %2562 = vst.msk [vmem:[#allocation2 + $0x38] sm:$0xff] %vm2308, %v2179
        %p2563 = scmp.eq.s32.totalorder %s36, 1
        // Predicated region
        $region81: #{hat_layer.3} parent=47 // pred_check
          %p2564 = pneg %p2563
        $region82: #{hat_layer.3} parent=47 // pred_check_branch
          %2566 = sbr.rel (%p2564) target = $region84
        $region83: #{hat_layer.3} parent=47 // pred_region
          %v2567 = vld [vmem:[#allocation3] sm:$0xff]
          %v2568 = vld [vmem:[#allocation3 + $0x8] sm:$0xff]
          %v2569 = vld [vmem:[#allocation3 + $0x10] sm:$0xff]
          %v2570 = vld [vmem:[#allocation3 + $0x18] sm:$0xff]
          %v2571 = vld [vmem:[#allocation3 + $0x20] sm:$0xff]
          %v2572 = vld [vmem:[#allocation3 + $0x28] sm:$0xff]
          %v2573 = vld [vmem:[#allocation3 + $0x30] sm:$0xff]
          %v2574 = vld [vmem:[#allocation3 + $0x38] sm:$0xff]
          %v2575 = vrcp.pop %v2567
          %v2576 = vrcp.pop %v2568
          %v2577 = vrcp.pop %v2569
          %v2578 = vrcp.pop %v2570
          %v2579 = vrcp.pop %v2571
          %v2580 = vrcp.pop %v2572
          %v2581 = vrcp.pop %v2573
          %v2582 = vrcp.pop %v2574
          %v2583 = vld [vmem:[#allocation4] sm:$0xff]
          %v2584 = vld [vmem:[#allocation4 + $0x8] sm:$0xff]
          %v2585 = vld [vmem:[#allocation4 + $0x10] sm:$0xff]
          %v2586 = vld [vmem:[#allocation4 + $0x18] sm:$0xff]
          %v2587 = vld [vmem:[#allocation4 + $0x20] sm:$0xff]
          %v2588 = vld [vmem:[#allocation4 + $0x28] sm:$0xff]
          %v2589 = vld [vmem:[#allocation4 + $0x30] sm:$0xff]
          %v2590 = vld [vmem:[#allocation4 + $0x38] sm:$0xff]
          %2592 = vset.pattern.permute.xlu0 0
          %2593 = vperm.xlu0 %2592, %v2575
          %v2594 = vpop.permute.xlu0 %2593
          %2597 = vset.pattern.permute.xlu0 0
          %2598 = vperm.xlu0 %2597, %v2576
          %v2599 = vpop.permute.xlu0 %2598
          %2602 = vset.pattern.permute.xlu0 0
          %2603 = vperm.xlu0 %2602, %v2577
          %v2604 = vpop.permute.xlu0 %2603
          %2607 = vset.pattern.permute.xlu0 0
          %2608 = vperm.xlu0 %2607, %v2578
          %v2609 = vpop.permute.xlu0 %2608
          %2612 = vset.pattern.permute.xlu0 0
          %2613 = vperm.xlu0 %2612, %v2579
          %v2614 = vpop.permute.xlu0 %2613
          %2617 = vset.pattern.permute.xlu0 0
          %2618 = vperm.xlu0 %2617, %v2580
          %v2619 = vpop.permute.xlu0 %2618
          %2622 = vset.pattern.permute.xlu0 0
          %2623 = vperm.xlu0 %2622, %v2581
          %v2624 = vpop.permute.xlu0 %2623
          %2627 = vset.pattern.permute.xlu0 0
          %2628 = vperm.xlu0 %2627, %v2582
          %v2629 = vpop.permute.xlu0 %2628
          %v2631 = vmul.f32 %v2583, %v2594
          %v2632 = vmul.f32 %v2584, %v2599
          %v2633 = vmul.f32 %v2585, %v2604
          %v2634 = vmul.f32 %v2586, %v2609
          %v2635 = vmul.f32 %v2587, %v2614
          %v2636 = vmul.f32 %v2588, %v2619
          %v2637 = vmul.f32 %v2589, %v2624
          %v2638 = vmul.f32 %v2590, %v2629
          %2639 = vst.msk [vmem:[#allocation4] sm:$0xff] %vm974, %v2631
          %2640 = vst.msk [vmem:[#allocation4 + $0x8] sm:$0xff] %vm974, %v2632
          %2641 = vst.msk [vmem:[#allocation4 + $0x10] sm:$0xff] %vm974, %v2633
          %2642 = vst.msk [vmem:[#allocation4 + $0x18] sm:$0xff] %vm974, %v2634
          %2643 = vst.msk [vmem:[#allocation4 + $0x20] sm:$0xff] %vm974, %v2635
          %2644 = vst.msk [vmem:[#allocation4 + $0x28] sm:$0xff] %vm974, %v2636
          %2645 = vst.msk [vmem:[#allocation4 + $0x30] sm:$0xff] %vm974, %v2637
          %2646 = vst.msk [vmem:[#allocation4 + $0x38] sm:$0xff] %vm974, %v2638
          %v2647 = vld [vmem:[#allocation3] sm:$0xff]
          %v2648 = vld [vmem:[#allocation3 + $0x8] sm:$0xff]
          %v2649 = vld [vmem:[#allocation3 + $0x10] sm:$0xff]
          %v2650 = vld [vmem:[#allocation3 + $0x18] sm:$0xff]
          %v2651 = vld [vmem:[#allocation3 + $0x20] sm:$0xff]
          %v2652 = vld [vmem:[#allocation3 + $0x28] sm:$0xff]
          %v2653 = vld [vmem:[#allocation3 + $0x30] sm:$0xff]
          %v2654 = vld [vmem:[#allocation3 + $0x38] sm:$0xff]
          %v2655 = vrcp.pop %v2647
          %v2656 = vrcp.pop %v2648
          %v2657 = vrcp.pop %v2649
          %v2658 = vrcp.pop %v2650
          %v2659 = vrcp.pop %v2651
          %v2660 = vrcp.pop %v2652
          %v2661 = vrcp.pop %v2653
          %v2662 = vrcp.pop %v2654
          %v2663 = vld [vmem:[#allocation4] sm:$0xff]
          %v2664 = vld [vmem:[#allocation4 + $0x8] sm:$0xff]
          %v2665 = vld [vmem:[#allocation4 + $0x10] sm:$0xff]
          %v2666 = vld [vmem:[#allocation4 + $0x18] sm:$0xff]
          %v2667 = vld [vmem:[#allocation4 + $0x20] sm:$0xff]
          %v2668 = vld [vmem:[#allocation4 + $0x28] sm:$0xff]
          %v2669 = vld [vmem:[#allocation4 + $0x30] sm:$0xff]
          %v2670 = vld [vmem:[#allocation4 + $0x38] sm:$0xff]
          %2672 = vset.pattern.permute.xlu0 1
          %2673 = vperm.xlu0 %2672, %v2655
          %v2674 = vpop.permute.xlu0 %2673
          %2677 = vset.pattern.permute.xlu0 1
          %2678 = vperm.xlu0 %2677, %v2656
          %v2679 = vpop.permute.xlu0 %2678
          %2682 = vset.pattern.permute.xlu0 1
          %2683 = vperm.xlu0 %2682, %v2657
          %v2684 = vpop.permute.xlu0 %2683
          %2687 = vset.pattern.permute.xlu0 1
          %2688 = vperm.xlu0 %2687, %v2658
          %v2689 = vpop.permute.xlu0 %2688
          %2692 = vset.pattern.permute.xlu0 1
          %2693 = vperm.xlu0 %2692, %v2659
          %v2694 = vpop.permute.xlu0 %2693
          %2697 = vset.pattern.permute.xlu0 1
          %2698 = vperm.xlu0 %2697, %v2660
          %v2699 = vpop.permute.xlu0 %2698
          %2702 = vset.pattern.permute.xlu0 1
          %2703 = vperm.xlu0 %2702, %v2661
          %v2704 = vpop.permute.xlu0 %2703
          %2707 = vset.pattern.permute.xlu0 1
          %2708 = vperm.xlu0 %2707, %v2662
          %v2709 = vpop.permute.xlu0 %2708
          %v2711 = vmul.f32 %v2663, %v2674
          %v2712 = vmul.f32 %v2664, %v2679
          %v2713 = vmul.f32 %v2665, %v2684
          %v2714 = vmul.f32 %v2666, %v2689
          %v2715 = vmul.f32 %v2667, %v2694
          %v2716 = vmul.f32 %v2668, %v2699
          %v2717 = vmul.f32 %v2669, %v2704
          %v2718 = vmul.f32 %v2670, %v2709
          %2719 = vst.msk [vmem:[#allocation4] sm:$0xff] %vm1498, %v2711
          %2720 = vst.msk [vmem:[#allocation4 + $0x8] sm:$0xff] %vm1498, %v2712
          %2721 = vst.msk [vmem:[#allocation4 + $0x10] sm:$0xff] %vm1498, %v2713
          %2722 = vst.msk [vmem:[#allocation4 + $0x18] sm:$0xff] %vm1498, %v2714
          %2723 = vst.msk [vmem:[#allocation4 + $0x20] sm:$0xff] %vm1498, %v2715
          %2724 = vst.msk [vmem:[#allocation4 + $0x28] sm:$0xff] %vm1498, %v2716
          %2725 = vst.msk [vmem:[#allocation4 + $0x30] sm:$0xff] %vm1498, %v2717
          %2726 = vst.msk [vmem:[#allocation4 + $0x38] sm:$0xff] %vm1498, %v2718
          %v2727 = vld [vmem:[#allocation3] sm:$0xff]
          %v2728 = vld [vmem:[#allocation3 + $0x8] sm:$0xff]
          %v2729 = vld [vmem:[#allocation3 + $0x10] sm:$0xff]
          %v2730 = vld [vmem:[#allocation3 + $0x18] sm:$0xff]
          %v2731 = vld [vmem:[#allocation3 + $0x20] sm:$0xff]
          %v2732 = vld [vmem:[#allocation3 + $0x28] sm:$0xff]
          %v2733 = vld [vmem:[#allocation3 + $0x30] sm:$0xff]
          %v2734 = vld [vmem:[#allocation3 + $0x38] sm:$0xff]
          %v2735 = vrcp.pop %v2727
          %v2736 = vrcp.pop %v2728
          %v2737 = vrcp.pop %v2729
          %v2738 = vrcp.pop %v2730
          %v2739 = vrcp.pop %v2731
          %v2740 = vrcp.pop %v2732
          %v2741 = vrcp.pop %v2733
          %v2742 = vrcp.pop %v2734
          %v2743 = vld [vmem:[#allocation4] sm:$0xff]
          %v2744 = vld [vmem:[#allocation4 + $0x8] sm:$0xff]
          %v2745 = vld [vmem:[#allocation4 + $0x10] sm:$0xff]
          %v2746 = vld [vmem:[#allocation4 + $0x18] sm:$0xff]
          %v2747 = vld [vmem:[#allocation4 + $0x20] sm:$0xff]
          %v2748 = vld [vmem:[#allocation4 + $0x28] sm:$0xff]
          %v2749 = vld [vmem:[#allocation4 + $0x30] sm:$0xff]
          %v2750 = vld [vmem:[#allocation4 + $0x38] sm:$0xff]
          %2752 = vset.pattern.permute.xlu0 2
          %2753 = vperm.xlu0 %2752, %v2735
          %v2754 = vpop.permute.xlu0 %2753
          %2757 = vset.pattern.permute.xlu0 2
          %2758 = vperm.xlu0 %2757, %v2736
          %v2759 = vpop.permute.xlu0 %2758
          %2762 = vset.pattern.permute.xlu0 2
          %2763 = vperm.xlu0 %2762, %v2737
          %v2764 = vpop.permute.xlu0 %2763
          %2767 = vset.pattern.permute.xlu0 2
          %2768 = vperm.xlu0 %2767, %v2738
          %v2769 = vpop.permute.xlu0 %2768
          %2772 = vset.pattern.permute.xlu0 2
          %2773 = vperm.xlu0 %2772, %v2739
          %v2774 = vpop.permute.xlu0 %2773
          %2777 = vset.pattern.permute.xlu0 2
          %2778 = vperm.xlu0 %2777, %v2740
          %v2779 = vpop.permute.xlu0 %2778
          %2782 = vset.pattern.permute.xlu0 2
          %2783 = vperm.xlu0 %2782, %v2741
          %v2784 = vpop.permute.xlu0 %2783
          %2787 = vset.pattern.permute.xlu0 2
          %2788 = vperm.xlu0 %2787, %v2742
          %v2789 = vpop.permute.xlu0 %2788
          %v2791 = vmul.f32 %v2743, %v2754
          %v2792 = vmul.f32 %v2744, %v2759
          %v2793 = vmul.f32 %v2745, %v2764
          %v2794 = vmul.f32 %v2746, %v2769
          %v2795 = vmul.f32 %v2747, %v2774
          %v2796 = vmul.f32 %v2748, %v2779
          %v2797 = vmul.f32 %v2749, %v2784
          %v2798 = vmul.f32 %v2750, %v2789
          %2799 = vst.msk [vmem:[#allocation4] sm:$0xff] %vm2022, %v2791
          %2800 = vst.msk [vmem:[#allocation4 + $0x8] sm:$0xff] %vm2022, %v2792
          %2801 = vst.msk [vmem:[#allocation4 + $0x10] sm:$0xff] %vm2022, %v2793
          %2802 = vst.msk [vmem:[#allocation4 + $0x18] sm:$0xff] %vm2022, %v2794
          %2803 = vst.msk [vmem:[#allocation4 + $0x20] sm:$0xff] %vm2022, %v2795
          %2804 = vst.msk [vmem:[#allocation4 + $0x28] sm:$0xff] %vm2022, %v2796
          %2805 = vst.msk [vmem:[#allocation4 + $0x30] sm:$0xff] %vm2022, %v2797
          %2806 = vst.msk [vmem:[#allocation4 + $0x38] sm:$0xff] %vm2022, %v2798
          %v2807 = vld [vmem:[#allocation3] sm:$0xff]
          %v2808 = vld [vmem:[#allocation3 + $0x8] sm:$0xff]
          %v2809 = vld [vmem:[#allocation3 + $0x10] sm:$0xff]
          %v2810 = vld [vmem:[#allocation3 + $0x18] sm:$0xff]
          %v2811 = vld [vmem:[#allocation3 + $0x20] sm:$0xff]
          %v2812 = vld [vmem:[#allocation3 + $0x28] sm:$0xff]
          %v2813 = vld [vmem:[#allocation3 + $0x30] sm:$0xff]
          %v2814 = vld [vmem:[#allocation3 + $0x38] sm:$0xff]
          %v2815 = vrcp.pop %v2807
          %v2816 = vrcp.pop %v2808
          %v2817 = vrcp.pop %v2809
          %v2818 = vrcp.pop %v2810
          %v2819 = vrcp.pop %v2811
          %v2820 = vrcp.pop %v2812
          %v2821 = vrcp.pop %v2813
          %v2822 = vrcp.pop %v2814
          %v2823 = vld [vmem:[#allocation4] sm:$0xff]
          %v2824 = vld [vmem:[#allocation4 + $0x8] sm:$0xff]
          %v2825 = vld [vmem:[#allocation4 + $0x10] sm:$0xff]
          %v2826 = vld [vmem:[#allocation4 + $0x18] sm:$0xff]
          %v2827 = vld [vmem:[#allocation4 + $0x20] sm:$0xff]
          %v2828 = vld [vmem:[#allocation4 + $0x28] sm:$0xff]
          %v2829 = vld [vmem:[#allocation4 + $0x30] sm:$0xff]
          %v2830 = vld [vmem:[#allocation4 + $0x38] sm:$0xff]
          %2832 = vset.pattern.permute.xlu0 3
          %2833 = vperm.xlu0 %2832, %v2815
          %v2834 = vpop.permute.xlu0 %2833
          %2837 = vset.pattern.permute.xlu0 3
          %2838 = vperm.xlu0 %2837, %v2816
          %v2839 = vpop.permute.xlu0 %2838
          %2842 = vset.pattern.permute.xlu0 3
          %2843 = vperm.xlu0 %2842, %v2817
          %v2844 = vpop.permute.xlu0 %2843
          %2847 = vset.pattern.permute.xlu0 3
          %2848 = vperm.xlu0 %2847, %v2818
          %v2849 = vpop.permute.xlu0 %2848
          %2852 = vset.pattern.permute.xlu0 3
          %2853 = vperm.xlu0 %2852, %v2819
          %v2854 = vpop.permute.xlu0 %2853
          %2857 = vset.pattern.permute.xlu0 3
          %2858 = vperm.xlu0 %2857, %v2820
          %v2859 = vpop.permute.xlu0 %2858
          %2862 = vset.pattern.permute.xlu0 3
          %2863 = vperm.xlu0 %2862, %v2821
          %v2864 = vpop.permute.xlu0 %2863
          %2867 = vset.pattern.permute.xlu0 3
          %2868 = vperm.xlu0 %2867, %v2822
          %v2869 = vpop.permute.xlu0 %2868
          %v2871 = vmul.f32 %v2823, %v2834
          %v2872 = vmul.f32 %v2824, %v2839
          %v2873 = vmul.f32 %v2825, %v2844
          %v2874 = vmul.f32 %v2826, %v2849
          %v2875 = vmul.f32 %v2827, %v2854
          %v2876 = vmul.f32 %v2828, %v2859
          %v2877 = vmul.f32 %v2829, %v2864
          %v2878 = vmul.f32 %v2830, %v2869
          %2879 = vst.msk [vmem:[#allocation4] sm:$0xff] %vm2546, %v2871
          %2880 = vst.msk [vmem:[#allocation4 + $0x8] sm:$0xff] %vm2546, %v2872
          %2881 = vst.msk [vmem:[#allocation4 + $0x10] sm:$0xff] %vm2546, %v2873
          %2882 = vst.msk [vmem:[#allocation4 + $0x18] sm:$0xff] %vm2546, %v2874
          %2883 = vst.msk [vmem:[#allocation4 + $0x20] sm:$0xff] %vm2546, %v2875
          %2884 = vst.msk [vmem:[#allocation4 + $0x28] sm:$0xff] %vm2546, %v2876
          %2885 = vst.msk [vmem:[#allocation4 + $0x30] sm:$0xff] %vm2546, %v2877
          %2886 = vst.msk [vmem:[#allocation4 + $0x38] sm:$0xff] %vm2546, %v2878
          %v2887 = vld [vmem:[#allocation4] sm:$0xff]
          %v2888 = vld [vmem:[#allocation4 + $0x8] sm:$0xff]
          %v2889 = vld [vmem:[#allocation4 + $0x10] sm:$0xff]
          %v2890 = vld [vmem:[#allocation4 + $0x18] sm:$0xff]
          %v2891 = vld [vmem:[#allocation4 + $0x20] sm:$0xff]
          %v2892 = vld [vmem:[#allocation4 + $0x28] sm:$0xff]
          %v2893 = vld [vmem:[#allocation4 + $0x30] sm:$0xff]
          %v2894 = vld [vmem:[#allocation4 + $0x38] sm:$0xff]
          %v2895 = vld [vmem:[#allocation13] sm:$0x1]
          %v2897 = vlaneseq
          %v2898 = vshrl.u32 %v2897, 7
          %v2899 = vsub.s32 0, %v2898
          %v2900 = vrot.slane %v2895, %v2899
          %v2902 = vadd.f32 %v2887, %v2900
          %v2903 = vadd.f32 %v2888, %v2900
          %v2904 = vadd.f32 %v2889, %v2900
          %v2905 = vadd.f32 %v2890, %v2900
          %v2906 = vadd.f32 %v2891, %v2900
          %v2907 = vadd.f32 %v2892, %v2900
          %v2908 = vadd.f32 %v2893, %v2900
          %v2909 = vadd.f32 %v2894, %v2900
          %v2910 = vld [vmem:[#allocation14] sm:$0x1]
          %v2911 = vld [vmem:[#allocation16] sm:$0x1]
          %v2912 = vlaneseq
          %v2913 = vand.u32 %v2912, 127
          %vm2914 = vcmp.gt.s32.totalorder %v2913, 0
          %v2915 = vmax.f32 %v2902, 1.0000001
          %v2916 = vmax.f32 %v2903, 1.0000001
          %v2917 = vmax.f32 %v2904, 1.0000001
          %v2918 = vmax.f32 %v2905, 1.0000001
          %v2919 = vmax.f32 %v2906, 1.0000001
          %v2920 = vmax.f32 %v2907, 1.0000001
          %v2921 = vmax.f32 %v2908, 1.0000001
          %v2922 = vmax.f32 %v2909, 1.0000001
          %v2923 = vsel %vm2914, 1, 0
          %vm2924 = vcmp.eq.s32.totalorder %v2923, 1
          %v2925 = vsel %vm2924, %v2902, 0.0
          %v2926 = vsel %vm2924, %v2903, 0.0
          %v2927 = vsel %vm2924, %v2904, 0.0
          %v2928 = vsel %vm2924, %v2905, 0.0
          %v2929 = vsel %vm2924, %v2906, 0.0
          %v2930 = vsel %vm2924, %v2907, 0.0
          %v2931 = vsel %vm2924, %v2908, 0.0
          %v2932 = vsel %vm2924, %v2909, 0.0
          %v2933 = vmul.f32 %v2925, %v2925
          %v2934 = vmul.f32 %v2926, %v2926
          %v2935 = vmul.f32 %v2927, %v2927
          %v2936 = vmul.f32 %v2928, %v2928
          %v2937 = vmul.f32 %v2929, %v2929
          %v2938 = vmul.f32 %v2930, %v2930
          %v2939 = vmul.f32 %v2931, %v2931
          %v2940 = vmul.f32 %v2932, %v2932
          %vm2941 = vcmask 523264
          %v2942 = vsel %vm2941, %v2933, 0.0
          %2943 = vadd.xlane.f32.xlu0 %v2942
          %v2944 = vpop.xlane.xlu0 %2943
          %v2945 = vsel %vm2941, %v2934, 0.0
          %2946 = vadd.xlane.f32.xlu0 %v2945
          %v2947 = vpop.xlane.xlu0 %2946
          %v2948 = vsel %vm2941, %v2935, 0.0
          %2949 = vadd.xlane.f32.xlu0 %v2948
          %v2950 = vpop.xlane.xlu0 %2949
          %v2951 = vsel %vm2941, %v2936, 0.0
          %2952 = vadd.xlane.f32.xlu0 %v2951
          %v2953 = vpop.xlane.xlu0 %2952
          %v2954 = vsel %vm2941, %v2937, 0.0
          %2955 = vadd.xlane.f32.xlu0 %v2954
          %v2956 = vpop.xlane.xlu0 %2955
          %v2957 = vsel %vm2941, %v2938, 0.0
          %2958 = vadd.xlane.f32.xlu0 %v2957
          %v2959 = vpop.xlane.xlu0 %2958
          %v2960 = vsel %vm2941, %v2939, 0.0
          %2961 = vadd.xlane.f32.xlu0 %v2960
          %v2962 = vpop.xlane.xlu0 %2961
          %v2963 = vsel %vm2941, %v2940, 0.0
          %2964 = vadd.xlane.f32.xlu0 %v2963
          %v2965 = vpop.xlane.xlu0 %2964
          %v2966 = vmax.f32 %v2944, 1e-15
          %v2967 = vmax.f32 %v2947, 1e-15
          %v2968 = vmax.f32 %v2950, 1e-15
          %v2969 = vmax.f32 %v2953, 1e-15
          %v2970 = vmax.f32 %v2956, 1e-15
          %v2971 = vmax.f32 %v2959, 1e-15
          %v2972 = vmax.f32 %v2962, 1e-15
          %v2973 = vmax.f32 %v2965, 1e-15
          %v2974 = vrcp.pop %v2915
          %v2975 = vmul.f32 1.0, %v2974
          %v2976 = vrcp.pop %v2916
          %v2977 = vmul.f32 1.0, %v2976
          %v2978 = vrcp.pop %v2917
          %v2979 = vmul.f32 1.0, %v2978
          %v2980 = vrcp.pop %v2918
          %v2981 = vmul.f32 1.0, %v2980
          %v2982 = vrcp.pop %v2919
          %v2983 = vmul.f32 1.0, %v2982
          %v2984 = vrcp.pop %v2920
          %v2985 = vmul.f32 1.0, %v2984
          %v2986 = vrcp.pop %v2921
          %v2987 = vmul.f32 1.0, %v2986
          %v2988 = vrcp.pop %v2922
          %v2989 = vmul.f32 1.0, %v2988
          %v2990 = vmul.f32 %v2975, %v2975
          %v2991 = vmul.f32 %v2977, %v2977
          %v2992 = vmul.f32 %v2979, %v2979
          %v2993 = vmul.f32 %v2981, %v2981
          %v2994 = vmul.f32 %v2983, %v2983
          %v2995 = vmul.f32 %v2985, %v2985
          %v2996 = vmul.f32 %v2987, %v2987
          %v2997 = vmul.f32 %v2989, %v2989
          %v2998 = vsub.f32 1.0, %v2990
          %v2999 = vsub.f32 1.0, %v2991
          %v3000 = vsub.f32 1.0, %v2992
          %v3001 = vsub.f32 1.0, %v2993
          %v3002 = vsub.f32 1.0, %v2994
          %v3003 = vsub.f32 1.0, %v2995
          %v3004 = vsub.f32 1.0, %v2996
          %v3005 = vsub.f32 1.0, %v2997
          %v3006 = vmax.f32 %v2998, 0.0
          %v3007 = vmax.f32 %v2999, 0.0
          %v3008 = vmax.f32 %v3000, 0.0
          %v3009 = vmax.f32 %v3001, 0.0
          %v3010 = vmax.f32 %v3002, 0.0
          %v3011 = vmax.f32 %v3003, 0.0
          %v3012 = vmax.f32 %v3004, 0.0
          %v3013 = vmax.f32 %v3005, 0.0
          %v3014 = vrsqrt.pop %v3006
          %v3015 = vmul.f32 %v3006, %v3014
          %vm3016 = vcmp.eq.f32.partialorder %v3006, inf
          %v3017 = vsel %vm3016, %v3006, %v3015
          %vm3018 = vcmp.eq.f32.partialorder %v3006, 0.0
          %v3019 = vand.u32 %v3006, 2147483648
          %v3020 = vsel %vm3018, %v3019, %v3017
          %v3021 = vrsqrt.pop %v3007
          %v3022 = vmul.f32 %v3007, %v3021
          %vm3023 = vcmp.eq.f32.partialorder %v3007, inf
          %v3024 = vsel %vm3023, %v3007, %v3022
          %vm3025 = vcmp.eq.f32.partialorder %v3007, 0.0
          %v3026 = vand.u32 %v3007, 2147483648
          %v3027 = vsel %vm3025, %v3026, %v3024
          %v3028 = vrsqrt.pop %v3008
          %v3029 = vmul.f32 %v3008, %v3028
          %vm3030 = vcmp.eq.f32.partialorder %v3008, inf
          %v3031 = vsel %vm3030, %v3008, %v3029
          %vm3032 = vcmp.eq.f32.partialorder %v3008, 0.0
          %v3033 = vand.u32 %v3008, 2147483648
          %v3034 = vsel %vm3032, %v3033, %v3031
          %v3035 = vrsqrt.pop %v3009
          %v3036 = vmul.f32 %v3009, %v3035
          %vm3037 = vcmp.eq.f32.partialorder %v3009, inf
          %v3038 = vsel %vm3037, %v3009, %v3036
          %vm3039 = vcmp.eq.f32.partialorder %v3009, 0.0
          %v3040 = vand.u32 %v3009, 2147483648
          %v3041 = vsel %vm3039, %v3040, %v3038
          %v3042 = vrsqrt.pop %v3010
          %v3043 = vmul.f32 %v3010, %v3042
          %vm3044 = vcmp.eq.f32.partialorder %v3010, inf
          %v3045 = vsel %vm3044, %v3010, %v3043
          %vm3046 = vcmp.eq.f32.partialorder %v3010, 0.0
          %v3047 = vand.u32 %v3010, 2147483648
          %v3048 = vsel %vm3046, %v3047, %v3045
          %v3049 = vrsqrt.pop %v3011
          %v3050 = vmul.f32 %v3011, %v3049
          %vm3051 = vcmp.eq.f32.partialorder %v3011, inf
          %v3052 = vsel %vm3051, %v3011, %v3050
          %vm3053 = vcmp.eq.f32.partialorder %v3011, 0.0
          %v3054 = vand.u32 %v3011, 2147483648
          %v3055 = vsel %vm3053, %v3054, %v3052
          %v3056 = vrsqrt.pop %v3012
          %v3057 = vmul.f32 %v3012, %v3056
          %vm3058 = vcmp.eq.f32.partialorder %v3012, inf
          %v3059 = vsel %vm3058, %v3012, %v3057
          %vm3060 = vcmp.eq.f32.partialorder %v3012, 0.0
          %v3061 = vand.u32 %v3012, 2147483648
          %v3062 = vsel %vm3060, %v3061, %v3059
          %v3063 = vrsqrt.pop %v3013
          %v3064 = vmul.f32 %v3013, %v3063
          %vm3065 = vcmp.eq.f32.partialorder %v3013, inf
          %v3066 = vsel %vm3065, %v3013, %v3064
          %vm3067 = vcmp.eq.f32.partialorder %v3013, 0.0
          %v3068 = vand.u32 %v3013, 2147483648
          %v3069 = vsel %vm3067, %v3068, %v3066
          %v3070 = vadd.f32 %v3020, 1.0
          %v3071 = vadd.f32 %v3027, 1.0
          %v3072 = vadd.f32 %v3034, 1.0
          %v3073 = vadd.f32 %v3041, 1.0
          %v3074 = vadd.f32 %v3048, 1.0
          %v3075 = vadd.f32 %v3055, 1.0
          %v3076 = vadd.f32 %v3062, 1.0
          %v3077 = vadd.f32 %v3069, 1.0
          %v3078 = vmul.f32 %v2915, %v3070
          %v3079 = vmul.f32 %v2916, %v3071
          %v3080 = vmul.f32 %v2917, %v3072
          %v3081 = vmul.f32 %v2918, %v3073
          %v3082 = vmul.f32 %v2919, %v3074
          %v3083 = vmul.f32 %v2920, %v3075
          %v3084 = vmul.f32 %v2921, %v3076
          %v3085 = vmul.f32 %v2922, %v3077
          %v3086 = vlog2.pop %v3078
          %v3087 = vmul.f32 %v3086, 0.6931472
          %v3088 = vlog2.pop %v3079
          %v3089 = vmul.f32 %v3088, 0.6931472
          %v3090 = vlog2.pop %v3080
          %v3091 = vmul.f32 %v3090, 0.6931472
          %v3092 = vlog2.pop %v3081
          %v3093 = vmul.f32 %v3092, 0.6931472
          %v3094 = vlog2.pop %v3082
          %v3095 = vmul.f32 %v3094, 0.6931472
          %v3096 = vlog2.pop %v3083
          %v3097 = vmul.f32 %v3096, 0.6931472
          %v3098 = vlog2.pop %v3084
          %v3099 = vmul.f32 %v3098, 0.6931472
          %v3100 = vlog2.pop %v3085
          %v3101 = vmul.f32 %v3100, 0.6931472
          %v3102 = vrsqrt.pop %v2966
          %v3103 = vrsqrt.pop %v2967
          %v3104 = vrsqrt.pop %v2968
          %v3105 = vrsqrt.pop %v2969
          %v3106 = vrsqrt.pop %v2970
          %v3107 = vrsqrt.pop %v2971
          %v3108 = vrsqrt.pop %v2972
          %v3109 = vrsqrt.pop %v2973
          %v3110 = vmul.f32 %v3087, %v3102
          %v3111 = vmul.f32 %v3089, %v3103
          %v3112 = vmul.f32 %v3091, %v3104
          %v3113 = vmul.f32 %v3093, %v3105
          %v3114 = vmul.f32 %v3095, %v3106
          %v3115 = vmul.f32 %v3097, %v3107
          %v3116 = vmul.f32 %v3099, %v3108
          %v3117 = vmul.f32 %v3101, %v3109
          %3119 = vset.pattern.permute.xlu0 0
          %3120 = vperm.xlu0 %3119, %v3110
          %v3121 = vpop.permute.xlu0 %3120
          %3124 = vset.pattern.permute.xlu0 0
          %3125 = vperm.xlu0 %3124, %v3111
          %v3126 = vpop.permute.xlu0 %3125
          %3129 = vset.pattern.permute.xlu0 0
          %3130 = vperm.xlu0 %3129, %v3112
          %v3131 = vpop.permute.xlu0 %3130
          %3134 = vset.pattern.permute.xlu0 0
          %3135 = vperm.xlu0 %3134, %v3113
          %v3136 = vpop.permute.xlu0 %3135
          %3139 = vset.pattern.permute.xlu0 0
          %3140 = vperm.xlu0 %3139, %v3114
          %v3141 = vpop.permute.xlu0 %3140
          %3144 = vset.pattern.permute.xlu0 0
          %3145 = vperm.xlu0 %3144, %v3115
          %v3146 = vpop.permute.xlu0 %3145
          %3149 = vset.pattern.permute.xlu0 0
          %3150 = vperm.xlu0 %3149, %v3116
          %v3151 = vpop.permute.xlu0 %3150
          %3154 = vset.pattern.permute.xlu0 0
          %3155 = vperm.xlu0 %3154, %v3117
          %v3156 = vpop.permute.xlu0 %3155
          %v3158 = vmul.f32 %v3121, %v2925
          %v3159 = vmul.f32 %v3126, %v2926
          %v3160 = vmul.f32 %v3131, %v2927
          %v3161 = vmul.f32 %v3136, %v2928
          %v3162 = vmul.f32 %v3141, %v2929
          %v3163 = vmul.f32 %v3146, %v2930
          %v3164 = vmul.f32 %v3151, %v2931
          %v3165 = vmul.f32 %v3156, %v2932
          %v3166 = vsel %vm2924, %v3158, 0.0
          %v3167 = vsel %vm2924, %v3159, 0.0
          %v3168 = vsel %vm2924, %v3160, 0.0
          %v3169 = vsel %vm2924, %v3161, 0.0
          %v3170 = vsel %vm2924, %v3162, 0.0
          %v3171 = vsel %vm2924, %v3163, 0.0
          %v3172 = vsel %vm2924, %v3164, 0.0
          %v3173 = vsel %vm2924, %v3165, 0.0
          %v3174 = vsel %vm2941, %v3166, 0.0
          %3175 = vadd.xlane.f32.xlu0 %v3174
          %v3176 = vpop.xlane.xlu0 %3175
          %v3177 = vsel %vm2941, %v3167, 0.0
          %3178 = vadd.xlane.f32.xlu0 %v3177
          %v3179 = vpop.xlane.xlu0 %3178
          %v3180 = vsel %vm2941, %v3168, 0.0
          %3181 = vadd.xlane.f32.xlu0 %v3180
          %v3182 = vpop.xlane.xlu0 %3181
          %v3183 = vsel %vm2941, %v3169, 0.0
          %3184 = vadd.xlane.f32.xlu0 %v3183
          %v3185 = vpop.xlane.xlu0 %3184
          %v3186 = vsel %vm2941, %v3170, 0.0
          %3187 = vadd.xlane.f32.xlu0 %v3186
          %v3188 = vpop.xlane.xlu0 %3187
          %v3189 = vsel %vm2941, %v3171, 0.0
          %3190 = vadd.xlane.f32.xlu0 %v3189
          %v3191 = vpop.xlane.xlu0 %3190
          %v3192 = vsel %vm2941, %v3172, 0.0
          %3193 = vadd.xlane.f32.xlu0 %v3192
          %v3194 = vpop.xlane.xlu0 %3193
          %v3195 = vsel %vm2941, %v3173, 0.0
          %3196 = vadd.xlane.f32.xlu0 %v3195
          %v3197 = vpop.xlane.xlu0 %3196
          %v3198 = vmul.f32 %v3176, 0.015873017
          %v3199 = vmul.f32 %v3179, 0.015873017
          %v3200 = vmul.f32 %v3182, 0.015873017
          %v3201 = vmul.f32 %v3185, 0.015873017
          %v3202 = vmul.f32 %v3188, 0.015873017
          %v3203 = vmul.f32 %v3191, 0.015873017
          %v3204 = vmul.f32 %v3194, 0.015873017
          %v3205 = vmul.f32 %v3197, 0.015873017
          %v3206 = vsub.f32 %v3166, %v3198
          %v3207 = vsub.f32 %v3167, %v3199
          %v3208 = vsub.f32 %v3168, %v3200
          %v3209 = vsub.f32 %v3169, %v3201
          %v3210 = vsub.f32 %v3170, %v3202
          %v3211 = vsub.f32 %v3171, %v3203
          %v3212 = vsub.f32 %v3172, %v3204
          %v3213 = vsub.f32 %v3173, %v3205
          %v3214 = vsel %vm2924, %v3206, 0.0
          %v3215 = vsel %vm2924, %v3207, 0.0
          %v3216 = vsel %vm2924, %v3208, 0.0
          %v3217 = vsel %vm2924, %v3209, 0.0
          %v3218 = vsel %vm2924, %v3210, 0.0
          %v3219 = vsel %vm2924, %v3211, 0.0
          %v3220 = vsel %vm2924, %v3212, 0.0
          %v3221 = vsel %vm2924, %v3213, 0.0
          %v3222 = vmul.f32 %v3214, %v3214
          %v3223 = vmul.f32 %v3215, %v3215
          %v3224 = vmul.f32 %v3216, %v3216
          %v3225 = vmul.f32 %v3217, %v3217
          %v3226 = vmul.f32 %v3218, %v3218
          %v3227 = vmul.f32 %v3219, %v3219
          %v3228 = vmul.f32 %v3220, %v3220
          %v3229 = vmul.f32 %v3221, %v3221
          %v3230 = vsel %vm2941, %v3222, 0.0
          %3231 = vadd.xlane.f32.xlu0 %v3230
          %v3232 = vpop.xlane.xlu0 %3231
          %v3233 = vsel %vm2941, %v3223, 0.0
          %3234 = vadd.xlane.f32.xlu0 %v3233
          %v3235 = vpop.xlane.xlu0 %3234
          %v3236 = vsel %vm2941, %v3224, 0.0
          %3237 = vadd.xlane.f32.xlu0 %v3236
          %v3238 = vpop.xlane.xlu0 %3237
          %v3239 = vsel %vm2941, %v3225, 0.0
          %3240 = vadd.xlane.f32.xlu0 %v3239
          %v3241 = vpop.xlane.xlu0 %3240
          %v3242 = vsel %vm2941, %v3226, 0.0
          %3243 = vadd.xlane.f32.xlu0 %v3242
          %v3244 = vpop.xlane.xlu0 %3243
          %v3245 = vsel %vm2941, %v3227, 0.0
          %3246 = vadd.xlane.f32.xlu0 %v3245
          %v3247 = vpop.xlane.xlu0 %3246
          %v3248 = vsel %vm2941, %v3228, 0.0
          %3249 = vadd.xlane.f32.xlu0 %v3248
          %v3250 = vpop.xlane.xlu0 %3249
          %v3251 = vsel %vm2941, %v3229, 0.0
          %3252 = vadd.xlane.f32.xlu0 %v3251
          %v3253 = vpop.xlane.xlu0 %3252
          %v3254 = vmul.f32 %v3232, 0.015873017
          %v3255 = vmul.f32 %v3235, 0.015873017
          %v3256 = vmul.f32 %v3238, 0.015873017
          %v3257 = vmul.f32 %v3241, 0.015873017
          %v3258 = vmul.f32 %v3244, 0.015873017
          %v3259 = vmul.f32 %v3247, 0.015873017
          %v3260 = vmul.f32 %v3250, 0.015873017
          %v3261 = vmul.f32 %v3253, 0.015873017
          %v3262 = vadd.f32 %v3254, 1e-05
          %v3263 = vadd.f32 %v3255, 1e-05
          %v3264 = vadd.f32 %v3256, 1e-05
          %v3265 = vadd.f32 %v3257, 1e-05
          %v3266 = vadd.f32 %v3258, 1e-05
          %v3267 = vadd.f32 %v3259, 1e-05
          %v3268 = vadd.f32 %v3260, 1e-05
          %v3269 = vadd.f32 %v3261, 1e-05
          %v3270 = vrsqrt.pop %v3262
          %v3271 = vrsqrt.pop %v3263
          %v3272 = vrsqrt.pop %v3264
          %v3273 = vrsqrt.pop %v3265
          %v3274 = vrsqrt.pop %v3266
          %v3275 = vrsqrt.pop %v3267
          %v3276 = vrsqrt.pop %v3268
          %v3277 = vrsqrt.pop %v3269
          %v3278 = vmul.f32 %v3214, %v3270
          %v3279 = vmul.f32 %v3215, %v3271
          %v3280 = vmul.f32 %v3216, %v3272
          %v3281 = vmul.f32 %v3217, %v3273
          %v3282 = vmul.f32 %v3218, %v3274
          %v3283 = vmul.f32 %v3219, %v3275
          %v3284 = vmul.f32 %v3220, %v3276
          %v3285 = vmul.f32 %v3221, %v3277
          %v3287 = vlaneseq
          %v3288 = vshrl.u32 %v3287, 7
          %v3289 = vsub.s32 0, %v3288
          %v3290 = vrot.slane %v2910, %v3289
          %v3292 = vmul.f32 %v3278, %v3290
          %v3293 = vmul.f32 %v3279, %v3290
          %v3294 = vmul.f32 %v3280, %v3290
          %v3295 = vmul.f32 %v3281, %v3290
          %v3296 = vmul.f32 %v3282, %v3290
          %v3297 = vmul.f32 %v3283, %v3290
          %v3298 = vmul.f32 %v3284, %v3290
          %v3299 = vmul.f32 %v3285, %v3290
          %v3301 = vlaneseq
          %v3302 = vshrl.u32 %v3301, 7
          %v3303 = vsub.s32 0, %v3302
          %v3304 = vrot.slane %v2911, %v3303
          %v3306 = vadd.f32 %v3292, %v3304
          %v3307 = vadd.f32 %v3293, %v3304
          %v3308 = vadd.f32 %v3294, %v3304
          %v3309 = vadd.f32 %v3295, %v3304
          %v3310 = vadd.f32 %v3296, %v3304
          %v3311 = vadd.f32 %v3297, %v3304
          %v3312 = vadd.f32 %v3298, %v3304
          %v3313 = vadd.f32 %v3299, %v3304
          %v3314 = vsel %vm2924, %v3306, 0.0
          %v3315 = vsel %vm2924, %v3307, 0.0
          %v3316 = vsel %vm2924, %v3308, 0.0
          %v3317 = vsel %vm2924, %v3309, 0.0
          %v3318 = vsel %vm2924, %v3310, 0.0
          %v3319 = vsel %vm2924, %v3311, 0.0
          %v3320 = vsel %vm2924, %v3312, 0.0
          %v3321 = vsel %vm2924, %v3313, 0.0
          %v3322 = vmul.f32 %v3314, %v3314
          %v3323 = vmul.f32 %v3315, %v3315
          %v3324 = vmul.f32 %v3316, %v3316
          %v3325 = vmul.f32 %v3317, %v3317
          %v3326 = vmul.f32 %v3318, %v3318
          %v3327 = vmul.f32 %v3319, %v3319
          %v3328 = vmul.f32 %v3320, %v3320
          %v3329 = vmul.f32 %v3321, %v3321
          %v3330 = vsel %vm2941, %v3322, 0.0
          %3331 = vadd.xlane.f32.xlu0 %v3330
          %v3332 = vpop.xlane.xlu0 %3331
          %v3333 = vsel %vm2941, %v3323, 0.0
          %3334 = vadd.xlane.f32.xlu0 %v3333
          %v3335 = vpop.xlane.xlu0 %3334
          %v3336 = vsel %vm2941, %v3324, 0.0
          %3337 = vadd.xlane.f32.xlu0 %v3336
          %v3338 = vpop.xlane.xlu0 %3337
          %v3339 = vsel %vm2941, %v3325, 0.0
          %3340 = vadd.xlane.f32.xlu0 %v3339
          %v3341 = vpop.xlane.xlu0 %3340
          %v3342 = vsel %vm2941, %v3326, 0.0
          %3343 = vadd.xlane.f32.xlu0 %v3342
          %v3344 = vpop.xlane.xlu0 %3343
          %v3345 = vsel %vm2941, %v3327, 0.0
          %3346 = vadd.xlane.f32.xlu0 %v3345
          %v3347 = vpop.xlane.xlu0 %3346
          %v3348 = vsel %vm2941, %v3328, 0.0
          %3349 = vadd.xlane.f32.xlu0 %v3348
          %v3350 = vpop.xlane.xlu0 %3349
          %v3351 = vsel %vm2941, %v3329, 0.0
          %3352 = vadd.xlane.f32.xlu0 %v3351
          %v3353 = vpop.xlane.xlu0 %3352
          %v3354 = vmax.f32 %v3332, 1e-15
          %v3355 = vmax.f32 %v3335, 1e-15
          %v3356 = vmax.f32 %v3338, 1e-15
          %v3357 = vmax.f32 %v3341, 1e-15
          %v3358 = vmax.f32 %v3344, 1e-15
          %v3359 = vmax.f32 %v3347, 1e-15
          %v3360 = vmax.f32 %v3350, 1e-15
          %v3361 = vmax.f32 %v3353, 1e-15
          %v3362 = vrsqrt.pop %v3354
          %v3363 = vmul.f32 %v3354, %v3362
          %vm3364 = vcmp.eq.f32.partialorder %v3354, inf
          %v3365 = vsel %vm3364, %v3354, %v3363
          %vm3366 = vcmp.eq.f32.partialorder %v3354, 0.0
          %v3367 = vand.u32 %v3354, 2147483648
          %v3368 = vsel %vm3366, %v3367, %v3365
          %v3369 = vrsqrt.pop %v3355
          %v3370 = vmul.f32 %v3355, %v3369
          %vm3371 = vcmp.eq.f32.partialorder %v3355, inf
          %v3372 = vsel %vm3371, %v3355, %v3370
          %vm3373 = vcmp.eq.f32.partialorder %v3355, 0.0
          %v3374 = vand.u32 %v3355, 2147483648
          %v3375 = vsel %vm3373, %v3374, %v3372
          %v3376 = vrsqrt.pop %v3356
          %v3377 = vmul.f32 %v3356, %v3376
          %vm3378 = vcmp.eq.f32.partialorder %v3356, inf
          %v3379 = vsel %vm3378, %v3356, %v3377
          %vm3380 = vcmp.eq.f32.partialorder %v3356, 0.0
          %v3381 = vand.u32 %v3356, 2147483648
          %v3382 = vsel %vm3380, %v3381, %v3379
          %v3383 = vrsqrt.pop %v3357
          %v3384 = vmul.f32 %v3357, %v3383
          %vm3385 = vcmp.eq.f32.partialorder %v3357, inf
          %v3386 = vsel %vm3385, %v3357, %v3384
          %vm3387 = vcmp.eq.f32.partialorder %v3357, 0.0
          %v3388 = vand.u32 %v3357, 2147483648
          %v3389 = vsel %vm3387, %v3388, %v3386
          %v3390 = vrsqrt.pop %v3358
          %v3391 = vmul.f32 %v3358, %v3390
          %vm3392 = vcmp.eq.f32.partialorder %v3358, inf
          %v3393 = vsel %vm3392, %v3358, %v3391
          %vm3394 = vcmp.eq.f32.partialorder %v3358, 0.0
          %v3395 = vand.u32 %v3358, 2147483648
          %v3396 = vsel %vm3394, %v3395, %v3393
          %v3397 = vrsqrt.pop %v3359
          %v3398 = vmul.f32 %v3359, %v3397
          %vm3399 = vcmp.eq.f32.partialorder %v3359, inf
          %v3400 = vsel %vm3399, %v3359, %v3398
          %vm3401 = vcmp.eq.f32.partialorder %v3359, 0.0
          %v3402 = vand.u32 %v3359, 2147483648
          %v3403 = vsel %vm3401, %v3402, %v3400
          %v3404 = vrsqrt.pop %v3360
          %v3405 = vmul.f32 %v3360, %v3404
          %vm3406 = vcmp.eq.f32.partialorder %v3360, inf
          %v3407 = vsel %vm3406, %v3360, %v3405
          %vm3408 = vcmp.eq.f32.partialorder %v3360, 0.0
          %v3409 = vand.u32 %v3360, 2147483648
          %v3410 = vsel %vm3408, %v3409, %v3407
          %v3411 = vrsqrt.pop %v3361
          %v3412 = vmul.f32 %v3361, %v3411
          %vm3413 = vcmp.eq.f32.partialorder %v3361, inf
          %v3414 = vsel %vm3413, %v3361, %v3412
          %vm3415 = vcmp.eq.f32.partialorder %v3361, 0.0
          %v3416 = vand.u32 %v3361, 2147483648
          %v3417 = vsel %vm3415, %v3416, %v3414
          %v3418 = vmin.f32 %v3368, 50.0
          %v3419 = vmin.f32 %v3375, 50.0
          %v3420 = vmin.f32 %v3382, 50.0
          %v3421 = vmin.f32 %v3389, 50.0
          %v3422 = vmin.f32 %v3396, 50.0
          %v3423 = vmin.f32 %v3403, 50.0
          %v3424 = vmin.f32 %v3410, 50.0
          %v3425 = vmin.f32 %v3417, 50.0
          %v3426 = vmul.f32 %v3418, 1.442695
          %v3427 = vpow.pop %v3426
          %v3428 = vmul.f32 %v3419, 1.442695
          %v3429 = vpow.pop %v3428
          %v3430 = vmul.f32 %v3420, 1.442695
          %v3431 = vpow.pop %v3430
          %v3432 = vmul.f32 %v3421, 1.442695
          %v3433 = vpow.pop %v3432
          %v3434 = vmul.f32 %v3422, 1.442695
          %v3435 = vpow.pop %v3434
          %v3436 = vmul.f32 %v3423, 1.442695
          %v3437 = vpow.pop %v3436
          %v3438 = vmul.f32 %v3424, 1.442695
          %v3439 = vpow.pop %v3438
          %v3440 = vmul.f32 %v3425, 1.442695
          %v3441 = vpow.pop %v3440
          %v3442 = vsub.f32 0.0, %v3418
          %v3443 = vsub.f32 0.0, %v3419
          %v3444 = vsub.f32 0.0, %v3420
          %v3445 = vsub.f32 0.0, %v3421
          %v3446 = vsub.f32 0.0, %v3422
          %v3447 = vsub.f32 0.0, %v3423
          %v3448 = vsub.f32 0.0, %v3424
          %v3449 = vsub.f32 0.0, %v3425
          %v3450 = vmul.f32 %v3442, 1.442695
          %v3451 = vpow.pop %v3450
          %v3452 = vmul.f32 %v3443, 1.442695
          %v3453 = vpow.pop %v3452
          %v3454 = vmul.f32 %v3444, 1.442695
          %v3455 = vpow.pop %v3454
          %v3456 = vmul.f32 %v3445, 1.442695
          %v3457 = vpow.pop %v3456
          %v3458 = vmul.f32 %v3446, 1.442695
          %v3459 = vpow.pop %v3458
          %v3460 = vmul.f32 %v3447, 1.442695
          %v3461 = vpow.pop %v3460
          %v3462 = vmul.f32 %v3448, 1.442695
          %v3463 = vpow.pop %v3462
          %v3464 = vmul.f32 %v3449, 1.442695
          %v3465 = vpow.pop %v3464
          %v3466 = vadd.f32 %v3427, %v3451
          %v3467 = vadd.f32 %v3429, %v3453
          %v3468 = vadd.f32 %v3431, %v3455
          %v3469 = vadd.f32 %v3433, %v3457
          %v3470 = vadd.f32 %v3435, %v3459
          %v3471 = vadd.f32 %v3437, %v3461
          %v3472 = vadd.f32 %v3439, %v3463
          %v3473 = vadd.f32 %v3441, %v3465
          %v3474 = vmul.f32 %v3466, 0.5
          %v3475 = vmul.f32 %v3467, 0.5
          %v3476 = vmul.f32 %v3468, 0.5
          %v3477 = vmul.f32 %v3469, 0.5
          %v3478 = vmul.f32 %v3470, 0.5
          %v3479 = vmul.f32 %v3471, 0.5
          %v3480 = vmul.f32 %v3472, 0.5
          %v3481 = vmul.f32 %v3473, 0.5
          %v3482 = vsub.f32 %v3427, %v3451
          %v3483 = vsub.f32 %v3429, %v3453
          %v3484 = vsub.f32 %v3431, %v3455
          %v3485 = vsub.f32 %v3433, %v3457
          %v3486 = vsub.f32 %v3435, %v3459
          %v3487 = vsub.f32 %v3437, %v3461
          %v3488 = vsub.f32 %v3439, %v3463
          %v3489 = vsub.f32 %v3441, %v3465
          %v3490 = vmul.f32 %v3482, 0.5
          %v3491 = vmul.f32 %v3483, 0.5
          %v3492 = vmul.f32 %v3484, 0.5
          %v3493 = vmul.f32 %v3485, 0.5
          %v3494 = vmul.f32 %v3486, 0.5
          %v3495 = vmul.f32 %v3487, 0.5
          %v3496 = vmul.f32 %v3488, 0.5
          %v3497 = vmul.f32 %v3489, 0.5
          %v3498 = vrsqrt.pop %v3354
          %v3499 = vrsqrt.pop %v3355
          %v3500 = vrsqrt.pop %v3356
          %v3501 = vrsqrt.pop %v3357
          %v3502 = vrsqrt.pop %v3358
          %v3503 = vrsqrt.pop %v3359
          %v3504 = vrsqrt.pop %v3360
          %v3505 = vrsqrt.pop %v3361
          %v3506 = vmul.f32 %v3490, %v3498
          %v3507 = vmul.f32 %v3491, %v3499
          %v3508 = vmul.f32 %v3492, %v3500
          %v3509 = vmul.f32 %v3493, %v3501
          %v3510 = vmul.f32 %v3494, %v3502
          %v3511 = vmul.f32 %v3495, %v3503
          %v3512 = vmul.f32 %v3496, %v3504
          %v3513 = vmul.f32 %v3497, %v3505
          %v3514 = vmul.f32 %v3506, %v3314
          %v3515 = vmul.f32 %v3507, %v3315
          %v3516 = vmul.f32 %v3508, %v3316
          %v3517 = vmul.f32 %v3509, %v3317
          %v3518 = vmul.f32 %v3510, %v3318
          %v3519 = vmul.f32 %v3511, %v3319
          %v3520 = vmul.f32 %v3512, %v3320
          %v3521 = vmul.f32 %v3513, %v3321
          %v3522 = vsel %vm2924, %v3514, %v3474
          %v3523 = vsel %vm2924, %v3515, %v3475
          %v3524 = vsel %vm2924, %v3516, %v3476
          %v3525 = vsel %vm2924, %v3517, %v3477
          %v3526 = vsel %vm2924, %v3518, %v3478
          %v3527 = vsel %vm2924, %v3519, %v3479
          %v3528 = vsel %vm2924, %v3520, %v3480
          %v3529 = vsel %vm2924, %v3521, %v3481
          %v3530 = vmax.f32 %v3522, 1.0000001
          %v3531 = vmax.f32 %v3523, 1.0000001
          %v3532 = vmax.f32 %v3524, 1.0000001
          %v3533 = vmax.f32 %v3525, 1.0000001
          %v3534 = vmax.f32 %v3526, 1.0000001
          %v3535 = vmax.f32 %v3527, 1.0000001
          %v3536 = vmax.f32 %v3528, 1.0000001
          %v3537 = vmax.f32 %v3529, 1.0000001
          %v3538 = vsel %vm2924, %v3514, 0.0
          %v3539 = vsel %vm2924, %v3515, 0.0
          %v3540 = vsel %vm2924, %v3516, 0.0
          %v3541 = vsel %vm2924, %v3517, 0.0
          %v3542 = vsel %vm2924, %v3518, 0.0
          %v3543 = vsel %vm2924, %v3519, 0.0
          %v3544 = vsel %vm2924, %v3520, 0.0
          %v3545 = vsel %vm2924, %v3521, 0.0
          %v3546 = vmul.f32 %v3538, %v3538
          %v3547 = vmul.f32 %v3539, %v3539
          %v3548 = vmul.f32 %v3540, %v3540
          %v3549 = vmul.f32 %v3541, %v3541
          %v3550 = vmul.f32 %v3542, %v3542
          %v3551 = vmul.f32 %v3543, %v3543
          %v3552 = vmul.f32 %v3544, %v3544
          %v3553 = vmul.f32 %v3545, %v3545
          %v3554 = vsel %vm2941, %v3546, 0.0
          %3555 = vadd.xlane.f32.xlu0 %v3554
          %v3556 = vpop.xlane.xlu0 %3555
          %v3557 = vsel %vm2941, %v3547, 0.0
          %3558 = vadd.xlane.f32.xlu0 %v3557
          %v3559 = vpop.xlane.xlu0 %3558
          %v3560 = vsel %vm2941, %v3548, 0.0
          %3561 = vadd.xlane.f32.xlu0 %v3560
          %v3562 = vpop.xlane.xlu0 %3561
          %v3563 = vsel %vm2941, %v3549, 0.0
          %3564 = vadd.xlane.f32.xlu0 %v3563
          %v3565 = vpop.xlane.xlu0 %3564
          %v3566 = vsel %vm2941, %v3550, 0.0
          %3567 = vadd.xlane.f32.xlu0 %v3566
          %v3568 = vpop.xlane.xlu0 %3567
          %v3569 = vsel %vm2941, %v3551, 0.0
          %3570 = vadd.xlane.f32.xlu0 %v3569
          %v3571 = vpop.xlane.xlu0 %3570
          %v3572 = vsel %vm2941, %v3552, 0.0
          %3573 = vadd.xlane.f32.xlu0 %v3572
          %v3574 = vpop.xlane.xlu0 %3573
          %v3575 = vsel %vm2941, %v3553, 0.0
          %3576 = vadd.xlane.f32.xlu0 %v3575
          %v3577 = vpop.xlane.xlu0 %3576
          %v3578 = vmax.f32 %v3556, 1e-15
          %v3579 = vmax.f32 %v3559, 1e-15
          %v3580 = vmax.f32 %v3562, 1e-15
          %v3581 = vmax.f32 %v3565, 1e-15
          %v3582 = vmax.f32 %v3568, 1e-15
          %v3583 = vmax.f32 %v3571, 1e-15
          %v3584 = vmax.f32 %v3574, 1e-15
          %v3585 = vmax.f32 %v3577, 1e-15
          %v3586 = vrcp.pop %v3530
          %v3587 = vmul.f32 1.0, %v3586
          %v3588 = vrcp.pop %v3531
          %v3589 = vmul.f32 1.0, %v3588
          %v3590 = vrcp.pop %v3532
          %v3591 = vmul.f32 1.0, %v3590
          %v3592 = vrcp.pop %v3533
          %v3593 = vmul.f32 1.0, %v3592
          %v3594 = vrcp.pop %v3534
          %v3595 = vmul.f32 1.0, %v3594
          %v3596 = vrcp.pop %v3535
          %v3597 = vmul.f32 1.0, %v3596
          %v3598 = vrcp.pop %v3536
          %v3599 = vmul.f32 1.0, %v3598
          %v3600 = vrcp.pop %v3537
          %v3601 = vmul.f32 1.0, %v3600
          %v3602 = vmul.f32 %v3587, %v3587
          %v3603 = vmul.f32 %v3589, %v3589
          %v3604 = vmul.f32 %v3591, %v3591
          %v3605 = vmul.f32 %v3593, %v3593
          %v3606 = vmul.f32 %v3595, %v3595
          %v3607 = vmul.f32 %v3597, %v3597
          %v3608 = vmul.f32 %v3599, %v3599
          %v3609 = vmul.f32 %v3601, %v3601
          %v3610 = vsub.f32 1.0, %v3602
          %v3611 = vsub.f32 1.0, %v3603
          %v3612 = vsub.f32 1.0, %v3604
          %v3613 = vsub.f32 1.0, %v3605
          %v3614 = vsub.f32 1.0, %v3606
          %v3615 = vsub.f32 1.0, %v3607
          %v3616 = vsub.f32 1.0, %v3608
          %v3617 = vsub.f32 1.0, %v3609
          %v3618 = vmax.f32 %v3610, 0.0
          %v3619 = vmax.f32 %v3611, 0.0
          %v3620 = vmax.f32 %v3612, 0.0
          %v3621 = vmax.f32 %v3613, 0.0
          %v3622 = vmax.f32 %v3614, 0.0
          %v3623 = vmax.f32 %v3615, 0.0
          %v3624 = vmax.f32 %v3616, 0.0
          %v3625 = vmax.f32 %v3617, 0.0
          %v3626 = vrsqrt.pop %v3618
          %v3627 = vmul.f32 %v3618, %v3626
          %vm3628 = vcmp.eq.f32.partialorder %v3618, inf
          %v3629 = vsel %vm3628, %v3618, %v3627
          %vm3630 = vcmp.eq.f32.partialorder %v3618, 0.0
          %v3631 = vand.u32 %v3618, 2147483648
          %v3632 = vsel %vm3630, %v3631, %v3629
          %v3633 = vrsqrt.pop %v3619
          %v3634 = vmul.f32 %v3619, %v3633
          %vm3635 = vcmp.eq.f32.partialorder %v3619, inf
          %v3636 = vsel %vm3635, %v3619, %v3634
          %vm3637 = vcmp.eq.f32.partialorder %v3619, 0.0
          %v3638 = vand.u32 %v3619, 2147483648
          %v3639 = vsel %vm3637, %v3638, %v3636
          %v3640 = vrsqrt.pop %v3620
          %v3641 = vmul.f32 %v3620, %v3640
          %vm3642 = vcmp.eq.f32.partialorder %v3620, inf
          %v3643 = vsel %vm3642, %v3620, %v3641
          %vm3644 = vcmp.eq.f32.partialorder %v3620, 0.0
          %v3645 = vand.u32 %v3620, 2147483648
          %v3646 = vsel %vm3644, %v3645, %v3643
          %v3647 = vrsqrt.pop %v3621
          %v3648 = vmul.f32 %v3621, %v3647
          %vm3649 = vcmp.eq.f32.partialorder %v3621, inf
          %v3650 = vsel %vm3649, %v3621, %v3648
          %vm3651 = vcmp.eq.f32.partialorder %v3621, 0.0
          %v3652 = vand.u32 %v3621, 2147483648
          %v3653 = vsel %vm3651, %v3652, %v3650
          %v3654 = vrsqrt.pop %v3622
          %v3655 = vmul.f32 %v3622, %v3654
          %vm3656 = vcmp.eq.f32.partialorder %v3622, inf
          %v3657 = vsel %vm3656, %v3622, %v3655
          %vm3658 = vcmp.eq.f32.partialorder %v3622, 0.0
          %v3659 = vand.u32 %v3622, 2147483648
          %v3660 = vsel %vm3658, %v3659, %v3657
          %v3661 = vrsqrt.pop %v3623
          %v3662 = vmul.f32 %v3623, %v3661
          %vm3663 = vcmp.eq.f32.partialorder %v3623, inf
          %v3664 = vsel %vm3663, %v3623, %v3662
          %vm3665 = vcmp.eq.f32.partialorder %v3623, 0.0
          %v3666 = vand.u32 %v3623, 2147483648
          %v3667 = vsel %vm3665, %v3666, %v3664
          %v3668 = vrsqrt.pop %v3624
          %v3669 = vmul.f32 %v3624, %v3668
          %vm3670 = vcmp.eq.f32.partialorder %v3624, inf
          %v3671 = vsel %vm3670, %v3624, %v3669
          %vm3672 = vcmp.eq.f32.partialorder %v3624, 0.0
          %v3673 = vand.u32 %v3624, 2147483648
          %v3674 = vsel %vm3672, %v3673, %v3671
          %v3675 = vrsqrt.pop %v3625
          %v3676 = vmul.f32 %v3625, %v3675
          %vm3677 = vcmp.eq.f32.partialorder %v3625, inf
          %v3678 = vsel %vm3677, %v3625, %v3676
          %vm3679 = vcmp.eq.f32.partialorder %v3625, 0.0
          %v3680 = vand.u32 %v3625, 2147483648
          %v3681 = vsel %vm3679, %v3680, %v3678
          %v3682 = vadd.f32 %v3632, 1.0
          %v3683 = vadd.f32 %v3639, 1.0
          %v3684 = vadd.f32 %v3646, 1.0
          %v3685 = vadd.f32 %v3653, 1.0
          %v3686 = vadd.f32 %v3660, 1.0
          %v3687 = vadd.f32 %v3667, 1.0
          %v3688 = vadd.f32 %v3674, 1.0
          %v3689 = vadd.f32 %v3681, 1.0
          %v3690 = vmul.f32 %v3530, %v3682
          %v3691 = vmul.f32 %v3531, %v3683
          %v3692 = vmul.f32 %v3532, %v3684
          %v3693 = vmul.f32 %v3533, %v3685
          %v3694 = vmul.f32 %v3534, %v3686
          %v3695 = vmul.f32 %v3535, %v3687
          %v3696 = vmul.f32 %v3536, %v3688
          %v3697 = vmul.f32 %v3537, %v3689
          %v3698 = vlog2.pop %v3690
          %v3699 = vmul.f32 %v3698, 0.6931472
          %v3700 = vlog2.pop %v3691
          %v3701 = vmul.f32 %v3700, 0.6931472
          %v3702 = vlog2.pop %v3692
          %v3703 = vmul.f32 %v3702, 0.6931472
          %v3704 = vlog2.pop %v3693
          %v3705 = vmul.f32 %v3704, 0.6931472
          %v3706 = vlog2.pop %v3694
          %v3707 = vmul.f32 %v3706, 0.6931472
          %v3708 = vlog2.pop %v3695
          %v3709 = vmul.f32 %v3708, 0.6931472
          %v3710 = vlog2.pop %v3696
          %v3711 = vmul.f32 %v3710, 0.6931472
          %v3712 = vlog2.pop %v3697
          %v3713 = vmul.f32 %v3712, 0.6931472
          %v3714 = vrsqrt.pop %v3578
          %v3715 = vrsqrt.pop %v3579
          %v3716 = vrsqrt.pop %v3580
          %v3717 = vrsqrt.pop %v3581
          %v3718 = vrsqrt.pop %v3582
          %v3719 = vrsqrt.pop %v3583
          %v3720 = vrsqrt.pop %v3584
          %v3721 = vrsqrt.pop %v3585
          %v3722 = vmul.f32 %v3699, %v3714
          %v3723 = vmul.f32 %v3701, %v3715
          %v3724 = vmul.f32 %v3703, %v3716
          %v3725 = vmul.f32 %v3705, %v3717
          %v3726 = vmul.f32 %v3707, %v3718
          %v3727 = vmul.f32 %v3709, %v3719
          %v3728 = vmul.f32 %v3711, %v3720
          %v3729 = vmul.f32 %v3713, %v3721
          %3731 = vset.pattern.permute.xlu0 0
          %3732 = vperm.xlu0 %3731, %v3722
          %v3733 = vpop.permute.xlu0 %3732
          %3736 = vset.pattern.permute.xlu0 0
          %3737 = vperm.xlu0 %3736, %v3723
          %v3738 = vpop.permute.xlu0 %3737
          %3741 = vset.pattern.permute.xlu0 0
          %3742 = vperm.xlu0 %3741, %v3724
          %v3743 = vpop.permute.xlu0 %3742
          %3746 = vset.pattern.permute.xlu0 0
          %3747 = vperm.xlu0 %3746, %v3725
          %v3748 = vpop.permute.xlu0 %3747
          %3751 = vset.pattern.permute.xlu0 0
          %3752 = vperm.xlu0 %3751, %v3726
          %v3753 = vpop.permute.xlu0 %3752
          %3756 = vset.pattern.permute.xlu0 0
          %3757 = vperm.xlu0 %3756, %v3727
          %v3758 = vpop.permute.xlu0 %3757
          %3761 = vset.pattern.permute.xlu0 0
          %3762 = vperm.xlu0 %3761, %v3728
          %v3763 = vpop.permute.xlu0 %3762
          %3766 = vset.pattern.permute.xlu0 0
          %3767 = vperm.xlu0 %3766, %v3729
          %v3768 = vpop.permute.xlu0 %3767
          %v3770 = vmul.f32 %v3733, %v3538
          %v3771 = vmul.f32 %v3738, %v3539
          %v3772 = vmul.f32 %v3743, %v3540
          %v3773 = vmul.f32 %v3748, %v3541
          %v3774 = vmul.f32 %v3753, %v3542
          %v3775 = vmul.f32 %v3758, %v3543
          %v3776 = vmul.f32 %v3763, %v3544
          %v3777 = vmul.f32 %v3768, %v3545
          %v3778 = vmax.f32 %v3770, 0.0
          %v3779 = vmax.f32 %v3771, 0.0
          %v3780 = vmax.f32 %v3772, 0.0
          %v3781 = vmax.f32 %v3773, 0.0
          %v3782 = vmax.f32 %v3774, 0.0
          %v3783 = vmax.f32 %v3775, 0.0
          %v3784 = vmax.f32 %v3776, 0.0
          %v3785 = vmax.f32 %v3777, 0.0
          %v3786 = vsel %vm2924, %v3778, 0.0
          %v3787 = vsel %vm2924, %v3779, 0.0
          %v3788 = vsel %vm2924, %v3780, 0.0
          %v3789 = vsel %vm2924, %v3781, 0.0
          %v3790 = vsel %vm2924, %v3782, 0.0
          %v3791 = vsel %vm2924, %v3783, 0.0
          %v3792 = vsel %vm2924, %v3784, 0.0
          %v3793 = vsel %vm2924, %v3785, 0.0
          %v3794 = vmul.f32 %v3786, %v3786
          %v3795 = vmul.f32 %v3787, %v3787
          %v3796 = vmul.f32 %v3788, %v3788
          %v3797 = vmul.f32 %v3789, %v3789
          %v3798 = vmul.f32 %v3790, %v3790
          %v3799 = vmul.f32 %v3791, %v3791
          %v3800 = vmul.f32 %v3792, %v3792
          %v3801 = vmul.f32 %v3793, %v3793
          %v3802 = vsel %vm2941, %v3794, 0.0
          %3803 = vadd.xlane.f32.xlu0 %v3802
          %v3804 = vpop.xlane.xlu0 %3803
          %v3805 = vsel %vm2941, %v3795, 0.0
          %3806 = vadd.xlane.f32.xlu0 %v3805
          %v3807 = vpop.xlane.xlu0 %3806
          %v3808 = vsel %vm2941, %v3796, 0.0
          %3809 = vadd.xlane.f32.xlu0 %v3808
          %v3810 = vpop.xlane.xlu0 %3809
          %v3811 = vsel %vm2941, %v3797, 0.0
          %3812 = vadd.xlane.f32.xlu0 %v3811
          %v3813 = vpop.xlane.xlu0 %3812
          %v3814 = vsel %vm2941, %v3798, 0.0
          %3815 = vadd.xlane.f32.xlu0 %v3814
          %v3816 = vpop.xlane.xlu0 %3815
          %v3817 = vsel %vm2941, %v3799, 0.0
          %3818 = vadd.xlane.f32.xlu0 %v3817
          %v3819 = vpop.xlane.xlu0 %3818
          %v3820 = vsel %vm2941, %v3800, 0.0
          %3821 = vadd.xlane.f32.xlu0 %v3820
          %v3822 = vpop.xlane.xlu0 %3821
          %v3823 = vsel %vm2941, %v3801, 0.0
          %3824 = vadd.xlane.f32.xlu0 %v3823
          %v3825 = vpop.xlane.xlu0 %3824
          %v3826 = vmax.f32 %v3804, 1e-15
          %v3827 = vmax.f32 %v3807, 1e-15
          %v3828 = vmax.f32 %v3810, 1e-15
          %v3829 = vmax.f32 %v3813, 1e-15
          %v3830 = vmax.f32 %v3816, 1e-15
          %v3831 = vmax.f32 %v3819, 1e-15
          %v3832 = vmax.f32 %v3822, 1e-15
          %v3833 = vmax.f32 %v3825, 1e-15
          %v3834 = vrsqrt.pop %v3826
          %v3835 = vmul.f32 %v3826, %v3834
          %vm3836 = vcmp.eq.f32.partialorder %v3826, inf
          %v3837 = vsel %vm3836, %v3826, %v3835
          %vm3838 = vcmp.eq.f32.partialorder %v3826, 0.0
          %v3839 = vand.u32 %v3826, 2147483648
          %v3840 = vsel %vm3838, %v3839, %v3837
          %v3841 = vrsqrt.pop %v3827
          %v3842 = vmul.f32 %v3827, %v3841
          %vm3843 = vcmp.eq.f32.partialorder %v3827, inf
          %v3844 = vsel %vm3843, %v3827, %v3842
          %vm3845 = vcmp.eq.f32.partialorder %v3827, 0.0
          %v3846 = vand.u32 %v3827, 2147483648
          %v3847 = vsel %vm3845, %v3846, %v3844
          %v3848 = vrsqrt.pop %v3828
          %v3849 = vmul.f32 %v3828, %v3848
          %vm3850 = vcmp.eq.f32.partialorder %v3828, inf
          %v3851 = vsel %vm3850, %v3828, %v3849
          %vm3852 = vcmp.eq.f32.partialorder %v3828, 0.0
          %v3853 = vand.u32 %v3828, 2147483648
          %v3854 = vsel %vm3852, %v3853, %v3851
          %v3855 = vrsqrt.pop %v3829
          %v3856 = vmul.f32 %v3829, %v3855
          %vm3857 = vcmp.eq.f32.partialorder %v3829, inf
          %v3858 = vsel %vm3857, %v3829, %v3856
          %vm3859 = vcmp.eq.f32.partialorder %v3829, 0.0
          %v3860 = vand.u32 %v3829, 2147483648
          %v3861 = vsel %vm3859, %v3860, %v3858
          %v3862 = vrsqrt.pop %v3830
          %v3863 = vmul.f32 %v3830, %v3862
          %vm3864 = vcmp.eq.f32.partialorder %v3830, inf
          %v3865 = vsel %vm3864, %v3830, %v3863
          %vm3866 = vcmp.eq.f32.partialorder %v3830, 0.0
          %v3867 = vand.u32 %v3830, 2147483648
          %v3868 = vsel %vm3866, %v3867, %v3865
          %v3869 = vrsqrt.pop %v3831
          %v3870 = vmul.f32 %v3831, %v3869
          %vm3871 = vcmp.eq.f32.partialorder %v3831, inf
          %v3872 = vsel %vm3871, %v3831, %v3870
          %vm3873 = vcmp.eq.f32.partialorder %v3831, 0.0
          %v3874 = vand.u32 %v3831, 2147483648
          %v3875 = vsel %vm3873, %v3874, %v3872
          %v3876 = vrsqrt.pop %v3832
          %v3877 = vmul.f32 %v3832, %v3876
          %vm3878 = vcmp.eq.f32.partialorder %v3832, inf
          %v3879 = vsel %vm3878, %v3832, %v3877
          %vm3880 = vcmp.eq.f32.partialorder %v3832, 0.0
          %v3881 = vand.u32 %v3832, 2147483648
          %v3882 = vsel %vm3880, %v3881, %v3879
          %v3883 = vrsqrt.pop %v3833
          %v3884 = vmul.f32 %v3833, %v3883
          %vm3885 = vcmp.eq.f32.partialorder %v3833, inf
          %v3886 = vsel %vm3885, %v3833, %v3884
          %vm3887 = vcmp.eq.f32.partialorder %v3833, 0.0
          %v3888 = vand.u32 %v3833, 2147483648
          %v3889 = vsel %vm3887, %v3888, %v3886
          %v3890 = vmin.f32 %v3840, 50.0
          %v3891 = vmin.f32 %v3847, 50.0
          %v3892 = vmin.f32 %v3854, 50.0
          %v3893 = vmin.f32 %v3861, 50.0
          %v3894 = vmin.f32 %v3868, 50.0
          %v3895 = vmin.f32 %v3875, 50.0
          %v3896 = vmin.f32 %v3882, 50.0
          %v3897 = vmin.f32 %v3889, 50.0
          %v3898 = vmul.f32 %v3890, 1.442695
          %v3899 = vpow.pop %v3898
          %v3900 = vmul.f32 %v3891, 1.442695
          %v3901 = vpow.pop %v3900
          %v3902 = vmul.f32 %v3892, 1.442695
          %v3903 = vpow.pop %v3902
          %v3904 = vmul.f32 %v3893, 1.442695
          %v3905 = vpow.pop %v3904
          %v3906 = vmul.f32 %v3894, 1.442695
          %v3907 = vpow.pop %v3906
          %v3908 = vmul.f32 %v3895, 1.442695
          %v3909 = vpow.pop %v3908
          %v3910 = vmul.f32 %v3896, 1.442695
          %v3911 = vpow.pop %v3910
          %v3912 = vmul.f32 %v3897, 1.442695
          %v3913 = vpow.pop %v3912
          %v3914 = vsub.f32 0.0, %v3890
          %v3915 = vsub.f32 0.0, %v3891
          %v3916 = vsub.f32 0.0, %v3892
          %v3917 = vsub.f32 0.0, %v3893
          %v3918 = vsub.f32 0.0, %v3894
          %v3919 = vsub.f32 0.0, %v3895
          %v3920 = vsub.f32 0.0, %v3896
          %v3921 = vsub.f32 0.0, %v3897
          %v3922 = vmul.f32 %v3914, 1.442695
          %v3923 = vpow.pop %v3922
          %v3924 = vmul.f32 %v3915, 1.442695
          %v3925 = vpow.pop %v3924
          %v3926 = vmul.f32 %v3916, 1.442695
          %v3927 = vpow.pop %v3926
          %v3928 = vmul.f32 %v3917, 1.442695
          %v3929 = vpow.pop %v3928
          %v3930 = vmul.f32 %v3918, 1.442695
          %v3931 = vpow.pop %v3930
          %v3932 = vmul.f32 %v3919, 1.442695
          %v3933 = vpow.pop %v3932
          %v3934 = vmul.f32 %v3920, 1.442695
          %v3935 = vpow.pop %v3934
          %v3936 = vmul.f32 %v3921, 1.442695
          %v3937 = vpow.pop %v3936
          %v3938 = vadd.f32 %v3899, %v3923
          %v3939 = vadd.f32 %v3901, %v3925
          %v3940 = vadd.f32 %v3903, %v3927
          %v3941 = vadd.f32 %v3905, %v3929
          %v3942 = vadd.f32 %v3907, %v3931
          %v3943 = vadd.f32 %v3909, %v3933
          %v3944 = vadd.f32 %v3911, %v3935
          %v3945 = vadd.f32 %v3913, %v3937
          %v3946 = vmul.f32 %v3938, 0.5
          %v3947 = vmul.f32 %v3939, 0.5
          %v3948 = vmul.f32 %v3940, 0.5
          %v3949 = vmul.f32 %v3941, 0.5
          %v3950 = vmul.f32 %v3942, 0.5
          %v3951 = vmul.f32 %v3943, 0.5
          %v3952 = vmul.f32 %v3944, 0.5
          %v3953 = vmul.f32 %v3945, 0.5
          %v3954 = vsub.f32 %v3899, %v3923
          %v3955 = vsub.f32 %v3901, %v3925
          %v3956 = vsub.f32 %v3903, %v3927
          %v3957 = vsub.f32 %v3905, %v3929
          %v3958 = vsub.f32 %v3907, %v3931
          %v3959 = vsub.f32 %v3909, %v3933
          %v3960 = vsub.f32 %v3911, %v3935
          %v3961 = vsub.f32 %v3913, %v3937
          %v3962 = vmul.f32 %v3954, 0.5
          %v3963 = vmul.f32 %v3955, 0.5
          %v3964 = vmul.f32 %v3956, 0.5
          %v3965 = vmul.f32 %v3957, 0.5
          %v3966 = vmul.f32 %v3958, 0.5
          %v3967 = vmul.f32 %v3959, 0.5
          %v3968 = vmul.f32 %v3960, 0.5
          %v3969 = vmul.f32 %v3961, 0.5
          %v3970 = vrsqrt.pop %v3826
          %v3971 = vrsqrt.pop %v3827
          %v3972 = vrsqrt.pop %v3828
          %v3973 = vrsqrt.pop %v3829
          %v3974 = vrsqrt.pop %v3830
          %v3975 = vrsqrt.pop %v3831
          %v3976 = vrsqrt.pop %v3832
          %v3977 = vrsqrt.pop %v3833
          %v3978 = vmul.f32 %v3962, %v3970
          %v3979 = vmul.f32 %v3963, %v3971
          %v3980 = vmul.f32 %v3964, %v3972
          %v3981 = vmul.f32 %v3965, %v3973
          %v3982 = vmul.f32 %v3966, %v3974
          %v3983 = vmul.f32 %v3967, %v3975
          %v3984 = vmul.f32 %v3968, %v3976
          %v3985 = vmul.f32 %v3969, %v3977
          %v3986 = vmul.f32 %v3978, %v3786
          %v3987 = vmul.f32 %v3979, %v3787
          %v3988 = vmul.f32 %v3980, %v3788
          %v3989 = vmul.f32 %v3981, %v3789
          %v3990 = vmul.f32 %v3982, %v3790
          %v3991 = vmul.f32 %v3983, %v3791
          %v3992 = vmul.f32 %v3984, %v3792
          %v3993 = vmul.f32 %v3985, %v3793
          %v3994 = vsel %vm2924, %v3986, %v3946
          %v3995 = vsel %vm2924, %v3987, %v3947
          %v3996 = vsel %vm2924, %v3988, %v3948
          %v3997 = vsel %vm2924, %v3989, %v3949
          %v3998 = vsel %vm2924, %v3990, %v3950
          %v3999 = vsel %vm2924, %v3991, %v3951
          %v4000 = vsel %vm2924, %v3992, %v3952
          %v4001 = vsel %vm2924, %v3993, %v3953
          %4002 = vst.msk [vmem:[%s463] sm:$0xff] %vm2941, %v3994
          %4003 = vst.msk [vmem:[%s463 + $0x8] sm:$0xff] %vm2941, %v3995
          %4004 = vst.msk [vmem:[%s463 + $0x10] sm:$0xff] %vm2941, %v3996
          %4005 = vst.msk [vmem:[%s463 + $0x18] sm:$0xff] %vm2941, %v3997
          %4006 = vst.msk [vmem:[%s463 + $0x20] sm:$0xff] %vm2941, %v3998
          %4007 = vst.msk [vmem:[%s463 + $0x28] sm:$0xff] %vm2941, %v3999
          %4008 = vst.msk [vmem:[%s463 + $0x30] sm:$0xff] %vm2941, %v4000
          %4009 = vst.msk [vmem:[%s463 + $0x38] sm:$0xff] %vm2941, %v4001
        $region84: #{hat_layer.3} parent=47 // pred_fallthru
          _
        %s4010 = sand.u32 %s220, 1
        %s4011 = scalar_lea.sflag [#allocation7], %s4010
        %s4012 = sand.u32 %s220, 1
        %s4013 = smul.addr %s4012, 64
        %s4014 = scalar_lea.vmem [#allocation17], %s4013
        // Predicated region
        $region85: #{hat_layer.3} parent=47 // pred_check
          %p4015 = pneg %p230
        $region86: #{hat_layer.3} parent=47 // pred_check_branch
          %4017 = sbr.rel (%p4015) target = $region88
        $region87: #{hat_layer.3} parent=47 // pred_region
          %s4018 = smul.u32 8, %s35
          %s4020 = ssub.s32 1024, 1024
          %4021 = vsyncadd %s4011, %s4020
          %s4022 = smul.addr %s4018, 128
          %s4023 = scalar_lea.hbm %s7, %s4022
          %s4024 = sshll.u32 %s4014, 4
          %s4025 = int_to_ptr.vmem [resolvable:$true] %s4024
          %4030 = dma.vmem_to_hbm [thread:$0]  %s4025, 1024, %s4023, %s4011, 128, 128, 8
        $region88: #{hat_layer.3} parent=47 // pred_fallthru
          _
      $region48: #{hat_layer.3} parent=5 // pred_fallthru
        _
      %p4031 = scmp.le.s32.totalorder 2, %s26
      // Predicated region
      $region89: #{hat_layer.3} parent=5 // pred_check
        %p4032 = pneg %p4031
      $region90: #{hat_layer.3} parent=5 // pred_check_branch
        %4034 = sbr.rel (%p4032) target = $region92
      $region91: #{hat_layer.3} parent=5 // pred_region
        %s4035 = ssub.s32 %s26, 2
        // Predicated region
        $region93: #{hat_layer.3} parent=91 // pred_check
          %p4036 = pneg %p236
        $region94: #{hat_layer.3} parent=91 // pred_check_branch
          %4038 = sbr.rel (%p4036) target = $region96
        $region95: #{hat_layer.3} parent=91 // pred_region
          %s4039 = sand.u32 %s221, 1
          %s4040 = scalar_lea.sflag [#allocation7], %s4039
          %s4041 = sand.u32 %s221, 1
          %s4042 = smul.addr %s4041, 64
          %s4043 = scalar_lea.vmem [#allocation17], %s4042
          %4044 = dma.done %s4040, 1024
        $region96: #{hat_layer.3} parent=91 // pred_fallthru
          _
      $region92: #{hat_layer.3} parent=5 // pred_fallthru
        _
    $region6: #{hat_layer.3} parent=1 // loop_footer
      %s30 = sadd.s32 1, %s26
    $region7: #{hat_layer.3} parent=1 // loop_footer_branch
      %25 = sbr.rel target = $region3
    $region8: #{hat_layer.3} parent=1 // loop_exit
      _
    %4045 = vsyncpa [#allocation6], 1
    %s4046 = scalar_lea.sflag [#allocation6], 1
    %4047 = vsyncpa %s4046, 1
    %4048 = vsyncpa [#allocation9], 1
    %s4049 = scalar_lea.sflag [#allocation9], 1
    %4050 = vsyncpa %s4049, 1
    %4051 = vsyncpa [#allocation12], 1
    %s4052 = scalar_lea.sflag [#allocation12], 1
    %4053 = vsyncpa %s4052, 1
    %4054 = vsyncpa [#allocation15], 1
    %4055 = vsyncpa [#allocation7], 1
    %s4056 = scalar_lea.sflag [#allocation7], 1
    %4057 = vsyncpa %s4056, 1

</llo_original>
